<compile_context>
chip_gen: v6e
topology: v6e:2x2x1
jax: 0.10.0
libtpu: 0.0.40
codegen_flags: <defaults>
</compile_context>

<pallas_src>
import functools

import jax
import jax.numpy as jnp
import numpy as np
from jax.experimental import pallas as pl
from jax.experimental.pallas import tpu as pltpu


def _sl(start, size, stride):
    """Slice helper: plain pl.ds when stride==1, strided pl.ds otherwise."""
    if stride == 1:
        return pl.ds(start, size)
    return pl.ds(start, size, stride)


def _bottleneck_ir_kernel(x_ref, bn1_s_ref, bn1_b_ref, w1_ref, alpha_ref,
                          w2_ref, bn2_s_ref, bn2_b_ref, *rest,
                          stride, identity_shortcut):
    if identity_shortcut:
        out_ref, pad1_ref, pad2_ref, slab1_ref, slab2_ref = rest
        wsc_ref = scs_ref = scb_ref = None
    else:
        (wsc_ref, scs_ref, scb_ref,
         out_ref, pad1_ref, pad2_ref, slab1_ref, slab2_ref) = rest

    B, H, W, Cin = x_ref.shape
    D = w2_ref.shape[-1]
    Hout = (H - 1) // stride + 1
    Wout = (W - 1) // stride + 1
    M1 = B * H * W
    M2 = B * Hout * Wout
    f32 = jnp.float32

    # ---- zero only the 1-pixel border of the padded scratches (interior is
    #      fully overwritten every step).  Re-done each step so it stays
    #      correct when the "parallel" batch axis is sharded across cores. ----
    for ref, C in ((pad1_ref, Cin), (pad2_ref, D)):
        row0 = jnp.zeros((B, 1, W + 2, C), ref.dtype)
        col0 = jnp.zeros((B, H + 2, 1, C), ref.dtype)
        ref[:, 0:1, :, :] = row0
        ref[:, H + 1:H + 2, :, :] = row0
        ref[:, :, 0:1, :] = col0
        ref[:, :, W + 1:W + 2, :] = col0

    # ---- res branch: BN1 (inference affine, f32 math) -> bf16 pad scratch ----
    x = x_ref[...].astype(f32)
    bn1 = (x * bn1_s_ref[...].reshape(1, 1, 1, Cin)
           + bn1_b_ref[...].reshape(1, 1, 1, Cin))
    pad1_ref[:, 1:H + 1, 1:W + 1, :] = bn1.astype(pad1_ref.dtype)

    # ---- conv1: 3x3, stride 1, pad 1.  K-merged im2col: one (M1, 3*Cin)
    #      bf16 slab + one MXU matmul per dy; dy contributions summed in
    #      vregs (single write-out after PReLU, no per-tap VMEM RMW). ----
    acc1 = None
    for dy in range(3):
        for dx in range(3):
            slab1_ref[:, dx * Cin:(dx + 1) * Cin] = (
                pad1_ref[:, dy:dy + H, dx:dx + W, :].reshape(M1, Cin))
        contrib = jnp.dot(slab1_ref[...], w1_ref[dy],
                          preferred_element_type=f32)
        acc1 = contrib if dy == 0 else acc1 + contrib

    # ---- PReLU (per-channel alpha, f32) -> padded scratch for conv2 ----
    act = jnp.where(acc1 > 0, acc1, acc1 * alpha_ref[...])
    pad2_ref[:, 1:H + 1, 1:W + 1, :] = (
        act.reshape(B, H, W, D).astype(pad2_ref.dtype))

    # ---- conv2: 3x3, stride s, pad 1 (same K-merged scheme), then BN2 ----
    acc2 = None
    for dy in range(3):
        for dx in range(3):
            patch = pad2_ref[:, _sl(dy, Hout, stride), _sl(dx, Wout, stride), :]
            slab2_ref[:, dx * D:(dx + 1) * D] = (
                patch.reshape(M2, D).astype(slab2_ref.dtype))
        contrib = jnp.dot(slab2_ref[...], w2_ref[dy],
                          preferred_element_type=f32)
        acc2 = contrib if dy == 0 else acc2 + contrib
    res = acc2 * bn2_s_ref[...] + bn2_b_ref[...]

    # ---- shortcut ----
    if stride == 1:
        xs = x
    else:
        xs = x_ref[:, _sl(0, Hout, stride), _sl(0, Wout, stride), :].astype(f32)
    xs2 = xs.reshape(M2, Cin)
    if identity_shortcut:
        # MaxPool2d(1, stride) == strided subsample; no matmul, no scale/bias.
        sc = xs2
    else:
        sc = jnp.dot(xs2.astype(jnp.bfloat16), wsc_ref[...],
                     preferred_element_type=f32)
        sc = sc * scs_ref[...] + scb_ref[...]

    out_ref[...] = (res + sc).reshape(B, Hout * Wout, D).astype(out_ref.dtype)


def _pick_batch_block(n, hout, wout):
    """Fatten the matmul M dim for small-spatial stages (aim M >= ~256)."""
    if n <= 1:
        return 1
    target = max(1, 256 // max(hout * wout, 1))
    bb = 1
    for cand in range(2, min(n, 8) + 1):
        if n % cand == 0 and cand <= target:
            bb = cand
    return bb


def bottleneck_ir_forward(x, params, stride, batch_block=None):
    """x: (N, H, W, Cin) float32, NHWC."""
    N, H, W, Cin = x.shape
    D = params['w2'].shape[-1]
    Hout = (H - 1) // stride + 1
    Wout = (W - 1) // stride + 1
    identity_shortcut = 'wsc' not in params

    if batch_block is None:
        batch_block = _pick_batch_block(N, Hout, Wout)
    assert N % batch_block == 0, "batch_block must divide N"
    B = batch_block

    row = lambda v: v.reshape(1, -1).astype(jnp.float32)
    # HWIO (3,3,Cin,D) -> (dy, 3*Cin, D): per-dy weight block for the K-merge.
    w1 = params['w1'].reshape(3, 3 * Cin, D).astype(jnp.bfloat16)
    w2 = params['w2'].reshape(3, 3 * D, D).astype(jnp.bfloat16)

    inputs = [x,
              row(params['bn1_scale']), row(params['bn1_bias']),
              w1, row(params['alpha']), w2,
              row(params['bn2_scale']), row(params['bn2_bias'])]
    if not identity_shortcut:
        inputs += [params['wsc'].astype(jnp.bfloat16),
                   row(params['sc_scale']), row(params['sc_bias'])]

    def param_spec(a):
        return pl.BlockSpec(a.shape, lambda n, _nd=a.ndim: (0,) * _nd)

    in_specs = [pl.BlockSpec((B, H, W, Cin), lambda n: (n, 0, 0, 0))]
    in_specs += [param_spec(a) for a in inputs[1:]]

    pad2_dtype = jnp.bfloat16 if stride == 1 else jnp.float32
    pad2_isz = 2 if stride == 1 else 4

    # VMEM budget estimate -> vmem_limit_bytes (leave headroom on v7x's 64 MiB).
    scratch_bytes = (B * (H + 2) * (W + 2) * (Cin * 2 + D * pad2_isz)
                     + B * H * W * 3 * Cin * 2
                     + B * Hout * Wout * 3 * D * 2)
    io_bytes = 2 * B * (H * W * Cin + Hout * Wout * D) * 4   # double-buffered
    param_bytes = 2 * sum(int(a.size) * a.dtype.itemsize for a in inputs[1:])
    vmem_limit = int(min(max(2.5 * (scratch_bytes + io_bytes + param_bytes),
                             32 * 1024 * 1024), 112 * 1024 * 1024))

    flops_per_img = (2 * H * W * 9 * Cin * D
                     + 2 * Hout * Wout * 9 * D * D
                     + (0 if identity_shortcut else 2 * Hout * Wout * Cin * D))
    bytes_accessed = (int(x.size) * 4 + N * Hout * Wout * D * 4
                      + (int(w1.size) + int(w2.size)) * 2
                      + (0 if identity_shortcut else int(params['wsc'].size) * 2))
    cost = pl.CostEstimate(flops=int(N * flops_per_img), transcendentals=0,
                           bytes_accessed=int(bytes_accessed))

    grid_spec = pltpu.PrefetchScalarGridSpec(
        num_scalar_prefetch=0,
        grid=(N // B,),
        in_specs=in_specs,
        out_specs=pl.BlockSpec((B, Hout * Wout, D), lambda n: (n, 0, 0)),
        scratch_shapes=[
            pltpu.VMEM((B, H + 2, W + 2, Cin), jnp.bfloat16),   # padded BN1(x)
            pltpu.VMEM((B, H + 2, W + 2, D), pad2_dtype),       # padded PReLU
            pltpu.VMEM((B * H * W, 3 * Cin), jnp.bfloat16),     # conv1 im2col slab
            pltpu.VMEM((B * Hout * Wout, 3 * D), jnp.bfloat16), # conv2 im2col slab
        ],
    )

    kernel = functools.partial(_bottleneck_ir_kernel, stride=stride,
                               identity_shortcut=identity_shortcut)
    out = pl.pallas_call(
        kernel,
        out_shape=jax.ShapeDtypeStruct((N, Hout * Wout, D), jnp.float32),
        grid_spec=grid_spec,
        compiler_params=pltpu.CompilerParams(
            dimension_semantics=("parallel",),
            vmem_limit_bytes=vmem_limit),
        cost_estimate=cost,
    )(*inputs)
    return out.reshape(N, Hout, Wout, D)


def init_params(key, in_c, depth):
    keys = jax.random.split(key, 16)

    def bn_fold(kg, kb, km, kv, c):
        gamma = 1.0 + 0.1 * jax.random.normal(kg, (c,), jnp.float32)
        beta = 0.1 * jax.random.normal(kb, (c,), jnp.float32)
        mean = 0.1 * jax.random.normal(km, (c,), jnp.float32)
        var = 1.0 + 0.2 * jax.random.uniform(kv, (c,), jnp.float32)
        scale = gamma / jnp.sqrt(var + 1e-5)
        bias = beta - mean * scale
        return scale, bias

    bn1_scale, bn1_bias = bn_fold(keys[0], keys[1], keys[2], keys[3], in_c)
    bn2_scale, bn2_bias = bn_fold(keys[4], keys[5], keys[6], keys[7], depth)

    w1 = 0.1 * jax.random.normal(keys[8], (3, 3, in_c, depth), jnp.float32)    # HWIO
    w2 = 0.1 * jax.random.normal(keys[9], (3, 3, depth, depth), jnp.float32)   # HWIO
    alpha = (jnp.full((depth,), 0.25, jnp.float32)
             + 0.05 * jax.random.normal(keys[10], (depth,), jnp.float32))

    p = dict(bn1_scale=bn1_scale, bn1_bias=bn1_bias, w1=w1, alpha=alpha,
             w2=w2, bn2_scale=bn2_scale, bn2_bias=bn2_bias)
    if in_c != depth:
        p['wsc'] = 0.1 * jax.random.normal(keys[11], (in_c, depth), jnp.float32)  # 1x1 conv
        p['sc_scale'], p['sc_bias'] = bn_fold(keys[12], keys[13], keys[14], keys[15], depth)
    return p


# ---------------- pure-JAX reference (for verification) ----------------
def _conv(x, w, stride, pad):
    return jax.lax.conv_general_dilated(
        x, w, window_strides=(stride, stride), padding=pad,
        dimension_numbers=('NHWC', 'HWIO', 'NHWC'),
        precision=jax.lax.Precision.HIGHEST)


def ref_forward(x, p, stride):
    bn1 = x * p['bn1_scale'] + p['bn1_bias']
    c1 = _conv(bn1, p['w1'], 1, [(1, 1), (1, 1)])
    act = jnp.where(c1 > 0, c1, c1 * p['alpha'])
    c2 = _conv(act, p['w2'], stride, [(1, 1), (1, 1)])
    res = c2 * p['bn2_scale'] + p['bn2_bias']
    xs = x[:, ::stride, ::stride, :]
    if 'wsc' in p:
        sc = jnp.einsum('nhwc,cd->nhwd', xs, p['wsc'],
                        precision=jax.lax.Precision.HIGHEST)
        sc = sc * p['sc_scale'] + p['sc_bias']
    else:
        sc = xs   # MaxPool2d(1, stride) == strided subsample
    return res + sc


def _check(x, params, stride, rtol=3e-2, atol=1e-1):
    out = bottleneck_ir_forward(x, params, stride)
    jax.block_until_ready(out)
    ref = ref_forward(x, params, stride)
    np.testing.assert_allclose(np.asarray(out), np.asarray(ref),
                               rtol=rtol, atol=atol)


if __name__ == "__main__":
    key = jax.random.PRNGKey(0)
    kx1, kx2, kx3, kp1, kp2, kp3 = jax.random.split(key, 6)

    # Config A: tiny unaligned shapes — in_channel != depth, stride 2
    # (Conv1x1 + BN shortcut); small spatial -> batch-blocked grid step.
    xa = jax.random.normal(kx1, (2, 16, 16, 4), jnp.float32)
    pa = init_params(kp1, 4, 8)
    _check(xa, pa, stride=2)

    # Config B: in_channel == depth, stride 1 (MaxPool2d(1,1) identity
    # shortcut — the most common block in IR-ResNet); bf16 pad2 path.
    xb = jax.random.normal(kx2, (2, 16, 16, 64), jnp.float32)
    pb = init_params(kp2, 64, 64)
    _check(xb, pb, stride=1)

    # Config C: MXU-friendly downsampling block — 64 -> 128 channels, stride 2;
    # exercises batch-blocked + strided-read + non-identity shortcut path.
    xc = jax.random.normal(kx3, (2, 14, 14, 64), jnp.float32)
    pc = init_params(kp3, 64, 128)
    _check(xc, pc, stride=2)

    print("KERNEL_OK")
</pallas_src>

<mosaic_0001>
module attributes {stable_mosaic.version = 11 : i64} {
  func.func @_bottleneck_ir_kernel(%arg0: i32, %arg1: memref<2x16x16x4xf32, #tpu.memory_space<vmem>>, %arg2: memref<1x4xf32, #tpu.memory_space<vmem>>, %arg3: memref<1x4xf32, #tpu.memory_space<vmem>>, %arg4: memref<3x12x8xbf16, #tpu.memory_space<vmem>>, %arg5: memref<1x8xf32, #tpu.memory_space<vmem>>, %arg6: memref<3x24x8xbf16, #tpu.memory_space<vmem>>, %arg7: memref<1x8xf32, #tpu.memory_space<vmem>>, %arg8: memref<1x8xf32, #tpu.memory_space<vmem>>, %arg9: memref<4x8xbf16, #tpu.memory_space<vmem>>, %arg10: memref<1x8xf32, #tpu.memory_space<vmem>>, %arg11: memref<1x8xf32, #tpu.memory_space<vmem>>, %arg12: memref<2x64x8xf32, #tpu.memory_space<vmem>>, %arg13: memref<2x18x18x4xbf16, #tpu.memory_space<vmem>>, %arg14: memref<2x18x18x8xf32, #tpu.memory_space<vmem>>, %arg15: memref<512x12xbf16, #tpu.memory_space<vmem>>, %arg16: memref<128x24xbf16, #tpu.memory_space<vmem>>) attributes {dimension_semantics = [#tpu.dimension_semantics<parallel>], iteration_bounds = array<i64: 1>, scalar_prefetch = 0 : i64, scratch_operands = 4 : i64, tpu.core_type = #tpu.core_type<tc>, window_params = [{transform_indices = @transform_0, window_bounds = array<i64: 2, 16, 16, 4>}, {pipeline_mode = #tpu.pipeline_mode<synchronous>, transform_indices = @transform_1, window_bounds = array<i64: 1, 4>}, {pipeline_mode = #tpu.pipeline_mode<synchronous>, transform_indices = @transform_2, window_bounds = array<i64: 1, 4>}, {pipeline_mode = #tpu.pipeline_mode<synchronous>, transform_indices = @transform_3, window_bounds = array<i64: 3, 12, 8>}, {pipeline_mode = #tpu.pipeline_mode<synchronous>, transform_indices = @transform_4, window_bounds = array<i64: 1, 8>}, {pipeline_mode = #tpu.pipeline_mode<synchronous>, transform_indices = @transform_5, window_bounds = array<i64: 3, 24, 8>}, {pipeline_mode = #tpu.pipeline_mode<synchronous>, transform_indices = @transform_6, window_bounds = array<i64: 1, 8>}, {pipeline_mode = #tpu.pipeline_mode<synchronous>, transform_indices = @transform_7, window_bounds = array<i64: 1, 8>}, {pipeline_mode = #tpu.pipeline_mode<synchronous>, transform_indices = @transform_8, window_bounds = array<i64: 4, 8>}, {pipeline_mode = #tpu.pipeline_mode<synchronous>, transform_indices = @transform_9, window_bounds = array<i64: 1, 8>}, {pipeline_mode = #tpu.pipeline_mode<synchronous>, transform_indices = @transform_10, window_bounds = array<i64: 1, 8>}, {transform_indices = @transform_11, window_bounds = array<i64: 2, 64, 8>}]} {
    %cst = arith.constant 0.000000e+00 : bf16
    %0 = vector.broadcast %cst : bf16 to vector<2x1x18x4xbf16>
    %cst_0 = arith.constant 0.000000e+00 : bf16
    %1 = vector.broadcast %cst_0 : bf16 to vector<2x18x1x4xbf16>
    %c0 = arith.constant 0 : index
    %c0_1 = arith.constant 0 : index
    %c0_2 = arith.constant 0 : index
    %c0_3 = arith.constant 0 : index
    %2 = vector.load %arg13[%c0, %c0_1, %c0_2, %c0_3] : memref<2x18x18x4xbf16, #tpu.memory_space<vmem>>, vector<2x1x18x4xbf16>
    tpu.vector_store %arg13[%c0, %c0_1, %c0_2, %c0_3], %0 {strides = array<i32>} : memref<2x18x18x4xbf16, #tpu.memory_space<vmem>>, vector<2x1x18x4xbf16>,
    %c0_4 = arith.constant 0 : index
    %c17 = arith.constant 17 : index
    %c0_5 = arith.constant 0 : index
    %c0_6 = arith.constant 0 : index
    %3 = vector.load %arg13[%c0_4, %c17, %c0_5, %c0_6] : memref<2x18x18x4xbf16, #tpu.memory_space<vmem>>, vector<2x1x18x4xbf16>
    tpu.vector_store %arg13[%c0_4, %c17, %c0_5, %c0_6], %0 {strides = array<i32>} : memref<2x18x18x4xbf16, #tpu.memory_space<vmem>>, vector<2x1x18x4xbf16>,
    %c0_7 = arith.constant 0 : index
    %c0_8 = arith.constant 0 : index
    %c0_9 = arith.constant 0 : index
    %c0_10 = arith.constant 0 : index
    %4 = vector.load %arg13[%c0_7, %c0_8, %c0_9, %c0_10] : memref<2x18x18x4xbf16, #tpu.memory_space<vmem>>, vector<2x18x1x4xbf16>
    tpu.vector_store %arg13[%c0_7, %c0_8, %c0_9, %c0_10], %1 {strides = array<i32>} : memref<2x18x18x4xbf16, #tpu.memory_space<vmem>>, vector<2x18x1x4xbf16>,
    %c0_11 = arith.constant 0 : index
    %c0_12 = arith.constant 0 : index
    %c17_13 = arith.constant 17 : index
    %c0_14 = arith.constant 0 : index
    %5 = vector.load %arg13[%c0_11, %c0_12, %c17_13, %c0_14] : memref<2x18x18x4xbf16, #tpu.memory_space<vmem>>, vector<2x18x1x4xbf16>
    tpu.vector_store %arg13[%c0_11, %c0_12, %c17_13, %c0_14], %1 {strides = array<i32>} : memref<2x18x18x4xbf16, #tpu.memory_space<vmem>>, vector<2x18x1x4xbf16>,
    %cst_15 = arith.constant 0.000000e+00 : f32
    %6 = vector.broadcast %cst_15 : f32 to vector<2x1x18x8xf32>
    %cst_16 = arith.constant 0.000000e+00 : f32
    %7 = vector.broadcast %cst_16 : f32 to vector<2x18x1x8xf32>
    %c0_17 = arith.constant 0 : index
    %c0_18 = arith.constant 0 : index
    %c0_19 = arith.constant 0 : index
    %c0_20 = arith.constant 0 : index
    %8 = vector.load %arg14[%c0_17, %c0_18, %c0_19, %c0_20] : memref<2x18x18x8xf32, #tpu.memory_space<vmem>>, vector<2x1x18x8xf32>
    tpu.vector_store %arg14[%c0_17, %c0_18, %c0_19, %c0_20], %6 {strides = array<i32>} : memref<2x18x18x8xf32, #tpu.memory_space<vmem>>, vector<2x1x18x8xf32>,
    %c0_21 = arith.constant 0 : index
    %c17_22 = arith.constant 17 : index
    %c0_23 = arith.constant 0 : index
    %c0_24 = arith.constant 0 : index
    %9 = vector.load %arg14[%c0_21, %c17_22, %c0_23, %c0_24] : memref<2x18x18x8xf32, #tpu.memory_space<vmem>>, vector<2x1x18x8xf32>
    tpu.vector_store %arg14[%c0_21, %c17_22, %c0_23, %c0_24], %6 {strides = array<i32>} : memref<2x18x18x8xf32, #tpu.memory_space<vmem>>, vector<2x1x18x8xf32>,
    %c0_25 = arith.constant 0 : index
    %c0_26 = arith.constant 0 : index
    %c0_27 = arith.constant 0 : index
    %c0_28 = arith.constant 0 : index
    %10 = vector.load %arg14[%c0_25, %c0_26, %c0_27, %c0_28] : memref<2x18x18x8xf32, #tpu.memory_space<vmem>>, vector<2x18x1x8xf32>
    tpu.vector_store %arg14[%c0_25, %c0_26, %c0_27, %c0_28], %7 {strides = array<i32>} : memref<2x18x18x8xf32, #tpu.memory_space<vmem>>, vector<2x18x1x8xf32>,
    %c0_29 = arith.constant 0 : index
    %c0_30 = arith.constant 0 : index
    %c17_31 = arith.constant 17 : index
    %c0_32 = arith.constant 0 : index
    %11 = vector.load %arg14[%c0_29, %c0_30, %c17_31, %c0_32] : memref<2x18x18x8xf32, #tpu.memory_space<vmem>>, vector<2x18x1x8xf32>
    tpu.vector_store %arg14[%c0_29, %c0_30, %c17_31, %c0_32], %7 {strides = array<i32>} : memref<2x18x18x8xf32, #tpu.memory_space<vmem>>, vector<2x18x1x8xf32>,
    %c0_33 = arith.constant 0 : index
    %c0_34 = arith.constant 0 : index
    %c0_35 = arith.constant 0 : index
    %c0_36 = arith.constant 0 : index
    %12 = vector.load %arg1[%c0_33, %c0_34, %c0_35, %c0_36] : memref<2x16x16x4xf32, #tpu.memory_space<vmem>>, vector<2x16x16x4xf32>
    %c0_37 = arith.constant 0 : index
    %c0_38 = arith.constant 0 : index
    %13 = vector.load %arg2[%c0_37, %c0_38] : memref<1x4xf32, #tpu.memory_space<vmem>>, vector<1x4xf32>
    %14 = vector.shape_cast %13 : vector<1x4xf32> to vector<1x1x1x4xf32>
    %15 = vector.broadcast %14 : vector<1x1x1x4xf32> to vector<2x16x16x4xf32>
    %16 = arith.mulf %12, %15 : vector<2x16x16x4xf32>
    %c0_39 = arith.constant 0 : index
    %c0_40 = arith.constant 0 : index
    %17 = vector.load %arg3[%c0_39, %c0_40] : memref<1x4xf32, #tpu.memory_space<vmem>>, vector<1x4xf32>
    %18 = vector.shape_cast %17 : vector<1x4xf32> to vector<1x1x1x4xf32>
    %19 = vector.broadcast %18 : vector<1x1x1x4xf32> to vector<2x16x16x4xf32>
    %20 = arith.addf %16, %19 : vector<2x16x16x4xf32>
    %21 = arith.truncf %20 : vector<2x16x16x4xf32> to vector<2x16x16x4xbf16>
    %c0_41 = arith.constant 0 : index
    %c1 = arith.constant 1 : index
    %c1_42 = arith.constant 1 : index
    %c0_43 = arith.constant 0 : index
    %22 = vector.load %arg13[%c0_41, %c1, %c1_42, %c0_43] : memref<2x18x18x4xbf16, #tpu.memory_space<vmem>>, vector<2x16x16x4xbf16>
    tpu.vector_store %arg13[%c0_41, %c1, %c1_42, %c0_43], %21 {strides = array<i32>} : memref<2x18x18x4xbf16, #tpu.memory_space<vmem>>, vector<2x16x16x4xbf16>,
    %c0_44 = arith.constant 0 : index
    %c0_45 = arith.constant 0 : index
    %c0_46 = arith.constant 0 : index
    %c0_47 = arith.constant 0 : index
    %23 = vector.load %arg13[%c0_44, %c0_45, %c0_46, %c0_47] : memref<2x18x18x4xbf16, #tpu.memory_space<vmem>>, vector<2x16x16x4xbf16>
    %24 = vector.shape_cast %23 : vector<2x16x16x4xbf16> to vector<512x4xbf16>
    %c0_48 = arith.constant 0 : index
    %c0_49 = arith.constant 0 : index
    %25 = vector.load %arg15[%c0_48, %c0_49] : memref<512x12xbf16, #tpu.memory_space<vmem>>, vector<512x4xbf16>
    tpu.vector_store %arg15[%c0_48, %c0_49], %24 {strides = array<i32>} : memref<512x12xbf16, #tpu.memory_space<vmem>>, vector<512x4xbf16>,
    %c0_50 = arith.constant 0 : index
    %c0_51 = arith.constant 0 : index
    %c1_52 = arith.constant 1 : index
    %c0_53 = arith.constant 0 : index
    %26 = vector.load %arg13[%c0_50, %c0_51, %c1_52, %c0_53] : memref<2x18x18x4xbf16, #tpu.memory_space<vmem>>, vector<2x16x16x4xbf16>
    %27 = vector.shape_cast %26 : vector<2x16x16x4xbf16> to vector<512x4xbf16>
    %c0_54 = arith.constant 0 : index
    %c4 = arith.constant 4 : index
    %28 = vector.load %arg15[%c0_54, %c4] : memref<512x12xbf16, #tpu.memory_space<vmem>>, vector<512x4xbf16>
    tpu.vector_store %arg15[%c0_54, %c4], %27 {strides = array<i32>} : memref<512x12xbf16, #tpu.memory_space<vmem>>, vector<512x4xbf16>,
    %c0_55 = arith.constant 0 : index
    %c0_56 = arith.constant 0 : index
    %c2 = arith.constant 2 : index
    %c0_57 = arith.constant 0 : index
    %29 = vector.load %arg13[%c0_55, %c0_56, %c2, %c0_57] : memref<2x18x18x4xbf16, #tpu.memory_space<vmem>>, vector<2x16x16x4xbf16>
    %30 = vector.shape_cast %29 : vector<2x16x16x4xbf16> to vector<512x4xbf16>
    %c0_58 = arith.constant 0 : index
    %c8 = arith.constant 8 : index
    %31 = vector.load %arg15[%c0_58, %c8] : memref<512x12xbf16, #tpu.memory_space<vmem>>, vector<512x4xbf16>
    tpu.vector_store %arg15[%c0_58, %c8], %30 {strides = array<i32>} : memref<512x12xbf16, #tpu.memory_space<vmem>>, vector<512x4xbf16>,
    %c0_59 = arith.constant 0 : index
    %c0_60 = arith.constant 0 : index
    %32 = vector.load %arg15[%c0_59, %c0_60] : memref<512x12xbf16, #tpu.memory_space<vmem>>, vector<512x12xbf16>
    %c0_61 = arith.constant 0 : index
    %c0_62 = arith.constant 0 : index
    %c0_63 = arith.constant 0 : index
    %33 = vector.load %arg4[%c0_61, %c0_62, %c0_63] : memref<3x12x8xbf16, #tpu.memory_space<vmem>>, vector<1x12x8xbf16>
    %34 = vector.shape_cast %33 : vector<1x12x8xbf16> to vector<12x8xbf16>
    %cst_64 = arith.constant dense<0.000000e+00> : vector<512x8xf32>
    %35 = tpu.matmul %32, %34, %cst_64 {dimension_numbers = #tpu.dot_dimension_numbers<[1], [0], [0], [1], [0, 0, 1, 1], [], []>} : vector<512x12xbf16>, vector<12x8xbf16>, vector<512x8xf32> -> vector<512x8xf32>
    %c0_65 = arith.constant 0 : index
    %c1_66 = arith.constant 1 : index
    %c0_67 = arith.constant 0 : index
    %c0_68 = arith.constant 0 : index
    %36 = vector.load %arg13[%c0_65, %c1_66, %c0_67, %c0_68] : memref<2x18x18x4xbf16, #tpu.memory_space<vmem>>, vector<2x16x16x4xbf16>
    %37 = vector.shape_cast %36 : vector<2x16x16x4xbf16> to vector<512x4xbf16>
    %c0_69 = arith.constant 0 : index
    %c0_70 = arith.constant 0 : index
    %38 = vector.load %arg15[%c0_69, %c0_70] : memref<512x12xbf16, #tpu.memory_space<vmem>>, vector<512x4xbf16>
    tpu.vector_store %arg15[%c0_69, %c0_70], %37 {strides = array<i32>} : memref<512x12xbf16, #tpu.memory_space<vmem>>, vector<512x4xbf16>,
    %c0_71 = arith.constant 0 : index
    %c1_72 = arith.constant 1 : index
    %c1_73 = arith.constant 1 : index
    %c0_74 = arith.constant 0 : index
    %39 = vector.load %arg13[%c0_71, %c1_72, %c1_73, %c0_74] : memref<2x18x18x4xbf16, #tpu.memory_space<vmem>>, vector<2x16x16x4xbf16>
    %40 = vector.shape_cast %39 : vector<2x16x16x4xbf16> to vector<512x4xbf16>
    %c0_75 = arith.constant 0 : index
    %c4_76 = arith.constant 4 : index
    %41 = vector.load %arg15[%c0_75, %c4_76] : memref<512x12xbf16, #tpu.memory_space<vmem>>, vector<512x4xbf16>
    tpu.vector_store %arg15[%c0_75, %c4_76], %40 {strides = array<i32>} : memref<512x12xbf16, #tpu.memory_space<vmem>>, vector<512x4xbf16>,
    %c0_77 = arith.constant 0 : index
    %c1_78 = arith.constant 1 : index
    %c2_79 = arith.constant 2 : index
    %c0_80 = arith.constant 0 : index
    %42 = vector.load %arg13[%c0_77, %c1_78, %c2_79, %c0_80] : memref<2x18x18x4xbf16, #tpu.memory_space<vmem>>, vector<2x16x16x4xbf16>
    %43 = vector.shape_cast %42 : vector<2x16x16x4xbf16> to vector<512x4xbf16>
    %c0_81 = arith.constant 0 : index
    %c8_82 = arith.constant 8 : index
    %44 = vector.load %arg15[%c0_81, %c8_82] : memref<512x12xbf16, #tpu.memory_space<vmem>>, vector<512x4xbf16>
    tpu.vector_store %arg15[%c0_81, %c8_82], %43 {strides = array<i32>} : memref<512x12xbf16, #tpu.memory_space<vmem>>, vector<512x4xbf16>,
    %c0_83 = arith.constant 0 : index
    %c0_84 = arith.constant 0 : index
    %45 = vector.load %arg15[%c0_83, %c0_84] : memref<512x12xbf16, #tpu.memory_space<vmem>>, vector<512x12xbf16>
    %c1_85 = arith.constant 1 : index
    %c0_86 = arith.constant 0 : index
    %c0_87 = arith.constant 0 : index
    %46 = vector.load %arg4[%c1_85, %c0_86, %c0_87] : memref<3x12x8xbf16, #tpu.memory_space<vmem>>, vector<1x12x8xbf16>
    %47 = vector.shape_cast %46 : vector<1x12x8xbf16> to vector<12x8xbf16>
    %cst_88 = arith.constant dense<0.000000e+00> : vector<512x8xf32>
    %48 = tpu.matmul %45, %47, %cst_88 {dimension_numbers = #tpu.dot_dimension_numbers<[1], [0], [0], [1], [0, 0, 1, 1], [], []>} : vector<512x12xbf16>, vector<12x8xbf16>, vector<512x8xf32> -> vector<512x8xf32>
    %49 = arith.addf %35, %48 : vector<512x8xf32>
    %c0_89 = arith.constant 0 : index
    %c2_90 = arith.constant 2 : index
    %c0_91 = arith.constant 0 : index
    %c0_92 = arith.constant 0 : index
    %50 = vector.load %arg13[%c0_89, %c2_90, %c0_91, %c0_92] : memref<2x18x18x4xbf16, #tpu.memory_space<vmem>>, vector<2x16x16x4xbf16>
    %51 = vector.shape_cast %50 : vector<2x16x16x4xbf16> to vector<512x4xbf16>
    %c0_93 = arith.constant 0 : index
    %c0_94 = arith.constant 0 : index
    %52 = vector.load %arg15[%c0_93, %c0_94] : memref<512x12xbf16, #tpu.memory_space<vmem>>, vector<512x4xbf16>
    tpu.vector_store %arg15[%c0_93, %c0_94], %51 {strides = array<i32>} : memref<512x12xbf16, #tpu.memory_space<vmem>>, vector<512x4xbf16>,
    %c0_95 = arith.constant 0 : index
    %c2_96 = arith.constant 2 : index
    %c1_97 = arith.constant 1 : index
    %c0_98 = arith.constant 0 : index
    %53 = vector.load %arg13[%c0_95, %c2_96, %c1_97, %c0_98] : memref<2x18x18x4xbf16, #tpu.memory_space<vmem>>, vector<2x16x16x4xbf16>
    %54 = vector.shape_cast %53 : vector<2x16x16x4xbf16> to vector<512x4xbf16>
    %c0_99 = arith.constant 0 : index
    %c4_100 = arith.constant 4 : index
    %55 = vector.load %arg15[%c0_99, %c4_100] : memref<512x12xbf16, #tpu.memory_space<vmem>>, vector<512x4xbf16>
    tpu.vector_store %arg15[%c0_99, %c4_100], %54 {strides = array<i32>} : memref<512x12xbf16, #tpu.memory_space<vmem>>, vector<512x4xbf16>,
    %c0_101 = arith.constant 0 : index
    %c2_102 = arith.constant 2 : index
    %c2_103 = arith.constant 2 : index
    %c0_104 = arith.constant 0 : index
    %56 = vector.load %arg13[%c0_101, %c2_102, %c2_103, %c0_104] : memref<2x18x18x4xbf16, #tpu.memory_space<vmem>>, vector<2x16x16x4xbf16>
    %57 = vector.shape_cast %56 : vector<2x16x16x4xbf16> to vector<512x4xbf16>
    %c0_105 = arith.constant 0 : index
    %c8_106 = arith.constant 8 : index
    %58 = vector.load %arg15[%c0_105, %c8_106] : memref<512x12xbf16, #tpu.memory_space<vmem>>, vector<512x4xbf16>
    tpu.vector_store %arg15[%c0_105, %c8_106], %57 {strides = array<i32>} : memref<512x12xbf16, #tpu.memory_space<vmem>>, vector<512x4xbf16>,
    %c0_107 = arith.constant 0 : index
    %c0_108 = arith.constant 0 : index
    %59 = vector.load %arg15[%c0_107, %c0_108] : memref<512x12xbf16, #tpu.memory_space<vmem>>, vector<512x12xbf16>
    %c2_109 = arith.constant 2 : index
    %c0_110 = arith.constant 0 : index
    %c0_111 = arith.constant 0 : index
    %60 = vector.load %arg4[%c2_109, %c0_110, %c0_111] : memref<3x12x8xbf16, #tpu.memory_space<vmem>>, vector<1x12x8xbf16>
    %61 = vector.shape_cast %60 : vector<1x12x8xbf16> to vector<12x8xbf16>
    %cst_112 = arith.constant dense<0.000000e+00> : vector<512x8xf32>
    %62 = tpu.matmul %59, %61, %cst_112 {dimension_numbers = #tpu.dot_dimension_numbers<[1], [0], [0], [1], [0, 0, 1, 1], [], []>} : vector<512x12xbf16>, vector<12x8xbf16>, vector<512x8xf32> -> vector<512x8xf32>
    %63 = arith.addf %49, %62 : vector<512x8xf32>
    %cst_113 = arith.constant 0.000000e+00 : f32
    %64 = vector.broadcast %cst_113 : f32 to vector<512x8xf32>
    %65 = arith.cmpf ogt, %63, %64 : vector<512x8xf32>
    %c0_114 = arith.constant 0 : index
    %c0_115 = arith.constant 0 : index
    %66 = vector.load %arg5[%c0_114, %c0_115] : memref<1x8xf32, #tpu.memory_space<vmem>>, vector<1x8xf32>
    %67 = vector.broadcast %66 : vector<1x8xf32> to vector<512x8xf32>
    %68 = arith.mulf %63, %67 : vector<512x8xf32>
    %69 = arith.select %65, %63, %68 : vector<512x8xi1>, vector<512x8xf32>
    %70 = vector.shape_cast %69 : vector<512x8xf32> to vector<2x16x16x8xf32>
    %c0_116 = arith.constant 0 : index
    %c1_117 = arith.constant 1 : index
    %c1_118 = arith.constant 1 : index
    %c0_119 = arith.constant 0 : index
    %71 = vector.load %arg14[%c0_116, %c1_117, %c1_118, %c0_119] : memref<2x18x18x8xf32, #tpu.memory_space<vmem>>, vector<2x16x16x8xf32>
    tpu.vector_store %arg14[%c0_116, %c1_117, %c1_118, %c0_119], %70 {strides = array<i32>} : memref<2x18x18x8xf32, #tpu.memory_space<vmem>>, vector<2x16x16x8xf32>,
    %c0_120 = arith.constant 0 : index
    %c0_121 = arith.constant 0 : index
    %c0_122 = arith.constant 0 : index
    %c0_123 = arith.constant 0 : index
    %72 = tpu.strided_load %arg14[%c0_120, %c0_121, %c0_122, %c0_123] {strides = array<i32: 1, 2, 2, 1>} : memref<2x18x18x8xf32, #tpu.memory_space<vmem>>, vector<2x8x8x8xf32>
    %73 = vector.shape_cast %72 : vector<2x8x8x8xf32> to vector<128x8xf32>
    %74 = arith.truncf %73 : vector<128x8xf32> to vector<128x8xbf16>
    %c0_124 = arith.constant 0 : index
    %c0_125 = arith.constant 0 : index
    %75 = vector.load %arg16[%c0_124, %c0_125] : memref<128x24xbf16, #tpu.memory_space<vmem>>, vector<128x8xbf16>
    tpu.vector_store %arg16[%c0_124, %c0_125], %74 {strides = array<i32>} : memref<128x24xbf16, #tpu.memory_space<vmem>>, vector<128x8xbf16>,
    %c0_126 = arith.constant 0 : index
    %c0_127 = arith.constant 0 : index
    %c1_128 = arith.constant 1 : index
    %c0_129 = arith.constant 0 : index
    %76 = tpu.strided_load %arg14[%c0_126, %c0_127, %c1_128, %c0_129] {strides = array<i32: 1, 2, 2, 1>} : memref<2x18x18x8xf32, #tpu.memory_space<vmem>>, vector<2x8x8x8xf32>
    %77 = vector.shape_cast %76 : vector<2x8x8x8xf32> to vector<128x8xf32>
    %78 = arith.truncf %77 : vector<128x8xf32> to vector<128x8xbf16>
    %c0_130 = arith.constant 0 : index
    %c8_131 = arith.constant 8 : index
    %79 = vector.load %arg16[%c0_130, %c8_131] : memref<128x24xbf16, #tpu.memory_space<vmem>>, vector<128x8xbf16>
    tpu.vector_store %arg16[%c0_130, %c8_131], %78 {strides = array<i32>} : memref<128x24xbf16, #tpu.memory_space<vmem>>, vector<128x8xbf16>,
    %c0_132 = arith.constant 0 : index
    %c0_133 = arith.constant 0 : index
    %c2_134 = arith.constant 2 : index
    %c0_135 = arith.constant 0 : index
    %80 = tpu.strided_load %arg14[%c0_132, %c0_133, %c2_134, %c0_135] {strides = array<i32: 1, 2, 2, 1>} : memref<2x18x18x8xf32, #tpu.memory_space<vmem>>, vector<2x8x8x8xf32>
    %81 = vector.shape_cast %80 : vector<2x8x8x8xf32> to vector<128x8xf32>
    %82 = arith.truncf %81 : vector<128x8xf32> to vector<128x8xbf16>
    %c0_136 = arith.constant 0 : index
    %c16 = arith.constant 16 : index
    %83 = vector.load %arg16[%c0_136, %c16] : memref<128x24xbf16, #tpu.memory_space<vmem>>, vector<128x8xbf16>
    tpu.vector_store %arg16[%c0_136, %c16], %82 {strides = array<i32>} : memref<128x24xbf16, #tpu.memory_space<vmem>>, vector<128x8xbf16>,
    %c0_137 = arith.constant 0 : index
    %c0_138 = arith.constant 0 : index
    %84 = vector.load %arg16[%c0_137, %c0_138] : memref<128x24xbf16, #tpu.memory_space<vmem>>, vector<128x24xbf16>
    %c0_139 = arith.constant 0 : index
    %c0_140 = arith.constant 0 : index
    %c0_141 = arith.constant 0 : index
    %85 = vector.load %arg6[%c0_139, %c0_140, %c0_141] : memref<3x24x8xbf16, #tpu.memory_space<vmem>>, vector<1x24x8xbf16>
    %86 = vector.shape_cast %85 : vector<1x24x8xbf16> to vector<24x8xbf16>
    %cst_142 = arith.constant dense<0.000000e+00> : vector<128x8xf32>
    %87 = tpu.matmul %84, %86, %cst_142 {dimension_numbers = #tpu.dot_dimension_numbers<[1], [0], [0], [1], [0, 0, 1, 1], [], []>} : vector<128x24xbf16>, vector<24x8xbf16>, vector<128x8xf32> -> vector<128x8xf32>
    %c0_143 = arith.constant 0 : index
    %c1_144 = arith.constant 1 : index
    %c0_145 = arith.constant 0 : index
    %c0_146 = arith.constant 0 : index
    %88 = tpu.strided_load %arg14[%c0_143, %c1_144, %c0_145, %c0_146] {strides = array<i32: 1, 2, 2, 1>} : memref<2x18x18x8xf32, #tpu.memory_space<vmem>>, vector<2x8x8x8xf32>
    %89 = vector.shape_cast %88 : vector<2x8x8x8xf32> to vector<128x8xf32>
    %90 = arith.truncf %89 : vector<128x8xf32> to vector<128x8xbf16>
    %c0_147 = arith.constant 0 : index
    %c0_148 = arith.constant 0 : index
    %91 = vector.load %arg16[%c0_147, %c0_148] : memref<128x24xbf16, #tpu.memory_space<vmem>>, vector<128x8xbf16>
    tpu.vector_store %arg16[%c0_147, %c0_148], %90 {strides = array<i32>} : memref<128x24xbf16, #tpu.memory_space<vmem>>, vector<128x8xbf16>,
    %c0_149 = arith.constant 0 : index
    %c1_150 = arith.constant 1 : index
    %c1_151 = arith.constant 1 : index
    %c0_152 = arith.constant 0 : index
    %92 = tpu.strided_load %arg14[%c0_149, %c1_150, %c1_151, %c0_152] {strides = array<i32: 1, 2, 2, 1>} : memref<2x18x18x8xf32, #tpu.memory_space<vmem>>, vector<2x8x8x8xf32>
    %93 = vector.shape_cast %92 : vector<2x8x8x8xf32> to vector<128x8xf32>
    %94 = arith.truncf %93 : vector<128x8xf32> to vector<128x8xbf16>
    %c0_153 = arith.constant 0 : index
    %c8_154 = arith.constant 8 : index
    %95 = vector.load %arg16[%c0_153, %c8_154] : memref<128x24xbf16, #tpu.memory_space<vmem>>, vector<128x8xbf16>
    tpu.vector_store %arg16[%c0_153, %c8_154], %94 {strides = array<i32>} : memref<128x24xbf16, #tpu.memory_space<vmem>>, vector<128x8xbf16>,
    %c0_155 = arith.constant 0 : index
    %c1_156 = arith.constant 1 : index
    %c2_157 = arith.constant 2 : index
    %c0_158 = arith.constant 0 : index
    %96 = tpu.strided_load %arg14[%c0_155, %c1_156, %c2_157, %c0_158] {strides = array<i32: 1, 2, 2, 1>} : memref<2x18x18x8xf32, #tpu.memory_space<vmem>>, vector<2x8x8x8xf32>
    %97 = vector.shape_cast %96 : vector<2x8x8x8xf32> to vector<128x8xf32>
    %98 = arith.truncf %97 : vector<128x8xf32> to vector<128x8xbf16>
    %c0_159 = arith.constant 0 : index
    %c16_160 = arith.constant 16 : index
    %99 = vector.load %arg16[%c0_159, %c16_160] : memref<128x24xbf16, #tpu.memory_space<vmem>>, vector<128x8xbf16>
    tpu.vector_store %arg16[%c0_159, %c16_160], %98 {strides = array<i32>} : memref<128x24xbf16, #tpu.memory_space<vmem>>, vector<128x8xbf16>,
    %c0_161 = arith.constant 0 : index
    %c0_162 = arith.constant 0 : index
    %100 = vector.load %arg16[%c0_161, %c0_162] : memref<128x24xbf16, #tpu.memory_space<vmem>>, vector<128x24xbf16>
    %c1_163 = arith.constant 1 : index
    %c0_164 = arith.constant 0 : index
    %c0_165 = arith.constant 0 : index
    %101 = vector.load %arg6[%c1_163, %c0_164, %c0_165] : memref<3x24x8xbf16, #tpu.memory_space<vmem>>, vector<1x24x8xbf16>
    %102 = vector.shape_cast %101 : vector<1x24x8xbf16> to vector<24x8xbf16>
    %cst_166 = arith.constant dense<0.000000e+00> : vector<128x8xf32>
    %103 = tpu.matmul %100, %102, %cst_166 {dimension_numbers = #tpu.dot_dimension_numbers<[1], [0], [0], [1], [0, 0, 1, 1], [], []>} : vector<128x24xbf16>, vector<24x8xbf16>, vector<128x8xf32> -> vector<128x8xf32>
    %104 = arith.addf %87, %103 : vector<128x8xf32>
    %c0_167 = arith.constant 0 : index
    %c2_168 = arith.constant 2 : index
    %c0_169 = arith.constant 0 : index
    %c0_170 = arith.constant 0 : index
    %105 = tpu.strided_load %arg14[%c0_167, %c2_168, %c0_169, %c0_170] {strides = array<i32: 1, 2, 2, 1>} : memref<2x18x18x8xf32, #tpu.memory_space<vmem>>, vector<2x8x8x8xf32>
    %106 = vector.shape_cast %105 : vector<2x8x8x8xf32> to vector<128x8xf32>
    %107 = arith.truncf %106 : vector<128x8xf32> to vector<128x8xbf16>
    %c0_171 = arith.constant 0 : index
    %c0_172 = arith.constant 0 : index
    %108 = vector.load %arg16[%c0_171, %c0_172] : memref<128x24xbf16, #tpu.memory_space<vmem>>, vector<128x8xbf16>
    tpu.vector_store %arg16[%c0_171, %c0_172], %107 {strides = array<i32>} : memref<128x24xbf16, #tpu.memory_space<vmem>>, vector<128x8xbf16>,
    %c0_173 = arith.constant 0 : index
    %c2_174 = arith.constant 2 : index
    %c1_175 = arith.constant 1 : index
    %c0_176 = arith.constant 0 : index
    %109 = tpu.strided_load %arg14[%c0_173, %c2_174, %c1_175, %c0_176] {strides = array<i32: 1, 2, 2, 1>} : memref<2x18x18x8xf32, #tpu.memory_space<vmem>>, vector<2x8x8x8xf32>
    %110 = vector.shape_cast %109 : vector<2x8x8x8xf32> to vector<128x8xf32>
    %111 = arith.truncf %110 : vector<128x8xf32> to vector<128x8xbf16>
    %c0_177 = arith.constant 0 : index
    %c8_178 = arith.constant 8 : index
    %112 = vector.load %arg16[%c0_177, %c8_178] : memref<128x24xbf16, #tpu.memory_space<vmem>>, vector<128x8xbf16>
    tpu.vector_store %arg16[%c0_177, %c8_178], %111 {strides = array<i32>} : memref<128x24xbf16, #tpu.memory_space<vmem>>, vector<128x8xbf16>,
    %c0_179 = arith.constant 0 : index
    %c2_180 = arith.constant 2 : index
    %c2_181 = arith.constant 2 : index
    %c0_182 = arith.constant 0 : index
    %113 = tpu.strided_load %arg14[%c0_179, %c2_180, %c2_181, %c0_182] {strides = array<i32: 1, 2, 2, 1>} : memref<2x18x18x8xf32, #tpu.memory_space<vmem>>, vector<2x8x8x8xf32>
    %114 = vector.shape_cast %113 : vector<2x8x8x8xf32> to vector<128x8xf32>
    %115 = arith.truncf %114 : vector<128x8xf32> to vector<128x8xbf16>
    %c0_183 = arith.constant 0 : index
    %c16_184 = arith.constant 16 : index
    %116 = vector.load %arg16[%c0_183, %c16_184] : memref<128x24xbf16, #tpu.memory_space<vmem>>, vector<128x8xbf16>
    tpu.vector_store %arg16[%c0_183, %c16_184], %115 {strides = array<i32>} : memref<128x24xbf16, #tpu.memory_space<vmem>>, vector<128x8xbf16>,
    %c0_185 = arith.constant 0 : index
    %c0_186 = arith.constant 0 : index
    %117 = vector.load %arg16[%c0_185, %c0_186] : memref<128x24xbf16, #tpu.memory_space<vmem>>, vector<128x24xbf16>
    %c2_187 = arith.constant 2 : index
    %c0_188 = arith.constant 0 : index
    %c0_189 = arith.constant 0 : index
    %118 = vector.load %arg6[%c2_187, %c0_188, %c0_189] : memref<3x24x8xbf16, #tpu.memory_space<vmem>>, vector<1x24x8xbf16>
    %119 = vector.shape_cast %118 : vector<1x24x8xbf16> to vector<24x8xbf16>
    %cst_190 = arith.constant dense<0.000000e+00> : vector<128x8xf32>
    %120 = tpu.matmul %117, %119, %cst_190 {dimension_numbers = #tpu.dot_dimension_numbers<[1], [0], [0], [1], [0, 0, 1, 1], [], []>} : vector<128x24xbf16>, vector<24x8xbf16>, vector<128x8xf32> -> vector<128x8xf32>
    %121 = arith.addf %104, %120 : vector<128x8xf32>
    %c0_191 = arith.constant 0 : index
    %c0_192 = arith.constant 0 : index
    %122 = vector.load %arg7[%c0_191, %c0_192] : memref<1x8xf32, #tpu.memory_space<vmem>>, vector<1x8xf32>
    %123 = vector.broadcast %122 : vector<1x8xf32> to vector<128x8xf32>
    %124 = arith.mulf %121, %123 : vector<128x8xf32>
    %c0_193 = arith.constant 0 : index
    %c0_194 = arith.constant 0 : index
    %125 = vector.load %arg8[%c0_193, %c0_194] : memref<1x8xf32, #tpu.memory_space<vmem>>, vector<1x8xf32>
    %126 = vector.broadcast %125 : vector<1x8xf32> to vector<128x8xf32>
    %127 = arith.addf %124, %126 : vector<128x8xf32>
    %c0_195 = arith.constant 0 : index
    %c0_196 = arith.constant 0 : index
    %c0_197 = arith.constant 0 : index
    %c0_198 = arith.constant 0 : index
    %128 = tpu.strided_load %arg1[%c0_195, %c0_196, %c0_197, %c0_198] {strides = array<i32: 1, 2, 2, 1>} : memref<2x16x16x4xf32, #tpu.memory_space<vmem>>, vector<2x8x8x4xf32>
    %129 = vector.shape_cast %128 : vector<2x8x8x4xf32> to vector<128x4xf32>
    %130 = arith.truncf %129 : vector<128x4xf32> to vector<128x4xbf16>
    %c0_199 = arith.constant 0 : index
    %c0_200 = arith.constant 0 : index
    %131 = vector.load %arg9[%c0_199, %c0_200] : memref<4x8xbf16, #tpu.memory_space<vmem>>, vector<4x8xbf16>
    %cst_201 = arith.constant dense<0.000000e+00> : vector<128x8xf32>
    %132 = tpu.matmul %130, %131, %cst_201 {dimension_numbers = #tpu.dot_dimension_numbers<[1], [0], [0], [1], [0, 0, 1, 1], [], []>} : vector<128x4xbf16>, vector<4x8xbf16>, vector<128x8xf32> -> vector<128x8xf32>
    %c0_202 = arith.constant 0 : index
    %c0_203 = arith.constant 0 : index
    %133 = vector.load %arg10[%c0_202, %c0_203] : memref<1x8xf32, #tpu.memory_space<vmem>>, vector<1x8xf32>
    %134 = vector.broadcast %133 : vector<1x8xf32> to vector<128x8xf32>
    %135 = arith.mulf %132, %134 : vector<128x8xf32>
    %c0_204 = arith.constant 0 : index
    %c0_205 = arith.constant 0 : index
    %136 = vector.load %arg11[%c0_204, %c0_205] : memref<1x8xf32, #tpu.memory_space<vmem>>, vector<1x8xf32>
    %137 = vector.broadcast %136 : vector<1x8xf32> to vector<128x8xf32>
    %138 = arith.addf %135, %137 : vector<128x8xf32>
    %139 = arith.addf %127, %138 : vector<128x8xf32>
    %140 = vector.shape_cast %139 : vector<128x8xf32> to vector<2x64x8xf32>
    %c0_206 = arith.constant 0 : index
    %c0_207 = arith.constant 0 : index
    %c0_208 = arith.constant 0 : index
    %141 = vector.load %arg12[%c0_206, %c0_207, %c0_208] : memref<2x64x8xf32, #tpu.memory_space<vmem>>, vector<2x64x8xf32>
    tpu.vector_store %arg12[%c0_206, %c0_207, %c0_208], %140 {strides = array<i32>} : memref<2x64x8xf32, #tpu.memory_space<vmem>>, vector<2x64x8xf32>,
    return
  }
  func.func @transform_0(%arg0: i32) -> (i32, i32, i32, i32) {
    %c0_i32 = arith.constant 0 : i32
    %c0_i32_0 = arith.constant 0 : i32
    %c0_i32_1 = arith.constant 0 : i32
    %c0_i32_2 = arith.constant 0 : i32
    return %arg0, %c0_i32, %c0_i32_0, %c0_i32_1 : i32, i32, i32, i32
  }
  func.func @transform_1(%arg0: i32) -> (i32, i32) {
    %c0_i32 = arith.constant 0 : i32
    %c0_i32_0 = arith.constant 0 : i32
    %c0_i32_1 = arith.constant 0 : i32
    return %c0_i32, %c0_i32_0 : i32, i32
  }
  func.func @transform_2(%arg0: i32) -> (i32, i32) {
    %c0_i32 = arith.constant 0 : i32
    %c0_i32_0 = arith.constant 0 : i32
    %c0_i32_1 = arith.constant 0 : i32
    return %c0_i32, %c0_i32_0 : i32, i32
  }
  func.func @transform_3(%arg0: i32) -> (i32, i32, i32) {
    %c0_i32 = arith.constant 0 : i32
    %c0_i32_0 = arith.constant 0 : i32
    %c0_i32_1 = arith.constant 0 : i32
    %c0_i32_2 = arith.constant 0 : i32
    return %c0_i32, %c0_i32_0, %c0_i32_1 : i32, i32, i32
  }
  func.func @transform_4(%arg0: i32) -> (i32, i32) {
    %c0_i32 = arith.constant 0 : i32
    %c0_i32_0 = arith.constant 0 : i32
    %c0_i32_1 = arith.constant 0 : i32
    return %c0_i32, %c0_i32_0 : i32, i32
  }
  func.func @transform_5(%arg0: i32) -> (i32, i32, i32) {
    %c0_i32 = arith.constant 0 : i32
    %c0_i32_0 = arith.constant 0 : i32
    %c0_i32_1 = arith.constant 0 : i32
    %c0_i32_2 = arith.constant 0 : i32
    return %c0_i32, %c0_i32_0, %c0_i32_1 : i32, i32, i32
  }
  func.func @transform_6(%arg0: i32) -> (i32, i32) {
    %c0_i32 = arith.constant 0 : i32
    %c0_i32_0 = arith.constant 0 : i32
    %c0_i32_1 = arith.constant 0 : i32
    return %c0_i32, %c0_i32_0 : i32, i32
  }
  func.func @transform_7(%arg0: i32) -> (i32, i32) {
    %c0_i32 = arith.constant 0 : i32
    %c0_i32_0 = arith.constant 0 : i32
    %c0_i32_1 = arith.constant 0 : i32
    return %c0_i32, %c0_i32_0 : i32, i32
  }
  func.func @transform_8(%arg0: i32) -> (i32, i32) {
    %c0_i32 = arith.constant 0 : i32
    %c0_i32_0 = arith.constant 0 : i32
    %c0_i32_1 = arith.constant 0 : i32
    return %c0_i32, %c0_i32_0 : i32, i32
  }
  func.func @transform_9(%arg0: i32) -> (i32, i32) {
    %c0_i32 = arith.constant 0 : i32
    %c0_i32_0 = arith.constant 0 : i32
    %c0_i32_1 = arith.constant 0 : i32
    return %c0_i32, %c0_i32_0 : i32, i32
  }
  func.func @transform_10(%arg0: i32) -> (i32, i32) {
    %c0_i32 = arith.constant 0 : i32
    %c0_i32_0 = arith.constant 0 : i32
    %c0_i32_1 = arith.constant 0 : i32
    return %c0_i32, %c0_i32_0 : i32, i32
  }
  func.func @transform_11(%arg0: i32) -> (i32, i32, i32) {
    %c0_i32 = arith.constant 0 : i32
    %c0_i32_0 = arith.constant 0 : i32
    %c0_i32_1 = arith.constant 0 : i32
    return %arg0, %c0_i32, %c0_i32_0 : i32, i32, i32
  }
}

</mosaic_0001>

<llo_original>
// kernel: tpu_custom_call.1
$region0: #{tpu_custom_call.1}
  #allocation0 [shape = 'u32[]', space=smem, size = 0x4, offset = 0x4, fixed_abs, tag = 'smem constant byte address 0x4 - core index']
  #allocation1 [shape = 'u32[144,128]{1,0:T(1,128)}', space=vmem, size = 0x12000, scoped, tag = 'internal scratch']
  #allocation2 [shape = 'bf16[2,18,18,4]{3,2,1,0:T(8,128)(2,1)}', space=vmem, size = 0x36000, scoped, tag = 'scratch operand']
  #allocation3 [shape = 'f32[2,18,18,8]{3,2,1,0:T(8,128)}', space=vmem, size = 0x6c000, scoped, tag = 'scratch operand']
  #allocation4 [shape = 'bf16[512,12]{1,0:T(8,128)(2,1)}', space=vmem, size = 0x20000, scoped, tag = 'scratch operand']
  #allocation5 [shape = 'bf16[128,24]{1,0:T(8,128)(2,1)}', space=vmem, size = 0x8000, scoped, tag = 'scratch operand']
  %s0 = inlined_call_operand.vmem [shape: f32[2,16,16,4], index: 0, kind: input, shape index: {}]
  %s1 = inlined_call_operand.vmem [shape: f32[1,4], index: 1, kind: input, shape index: {}]
  %s2 = inlined_call_operand.vmem [shape: f32[1,4], index: 2, kind: input, shape index: {}]
  %s3 = inlined_call_operand.vmem [shape: bf16[3,12,8], index: 3, kind: input, shape index: {}]
  %s4 = inlined_call_operand.vmem [shape: f32[1,8], index: 4, kind: input, shape index: {}]
  %s5 = inlined_call_operand.vmem [shape: bf16[3,24,8], index: 5, kind: input, shape index: {}]
  %s6 = inlined_call_operand.vmem [shape: f32[1,8], index: 6, kind: input, shape index: {}]
  %s7 = inlined_call_operand.vmem [shape: f32[1,8], index: 7, kind: input, shape index: {}]
  %s8 = inlined_call_operand.vmem [shape: bf16[4,8], index: 8, kind: input, shape index: {}]
  %s9 = inlined_call_operand.vmem [shape: f32[1,8], index: 9, kind: input, shape index: {}]
  %s10 = inlined_call_operand.vmem [shape: f32[1,8], index: 10, kind: input, shape index: {}]
  %s11 = inlined_call_operand.vmem [shape: f32[2,64,8], index: 11, kind: output, shape index: {}]
  %s12 = sld [smem:[#allocation0]]
  $region54: #{tpu_custom_call.1} parent=0
    _
  %s14 = ssub.s32 1, %s12
  %s15 = scalar_select 0, %s14, %s12
  // Predicated region
  $region2: #{tpu_custom_call.1} parent=0 // pred_check
    _
  $region3: #{tpu_custom_call.1} parent=0 // pred_check_branch
    %17 = sbr.rel (0) target = $region5
  $region4: #{tpu_custom_call.1} parent=0 // pred_region
    _
  $region5: #{tpu_custom_call.1} parent=0 // pred_fallthru
    _
  // Predicated region
  $region6: #{tpu_custom_call.1} parent=0 // pred_check
    _
  $region7: #{tpu_custom_call.1} parent=0 // pred_check_branch
    %19 = sbr.rel (0) target = $region9
  $region8: #{tpu_custom_call.1} parent=0 // pred_region
    _
  $region9: #{tpu_custom_call.1} parent=0 // pred_fallthru
    _
  // Predicated region
  $region10: #{tpu_custom_call.1} parent=0 // pred_check
    _
  $region11: #{tpu_custom_call.1} parent=0 // pred_check_branch
    %21 = sbr.rel (0) target = $region13
  $region12: #{tpu_custom_call.1} parent=0 // pred_region
    _
  $region13: #{tpu_custom_call.1} parent=0 // pred_fallthru
    _
  // Predicated region
  $region14: #{tpu_custom_call.1} parent=0 // pred_check
    _
  $region15: #{tpu_custom_call.1} parent=0 // pred_check_branch
    %23 = sbr.rel (0) target = $region17
  $region16: #{tpu_custom_call.1} parent=0 // pred_region
    _
  $region17: #{tpu_custom_call.1} parent=0 // pred_fallthru
    _
  // Predicated region
  $region18: #{tpu_custom_call.1} parent=0 // pred_check
    _
  $region19: #{tpu_custom_call.1} parent=0 // pred_check_branch
    %25 = sbr.rel (0) target = $region21
  $region20: #{tpu_custom_call.1} parent=0 // pred_region
    _
  $region21: #{tpu_custom_call.1} parent=0 // pred_fallthru
    _
  // Predicated region
  $region22: #{tpu_custom_call.1} parent=0 // pred_check
    _
  $region23: #{tpu_custom_call.1} parent=0 // pred_check_branch
    %27 = sbr.rel (0) target = $region25
  $region24: #{tpu_custom_call.1} parent=0 // pred_region
    _
  $region25: #{tpu_custom_call.1} parent=0 // pred_fallthru
    _
  // Predicated region
  $region26: #{tpu_custom_call.1} parent=0 // pred_check
    _
  $region27: #{tpu_custom_call.1} parent=0 // pred_check_branch
    %29 = sbr.rel (0) target = $region29
  $region28: #{tpu_custom_call.1} parent=0 // pred_region
    _
  $region29: #{tpu_custom_call.1} parent=0 // pred_fallthru
    _
  // Predicated region
  $region30: #{tpu_custom_call.1} parent=0 // pred_check
    _
  $region31: #{tpu_custom_call.1} parent=0 // pred_check_branch
    %31 = sbr.rel (0) target = $region33
  $region32: #{tpu_custom_call.1} parent=0 // pred_region
    _
  $region33: #{tpu_custom_call.1} parent=0 // pred_fallthru
    _
  // Predicated region
  $region34: #{tpu_custom_call.1} parent=0 // pred_check
    _
  $region35: #{tpu_custom_call.1} parent=0 // pred_check_branch
    %33 = sbr.rel (0) target = $region37
  $region36: #{tpu_custom_call.1} parent=0 // pred_region
    _
  $region37: #{tpu_custom_call.1} parent=0 // pred_fallthru
    _
  // Predicated region
  $region38: #{tpu_custom_call.1} parent=0 // pred_check
    _
  $region39: #{tpu_custom_call.1} parent=0 // pred_check_branch
    %35 = sbr.rel (0) target = $region41
  $region40: #{tpu_custom_call.1} parent=0 // pred_region
    _
  $region41: #{tpu_custom_call.1} parent=0 // pred_fallthru
    _
  // Predicated region
  $region42: #{tpu_custom_call.1} parent=0 // pred_check
    _
  $region43: #{tpu_custom_call.1} parent=0 // pred_check_branch
    %37 = sbr.rel (0) target = $region45
  $region44: #{tpu_custom_call.1} parent=0 // pred_region
    _
  $region45: #{tpu_custom_call.1} parent=0 // pred_fallthru
    _
  %vm39 = vcmask 27648
  %40 = vst.msk [vmem:[#allocation2] sm:$0xf] %vm39, 0
  %41 = vst.msk [vmem:[#allocation2 + $0x4] sm:$0xf] %vm39, 0
  %vm42 = vcmask 24576
  %43 = vst.msk [vmem:[#allocation2 + $0x8] sm:$0x1] %vm42, 0
  %44 = vst.msk [vmem:[#allocation2 + $0xd8] sm:$0xf] %vm39, 0
  %45 = vst.msk [vmem:[#allocation2 + $0xdc] sm:$0xf] %vm39, 0
  %46 = vst.msk [vmem:[#allocation2 + $0xe0] sm:$0x1] %vm42, 0
  %s47 = scalar_lea.vmem [#allocation2], 204
  %48 = vst.msk [vmem:[%s47] sm:$0xf] %vm39, 0
  %49 = vst.msk [vmem:[%s47 + $0x4] sm:$0xf] %vm39, 0
  %50 = vst.msk [vmem:[%s47 + $0x8] sm:$0x1] %vm42, 0
  %51 = vst.msk [vmem:[%s47 + $0xd8] sm:$0xf] %vm39, 0
  %52 = vst.msk [vmem:[%s47 + $0xdc] sm:$0xf] %vm39, 0
  %53 = vst.msk [vmem:[%s47 + $0xe0] sm:$0x1] %vm42, 0
  %vm54 = vcmask 24576
  %vm55 = vsmask.f32 256
  %vm56 = vmand %vm54, %vm55
  %v57 = vld [vmem:[#allocation2] sm:$0x1]
  %v58 = vsel %vm56, 0, %v57
  %59 = vst [vmem:[#allocation2] sm:$0x1] %v58
  %v60 = vld [vmem:[#allocation2 + $0xc] sm:$0x1]
  %v61 = vsel %vm56, 0, %v60
  %62 = vst [vmem:[#allocation2 + $0xc] sm:$0x1] %v61
  %v63 = vld [vmem:[#allocation2 + $0x18] sm:$0x1]
  %v64 = vsel %vm56, 0, %v63
  %65 = vst [vmem:[#allocation2 + $0x18] sm:$0x1] %v64
  %v66 = vld [vmem:[#allocation2 + $0x24] sm:$0x1]
  %v67 = vsel %vm56, 0, %v66
  %68 = vst [vmem:[#allocation2 + $0x24] sm:$0x1] %v67
  %v69 = vld [vmem:[#allocation2 + $0x30] sm:$0x1]
  %v70 = vsel %vm56, 0, %v69
  %71 = vst [vmem:[#allocation2 + $0x30] sm:$0x1] %v70
  %v72 = vld [vmem:[#allocation2 + $0x3c] sm:$0x1]
  %v73 = vsel %vm56, 0, %v72
  %74 = vst [vmem:[#allocation2 + $0x3c] sm:$0x1] %v73
  %v75 = vld [vmem:[#allocation2 + $0x48] sm:$0x1]
  %v76 = vsel %vm56, 0, %v75
  %77 = vst [vmem:[#allocation2 + $0x48] sm:$0x1] %v76
  %v78 = vld [vmem:[#allocation2 + $0x54] sm:$0x1]
  %v79 = vsel %vm56, 0, %v78
  %80 = vst [vmem:[#allocation2 + $0x54] sm:$0x1] %v79
  %v81 = vld [vmem:[#allocation2 + $0x60] sm:$0x1]
  %v82 = vsel %vm56, 0, %v81
  %83 = vst [vmem:[#allocation2 + $0x60] sm:$0x1] %v82
  %v84 = vld [vmem:[#allocation2 + $0x6c] sm:$0x1]
  %v85 = vsel %vm56, 0, %v84
  %86 = vst [vmem:[#allocation2 + $0x6c] sm:$0x1] %v85
  %v87 = vld [vmem:[#allocation2 + $0x78] sm:$0x1]
  %v88 = vsel %vm56, 0, %v87
  %89 = vst [vmem:[#allocation2 + $0x78] sm:$0x1] %v88
  %v90 = vld [vmem:[#allocation2 + $0x84] sm:$0x1]
  %v91 = vsel %vm56, 0, %v90
  %92 = vst [vmem:[#allocation2 + $0x84] sm:$0x1] %v91
  %v93 = vld [vmem:[#allocation2 + $0x90] sm:$0x1]
  %v94 = vsel %vm56, 0, %v93
  %95 = vst [vmem:[#allocation2 + $0x90] sm:$0x1] %v94
  %v96 = vld [vmem:[#allocation2 + $0x9c] sm:$0x1]
  %v97 = vsel %vm56, 0, %v96
  %98 = vst [vmem:[#allocation2 + $0x9c] sm:$0x1] %v97
  %v99 = vld [vmem:[#allocation2 + $0xa8] sm:$0x1]
  %v100 = vsel %vm56, 0, %v99
  %101 = vst [vmem:[#allocation2 + $0xa8] sm:$0x1] %v100
  %v102 = vld [vmem:[#allocation2 + $0xb4] sm:$0x1]
  %v103 = vsel %vm56, 0, %v102
  %104 = vst [vmem:[#allocation2 + $0xb4] sm:$0x1] %v103
  %v105 = vld [vmem:[#allocation2 + $0xc0] sm:$0x1]
  %v106 = vsel %vm56, 0, %v105
  %107 = vst [vmem:[#allocation2 + $0xc0] sm:$0x1] %v106
  %v108 = vld [vmem:[#allocation2 + $0xcc] sm:$0x1]
  %v109 = vsel %vm56, 0, %v108
  %110 = vst [vmem:[#allocation2 + $0xcc] sm:$0x1] %v109
  %v111 = vld [vmem:[#allocation2 + $0xd8] sm:$0x1]
  %v112 = vsel %vm56, 0, %v111
  %113 = vst [vmem:[#allocation2 + $0xd8] sm:$0x1] %v112
  %v114 = vld [vmem:[#allocation2 + $0xe4] sm:$0x1]
  %v115 = vsel %vm56, 0, %v114
  %116 = vst [vmem:[#allocation2 + $0xe4] sm:$0x1] %v115
  %v117 = vld [vmem:[#allocation2 + $0xf0] sm:$0x1]
  %v118 = vsel %vm56, 0, %v117
  %119 = vst [vmem:[#allocation2 + $0xf0] sm:$0x1] %v118
  %v120 = vld [vmem:[#allocation2 + $0xfc] sm:$0x1]
  %v121 = vsel %vm56, 0, %v120
  %122 = vst [vmem:[#allocation2 + $0xfc] sm:$0x1] %v121
  %v123 = vld [vmem:[#allocation2 + $0x108] sm:$0x1]
  %v124 = vsel %vm56, 0, %v123
  %125 = vst [vmem:[#allocation2 + $0x108] sm:$0x1] %v124
  %v126 = vld [vmem:[#allocation2 + $0x114] sm:$0x1]
  %v127 = vsel %vm56, 0, %v126
  %128 = vst [vmem:[#allocation2 + $0x114] sm:$0x1] %v127
  %v129 = vld [vmem:[#allocation2 + $0x120] sm:$0x1]
  %v130 = vsel %vm56, 0, %v129
  %131 = vst [vmem:[#allocation2 + $0x120] sm:$0x1] %v130
  %v132 = vld [vmem:[#allocation2 + $0x12c] sm:$0x1]
  %v133 = vsel %vm56, 0, %v132
  %134 = vst [vmem:[#allocation2 + $0x12c] sm:$0x1] %v133
  %v135 = vld [vmem:[#allocation2 + $0x138] sm:$0x1]
  %v136 = vsel %vm56, 0, %v135
  %137 = vst [vmem:[#allocation2 + $0x138] sm:$0x1] %v136
  %v138 = vld [vmem:[#allocation2 + $0x144] sm:$0x1]
  %v139 = vsel %vm56, 0, %v138
  %140 = vst [vmem:[#allocation2 + $0x144] sm:$0x1] %v139
  %v141 = vld [vmem:[#allocation2 + $0x150] sm:$0x1]
  %v142 = vsel %vm56, 0, %v141
  %143 = vst [vmem:[#allocation2 + $0x150] sm:$0x1] %v142
  %v144 = vld [vmem:[#allocation2 + $0x15c] sm:$0x1]
  %v145 = vsel %vm56, 0, %v144
  %146 = vst [vmem:[#allocation2 + $0x15c] sm:$0x1] %v145
  %v147 = vld [vmem:[#allocation2 + $0x168] sm:$0x1]
  %v148 = vsel %vm56, 0, %v147
  %149 = vst [vmem:[#allocation2 + $0x168] sm:$0x1] %v148
  %v150 = vld [vmem:[#allocation2 + $0x174] sm:$0x1]
  %v151 = vsel %vm56, 0, %v150
  %152 = vst [vmem:[#allocation2 + $0x174] sm:$0x1] %v151
  %v153 = vld [vmem:[#allocation2 + $0x180] sm:$0x1]
  %v154 = vsel %vm56, 0, %v153
  %155 = vst [vmem:[#allocation2 + $0x180] sm:$0x1] %v154
  %v156 = vld [vmem:[#allocation2 + $0x18c] sm:$0x1]
  %v157 = vsel %vm56, 0, %v156
  %158 = vst [vmem:[#allocation2 + $0x18c] sm:$0x1] %v157
  %v159 = vld [vmem:[#allocation2 + $0x198] sm:$0x1]
  %v160 = vsel %vm56, 0, %v159
  %161 = vst [vmem:[#allocation2 + $0x198] sm:$0x1] %v160
  %v162 = vld [vmem:[#allocation2 + $0x1a4] sm:$0x1]
  %v163 = vsel %vm56, 0, %v162
  %164 = vst [vmem:[#allocation2 + $0x1a4] sm:$0x1] %v163
  %vm165 = vsmask.f32 7938
  %vm166 = vmand %vm54, %vm165
  %v167 = vld [vmem:[#allocation2 + $0x8] sm:$0x1]
  %v168 = vsel %vm166, 0, %v167
  %169 = vst [vmem:[#allocation2 + $0x8] sm:$0x1] %v168
  %v170 = vld [vmem:[#allocation2 + $0x14] sm:$0x1]
  %v171 = vsel %vm166, 0, %v170
  %172 = vst [vmem:[#allocation2 + $0x14] sm:$0x1] %v171
  %v173 = vld [vmem:[#allocation2 + $0x20] sm:$0x1]
  %v174 = vsel %vm166, 0, %v173
  %175 = vst [vmem:[#allocation2 + $0x20] sm:$0x1] %v174
  %v176 = vld [vmem:[#allocation2 + $0x2c] sm:$0x1]
  %v177 = vsel %vm166, 0, %v176
  %178 = vst [vmem:[#allocation2 + $0x2c] sm:$0x1] %v177
  %v179 = vld [vmem:[#allocation2 + $0x38] sm:$0x1]
  %v180 = vsel %vm166, 0, %v179
  %181 = vst [vmem:[#allocation2 + $0x38] sm:$0x1] %v180
  %v182 = vld [vmem:[#allocation2 + $0x44] sm:$0x1]
  %v183 = vsel %vm166, 0, %v182
  %184 = vst [vmem:[#allocation2 + $0x44] sm:$0x1] %v183
  %v185 = vld [vmem:[#allocation2 + $0x50] sm:$0x1]
  %v186 = vsel %vm166, 0, %v185
  %187 = vst [vmem:[#allocation2 + $0x50] sm:$0x1] %v186
  %v188 = vld [vmem:[#allocation2 + $0x5c] sm:$0x1]
  %v189 = vsel %vm166, 0, %v188
  %190 = vst [vmem:[#allocation2 + $0x5c] sm:$0x1] %v189
  %v191 = vld [vmem:[#allocation2 + $0x68] sm:$0x1]
  %v192 = vsel %vm166, 0, %v191
  %193 = vst [vmem:[#allocation2 + $0x68] sm:$0x1] %v192
  %v194 = vld [vmem:[#allocation2 + $0x74] sm:$0x1]
  %v195 = vsel %vm166, 0, %v194
  %196 = vst [vmem:[#allocation2 + $0x74] sm:$0x1] %v195
  %v197 = vld [vmem:[#allocation2 + $0x80] sm:$0x1]
  %v198 = vsel %vm166, 0, %v197
  %199 = vst [vmem:[#allocation2 + $0x80] sm:$0x1] %v198
  %v200 = vld [vmem:[#allocation2 + $0x8c] sm:$0x1]
  %v201 = vsel %vm166, 0, %v200
  %202 = vst [vmem:[#allocation2 + $0x8c] sm:$0x1] %v201
  %v203 = vld [vmem:[#allocation2 + $0x98] sm:$0x1]
  %v204 = vsel %vm166, 0, %v203
  %205 = vst [vmem:[#allocation2 + $0x98] sm:$0x1] %v204
  %v206 = vld [vmem:[#allocation2 + $0xa4] sm:$0x1]
  %v207 = vsel %vm166, 0, %v206
  %208 = vst [vmem:[#allocation2 + $0xa4] sm:$0x1] %v207
  %v209 = vld [vmem:[#allocation2 + $0xb0] sm:$0x1]
  %v210 = vsel %vm166, 0, %v209
  %211 = vst [vmem:[#allocation2 + $0xb0] sm:$0x1] %v210
  %v212 = vld [vmem:[#allocation2 + $0xbc] sm:$0x1]
  %v213 = vsel %vm166, 0, %v212
  %214 = vst [vmem:[#allocation2 + $0xbc] sm:$0x1] %v213
  %v215 = vld [vmem:[#allocation2 + $0xc8] sm:$0x1]
  %v216 = vsel %vm166, 0, %v215
  %217 = vst [vmem:[#allocation2 + $0xc8] sm:$0x1] %v216
  %v218 = vld [vmem:[#allocation2 + $0xd4] sm:$0x1]
  %v219 = vsel %vm166, 0, %v218
  %220 = vst [vmem:[#allocation2 + $0xd4] sm:$0x1] %v219
  %v221 = vld [vmem:[#allocation2 + $0xe0] sm:$0x1]
  %v222 = vsel %vm166, 0, %v221
  %223 = vst [vmem:[#allocation2 + $0xe0] sm:$0x1] %v222
  %v224 = vld [vmem:[#allocation2 + $0xec] sm:$0x1]
  %v225 = vsel %vm166, 0, %v224
  %226 = vst [vmem:[#allocation2 + $0xec] sm:$0x1] %v225
  %v227 = vld [vmem:[#allocation2 + $0xf8] sm:$0x1]
  %v228 = vsel %vm166, 0, %v227
  %229 = vst [vmem:[#allocation2 + $0xf8] sm:$0x1] %v228
  %v230 = vld [vmem:[#allocation2 + $0x104] sm:$0x1]
  %v231 = vsel %vm166, 0, %v230
  %232 = vst [vmem:[#allocation2 + $0x104] sm:$0x1] %v231
  %v233 = vld [vmem:[#allocation2 + $0x110] sm:$0x1]
  %v234 = vsel %vm166, 0, %v233
  %235 = vst [vmem:[#allocation2 + $0x110] sm:$0x1] %v234
  %v236 = vld [vmem:[#allocation2 + $0x11c] sm:$0x1]
  %v237 = vsel %vm166, 0, %v236
  %238 = vst [vmem:[#allocation2 + $0x11c] sm:$0x1] %v237
  %v239 = vld [vmem:[#allocation2 + $0x128] sm:$0x1]
  %v240 = vsel %vm166, 0, %v239
  %241 = vst [vmem:[#allocation2 + $0x128] sm:$0x1] %v240
  %v242 = vld [vmem:[#allocation2 + $0x134] sm:$0x1]
  %v243 = vsel %vm166, 0, %v242
  %244 = vst [vmem:[#allocation2 + $0x134] sm:$0x1] %v243
  %v245 = vld [vmem:[#allocation2 + $0x140] sm:$0x1]
  %v246 = vsel %vm166, 0, %v245
  %247 = vst [vmem:[#allocation2 + $0x140] sm:$0x1] %v246
  %v248 = vld [vmem:[#allocation2 + $0x14c] sm:$0x1]
  %v249 = vsel %vm166, 0, %v248
  %250 = vst [vmem:[#allocation2 + $0x14c] sm:$0x1] %v249
  %v251 = vld [vmem:[#allocation2 + $0x158] sm:$0x1]
  %v252 = vsel %vm166, 0, %v251
  %253 = vst [vmem:[#allocation2 + $0x158] sm:$0x1] %v252
  %v254 = vld [vmem:[#allocation2 + $0x164] sm:$0x1]
  %v255 = vsel %vm166, 0, %v254
  %256 = vst [vmem:[#allocation2 + $0x164] sm:$0x1] %v255
  %v257 = vld [vmem:[#allocation2 + $0x170] sm:$0x1]
  %v258 = vsel %vm166, 0, %v257
  %259 = vst [vmem:[#allocation2 + $0x170] sm:$0x1] %v258
  %v260 = vld [vmem:[#allocation2 + $0x17c] sm:$0x1]
  %v261 = vsel %vm166, 0, %v260
  %262 = vst [vmem:[#allocation2 + $0x17c] sm:$0x1] %v261
  %v263 = vld [vmem:[#allocation2 + $0x188] sm:$0x1]
  %v264 = vsel %vm166, 0, %v263
  %265 = vst [vmem:[#allocation2 + $0x188] sm:$0x1] %v264
  %v266 = vld [vmem:[#allocation2 + $0x194] sm:$0x1]
  %v267 = vsel %vm166, 0, %v266
  %268 = vst [vmem:[#allocation2 + $0x194] sm:$0x1] %v267
  %v269 = vld [vmem:[#allocation2 + $0x1a0] sm:$0x1]
  %v270 = vsel %vm166, 0, %v269
  %271 = vst [vmem:[#allocation2 + $0x1a0] sm:$0x1] %v270
  %v272 = vld [vmem:[#allocation2 + $0x1ac] sm:$0x1]
  %v273 = vsel %vm166, 0, %v272
  %274 = vst [vmem:[#allocation2 + $0x1ac] sm:$0x1] %v273
  %vm275 = vcmask 64512
  %276 = vst.msk [vmem:[#allocation3] sm:$0xff] %vm275, 0.0
  %277 = vst.msk [vmem:[#allocation3 + $0x8] sm:$0xff] %vm275, 0.0
  %vm278 = vcmask 58368
  %279 = vst.msk [vmem:[#allocation3 + $0x10] sm:$0x3] %vm278, 0.0
  %280 = vst.msk [vmem:[#allocation3 + $0x1b0] sm:$0xff] %vm275, 0.0
  %281 = vst.msk [vmem:[#allocation3 + $0x1b8] sm:$0xff] %vm275, 0.0
  %282 = vst.msk [vmem:[#allocation3 + $0x1c0] sm:$0x3] %vm278, 0.0
  %s283 = scalar_lea.vmem [#allocation3], 408
  %284 = vst.msk [vmem:[%s283] sm:$0xff] %vm275, 0.0
  %285 = vst.msk [vmem:[%s283 + $0x8] sm:$0xff] %vm275, 0.0
  %286 = vst.msk [vmem:[%s283 + $0x10] sm:$0x3] %vm278, 0.0
  %287 = vst.msk [vmem:[%s283 + $0x1b0] sm:$0xff] %vm275, 0.0
  %288 = vst.msk [vmem:[%s283 + $0x1b8] sm:$0xff] %vm275, 0.0
  %289 = vst.msk [vmem:[%s283 + $0x1c0] sm:$0x3] %vm278, 0.0
  %vm290 = vcmask 57344
  %291 = vst.msk [vmem:[#allocation3] sm:$0x1] %vm290, 0.0
  %292 = vst.msk [vmem:[#allocation3 + $0x18] sm:$0x1] %vm290, 0.0
  %293 = vst.msk [vmem:[#allocation3 + $0x30] sm:$0x1] %vm290, 0.0
  %294 = vst.msk [vmem:[#allocation3 + $0x48] sm:$0x1] %vm290, 0.0
  %295 = vst.msk [vmem:[#allocation3 + $0x60] sm:$0x1] %vm290, 0.0
  %296 = vst.msk [vmem:[#allocation3 + $0x78] sm:$0x1] %vm290, 0.0
  %297 = vst.msk [vmem:[#allocation3 + $0x90] sm:$0x1] %vm290, 0.0
  %298 = vst.msk [vmem:[#allocation3 + $0xa8] sm:$0x1] %vm290, 0.0
  %299 = vst.msk [vmem:[#allocation3 + $0xc0] sm:$0x1] %vm290, 0.0
  %300 = vst.msk [vmem:[#allocation3 + $0xd8] sm:$0x1] %vm290, 0.0
  %301 = vst.msk [vmem:[#allocation3 + $0xf0] sm:$0x1] %vm290, 0.0
  %302 = vst.msk [vmem:[#allocation3 + $0x108] sm:$0x1] %vm290, 0.0
  %303 = vst.msk [vmem:[#allocation3 + $0x120] sm:$0x1] %vm290, 0.0
  %304 = vst.msk [vmem:[#allocation3 + $0x138] sm:$0x1] %vm290, 0.0
  %305 = vst.msk [vmem:[#allocation3 + $0x150] sm:$0x1] %vm290, 0.0
  %306 = vst.msk [vmem:[#allocation3 + $0x168] sm:$0x1] %vm290, 0.0
  %307 = vst.msk [vmem:[#allocation3 + $0x180] sm:$0x1] %vm290, 0.0
  %308 = vst.msk [vmem:[#allocation3 + $0x198] sm:$0x1] %vm290, 0.0
  %309 = vst.msk [vmem:[#allocation3 + $0x1b0] sm:$0x1] %vm290, 0.0
  %310 = vst.msk [vmem:[#allocation3 + $0x1c8] sm:$0x1] %vm290, 0.0
  %311 = vst.msk [vmem:[#allocation3 + $0x1e0] sm:$0x1] %vm290, 0.0
  %312 = vst.msk [vmem:[#allocation3 + $0x1f8] sm:$0x1] %vm290, 0.0
  %313 = vst.msk [vmem:[#allocation3 + $0x210] sm:$0x1] %vm290, 0.0
  %314 = vst.msk [vmem:[#allocation3 + $0x228] sm:$0x1] %vm290, 0.0
  %315 = vst.msk [vmem:[#allocation3 + $0x240] sm:$0x1] %vm290, 0.0
  %316 = vst.msk [vmem:[#allocation3 + $0x258] sm:$0x1] %vm290, 0.0
  %317 = vst.msk [vmem:[#allocation3 + $0x270] sm:$0x1] %vm290, 0.0
  %318 = vst.msk [vmem:[#allocation3 + $0x288] sm:$0x1] %vm290, 0.0
  %319 = vst.msk [vmem:[#allocation3 + $0x2a0] sm:$0x1] %vm290, 0.0
  %320 = vst.msk [vmem:[#allocation3 + $0x2b8] sm:$0x1] %vm290, 0.0
  %321 = vst.msk [vmem:[#allocation3 + $0x2d0] sm:$0x1] %vm290, 0.0
  %322 = vst.msk [vmem:[#allocation3 + $0x2e8] sm:$0x1] %vm290, 0.0
  %323 = vst.msk [vmem:[#allocation3 + $0x300] sm:$0x1] %vm290, 0.0
  %324 = vst.msk [vmem:[#allocation3 + $0x318] sm:$0x1] %vm290, 0.0
  %325 = vst.msk [vmem:[#allocation3 + $0x330] sm:$0x1] %vm290, 0.0
  %326 = vst.msk [vmem:[#allocation3 + $0x348] sm:$0x1] %vm290, 0.0
  %327 = vst.msk [vmem:[#allocation3 + $0x11] sm:$0x1] %vm290, 0.0
  %328 = vst.msk [vmem:[#allocation3 + $0x29] sm:$0x1] %vm290, 0.0
  %329 = vst.msk [vmem:[#allocation3 + $0x41] sm:$0x1] %vm290, 0.0
  %330 = vst.msk [vmem:[#allocation3 + $0x59] sm:$0x1] %vm290, 0.0
  %331 = vst.msk [vmem:[#allocation3 + $0x71] sm:$0x1] %vm290, 0.0
  %332 = vst.msk [vmem:[#allocation3 + $0x89] sm:$0x1] %vm290, 0.0
  %333 = vst.msk [vmem:[#allocation3 + $0xa1] sm:$0x1] %vm290, 0.0
  %334 = vst.msk [vmem:[#allocation3 + $0xb9] sm:$0x1] %vm290, 0.0
  %335 = vst.msk [vmem:[#allocation3 + $0xd1] sm:$0x1] %vm290, 0.0
  %336 = vst.msk [vmem:[#allocation3 + $0xe9] sm:$0x1] %vm290, 0.0
  %337 = vst.msk [vmem:[#allocation3 + $0x101] sm:$0x1] %vm290, 0.0
  %338 = vst.msk [vmem:[#allocation3 + $0x119] sm:$0x1] %vm290, 0.0
  %339 = vst.msk [vmem:[#allocation3 + $0x131] sm:$0x1] %vm290, 0.0
  %340 = vst.msk [vmem:[#allocation3 + $0x149] sm:$0x1] %vm290, 0.0
  %341 = vst.msk [vmem:[#allocation3 + $0x161] sm:$0x1] %vm290, 0.0
  %342 = vst.msk [vmem:[#allocation3 + $0x179] sm:$0x1] %vm290, 0.0
  %343 = vst.msk [vmem:[#allocation3 + $0x191] sm:$0x1] %vm290, 0.0
  %344 = vst.msk [vmem:[#allocation3 + $0x1a9] sm:$0x1] %vm290, 0.0
  %345 = vst.msk [vmem:[#allocation3 + $0x1c1] sm:$0x1] %vm290, 0.0
  %346 = vst.msk [vmem:[#allocation3 + $0x1d9] sm:$0x1] %vm290, 0.0
  %347 = vst.msk [vmem:[#allocation3 + $0x1f1] sm:$0x1] %vm290, 0.0
  %348 = vst.msk [vmem:[#allocation3 + $0x209] sm:$0x1] %vm290, 0.0
  %349 = vst.msk [vmem:[#allocation3 + $0x221] sm:$0x1] %vm290, 0.0
  %350 = vst.msk [vmem:[#allocation3 + $0x239] sm:$0x1] %vm290, 0.0
  %351 = vst.msk [vmem:[#allocation3 + $0x251] sm:$0x1] %vm290, 0.0
  %352 = vst.msk [vmem:[#allocation3 + $0x269] sm:$0x1] %vm290, 0.0
  %353 = vst.msk [vmem:[#allocation3 + $0x281] sm:$0x1] %vm290, 0.0
  %354 = vst.msk [vmem:[#allocation3 + $0x299] sm:$0x1] %vm290, 0.0
  %355 = vst.msk [vmem:[#allocation3 + $0x2b1] sm:$0x1] %vm290, 0.0
  %356 = vst.msk [vmem:[#allocation3 + $0x2c9] sm:$0x1] %vm290, 0.0
  %357 = vst.msk [vmem:[#allocation3 + $0x2e1] sm:$0x1] %vm290, 0.0
  %358 = vst.msk [vmem:[#allocation3 + $0x2f9] sm:$0x1] %vm290, 0.0
  %359 = vst.msk [vmem:[#allocation3 + $0x311] sm:$0x1] %vm290, 0.0
  %360 = vst.msk [vmem:[#allocation3 + $0x329] sm:$0x1] %vm290, 0.0
  %361 = vst.msk [vmem:[#allocation3 + $0x341] sm:$0x1] %vm290, 0.0
  %362 = vst.msk [vmem:[#allocation3 + $0x359] sm:$0x1] %vm290, 0.0
  %v363 = vld [vmem:[%s0] sm:$0xff]
  %v364 = vld [vmem:[%s0 + $0x8] sm:$0xff]
  %v365 = vld [vmem:[%s0 + $0x10] sm:$0xff]
  %v366 = vld [vmem:[%s0 + $0x18] sm:$0xff]
  %v367 = vld [vmem:[%s0 + $0x20] sm:$0xff]
  %v368 = vld [vmem:[%s0 + $0x28] sm:$0xff]
  %v369 = vld [vmem:[%s0 + $0x30] sm:$0xff]
  %v370 = vld [vmem:[%s0 + $0x38] sm:$0xff]
  %v371 = vld [vmem:[%s0 + $0x40] sm:$0xff]
  %v372 = vld [vmem:[%s0 + $0x48] sm:$0xff]
  %v373 = vld [vmem:[%s0 + $0x50] sm:$0xff]
  %v374 = vld [vmem:[%s0 + $0x58] sm:$0xff]
  %v375 = vld [vmem:[%s0 + $0x60] sm:$0xff]
  %v376 = vld [vmem:[%s0 + $0x68] sm:$0xff]
  %v377 = vld [vmem:[%s0 + $0x70] sm:$0xff]
  %v378 = vld [vmem:[%s0 + $0x78] sm:$0xff]
  %v379 = vld [vmem:[%s0 + $0x80] sm:$0xff]
  %v380 = vld [vmem:[%s0 + $0x88] sm:$0xff]
  %v381 = vld [vmem:[%s0 + $0x90] sm:$0xff]
  %v382 = vld [vmem:[%s0 + $0x98] sm:$0xff]
  %v383 = vld [vmem:[%s0 + $0xa0] sm:$0xff]
  %v384 = vld [vmem:[%s0 + $0xa8] sm:$0xff]
  %v385 = vld [vmem:[%s0 + $0xb0] sm:$0xff]
  %v386 = vld [vmem:[%s0 + $0xb8] sm:$0xff]
  %v387 = vld [vmem:[%s0 + $0xc0] sm:$0xff]
  %v388 = vld [vmem:[%s0 + $0xc8] sm:$0xff]
  %v389 = vld [vmem:[%s0 + $0xd0] sm:$0xff]
  %v390 = vld [vmem:[%s0 + $0xd8] sm:$0xff]
  %v391 = vld [vmem:[%s0 + $0xe0] sm:$0xff]
  %v392 = vld [vmem:[%s0 + $0xe8] sm:$0xff]
  %v393 = vld [vmem:[%s0 + $0xf0] sm:$0xff]
  %v394 = vld [vmem:[%s0 + $0xf8] sm:$0xff]
  %v395 = vld [vmem:[%s0 + $0x100] sm:$0xff]
  %v396 = vld [vmem:[%s0 + $0x108] sm:$0xff]
  %v397 = vld [vmem:[%s0 + $0x110] sm:$0xff]
  %v398 = vld [vmem:[%s0 + $0x118] sm:$0xff]
  %v399 = vld [vmem:[%s0 + $0x120] sm:$0xff]
  %v400 = vld [vmem:[%s0 + $0x128] sm:$0xff]
  %v401 = vld [vmem:[%s0 + $0x130] sm:$0xff]
  %v402 = vld [vmem:[%s0 + $0x138] sm:$0xff]
  %v403 = vld [vmem:[%s0 + $0x140] sm:$0xff]
  %v404 = vld [vmem:[%s0 + $0x148] sm:$0xff]
  %v405 = vld [vmem:[%s0 + $0x150] sm:$0xff]
  %v406 = vld [vmem:[%s0 + $0x158] sm:$0xff]
  %v407 = vld [vmem:[%s0 + $0x160] sm:$0xff]
  %v408 = vld [vmem:[%s0 + $0x168] sm:$0xff]
  %v409 = vld [vmem:[%s0 + $0x170] sm:$0xff]
  %v410 = vld [vmem:[%s0 + $0x178] sm:$0xff]
  %v411 = vld [vmem:[%s0 + $0x180] sm:$0xff]
  %v412 = vld [vmem:[%s0 + $0x188] sm:$0xff]
  %v413 = vld [vmem:[%s0 + $0x190] sm:$0xff]
  %v414 = vld [vmem:[%s0 + $0x198] sm:$0xff]
  %v415 = vld [vmem:[%s0 + $0x1a0] sm:$0xff]
  %v416 = vld [vmem:[%s0 + $0x1a8] sm:$0xff]
  %v417 = vld [vmem:[%s0 + $0x1b0] sm:$0xff]
  %v418 = vld [vmem:[%s0 + $0x1b8] sm:$0xff]
  %v419 = vld [vmem:[%s0 + $0x1c0] sm:$0xff]
  %v420 = vld [vmem:[%s0 + $0x1c8] sm:$0xff]
  %v421 = vld [vmem:[%s0 + $0x1d0] sm:$0xff]
  %v422 = vld [vmem:[%s0 + $0x1d8] sm:$0xff]
  %v423 = vld [vmem:[%s0 + $0x1e0] sm:$0xff]
  %v424 = vld [vmem:[%s0 + $0x1e8] sm:$0xff]
  %v425 = vld [vmem:[%s0 + $0x1f0] sm:$0xff]
  %v426 = vld [vmem:[%s0 + $0x1f8] sm:$0xff]
  %v427 = vld [vmem:[%s1] sm:$0x1]
  %v429 = vlaneseq
  %v430 = vshrl.u32 %v429, 7
  %v431 = vsub.s32 0, %v430
  %v432 = vrot.slane %v427, %v431
  %v434 = vmul.f32 %v363, %v432
  %v435 = vmul.f32 %v364, %v432
  %v436 = vmul.f32 %v365, %v432
  %v437 = vmul.f32 %v366, %v432
  %v438 = vmul.f32 %v367, %v432
  %v439 = vmul.f32 %v368, %v432
  %v440 = vmul.f32 %v369, %v432
  %v441 = vmul.f32 %v370, %v432
  %v442 = vmul.f32 %v371, %v432
  %v443 = vmul.f32 %v372, %v432
  %v444 = vmul.f32 %v373, %v432
  %v445 = vmul.f32 %v374, %v432
  %v446 = vmul.f32 %v375, %v432
  %v447 = vmul.f32 %v376, %v432
  %v448 = vmul.f32 %v377, %v432
  %v449 = vmul.f32 %v378, %v432
  %v450 = vmul.f32 %v379, %v432
  %v451 = vmul.f32 %v380, %v432
  %v452 = vmul.f32 %v381, %v432
  %v453 = vmul.f32 %v382, %v432
  %v454 = vmul.f32 %v383, %v432
  %v455 = vmul.f32 %v384, %v432
  %v456 = vmul.f32 %v385, %v432
  %v457 = vmul.f32 %v386, %v432
  %v458 = vmul.f32 %v387, %v432
  %v459 = vmul.f32 %v388, %v432
  %v460 = vmul.f32 %v389, %v432
  %v461 = vmul.f32 %v390, %v432
  %v462 = vmul.f32 %v391, %v432
  %v463 = vmul.f32 %v392, %v432
  %v464 = vmul.f32 %v393, %v432
  %v465 = vmul.f32 %v394, %v432
  %v466 = vmul.f32 %v395, %v432
  %v467 = vmul.f32 %v396, %v432
  %v468 = vmul.f32 %v397, %v432
  %v469 = vmul.f32 %v398, %v432
  %v470 = vmul.f32 %v399, %v432
  %v471 = vmul.f32 %v400, %v432
  %v472 = vmul.f32 %v401, %v432
  %v473 = vmul.f32 %v402, %v432
  %v474 = vmul.f32 %v403, %v432
  %v475 = vmul.f32 %v404, %v432
  %v476 = vmul.f32 %v405, %v432
  %v477 = vmul.f32 %v406, %v432
  %v478 = vmul.f32 %v407, %v432
  %v479 = vmul.f32 %v408, %v432
  %v480 = vmul.f32 %v409, %v432
  %v481 = vmul.f32 %v410, %v432
  %v482 = vmul.f32 %v411, %v432
  %v483 = vmul.f32 %v412, %v432
  %v484 = vmul.f32 %v413, %v432
  %v485 = vmul.f32 %v414, %v432
  %v486 = vmul.f32 %v415, %v432
  %v487 = vmul.f32 %v416, %v432
  %v488 = vmul.f32 %v417, %v432
  %v489 = vmul.f32 %v418, %v432
  %v490 = vmul.f32 %v419, %v432
  %v491 = vmul.f32 %v420, %v432
  %v492 = vmul.f32 %v421, %v432
  %v493 = vmul.f32 %v422, %v432
  %v494 = vmul.f32 %v423, %v432
  %v495 = vmul.f32 %v424, %v432
  %v496 = vmul.f32 %v425, %v432
  %v497 = vmul.f32 %v426, %v432
  %v498 = vld [vmem:[%s2] sm:$0x1]
  %v500 = vlaneseq
  %v501 = vshrl.u32 %v500, 7
  %v502 = vsub.s32 0, %v501
  %v503 = vrot.slane %v498, %v502
  %v505 = vadd.f32 %v434, %v503
  %v506 = vadd.f32 %v435, %v503
  %v507 = vadd.f32 %v436, %v503
  %v508 = vadd.f32 %v437, %v503
  %v509 = vadd.f32 %v438, %v503
  %v510 = vadd.f32 %v439, %v503
  %v511 = vadd.f32 %v440, %v503
  %v512 = vadd.f32 %v441, %v503
  %v513 = vadd.f32 %v442, %v503
  %v514 = vadd.f32 %v443, %v503
  %v515 = vadd.f32 %v444, %v503
  %v516 = vadd.f32 %v445, %v503
  %v517 = vadd.f32 %v446, %v503
  %v518 = vadd.f32 %v447, %v503
  %v519 = vadd.f32 %v448, %v503
  %v520 = vadd.f32 %v449, %v503
  %v521 = vadd.f32 %v450, %v503
  %v522 = vadd.f32 %v451, %v503
  %v523 = vadd.f32 %v452, %v503
  %v524 = vadd.f32 %v453, %v503
  %v525 = vadd.f32 %v454, %v503
  %v526 = vadd.f32 %v455, %v503
  %v527 = vadd.f32 %v456, %v503
  %v528 = vadd.f32 %v457, %v503
  %v529 = vadd.f32 %v458, %v503
  %v530 = vadd.f32 %v459, %v503
  %v531 = vadd.f32 %v460, %v503
  %v532 = vadd.f32 %v461, %v503
  %v533 = vadd.f32 %v462, %v503
  %v534 = vadd.f32 %v463, %v503
  %v535 = vadd.f32 %v464, %v503
  %v536 = vadd.f32 %v465, %v503
  %v537 = vadd.f32 %v466, %v503
  %v538 = vadd.f32 %v467, %v503
  %v539 = vadd.f32 %v468, %v503
  %v540 = vadd.f32 %v469, %v503
  %v541 = vadd.f32 %v470, %v503
  %v542 = vadd.f32 %v471, %v503
  %v543 = vadd.f32 %v472, %v503
  %v544 = vadd.f32 %v473, %v503
  %v545 = vadd.f32 %v474, %v503
  %v546 = vadd.f32 %v475, %v503
  %v547 = vadd.f32 %v476, %v503
  %v548 = vadd.f32 %v477, %v503
  %v549 = vadd.f32 %v478, %v503
  %v550 = vadd.f32 %v479, %v503
  %v551 = vadd.f32 %v480, %v503
  %v552 = vadd.f32 %v481, %v503
  %v553 = vadd.f32 %v482, %v503
  %v554 = vadd.f32 %v483, %v503
  %v555 = vadd.f32 %v484, %v503
  %v556 = vadd.f32 %v485, %v503
  %v557 = vadd.f32 %v486, %v503
  %v558 = vadd.f32 %v487, %v503
  %v559 = vadd.f32 %v488, %v503
  %v560 = vadd.f32 %v489, %v503
  %v561 = vadd.f32 %v490, %v503
  %v562 = vadd.f32 %v491, %v503
  %v563 = vadd.f32 %v492, %v503
  %v564 = vadd.f32 %v493, %v503
  %v565 = vadd.f32 %v494, %v503
  %v566 = vadd.f32 %v495, %v503
  %v567 = vadd.f32 %v496, %v503
  %v568 = vadd.f32 %v497, %v503
  %v569 = vpack.c.bf16 %v506, %v505
  %v570 = vpack.c.bf16 %v508, %v507
  %v571 = vpack.c.bf16 %v510, %v509
  %v572 = vpack.c.bf16 %v512, %v511
  %v573 = vpack.c.bf16 %v514, %v513
  %v574 = vpack.c.bf16 %v516, %v515
  %v575 = vpack.c.bf16 %v518, %v517
  %v576 = vpack.c.bf16 %v520, %v519
  %v577 = vpack.c.bf16 %v522, %v521
  %v578 = vpack.c.bf16 %v524, %v523
  %v579 = vpack.c.bf16 %v526, %v525
  %v580 = vpack.c.bf16 %v528, %v527
  %v581 = vpack.c.bf16 %v530, %v529
  %v582 = vpack.c.bf16 %v532, %v531
  %v583 = vpack.c.bf16 %v534, %v533
  %v584 = vpack.c.bf16 %v536, %v535
  %v585 = vpack.c.bf16 %v538, %v537
  %v586 = vpack.c.bf16 %v540, %v539
  %v587 = vpack.c.bf16 %v542, %v541
  %v588 = vpack.c.bf16 %v544, %v543
  %v589 = vpack.c.bf16 %v546, %v545
  %v590 = vpack.c.bf16 %v548, %v547
  %v591 = vpack.c.bf16 %v550, %v549
  %v592 = vpack.c.bf16 %v552, %v551
  %v593 = vpack.c.bf16 %v554, %v553
  %v594 = vpack.c.bf16 %v556, %v555
  %v595 = vpack.c.bf16 %v558, %v557
  %v596 = vpack.c.bf16 %v560, %v559
  %v597 = vpack.c.bf16 %v562, %v561
  %v598 = vpack.c.bf16 %v564, %v563
  %v599 = vpack.c.bf16 %v566, %v565
  %v600 = vpack.c.bf16 %v568, %v567
  %v633 = vunpack.c.l.b16 %v569
  %v634 = vunpack.c.h.b16 %v569
  %v635 = vunpack.c.l.b16 %v570
  %v636 = vunpack.c.h.b16 %v570
  %v637 = vunpack.c.l.b16 %v571
  %v638 = vunpack.c.h.b16 %v571
  %v639 = vunpack.c.l.b16 %v572
  %v640 = vunpack.c.h.b16 %v572
  %v641 = vunpack.c.l.b16 %v573
  %v642 = vunpack.c.h.b16 %v573
  %v643 = vunpack.c.l.b16 %v574
  %v644 = vunpack.c.h.b16 %v574
  %v645 = vunpack.c.l.b16 %v575
  %v646 = vunpack.c.h.b16 %v575
  %v647 = vunpack.c.l.b16 %v576
  %v648 = vunpack.c.h.b16 %v576
  %v649 = vunpack.c.l.b16 %v577
  %v650 = vunpack.c.h.b16 %v577
  %v651 = vunpack.c.l.b16 %v578
  %v652 = vunpack.c.h.b16 %v578
  %v653 = vunpack.c.l.b16 %v579
  %v654 = vunpack.c.h.b16 %v579
  %v655 = vunpack.c.l.b16 %v580
  %v656 = vunpack.c.h.b16 %v580
  %v657 = vunpack.c.l.b16 %v581
  %v658 = vunpack.c.h.b16 %v581
  %v659 = vunpack.c.l.b16 %v582
  %v660 = vunpack.c.h.b16 %v582
  %v661 = vunpack.c.l.b16 %v583
  %v662 = vunpack.c.h.b16 %v583
  %v663 = vunpack.c.l.b16 %v584
  %v664 = vunpack.c.h.b16 %v584
  %v665 = vunpack.c.l.b16 %v585
  %v666 = vunpack.c.h.b16 %v585
  %v667 = vunpack.c.l.b16 %v586
  %v668 = vunpack.c.h.b16 %v586
  %v669 = vunpack.c.l.b16 %v587
  %v670 = vunpack.c.h.b16 %v587
  %v671 = vunpack.c.l.b16 %v588
  %v672 = vunpack.c.h.b16 %v588
  %v673 = vunpack.c.l.b16 %v589
  %v674 = vunpack.c.h.b16 %v589
  %v675 = vunpack.c.l.b16 %v590
  %v676 = vunpack.c.h.b16 %v590
  %v677 = vunpack.c.l.b16 %v591
  %v678 = vunpack.c.h.b16 %v591
  %v679 = vunpack.c.l.b16 %v592
  %v680 = vunpack.c.h.b16 %v592
  %v681 = vunpack.c.l.b16 %v593
  %v682 = vunpack.c.h.b16 %v593
  %v683 = vunpack.c.l.b16 %v594
  %v684 = vunpack.c.h.b16 %v594
  %v685 = vunpack.c.l.b16 %v595
  %v686 = vunpack.c.h.b16 %v595
  %v687 = vunpack.c.l.b16 %v596
  %v688 = vunpack.c.h.b16 %v596
  %v689 = vunpack.c.l.b16 %v597
  %v690 = vunpack.c.h.b16 %v597
  %v691 = vunpack.c.l.b16 %v598
  %v692 = vunpack.c.h.b16 %v598
  %v693 = vunpack.c.l.b16 %v599
  %v694 = vunpack.c.h.b16 %v599
  %v695 = vunpack.c.l.b16 %v600
  %v696 = vunpack.c.h.b16 %v600
  %v697 = vpack.c.b16 %v633, %v633
  %v698 = vpack.c.b16 %v634, %v634
  %v699 = vpack.c.b16 %v635, %v635
  %v700 = vpack.c.b16 %v636, %v636
  %v701 = vpack.c.b16 %v637, %v637
  %v702 = vpack.c.b16 %v638, %v638
  %v703 = vpack.c.b16 %v639, %v639
  %v704 = vpack.c.b16 %v640, %v640
  %v705 = vpack.c.b16 %v641, %v641
  %v706 = vpack.c.b16 %v642, %v642
  %v707 = vpack.c.b16 %v643, %v643
  %v708 = vpack.c.b16 %v644, %v644
  %v709 = vpack.c.b16 %v645, %v645
  %v710 = vpack.c.b16 %v646, %v646
  %v711 = vpack.c.b16 %v647, %v647
  %v712 = vpack.c.b16 %v648, %v648
  %v713 = vpack.c.b16 %v649, %v649
  %v714 = vpack.c.b16 %v650, %v650
  %v715 = vpack.c.b16 %v651, %v651
  %v716 = vpack.c.b16 %v652, %v652
  %v717 = vpack.c.b16 %v653, %v653
  %v718 = vpack.c.b16 %v654, %v654
  %v719 = vpack.c.b16 %v655, %v655
  %v720 = vpack.c.b16 %v656, %v656
  %v721 = vpack.c.b16 %v657, %v657
  %v722 = vpack.c.b16 %v658, %v658
  %v723 = vpack.c.b16 %v659, %v659
  %v724 = vpack.c.b16 %v660, %v660
  %v725 = vpack.c.b16 %v661, %v661
  %v726 = vpack.c.b16 %v662, %v662
  %v727 = vpack.c.b16 %v663, %v663
  %v728 = vpack.c.b16 %v664, %v664
  %v729 = vpack.c.b16 %v665, %v665
  %v730 = vpack.c.b16 %v666, %v666
  %v731 = vpack.c.b16 %v667, %v667
  %v732 = vpack.c.b16 %v668, %v668
  %v733 = vpack.c.b16 %v669, %v669
  %v734 = vpack.c.b16 %v670, %v670
  %v735 = vpack.c.b16 %v671, %v671
  %v736 = vpack.c.b16 %v672, %v672
  %v737 = vpack.c.b16 %v673, %v673
  %v738 = vpack.c.b16 %v674, %v674
  %v739 = vpack.c.b16 %v675, %v675
  %v740 = vpack.c.b16 %v676, %v676
  %v741 = vpack.c.b16 %v677, %v677
  %v742 = vpack.c.b16 %v678, %v678
  %v743 = vpack.c.b16 %v679, %v679
  %v744 = vpack.c.b16 %v680, %v680
  %v745 = vpack.c.b16 %v681, %v681
  %v746 = vpack.c.b16 %v682, %v682
  %v747 = vpack.c.b16 %v683, %v683
  %v748 = vpack.c.b16 %v684, %v684
  %v749 = vpack.c.b16 %v685, %v685
  %v750 = vpack.c.b16 %v686, %v686
  %v751 = vpack.c.b16 %v687, %v687
  %v752 = vpack.c.b16 %v688, %v688
  %v753 = vpack.c.b16 %v689, %v689
  %v754 = vpack.c.b16 %v690, %v690
  %v755 = vpack.c.b16 %v691, %v691
  %v756 = vpack.c.b16 %v692, %v692
  %v757 = vpack.c.b16 %v693, %v693
  %v758 = vpack.c.b16 %v694, %v694
  %v759 = vpack.c.b16 %v695, %v695
  %v760 = vpack.c.b16 %v696, %v696
  %vm761 = vsmask.f32 4368
  %vm762 = vmor %vm55, %vm761
  %v764 = vshrl.u32 %v697, 16
  %v766 = vrot.slane %v764, 7
  %v767 = vshll.u32 %v697, 16
  %v769 = vor.u32 %v766, %v767
  %v770 = vrot.slane %v766, 4
  %v772 = vshrl.u32 %v698, 16
  %v774 = vrot.slane %v772, 7
  %v775 = vshll.u32 %v698, 16
  %v777 = vor.u32 %v774, %v775
  %v778 = vsel %vm762, %v770, %v777
  %v779 = vrot.slane %v774, 4
  %v781 = vshrl.u32 %v699, 16
  %v783 = vrot.slane %v781, 7
  %v784 = vshll.u32 %v699, 16
  %v786 = vor.u32 %v783, %v784
  %v787 = vrot.slane %v783, 4
  %v789 = vshrl.u32 %v700, 16
  %v791 = vrot.slane %v789, 7
  %v792 = vshll.u32 %v700, 16
  %v794 = vor.u32 %v791, %v792
  %v795 = vsel %vm762, %v787, %v794
  %v796 = vrot.slane %v791, 4
  %v798 = vshrl.u32 %v701, 16
  %v800 = vrot.slane %v798, 7
  %v801 = vshll.u32 %v701, 16
  %v803 = vor.u32 %v800, %v801
  %v804 = vrot.slane %v800, 4
  %v806 = vshrl.u32 %v702, 16
  %v808 = vrot.slane %v806, 7
  %v809 = vshll.u32 %v702, 16
  %v811 = vor.u32 %v808, %v809
  %v812 = vsel %vm762, %v804, %v811
  %v813 = vrot.slane %v808, 4
  %v815 = vshrl.u32 %v703, 16
  %v817 = vrot.slane %v815, 7
  %v818 = vshll.u32 %v703, 16
  %v820 = vor.u32 %v817, %v818
  %v821 = vrot.slane %v817, 4
  %v823 = vshrl.u32 %v704, 16
  %v825 = vrot.slane %v823, 7
  %v826 = vshll.u32 %v704, 16
  %v828 = vor.u32 %v825, %v826
  %v829 = vsel %vm762, %v821, %v828
  %v830 = vrot.slane %v825, 4
  %v832 = vshrl.u32 %v705, 16
  %v834 = vrot.slane %v832, 7
  %v835 = vshll.u32 %v705, 16
  %v837 = vor.u32 %v834, %v835
  %v838 = vrot.slane %v834, 4
  %v840 = vshrl.u32 %v706, 16
  %v842 = vrot.slane %v840, 7
  %v843 = vshll.u32 %v706, 16
  %v845 = vor.u32 %v842, %v843
  %v846 = vsel %vm762, %v838, %v845
  %v847 = vrot.slane %v842, 4
  %v849 = vshrl.u32 %v707, 16
  %v851 = vrot.slane %v849, 7
  %v852 = vshll.u32 %v707, 16
  %v854 = vor.u32 %v851, %v852
  %v855 = vrot.slane %v851, 4
  %v857 = vshrl.u32 %v708, 16
  %v859 = vrot.slane %v857, 7
  %v860 = vshll.u32 %v708, 16
  %v862 = vor.u32 %v859, %v860
  %v863 = vsel %vm762, %v855, %v862
  %v864 = vrot.slane %v859, 4
  %v866 = vshrl.u32 %v709, 16
  %v868 = vrot.slane %v866, 7
  %v869 = vshll.u32 %v709, 16
  %v871 = vor.u32 %v868, %v869
  %v872 = vrot.slane %v868, 4
  %v874 = vshrl.u32 %v710, 16
  %v876 = vrot.slane %v874, 7
  %v877 = vshll.u32 %v710, 16
  %v879 = vor.u32 %v876, %v877
  %v880 = vsel %vm762, %v872, %v879
  %v881 = vrot.slane %v876, 4
  %v883 = vshrl.u32 %v711, 16
  %v885 = vrot.slane %v883, 7
  %v886 = vshll.u32 %v711, 16
  %v888 = vor.u32 %v885, %v886
  %v889 = vrot.slane %v885, 4
  %v891 = vshrl.u32 %v712, 16
  %v893 = vrot.slane %v891, 7
  %v894 = vshll.u32 %v712, 16
  %v896 = vor.u32 %v893, %v894
  %v897 = vsel %vm762, %v889, %v896
  %v898 = vrot.slane %v893, 4
  %v900 = vshrl.u32 %v713, 16
  %v902 = vrot.slane %v900, 7
  %v903 = vshll.u32 %v713, 16
  %v905 = vor.u32 %v902, %v903
  %v906 = vrot.slane %v902, 4
  %v908 = vshrl.u32 %v714, 16
  %v910 = vrot.slane %v908, 7
  %v911 = vshll.u32 %v714, 16
  %v913 = vor.u32 %v910, %v911
  %v914 = vsel %vm762, %v906, %v913
  %v915 = vrot.slane %v910, 4
  %v917 = vshrl.u32 %v715, 16
  %v919 = vrot.slane %v917, 7
  %v920 = vshll.u32 %v715, 16
  %v922 = vor.u32 %v919, %v920
  %v923 = vrot.slane %v919, 4
  %v925 = vshrl.u32 %v716, 16
  %v927 = vrot.slane %v925, 7
  %v928 = vshll.u32 %v716, 16
  %v930 = vor.u32 %v927, %v928
  %v931 = vsel %vm762, %v923, %v930
  %v932 = vrot.slane %v927, 4
  %v934 = vshrl.u32 %v717, 16
  %v936 = vrot.slane %v934, 7
  %v937 = vshll.u32 %v717, 16
  %v939 = vor.u32 %v936, %v937
  %v940 = vrot.slane %v936, 4
  %v942 = vshrl.u32 %v718, 16
  %v944 = vrot.slane %v942, 7
  %v945 = vshll.u32 %v718, 16
  %v947 = vor.u32 %v944, %v945
  %v948 = vsel %vm762, %v940, %v947
  %v949 = vrot.slane %v944, 4
  %v951 = vshrl.u32 %v719, 16
  %v953 = vrot.slane %v951, 7
  %v954 = vshll.u32 %v719, 16
  %v956 = vor.u32 %v953, %v954
  %v957 = vrot.slane %v953, 4
  %v959 = vshrl.u32 %v720, 16
  %v961 = vrot.slane %v959, 7
  %v962 = vshll.u32 %v720, 16
  %v964 = vor.u32 %v961, %v962
  %v965 = vsel %vm762, %v957, %v964
  %v966 = vrot.slane %v961, 4
  %v968 = vshrl.u32 %v721, 16
  %v970 = vrot.slane %v968, 7
  %v971 = vshll.u32 %v721, 16
  %v973 = vor.u32 %v970, %v971
  %v974 = vrot.slane %v970, 4
  %v976 = vshrl.u32 %v722, 16
  %v978 = vrot.slane %v976, 7
  %v979 = vshll.u32 %v722, 16
  %v981 = vor.u32 %v978, %v979
  %v982 = vsel %vm762, %v974, %v981
  %v983 = vrot.slane %v978, 4
  %v985 = vshrl.u32 %v723, 16
  %v987 = vrot.slane %v985, 7
  %v988 = vshll.u32 %v723, 16
  %v990 = vor.u32 %v987, %v988
  %v991 = vrot.slane %v987, 4
  %v993 = vshrl.u32 %v724, 16
  %v995 = vrot.slane %v993, 7
  %v996 = vshll.u32 %v724, 16
  %v998 = vor.u32 %v995, %v996
  %v999 = vsel %vm762, %v991, %v998
  %v1000 = vrot.slane %v995, 4
  %v1002 = vshrl.u32 %v725, 16
  %v1004 = vrot.slane %v1002, 7
  %v1005 = vshll.u32 %v725, 16
  %v1007 = vor.u32 %v1004, %v1005
  %v1008 = vrot.slane %v1004, 4
  %v1010 = vshrl.u32 %v726, 16
  %v1012 = vrot.slane %v1010, 7
  %v1013 = vshll.u32 %v726, 16
  %v1015 = vor.u32 %v1012, %v1013
  %v1016 = vsel %vm762, %v1008, %v1015
  %v1017 = vrot.slane %v1012, 4
  %v1019 = vshrl.u32 %v727, 16
  %v1021 = vrot.slane %v1019, 7
  %v1022 = vshll.u32 %v727, 16
  %v1024 = vor.u32 %v1021, %v1022
  %v1025 = vrot.slane %v1021, 4
  %v1027 = vshrl.u32 %v728, 16
  %v1029 = vrot.slane %v1027, 7
  %v1030 = vshll.u32 %v728, 16
  %v1032 = vor.u32 %v1029, %v1030
  %v1033 = vsel %vm762, %v1025, %v1032
  %v1034 = vrot.slane %v1029, 4
  %v1036 = vshrl.u32 %v729, 16
  %v1038 = vrot.slane %v1036, 7
  %v1039 = vshll.u32 %v729, 16
  %v1041 = vor.u32 %v1038, %v1039
  %v1042 = vrot.slane %v1038, 4
  %v1044 = vshrl.u32 %v730, 16
  %v1046 = vrot.slane %v1044, 7
  %v1047 = vshll.u32 %v730, 16
  %v1049 = vor.u32 %v1046, %v1047
  %v1050 = vsel %vm762, %v1042, %v1049
  %v1051 = vrot.slane %v1046, 4
  %v1053 = vshrl.u32 %v731, 16
  %v1055 = vrot.slane %v1053, 7
  %v1056 = vshll.u32 %v731, 16
  %v1058 = vor.u32 %v1055, %v1056
  %v1059 = vrot.slane %v1055, 4
  %v1061 = vshrl.u32 %v732, 16
  %v1063 = vrot.slane %v1061, 7
  %v1064 = vshll.u32 %v732, 16
  %v1066 = vor.u32 %v1063, %v1064
  %v1067 = vsel %vm762, %v1059, %v1066
  %v1068 = vrot.slane %v1063, 4
  %v1070 = vshrl.u32 %v733, 16
  %v1072 = vrot.slane %v1070, 7
  %v1073 = vshll.u32 %v733, 16
  %v1075 = vor.u32 %v1072, %v1073
  %v1076 = vrot.slane %v1072, 4
  %v1078 = vshrl.u32 %v734, 16
  %v1080 = vrot.slane %v1078, 7
  %v1081 = vshll.u32 %v734, 16
  %v1083 = vor.u32 %v1080, %v1081
  %v1084 = vsel %vm762, %v1076, %v1083
  %v1085 = vrot.slane %v1080, 4
  %v1087 = vshrl.u32 %v735, 16
  %v1089 = vrot.slane %v1087, 7
  %v1090 = vshll.u32 %v735, 16
  %v1092 = vor.u32 %v1089, %v1090
  %v1093 = vrot.slane %v1089, 4
  %v1095 = vshrl.u32 %v736, 16
  %v1097 = vrot.slane %v1095, 7
  %v1098 = vshll.u32 %v736, 16
  %v1100 = vor.u32 %v1097, %v1098
  %v1101 = vsel %vm762, %v1093, %v1100
  %v1102 = vrot.slane %v1097, 4
  %v1104 = vshrl.u32 %v737, 16
  %v1106 = vrot.slane %v1104, 7
  %v1107 = vshll.u32 %v737, 16
  %v1109 = vor.u32 %v1106, %v1107
  %v1110 = vrot.slane %v1106, 4
  %v1112 = vshrl.u32 %v738, 16
  %v1114 = vrot.slane %v1112, 7
  %v1115 = vshll.u32 %v738, 16
  %v1117 = vor.u32 %v1114, %v1115
  %v1118 = vsel %vm762, %v1110, %v1117
  %v1119 = vrot.slane %v1114, 4
  %v1121 = vshrl.u32 %v739, 16
  %v1123 = vrot.slane %v1121, 7
  %v1124 = vshll.u32 %v739, 16
  %v1126 = vor.u32 %v1123, %v1124
  %v1127 = vrot.slane %v1123, 4
  %v1129 = vshrl.u32 %v740, 16
  %v1131 = vrot.slane %v1129, 7
  %v1132 = vshll.u32 %v740, 16
  %v1134 = vor.u32 %v1131, %v1132
  %v1135 = vsel %vm762, %v1127, %v1134
  %v1136 = vrot.slane %v1131, 4
  %v1138 = vshrl.u32 %v741, 16
  %v1140 = vrot.slane %v1138, 7
  %v1141 = vshll.u32 %v741, 16
  %v1143 = vor.u32 %v1140, %v1141
  %v1144 = vrot.slane %v1140, 4
  %v1146 = vshrl.u32 %v742, 16
  %v1148 = vrot.slane %v1146, 7
  %v1149 = vshll.u32 %v742, 16
  %v1151 = vor.u32 %v1148, %v1149
  %v1152 = vsel %vm762, %v1144, %v1151
  %v1153 = vrot.slane %v1148, 4
  %v1155 = vshrl.u32 %v743, 16
  %v1157 = vrot.slane %v1155, 7
  %v1158 = vshll.u32 %v743, 16
  %v1160 = vor.u32 %v1157, %v1158
  %v1161 = vrot.slane %v1157, 4
  %v1163 = vshrl.u32 %v744, 16
  %v1165 = vrot.slane %v1163, 7
  %v1166 = vshll.u32 %v744, 16
  %v1168 = vor.u32 %v1165, %v1166
  %v1169 = vsel %vm762, %v1161, %v1168
  %v1170 = vrot.slane %v1165, 4
  %v1172 = vshrl.u32 %v745, 16
  %v1174 = vrot.slane %v1172, 7
  %v1175 = vshll.u32 %v745, 16
  %v1177 = vor.u32 %v1174, %v1175
  %v1178 = vrot.slane %v1174, 4
  %v1180 = vshrl.u32 %v746, 16
  %v1182 = vrot.slane %v1180, 7
  %v1183 = vshll.u32 %v746, 16
  %v1185 = vor.u32 %v1182, %v1183
  %v1186 = vsel %vm762, %v1178, %v1185
  %v1187 = vrot.slane %v1182, 4
  %v1189 = vshrl.u32 %v747, 16
  %v1191 = vrot.slane %v1189, 7
  %v1192 = vshll.u32 %v747, 16
  %v1194 = vor.u32 %v1191, %v1192
  %v1195 = vrot.slane %v1191, 4
  %v1197 = vshrl.u32 %v748, 16
  %v1199 = vrot.slane %v1197, 7
  %v1200 = vshll.u32 %v748, 16
  %v1202 = vor.u32 %v1199, %v1200
  %v1203 = vsel %vm762, %v1195, %v1202
  %v1204 = vrot.slane %v1199, 4
  %v1206 = vshrl.u32 %v749, 16
  %v1208 = vrot.slane %v1206, 7
  %v1209 = vshll.u32 %v749, 16
  %v1211 = vor.u32 %v1208, %v1209
  %v1212 = vrot.slane %v1208, 4
  %v1214 = vshrl.u32 %v750, 16
  %v1216 = vrot.slane %v1214, 7
  %v1217 = vshll.u32 %v750, 16
  %v1219 = vor.u32 %v1216, %v1217
  %v1220 = vsel %vm762, %v1212, %v1219
  %v1221 = vrot.slane %v1216, 4
  %v1223 = vshrl.u32 %v751, 16
  %v1225 = vrot.slane %v1223, 7
  %v1226 = vshll.u32 %v751, 16
  %v1228 = vor.u32 %v1225, %v1226
  %v1229 = vrot.slane %v1225, 4
  %v1231 = vshrl.u32 %v752, 16
  %v1233 = vrot.slane %v1231, 7
  %v1234 = vshll.u32 %v752, 16
  %v1236 = vor.u32 %v1233, %v1234
  %v1237 = vsel %vm762, %v1229, %v1236
  %v1238 = vrot.slane %v1233, 4
  %v1240 = vshrl.u32 %v753, 16
  %v1242 = vrot.slane %v1240, 7
  %v1243 = vshll.u32 %v753, 16
  %v1245 = vor.u32 %v1242, %v1243
  %v1246 = vrot.slane %v1242, 4
  %v1248 = vshrl.u32 %v754, 16
  %v1250 = vrot.slane %v1248, 7
  %v1251 = vshll.u32 %v754, 16
  %v1253 = vor.u32 %v1250, %v1251
  %v1254 = vsel %vm762, %v1246, %v1253
  %v1255 = vrot.slane %v1250, 4
  %v1257 = vshrl.u32 %v755, 16
  %v1259 = vrot.slane %v1257, 7
  %v1260 = vshll.u32 %v755, 16
  %v1262 = vor.u32 %v1259, %v1260
  %v1263 = vrot.slane %v1259, 4
  %v1265 = vshrl.u32 %v756, 16
  %v1267 = vrot.slane %v1265, 7
  %v1268 = vshll.u32 %v756, 16
  %v1270 = vor.u32 %v1267, %v1268
  %v1271 = vsel %vm762, %v1263, %v1270
  %v1272 = vrot.slane %v1267, 4
  %v1274 = vshrl.u32 %v757, 16
  %v1276 = vrot.slane %v1274, 7
  %v1277 = vshll.u32 %v757, 16
  %v1279 = vor.u32 %v1276, %v1277
  %v1280 = vrot.slane %v1276, 4
  %v1282 = vshrl.u32 %v758, 16
  %v1284 = vrot.slane %v1282, 7
  %v1285 = vshll.u32 %v758, 16
  %v1287 = vor.u32 %v1284, %v1285
  %v1288 = vsel %vm762, %v1280, %v1287
  %v1289 = vrot.slane %v1284, 4
  %v1291 = vshrl.u32 %v759, 16
  %v1293 = vrot.slane %v1291, 7
  %v1294 = vshll.u32 %v759, 16
  %v1296 = vor.u32 %v1293, %v1294
  %v1297 = vrot.slane %v1293, 4
  %v1299 = vshrl.u32 %v760, 16
  %v1301 = vrot.slane %v1299, 7
  %v1302 = vshll.u32 %v760, 16
  %v1304 = vor.u32 %v1301, %v1302
  %v1305 = vsel %vm762, %v1297, %v1304
  %v1306 = vrot.slane %v1301, 4
  %s1403 = scalar_lea.vmem [#allocation2], 12
  %vm1404 = vcmask 27648
  %vm1405 = vmand %vm1404, %vm165
  %v1406 = vld [vmem:[%s1403] sm:$0xf]
  %v1407 = vsel %vm1405, %v769, %v1406
  %1408 = vst [vmem:[%s1403] sm:$0xf] %v1407
  %1409 = vst.msk [vmem:[%s1403 + $0x4] sm:$0xf] %vm39, %v778
  %v1410 = vld [vmem:[%s1403 + $0x8] sm:$0x1]
  %v1411 = vsel %vm56, %v779, %v1410
  %1412 = vst [vmem:[%s1403 + $0x8] sm:$0x1] %v1411
  %v1413 = vld [vmem:[%s1403 + $0xc] sm:$0xf]
  %v1414 = vsel %vm1405, %v786, %v1413
  %1415 = vst [vmem:[%s1403 + $0xc] sm:$0xf] %v1414
  %1416 = vst.msk [vmem:[%s1403 + $0x10] sm:$0xf] %vm39, %v795
  %v1417 = vld [vmem:[%s1403 + $0x14] sm:$0x1]
  %v1418 = vsel %vm56, %v796, %v1417
  %1419 = vst [vmem:[%s1403 + $0x14] sm:$0x1] %v1418
  %v1420 = vld [vmem:[%s1403 + $0x18] sm:$0xf]
  %v1421 = vsel %vm1405, %v803, %v1420
  %1422 = vst [vmem:[%s1403 + $0x18] sm:$0xf] %v1421
  %1423 = vst.msk [vmem:[%s1403 + $0x1c] sm:$0xf] %vm39, %v812
  %v1424 = vld [vmem:[%s1403 + $0x20] sm:$0x1]
  %v1425 = vsel %vm56, %v813, %v1424
  %1426 = vst [vmem:[%s1403 + $0x20] sm:$0x1] %v1425
  %v1427 = vld [vmem:[%s1403 + $0x24] sm:$0xf]
  %v1428 = vsel %vm1405, %v820, %v1427
  %1429 = vst [vmem:[%s1403 + $0x24] sm:$0xf] %v1428
  %1430 = vst.msk [vmem:[%s1403 + $0x28] sm:$0xf] %vm39, %v829
  %v1431 = vld [vmem:[%s1403 + $0x2c] sm:$0x1]
  %v1432 = vsel %vm56, %v830, %v1431
  %1433 = vst [vmem:[%s1403 + $0x2c] sm:$0x1] %v1432
  %v1434 = vld [vmem:[%s1403 + $0x30] sm:$0xf]
  %v1435 = vsel %vm1405, %v837, %v1434
  %1436 = vst [vmem:[%s1403 + $0x30] sm:$0xf] %v1435
  %1437 = vst.msk [vmem:[%s1403 + $0x34] sm:$0xf] %vm39, %v846
  %v1438 = vld [vmem:[%s1403 + $0x38] sm:$0x1]
  %v1439 = vsel %vm56, %v847, %v1438
  %1440 = vst [vmem:[%s1403 + $0x38] sm:$0x1] %v1439
  %v1441 = vld [vmem:[%s1403 + $0x3c] sm:$0xf]
  %v1442 = vsel %vm1405, %v854, %v1441
  %1443 = vst [vmem:[%s1403 + $0x3c] sm:$0xf] %v1442
  %1444 = vst.msk [vmem:[%s1403 + $0x40] sm:$0xf] %vm39, %v863
  %v1445 = vld [vmem:[%s1403 + $0x44] sm:$0x1]
  %v1446 = vsel %vm56, %v864, %v1445
  %1447 = vst [vmem:[%s1403 + $0x44] sm:$0x1] %v1446
  %v1448 = vld [vmem:[%s1403 + $0x48] sm:$0xf]
  %v1449 = vsel %vm1405, %v871, %v1448
  %1450 = vst [vmem:[%s1403 + $0x48] sm:$0xf] %v1449
  %1451 = vst.msk [vmem:[%s1403 + $0x4c] sm:$0xf] %vm39, %v880
  %v1452 = vld [vmem:[%s1403 + $0x50] sm:$0x1]
  %v1453 = vsel %vm56, %v881, %v1452
  %1454 = vst [vmem:[%s1403 + $0x50] sm:$0x1] %v1453
  %v1455 = vld [vmem:[%s1403 + $0x54] sm:$0xf]
  %v1456 = vsel %vm1405, %v888, %v1455
  %1457 = vst [vmem:[%s1403 + $0x54] sm:$0xf] %v1456
  %1458 = vst.msk [vmem:[%s1403 + $0x58] sm:$0xf] %vm39, %v897
  %v1459 = vld [vmem:[%s1403 + $0x5c] sm:$0x1]
  %v1460 = vsel %vm56, %v898, %v1459
  %1461 = vst [vmem:[%s1403 + $0x5c] sm:$0x1] %v1460
  %v1462 = vld [vmem:[%s1403 + $0x60] sm:$0xf]
  %v1463 = vsel %vm1405, %v905, %v1462
  %1464 = vst [vmem:[%s1403 + $0x60] sm:$0xf] %v1463
  %1465 = vst.msk [vmem:[%s1403 + $0x64] sm:$0xf] %vm39, %v914
  %v1466 = vld [vmem:[%s1403 + $0x68] sm:$0x1]
  %v1467 = vsel %vm56, %v915, %v1466
  %1468 = vst [vmem:[%s1403 + $0x68] sm:$0x1] %v1467
  %v1469 = vld [vmem:[%s1403 + $0x6c] sm:$0xf]
  %v1470 = vsel %vm1405, %v922, %v1469
  %1471 = vst [vmem:[%s1403 + $0x6c] sm:$0xf] %v1470
  %1472 = vst.msk [vmem:[%s1403 + $0x70] sm:$0xf] %vm39, %v931
  %v1473 = vld [vmem:[%s1403 + $0x74] sm:$0x1]
  %v1474 = vsel %vm56, %v932, %v1473
  %1475 = vst [vmem:[%s1403 + $0x74] sm:$0x1] %v1474
  %v1476 = vld [vmem:[%s1403 + $0x78] sm:$0xf]
  %v1477 = vsel %vm1405, %v939, %v1476
  %1478 = vst [vmem:[%s1403 + $0x78] sm:$0xf] %v1477
  %1479 = vst.msk [vmem:[%s1403 + $0x7c] sm:$0xf] %vm39, %v948
  %v1480 = vld [vmem:[%s1403 + $0x80] sm:$0x1]
  %v1481 = vsel %vm56, %v949, %v1480
  %1482 = vst [vmem:[%s1403 + $0x80] sm:$0x1] %v1481
  %v1483 = vld [vmem:[%s1403 + $0x84] sm:$0xf]
  %v1484 = vsel %vm1405, %v956, %v1483
  %1485 = vst [vmem:[%s1403 + $0x84] sm:$0xf] %v1484
  %1486 = vst.msk [vmem:[%s1403 + $0x88] sm:$0xf] %vm39, %v965
  %v1487 = vld [vmem:[%s1403 + $0x8c] sm:$0x1]
  %v1488 = vsel %vm56, %v966, %v1487
  %1489 = vst [vmem:[%s1403 + $0x8c] sm:$0x1] %v1488
  %v1490 = vld [vmem:[%s1403 + $0x90] sm:$0xf]
  %v1491 = vsel %vm1405, %v973, %v1490
  %1492 = vst [vmem:[%s1403 + $0x90] sm:$0xf] %v1491
  %1493 = vst.msk [vmem:[%s1403 + $0x94] sm:$0xf] %vm39, %v982
  %v1494 = vld [vmem:[%s1403 + $0x98] sm:$0x1]
  %v1495 = vsel %vm56, %v983, %v1494
  %1496 = vst [vmem:[%s1403 + $0x98] sm:$0x1] %v1495
  %v1497 = vld [vmem:[%s1403 + $0x9c] sm:$0xf]
  %v1498 = vsel %vm1405, %v990, %v1497
  %1499 = vst [vmem:[%s1403 + $0x9c] sm:$0xf] %v1498
  %1500 = vst.msk [vmem:[%s1403 + $0xa0] sm:$0xf] %vm39, %v999
  %v1501 = vld [vmem:[%s1403 + $0xa4] sm:$0x1]
  %v1502 = vsel %vm56, %v1000, %v1501
  %1503 = vst [vmem:[%s1403 + $0xa4] sm:$0x1] %v1502
  %v1504 = vld [vmem:[%s1403 + $0xa8] sm:$0xf]
  %v1505 = vsel %vm1405, %v1007, %v1504
  %1506 = vst [vmem:[%s1403 + $0xa8] sm:$0xf] %v1505
  %1507 = vst.msk [vmem:[%s1403 + $0xac] sm:$0xf] %vm39, %v1016
  %v1508 = vld [vmem:[%s1403 + $0xb0] sm:$0x1]
  %v1509 = vsel %vm56, %v1017, %v1508
  %1510 = vst [vmem:[%s1403 + $0xb0] sm:$0x1] %v1509
  %v1511 = vld [vmem:[%s1403 + $0xb4] sm:$0xf]
  %v1512 = vsel %vm1405, %v1024, %v1511
  %1513 = vst [vmem:[%s1403 + $0xb4] sm:$0xf] %v1512
  %1514 = vst.msk [vmem:[%s1403 + $0xb8] sm:$0xf] %vm39, %v1033
  %v1515 = vld [vmem:[%s1403 + $0xbc] sm:$0x1]
  %v1516 = vsel %vm56, %v1034, %v1515
  %1517 = vst [vmem:[%s1403 + $0xbc] sm:$0x1] %v1516
  %v1518 = vld [vmem:[%s1403 + $0xd8] sm:$0xf]
  %v1519 = vsel %vm1405, %v1041, %v1518
  %1520 = vst [vmem:[%s1403 + $0xd8] sm:$0xf] %v1519
  %1521 = vst.msk [vmem:[%s1403 + $0xdc] sm:$0xf] %vm39, %v1050
  %v1522 = vld [vmem:[%s1403 + $0xe0] sm:$0x1]
  %v1523 = vsel %vm56, %v1051, %v1522
  %1524 = vst [vmem:[%s1403 + $0xe0] sm:$0x1] %v1523
  %v1525 = vld [vmem:[%s1403 + $0xe4] sm:$0xf]
  %v1526 = vsel %vm1405, %v1058, %v1525
  %1527 = vst [vmem:[%s1403 + $0xe4] sm:$0xf] %v1526
  %1528 = vst.msk [vmem:[%s1403 + $0xe8] sm:$0xf] %vm39, %v1067
  %v1529 = vld [vmem:[%s1403 + $0xec] sm:$0x1]
  %v1530 = vsel %vm56, %v1068, %v1529
  %1531 = vst [vmem:[%s1403 + $0xec] sm:$0x1] %v1530
  %v1532 = vld [vmem:[%s1403 + $0xf0] sm:$0xf]
  %v1533 = vsel %vm1405, %v1075, %v1532
  %1534 = vst [vmem:[%s1403 + $0xf0] sm:$0xf] %v1533
  %1535 = vst.msk [vmem:[%s1403 + $0xf4] sm:$0xf] %vm39, %v1084
  %v1536 = vld [vmem:[%s1403 + $0xf8] sm:$0x1]
  %v1537 = vsel %vm56, %v1085, %v1536
  %1538 = vst [vmem:[%s1403 + $0xf8] sm:$0x1] %v1537
  %v1539 = vld [vmem:[%s1403 + $0xfc] sm:$0xf]
  %v1540 = vsel %vm1405, %v1092, %v1539
  %1541 = vst [vmem:[%s1403 + $0xfc] sm:$0xf] %v1540
  %1542 = vst.msk [vmem:[%s1403 + $0x100] sm:$0xf] %vm39, %v1101
  %v1543 = vld [vmem:[%s1403 + $0x104] sm:$0x1]
  %v1544 = vsel %vm56, %v1102, %v1543
  %1545 = vst [vmem:[%s1403 + $0x104] sm:$0x1] %v1544
  %v1546 = vld [vmem:[%s1403 + $0x108] sm:$0xf]
  %v1547 = vsel %vm1405, %v1109, %v1546
  %1548 = vst [vmem:[%s1403 + $0x108] sm:$0xf] %v1547
  %1549 = vst.msk [vmem:[%s1403 + $0x10c] sm:$0xf] %vm39, %v1118
  %v1550 = vld [vmem:[%s1403 + $0x110] sm:$0x1]
  %v1551 = vsel %vm56, %v1119, %v1550
  %1552 = vst [vmem:[%s1403 + $0x110] sm:$0x1] %v1551
  %v1553 = vld [vmem:[%s1403 + $0x114] sm:$0xf]
  %v1554 = vsel %vm1405, %v1126, %v1553
  %1555 = vst [vmem:[%s1403 + $0x114] sm:$0xf] %v1554
  %1556 = vst.msk [vmem:[%s1403 + $0x118] sm:$0xf] %vm39, %v1135
  %v1557 = vld [vmem:[%s1403 + $0x11c] sm:$0x1]
  %v1558 = vsel %vm56, %v1136, %v1557
  %1559 = vst [vmem:[%s1403 + $0x11c] sm:$0x1] %v1558
  %v1560 = vld [vmem:[%s1403 + $0x120] sm:$0xf]
  %v1561 = vsel %vm1405, %v1143, %v1560
  %1562 = vst [vmem:[%s1403 + $0x120] sm:$0xf] %v1561
  %1563 = vst.msk [vmem:[%s1403 + $0x124] sm:$0xf] %vm39, %v1152
  %v1564 = vld [vmem:[%s1403 + $0x128] sm:$0x1]
  %v1565 = vsel %vm56, %v1153, %v1564
  %1566 = vst [vmem:[%s1403 + $0x128] sm:$0x1] %v1565
  %v1567 = vld [vmem:[%s1403 + $0x12c] sm:$0xf]
  %v1568 = vsel %vm1405, %v1160, %v1567
  %1569 = vst [vmem:[%s1403 + $0x12c] sm:$0xf] %v1568
  %1570 = vst.msk [vmem:[%s1403 + $0x130] sm:$0xf] %vm39, %v1169
  %v1571 = vld [vmem:[%s1403 + $0x134] sm:$0x1]
  %v1572 = vsel %vm56, %v1170, %v1571
  %1573 = vst [vmem:[%s1403 + $0x134] sm:$0x1] %v1572
  %v1574 = vld [vmem:[%s1403 + $0x138] sm:$0xf]
  %v1575 = vsel %vm1405, %v1177, %v1574
  %1576 = vst [vmem:[%s1403 + $0x138] sm:$0xf] %v1575
  %1577 = vst.msk [vmem:[%s1403 + $0x13c] sm:$0xf] %vm39, %v1186
  %v1578 = vld [vmem:[%s1403 + $0x140] sm:$0x1]
  %v1579 = vsel %vm56, %v1187, %v1578
  %1580 = vst [vmem:[%s1403 + $0x140] sm:$0x1] %v1579
  %v1581 = vld [vmem:[%s1403 + $0x144] sm:$0xf]
  %v1582 = vsel %vm1405, %v1194, %v1581
  %1583 = vst [vmem:[%s1403 + $0x144] sm:$0xf] %v1582
  %1584 = vst.msk [vmem:[%s1403 + $0x148] sm:$0xf] %vm39, %v1203
  %v1585 = vld [vmem:[%s1403 + $0x14c] sm:$0x1]
  %v1586 = vsel %vm56, %v1204, %v1585
  %1587 = vst [vmem:[%s1403 + $0x14c] sm:$0x1] %v1586
  %v1588 = vld [vmem:[%s1403 + $0x150] sm:$0xf]
  %v1589 = vsel %vm1405, %v1211, %v1588
  %1590 = vst [vmem:[%s1403 + $0x150] sm:$0xf] %v1589
  %1591 = vst.msk [vmem:[%s1403 + $0x154] sm:$0xf] %vm39, %v1220
  %v1592 = vld [vmem:[%s1403 + $0x158] sm:$0x1]
  %v1593 = vsel %vm56, %v1221, %v1592
  %1594 = vst [vmem:[%s1403 + $0x158] sm:$0x1] %v1593
  %v1595 = vld [vmem:[%s1403 + $0x15c] sm:$0xf]
  %v1596 = vsel %vm1405, %v1228, %v1595
  %1597 = vst [vmem:[%s1403 + $0x15c] sm:$0xf] %v1596
  %1598 = vst.msk [vmem:[%s1403 + $0x160] sm:$0xf] %vm39, %v1237
  %v1599 = vld [vmem:[%s1403 + $0x164] sm:$0x1]
  %v1600 = vsel %vm56, %v1238, %v1599
  %1601 = vst [vmem:[%s1403 + $0x164] sm:$0x1] %v1600
  %v1602 = vld [vmem:[%s1403 + $0x168] sm:$0xf]
  %v1603 = vsel %vm1405, %v1245, %v1602
  %1604 = vst [vmem:[%s1403 + $0x168] sm:$0xf] %v1603
  %1605 = vst.msk [vmem:[%s1403 + $0x16c] sm:$0xf] %vm39, %v1254
  %v1606 = vld [vmem:[%s1403 + $0x170] sm:$0x1]
  %v1607 = vsel %vm56, %v1255, %v1606
  %1608 = vst [vmem:[%s1403 + $0x170] sm:$0x1] %v1607
  %v1609 = vld [vmem:[%s1403 + $0x174] sm:$0xf]
  %v1610 = vsel %vm1405, %v1262, %v1609
  %1611 = vst [vmem:[%s1403 + $0x174] sm:$0xf] %v1610
  %1612 = vst.msk [vmem:[%s1403 + $0x178] sm:$0xf] %vm39, %v1271
  %v1613 = vld [vmem:[%s1403 + $0x17c] sm:$0x1]
  %v1614 = vsel %vm56, %v1272, %v1613
  %1615 = vst [vmem:[%s1403 + $0x17c] sm:$0x1] %v1614
  %v1616 = vld [vmem:[%s1403 + $0x180] sm:$0xf]
  %v1617 = vsel %vm1405, %v1279, %v1616
  %1618 = vst [vmem:[%s1403 + $0x180] sm:$0xf] %v1617
  %1619 = vst.msk [vmem:[%s1403 + $0x184] sm:$0xf] %vm39, %v1288
  %v1620 = vld [vmem:[%s1403 + $0x188] sm:$0x1]
  %v1621 = vsel %vm56, %v1289, %v1620
  %1622 = vst [vmem:[%s1403 + $0x188] sm:$0x1] %v1621
  %v1623 = vld [vmem:[%s1403 + $0x18c] sm:$0xf]
  %v1624 = vsel %vm1405, %v1296, %v1623
  %1625 = vst [vmem:[%s1403 + $0x18c] sm:$0xf] %v1624
  %1626 = vst.msk [vmem:[%s1403 + $0x190] sm:$0xf] %vm39, %v1305
  %v1627 = vld [vmem:[%s1403 + $0x194] sm:$0x1]
  %v1628 = vsel %vm56, %v1306, %v1627
  %1629 = vst [vmem:[%s1403 + $0x194] sm:$0x1] %v1628
  %v1630 = vld [vmem:[#allocation2] sm:$0xf]
  %v1631 = vld [vmem:[#allocation2 + $0x4] sm:$0xf]
  %v1632 = vld [vmem:[#allocation2 + $0xc] sm:$0xf]
  %v1633 = vld [vmem:[#allocation2 + $0x10] sm:$0xf]
  %v1634 = vld [vmem:[#allocation2 + $0x18] sm:$0xf]
  %v1635 = vld [vmem:[#allocation2 + $0x1c] sm:$0xf]
  %v1636 = vld [vmem:[#allocation2 + $0x24] sm:$0xf]
  %v1637 = vld [vmem:[#allocation2 + $0x28] sm:$0xf]
  %v1638 = vld [vmem:[#allocation2 + $0x30] sm:$0xf]
  %v1639 = vld [vmem:[#allocation2 + $0x34] sm:$0xf]
  %v1640 = vld [vmem:[#allocation2 + $0x3c] sm:$0xf]
  %v1641 = vld [vmem:[#allocation2 + $0x40] sm:$0xf]
  %v1642 = vld [vmem:[#allocation2 + $0x48] sm:$0xf]
  %v1643 = vld [vmem:[#allocation2 + $0x4c] sm:$0xf]
  %v1644 = vld [vmem:[#allocation2 + $0x54] sm:$0xf]
  %v1645 = vld [vmem:[#allocation2 + $0x58] sm:$0xf]
  %v1646 = vld [vmem:[#allocation2 + $0x60] sm:$0xf]
  %v1647 = vld [vmem:[#allocation2 + $0x64] sm:$0xf]
  %v1648 = vld [vmem:[#allocation2 + $0x6c] sm:$0xf]
  %v1649 = vld [vmem:[#allocation2 + $0x70] sm:$0xf]
  %v1650 = vld [vmem:[#allocation2 + $0x78] sm:$0xf]
  %v1651 = vld [vmem:[#allocation2 + $0x7c] sm:$0xf]
  %v1652 = vld [vmem:[#allocation2 + $0x84] sm:$0xf]
  %v1653 = vld [vmem:[#allocation2 + $0x88] sm:$0xf]
  %v1654 = vld [vmem:[#allocation2 + $0x90] sm:$0xf]
  %v1655 = vld [vmem:[#allocation2 + $0x94] sm:$0xf]
  %v1656 = vld [vmem:[#allocation2 + $0x9c] sm:$0xf]
  %v1657 = vld [vmem:[#allocation2 + $0xa0] sm:$0xf]
  %v1658 = vld [vmem:[#allocation2 + $0xa8] sm:$0xf]
  %v1659 = vld [vmem:[#allocation2 + $0xac] sm:$0xf]
  %v1660 = vld [vmem:[#allocation2 + $0xb4] sm:$0xf]
  %v1661 = vld [vmem:[#allocation2 + $0xb8] sm:$0xf]
  %v1662 = vld [vmem:[#allocation2 + $0xd8] sm:$0xf]
  %v1663 = vld [vmem:[#allocation2 + $0xdc] sm:$0xf]
  %v1664 = vld [vmem:[#allocation2 + $0xe4] sm:$0xf]
  %v1665 = vld [vmem:[#allocation2 + $0xe8] sm:$0xf]
  %v1666 = vld [vmem:[#allocation2 + $0xf0] sm:$0xf]
  %v1667 = vld [vmem:[#allocation2 + $0xf4] sm:$0xf]
  %v1668 = vld [vmem:[#allocation2 + $0xfc] sm:$0xf]
  %v1669 = vld [vmem:[#allocation2 + $0x100] sm:$0xf]
  %v1670 = vld [vmem:[#allocation2 + $0x108] sm:$0xf]
  %v1671 = vld [vmem:[#allocation2 + $0x10c] sm:$0xf]
  %v1672 = vld [vmem:[#allocation2 + $0x114] sm:$0xf]
  %v1673 = vld [vmem:[#allocation2 + $0x118] sm:$0xf]
  %v1674 = vld [vmem:[#allocation2 + $0x120] sm:$0xf]
  %v1675 = vld [vmem:[#allocation2 + $0x124] sm:$0xf]
  %v1676 = vld [vmem:[#allocation2 + $0x12c] sm:$0xf]
  %v1677 = vld [vmem:[#allocation2 + $0x130] sm:$0xf]
  %v1678 = vld [vmem:[#allocation2 + $0x138] sm:$0xf]
  %v1679 = vld [vmem:[#allocation2 + $0x13c] sm:$0xf]
  %v1680 = vld [vmem:[#allocation2 + $0x144] sm:$0xf]
  %v1681 = vld [vmem:[#allocation2 + $0x148] sm:$0xf]
  %v1682 = vld [vmem:[#allocation2 + $0x150] sm:$0xf]
  %v1683 = vld [vmem:[#allocation2 + $0x154] sm:$0xf]
  %v1684 = vld [vmem:[#allocation2 + $0x15c] sm:$0xf]
  %v1685 = vld [vmem:[#allocation2 + $0x160] sm:$0xf]
  %v1686 = vld [vmem:[#allocation2 + $0x168] sm:$0xf]
  %v1687 = vld [vmem:[#allocation2 + $0x16c] sm:$0xf]
  %v1688 = vld [vmem:[#allocation2 + $0x174] sm:$0xf]
  %v1689 = vld [vmem:[#allocation2 + $0x178] sm:$0xf]
  %v1690 = vld [vmem:[#allocation2 + $0x180] sm:$0xf]
  %v1691 = vld [vmem:[#allocation2 + $0x184] sm:$0xf]
  %v1692 = vld [vmem:[#allocation2 + $0x18c] sm:$0xf]
  %v1693 = vld [vmem:[#allocation2 + $0x190] sm:$0xf]
  %1694 = vst.msk [vmem:[#allocation4] sm:$0xf] %vm39, %v1630
  %1695 = vst.msk [vmem:[#allocation4 + $0x4] sm:$0xf] %vm39, %v1631
  %1696 = vst.msk [vmem:[#allocation4 + $0x8] sm:$0xf] %vm39, %v1632
  %1697 = vst.msk [vmem:[#allocation4 + $0xc] sm:$0xf] %vm39, %v1633
  %1698 = vst.msk [vmem:[#allocation4 + $0x10] sm:$0xf] %vm39, %v1634
  %1699 = vst.msk [vmem:[#allocation4 + $0x14] sm:$0xf] %vm39, %v1635
  %1700 = vst.msk [vmem:[#allocation4 + $0x18] sm:$0xf] %vm39, %v1636
  %1701 = vst.msk [vmem:[#allocation4 + $0x1c] sm:$0xf] %vm39, %v1637
  %1702 = vst.msk [vmem:[#allocation4 + $0x20] sm:$0xf] %vm39, %v1638
  %1703 = vst.msk [vmem:[#allocation4 + $0x24] sm:$0xf] %vm39, %v1639
  %1704 = vst.msk [vmem:[#allocation4 + $0x28] sm:$0xf] %vm39, %v1640
  %1705 = vst.msk [vmem:[#allocation4 + $0x2c] sm:$0xf] %vm39, %v1641
  %1706 = vst.msk [vmem:[#allocation4 + $0x30] sm:$0xf] %vm39, %v1642
  %1707 = vst.msk [vmem:[#allocation4 + $0x34] sm:$0xf] %vm39, %v1643
  %1708 = vst.msk [vmem:[#allocation4 + $0x38] sm:$0xf] %vm39, %v1644
  %1709 = vst.msk [vmem:[#allocation4 + $0x3c] sm:$0xf] %vm39, %v1645
  %1710 = vst.msk [vmem:[#allocation4 + $0x40] sm:$0xf] %vm39, %v1646
  %1711 = vst.msk [vmem:[#allocation4 + $0x44] sm:$0xf] %vm39, %v1647
  %1712 = vst.msk [vmem:[#allocation4 + $0x48] sm:$0xf] %vm39, %v1648
  %1713 = vst.msk [vmem:[#allocation4 + $0x4c] sm:$0xf] %vm39, %v1649
  %1714 = vst.msk [vmem:[#allocation4 + $0x50] sm:$0xf] %vm39, %v1650
  %1715 = vst.msk [vmem:[#allocation4 + $0x54] sm:$0xf] %vm39, %v1651
  %1716 = vst.msk [vmem:[#allocation4 + $0x58] sm:$0xf] %vm39, %v1652
  %1717 = vst.msk [vmem:[#allocation4 + $0x5c] sm:$0xf] %vm39, %v1653
  %1718 = vst.msk [vmem:[#allocation4 + $0x60] sm:$0xf] %vm39, %v1654
  %1719 = vst.msk [vmem:[#allocation4 + $0x64] sm:$0xf] %vm39, %v1655
  %1720 = vst.msk [vmem:[#allocation4 + $0x68] sm:$0xf] %vm39, %v1656
  %1721 = vst.msk [vmem:[#allocation4 + $0x6c] sm:$0xf] %vm39, %v1657
  %1722 = vst.msk [vmem:[#allocation4 + $0x70] sm:$0xf] %vm39, %v1658
  %1723 = vst.msk [vmem:[#allocation4 + $0x74] sm:$0xf] %vm39, %v1659
  %1724 = vst.msk [vmem:[#allocation4 + $0x78] sm:$0xf] %vm39, %v1660
  %1725 = vst.msk [vmem:[#allocation4 + $0x7c] sm:$0xf] %vm39, %v1661
  %1726 = vst.msk [vmem:[#allocation4 + $0x80] sm:$0xf] %vm39, %v1662
  %1727 = vst.msk [vmem:[#allocation4 + $0x84] sm:$0xf] %vm39, %v1663
  %1728 = vst.msk [vmem:[#allocation4 + $0x88] sm:$0xf] %vm39, %v1664
  %1729 = vst.msk [vmem:[#allocation4 + $0x8c] sm:$0xf] %vm39, %v1665
  %1730 = vst.msk [vmem:[#allocation4 + $0x90] sm:$0xf] %vm39, %v1666
  %1731 = vst.msk [vmem:[#allocation4 + $0x94] sm:$0xf] %vm39, %v1667
  %1732 = vst.msk [vmem:[#allocation4 + $0x98] sm:$0xf] %vm39, %v1668
  %1733 = vst.msk [vmem:[#allocation4 + $0x9c] sm:$0xf] %vm39, %v1669
  %1734 = vst.msk [vmem:[#allocation4 + $0xa0] sm:$0xf] %vm39, %v1670
  %1735 = vst.msk [vmem:[#allocation4 + $0xa4] sm:$0xf] %vm39, %v1671
  %1736 = vst.msk [vmem:[#allocation4 + $0xa8] sm:$0xf] %vm39, %v1672
  %1737 = vst.msk [vmem:[#allocation4 + $0xac] sm:$0xf] %vm39, %v1673
  %1738 = vst.msk [vmem:[#allocation4 + $0xb0] sm:$0xf] %vm39, %v1674
  %1739 = vst.msk [vmem:[#allocation4 + $0xb4] sm:$0xf] %vm39, %v1675
  %1740 = vst.msk [vmem:[#allocation4 + $0xb8] sm:$0xf] %vm39, %v1676
  %1741 = vst.msk [vmem:[#allocation4 + $0xbc] sm:$0xf] %vm39, %v1677
  %1742 = vst.msk [vmem:[#allocation4 + $0xc0] sm:$0xf] %vm39, %v1678
  %1743 = vst.msk [vmem:[#allocation4 + $0xc4] sm:$0xf] %vm39, %v1679
  %1744 = vst.msk [vmem:[#allocation4 + $0xc8] sm:$0xf] %vm39, %v1680
  %1745 = vst.msk [vmem:[#allocation4 + $0xcc] sm:$0xf] %vm39, %v1681
  %1746 = vst.msk [vmem:[#allocation4 + $0xd0] sm:$0xf] %vm39, %v1682
  %1747 = vst.msk [vmem:[#allocation4 + $0xd4] sm:$0xf] %vm39, %v1683
  %1748 = vst.msk [vmem:[#allocation4 + $0xd8] sm:$0xf] %vm39, %v1684
  %1749 = vst.msk [vmem:[#allocation4 + $0xdc] sm:$0xf] %vm39, %v1685
  %1750 = vst.msk [vmem:[#allocation4 + $0xe0] sm:$0xf] %vm39, %v1686
  %1751 = vst.msk [vmem:[#allocation4 + $0xe4] sm:$0xf] %vm39, %v1687
  %1752 = vst.msk [vmem:[#allocation4 + $0xe8] sm:$0xf] %vm39, %v1688
  %1753 = vst.msk [vmem:[#allocation4 + $0xec] sm:$0xf] %vm39, %v1689
  %1754 = vst.msk [vmem:[#allocation4 + $0xf0] sm:$0xf] %vm39, %v1690
  %1755 = vst.msk [vmem:[#allocation4 + $0xf4] sm:$0xf] %vm39, %v1691
  %1756 = vst.msk [vmem:[#allocation4 + $0xf8] sm:$0xf] %vm39, %v1692
  %1757 = vst.msk [vmem:[#allocation4 + $0xfc] sm:$0xf] %vm39, %v1693
  %v1758 = vld [vmem:[#allocation2] sm:$0xf]
  %v1759 = vld [vmem:[#allocation2 + $0x4] sm:$0xf]
  %v1760 = vld [vmem:[#allocation2 + $0x8] sm:$0x1]
  %v1761 = vld [vmem:[#allocation2 + $0xc] sm:$0xf]
  %v1762 = vld [vmem:[#allocation2 + $0x10] sm:$0xf]
  %v1763 = vld [vmem:[#allocation2 + $0x14] sm:$0x1]
  %v1764 = vld [vmem:[#allocation2 + $0x18] sm:$0xf]
  %v1765 = vld [vmem:[#allocation2 + $0x1c] sm:$0xf]
  %v1766 = vld [vmem:[#allocation2 + $0x20] sm:$0x1]
  %v1767 = vld [vmem:[#allocation2 + $0x24] sm:$0xf]
  %v1768 = vld [vmem:[#allocation2 + $0x28] sm:$0xf]
  %v1769 = vld [vmem:[#allocation2 + $0x2c] sm:$0x1]
  %v1770 = vld [vmem:[#allocation2 + $0x30] sm:$0xf]
  %v1771 = vld [vmem:[#allocation2 + $0x34] sm:$0xf]
  %v1772 = vld [vmem:[#allocation2 + $0x38] sm:$0x1]
  %v1773 = vld [vmem:[#allocation2 + $0x3c] sm:$0xf]
  %v1774 = vld [vmem:[#allocation2 + $0x40] sm:$0xf]
  %v1775 = vld [vmem:[#allocation2 + $0x44] sm:$0x1]
  %v1776 = vld [vmem:[#allocation2 + $0x48] sm:$0xf]
  %v1777 = vld [vmem:[#allocation2 + $0x4c] sm:$0xf]
  %v1778 = vld [vmem:[#allocation2 + $0x50] sm:$0x1]
  %v1779 = vld [vmem:[#allocation2 + $0x54] sm:$0xf]
  %v1780 = vld [vmem:[#allocation2 + $0x58] sm:$0xf]
  %v1781 = vld [vmem:[#allocation2 + $0x5c] sm:$0x1]
  %v1782 = vld [vmem:[#allocation2 + $0x60] sm:$0xf]
  %v1783 = vld [vmem:[#allocation2 + $0x64] sm:$0xf]
  %v1784 = vld [vmem:[#allocation2 + $0x68] sm:$0x1]
  %v1785 = vld [vmem:[#allocation2 + $0x6c] sm:$0xf]
  %v1786 = vld [vmem:[#allocation2 + $0x70] sm:$0xf]
  %v1787 = vld [vmem:[#allocation2 + $0x74] sm:$0x1]
  %v1788 = vld [vmem:[#allocation2 + $0x78] sm:$0xf]
  %v1789 = vld [vmem:[#allocation2 + $0x7c] sm:$0xf]
  %v1790 = vld [vmem:[#allocation2 + $0x80] sm:$0x1]
  %v1791 = vld [vmem:[#allocation2 + $0x84] sm:$0xf]
  %v1792 = vld [vmem:[#allocation2 + $0x88] sm:$0xf]
  %v1793 = vld [vmem:[#allocation2 + $0x8c] sm:$0x1]
  %v1794 = vld [vmem:[#allocation2 + $0x90] sm:$0xf]
  %v1795 = vld [vmem:[#allocation2 + $0x94] sm:$0xf]
  %v1796 = vld [vmem:[#allocation2 + $0x98] sm:$0x1]
  %v1797 = vld [vmem:[#allocation2 + $0x9c] sm:$0xf]
  %v1798 = vld [vmem:[#allocation2 + $0xa0] sm:$0xf]
  %v1799 = vld [vmem:[#allocation2 + $0xa4] sm:$0x1]
  %v1800 = vld [vmem:[#allocation2 + $0xa8] sm:$0xf]
  %v1801 = vld [vmem:[#allocation2 + $0xac] sm:$0xf]
  %v1802 = vld [vmem:[#allocation2 + $0xb0] sm:$0x1]
  %v1803 = vld [vmem:[#allocation2 + $0xb4] sm:$0xf]
  %v1804 = vld [vmem:[#allocation2 + $0xb8] sm:$0xf]
  %v1805 = vld [vmem:[#allocation2 + $0xbc] sm:$0x1]
  %v1806 = vld [vmem:[#allocation2 + $0xd8] sm:$0xf]
  %v1807 = vld [vmem:[#allocation2 + $0xdc] sm:$0xf]
  %v1808 = vld [vmem:[#allocation2 + $0xe0] sm:$0x1]
  %v1809 = vld [vmem:[#allocation2 + $0xe4] sm:$0xf]
  %v1810 = vld [vmem:[#allocation2 + $0xe8] sm:$0xf]
  %v1811 = vld [vmem:[#allocation2 + $0xec] sm:$0x1]
  %v1812 = vld [vmem:[#allocation2 + $0xf0] sm:$0xf]
  %v1813 = vld [vmem:[#allocation2 + $0xf4] sm:$0xf]
  %v1814 = vld [vmem:[#allocation2 + $0xf8] sm:$0x1]
  %v1815 = vld [vmem:[#allocation2 + $0xfc] sm:$0xf]
  %v1816 = vld [vmem:[#allocation2 + $0x100] sm:$0xf]
  %v1817 = vld [vmem:[#allocation2 + $0x104] sm:$0x1]
  %v1818 = vld [vmem:[#allocation2 + $0x108] sm:$0xf]
  %v1819 = vld [vmem:[#allocation2 + $0x10c] sm:$0xf]
  %v1820 = vld [vmem:[#allocation2 + $0x110] sm:$0x1]
  %v1821 = vld [vmem:[#allocation2 + $0x114] sm:$0xf]
  %v1822 = vld [vmem:[#allocation2 + $0x118] sm:$0xf]
  %v1823 = vld [vmem:[#allocation2 + $0x11c] sm:$0x1]
  %v1824 = vld [vmem:[#allocation2 + $0x120] sm:$0xf]
  %v1825 = vld [vmem:[#allocation2 + $0x124] sm:$0xf]
  %v1826 = vld [vmem:[#allocation2 + $0x128] sm:$0x1]
  %v1827 = vld [vmem:[#allocation2 + $0x12c] sm:$0xf]
  %v1828 = vld [vmem:[#allocation2 + $0x130] sm:$0xf]
  %v1829 = vld [vmem:[#allocation2 + $0x134] sm:$0x1]
  %v1830 = vld [vmem:[#allocation2 + $0x138] sm:$0xf]
  %v1831 = vld [vmem:[#allocation2 + $0x13c] sm:$0xf]
  %v1832 = vld [vmem:[#allocation2 + $0x140] sm:$0x1]
  %v1833 = vld [vmem:[#allocation2 + $0x144] sm:$0xf]
  %v1834 = vld [vmem:[#allocation2 + $0x148] sm:$0xf]
  %v1835 = vld [vmem:[#allocation2 + $0x14c] sm:$0x1]
  %v1836 = vld [vmem:[#allocation2 + $0x150] sm:$0xf]
  %v1837 = vld [vmem:[#allocation2 + $0x154] sm:$0xf]
  %v1838 = vld [vmem:[#allocation2 + $0x158] sm:$0x1]
  %v1839 = vld [vmem:[#allocation2 + $0x15c] sm:$0xf]
  %v1840 = vld [vmem:[#allocation2 + $0x160] sm:$0xf]
  %v1841 = vld [vmem:[#allocation2 + $0x164] sm:$0x1]
  %v1842 = vld [vmem:[#allocation2 + $0x168] sm:$0xf]
  %v1843 = vld [vmem:[#allocation2 + $0x16c] sm:$0xf]
  %v1844 = vld [vmem:[#allocation2 + $0x170] sm:$0x1]
  %v1845 = vld [vmem:[#allocation2 + $0x174] sm:$0xf]
  %v1846 = vld [vmem:[#allocation2 + $0x178] sm:$0xf]
  %v1847 = vld [vmem:[#allocation2 + $0x17c] sm:$0x1]
  %v1848 = vld [vmem:[#allocation2 + $0x180] sm:$0xf]
  %v1849 = vld [vmem:[#allocation2 + $0x184] sm:$0xf]
  %v1850 = vld [vmem:[#allocation2 + $0x188] sm:$0x1]
  %v1851 = vld [vmem:[#allocation2 + $0x18c] sm:$0xf]
  %v1852 = vld [vmem:[#allocation2 + $0x190] sm:$0xf]
  %v1853 = vld [vmem:[#allocation2 + $0x194] sm:$0x1]
  %vm1854 = vsmask.f32 3328
  %vm1855 = vsmask.f32 7440
  %vm1856 = vmor %vm1854, %vm1855
  %v1858 = vshrl.u32 %v1758, 16
  %v1860 = vrot.slane %v1858, 4
  %v1861 = vshll.u32 %v1758, 16
  %v1863 = vrot.slane %v1861, 5
  %v1864 = vor.u32 %v1860, %v1863
  %v1865 = vrot.slane %v1864, 4
  %v1867 = vshll.u32 %v1759, 16
  %v1869 = vrot.slane %v1867, 5
  %v1870 = vsel %vm1856, %v1865, %v1869
  %v1871 = vshrl.u32 %v1759, 16
  %v1873 = vrot.slane %v1871, 4
  %v1874 = vor.u32 %v1873, %v1869
  %v1875 = vrot.slane %v1874, 4
  %v1877 = vshll.u32 %v1760, 16
  %v1879 = vrot.slane %v1877, 5
  %v1880 = vsel %vm1856, %v1875, %v1879
  %v1882 = vshrl.u32 %v1761, 16
  %v1884 = vrot.slane %v1882, 4
  %v1885 = vshll.u32 %v1761, 16
  %v1887 = vrot.slane %v1885, 5
  %v1888 = vor.u32 %v1884, %v1887
  %v1889 = vrot.slane %v1888, 4
  %v1891 = vshll.u32 %v1762, 16
  %v1893 = vrot.slane %v1891, 5
  %v1894 = vsel %vm1856, %v1889, %v1893
  %v1895 = vshrl.u32 %v1762, 16
  %v1897 = vrot.slane %v1895, 4
  %v1898 = vor.u32 %v1897, %v1893
  %v1899 = vrot.slane %v1898, 4
  %v1901 = vshll.u32 %v1763, 16
  %v1903 = vrot.slane %v1901, 5
  %v1904 = vsel %vm1856, %v1899, %v1903
  %v1906 = vshrl.u32 %v1764, 16
  %v1908 = vrot.slane %v1906, 4
  %v1909 = vshll.u32 %v1764, 16
  %v1911 = vrot.slane %v1909, 5
  %v1912 = vor.u32 %v1908, %v1911
  %v1913 = vrot.slane %v1912, 4
  %v1915 = vshll.u32 %v1765, 16
  %v1917 = vrot.slane %v1915, 5
  %v1918 = vsel %vm1856, %v1913, %v1917
  %v1919 = vshrl.u32 %v1765, 16
  %v1921 = vrot.slane %v1919, 4
  %v1922 = vor.u32 %v1921, %v1917
  %v1923 = vrot.slane %v1922, 4
  %v1925 = vshll.u32 %v1766, 16
  %v1927 = vrot.slane %v1925, 5
  %v1928 = vsel %vm1856, %v1923, %v1927
  %v1930 = vshrl.u32 %v1767, 16
  %v1932 = vrot.slane %v1930, 4
  %v1933 = vshll.u32 %v1767, 16
  %v1935 = vrot.slane %v1933, 5
  %v1936 = vor.u32 %v1932, %v1935
  %v1937 = vrot.slane %v1936, 4
  %v1939 = vshll.u32 %v1768, 16
  %v1941 = vrot.slane %v1939, 5
  %v1942 = vsel %vm1856, %v1937, %v1941
  %v1943 = vshrl.u32 %v1768, 16
  %v1945 = vrot.slane %v1943, 4
  %v1946 = vor.u32 %v1945, %v1941
  %v1947 = vrot.slane %v1946, 4
  %v1949 = vshll.u32 %v1769, 16
  %v1951 = vrot.slane %v1949, 5
  %v1952 = vsel %vm1856, %v1947, %v1951
  %v1954 = vshrl.u32 %v1770, 16
  %v1956 = vrot.slane %v1954, 4
  %v1957 = vshll.u32 %v1770, 16
  %v1959 = vrot.slane %v1957, 5
  %v1960 = vor.u32 %v1956, %v1959
  %v1961 = vrot.slane %v1960, 4
  %v1963 = vshll.u32 %v1771, 16
  %v1965 = vrot.slane %v1963, 5
  %v1966 = vsel %vm1856, %v1961, %v1965
  %v1967 = vshrl.u32 %v1771, 16
  %v1969 = vrot.slane %v1967, 4
  %v1970 = vor.u32 %v1969, %v1965
  %v1971 = vrot.slane %v1970, 4
  %v1973 = vshll.u32 %v1772, 16
  %v1975 = vrot.slane %v1973, 5
  %v1976 = vsel %vm1856, %v1971, %v1975
  %v1978 = vshrl.u32 %v1773, 16
  %v1980 = vrot.slane %v1978, 4
  %v1981 = vshll.u32 %v1773, 16
  %v1983 = vrot.slane %v1981, 5
  %v1984 = vor.u32 %v1980, %v1983
  %v1985 = vrot.slane %v1984, 4
  %v1987 = vshll.u32 %v1774, 16
  %v1989 = vrot.slane %v1987, 5
  %v1990 = vsel %vm1856, %v1985, %v1989
  %v1991 = vshrl.u32 %v1774, 16
  %v1993 = vrot.slane %v1991, 4
  %v1994 = vor.u32 %v1993, %v1989
  %v1995 = vrot.slane %v1994, 4
  %v1997 = vshll.u32 %v1775, 16
  %v1999 = vrot.slane %v1997, 5
  %v2000 = vsel %vm1856, %v1995, %v1999
  %v2002 = vshrl.u32 %v1776, 16
  %v2004 = vrot.slane %v2002, 4
  %v2005 = vshll.u32 %v1776, 16
  %v2007 = vrot.slane %v2005, 5
  %v2008 = vor.u32 %v2004, %v2007
  %v2009 = vrot.slane %v2008, 4
  %v2011 = vshll.u32 %v1777, 16
  %v2013 = vrot.slane %v2011, 5
  %v2014 = vsel %vm1856, %v2009, %v2013
  %v2015 = vshrl.u32 %v1777, 16
  %v2017 = vrot.slane %v2015, 4
  %v2018 = vor.u32 %v2017, %v2013
  %v2019 = vrot.slane %v2018, 4
  %v2021 = vshll.u32 %v1778, 16
  %v2023 = vrot.slane %v2021, 5
  %v2024 = vsel %vm1856, %v2019, %v2023
  %v2026 = vshrl.u32 %v1779, 16
  %v2028 = vrot.slane %v2026, 4
  %v2029 = vshll.u32 %v1779, 16
  %v2031 = vrot.slane %v2029, 5
  %v2032 = vor.u32 %v2028, %v2031
  %v2033 = vrot.slane %v2032, 4
  %v2035 = vshll.u32 %v1780, 16
  %v2037 = vrot.slane %v2035, 5
  %v2038 = vsel %vm1856, %v2033, %v2037
  %v2039 = vshrl.u32 %v1780, 16
  %v2041 = vrot.slane %v2039, 4
  %v2042 = vor.u32 %v2041, %v2037
  %v2043 = vrot.slane %v2042, 4
  %v2045 = vshll.u32 %v1781, 16
  %v2047 = vrot.slane %v2045, 5
  %v2048 = vsel %vm1856, %v2043, %v2047
  %v2050 = vshrl.u32 %v1782, 16
  %v2052 = vrot.slane %v2050, 4
  %v2053 = vshll.u32 %v1782, 16
  %v2055 = vrot.slane %v2053, 5
  %v2056 = vor.u32 %v2052, %v2055
  %v2057 = vrot.slane %v2056, 4
  %v2059 = vshll.u32 %v1783, 16
  %v2061 = vrot.slane %v2059, 5
  %v2062 = vsel %vm1856, %v2057, %v2061
  %v2063 = vshrl.u32 %v1783, 16
  %v2065 = vrot.slane %v2063, 4
  %v2066 = vor.u32 %v2065, %v2061
  %v2067 = vrot.slane %v2066, 4
  %v2069 = vshll.u32 %v1784, 16
  %v2071 = vrot.slane %v2069, 5
  %v2072 = vsel %vm1856, %v2067, %v2071
  %v2074 = vshrl.u32 %v1785, 16
  %v2076 = vrot.slane %v2074, 4
  %v2077 = vshll.u32 %v1785, 16
  %v2079 = vrot.slane %v2077, 5
  %v2080 = vor.u32 %v2076, %v2079
  %v2081 = vrot.slane %v2080, 4
  %v2083 = vshll.u32 %v1786, 16
  %v2085 = vrot.slane %v2083, 5
  %v2086 = vsel %vm1856, %v2081, %v2085
  %v2087 = vshrl.u32 %v1786, 16
  %v2089 = vrot.slane %v2087, 4
  %v2090 = vor.u32 %v2089, %v2085
  %v2091 = vrot.slane %v2090, 4
  %v2093 = vshll.u32 %v1787, 16
  %v2095 = vrot.slane %v2093, 5
  %v2096 = vsel %vm1856, %v2091, %v2095
  %v2098 = vshrl.u32 %v1788, 16
  %v2100 = vrot.slane %v2098, 4
  %v2101 = vshll.u32 %v1788, 16
  %v2103 = vrot.slane %v2101, 5
  %v2104 = vor.u32 %v2100, %v2103
  %v2105 = vrot.slane %v2104, 4
  %v2107 = vshll.u32 %v1789, 16
  %v2109 = vrot.slane %v2107, 5
  %v2110 = vsel %vm1856, %v2105, %v2109
  %v2111 = vshrl.u32 %v1789, 16
  %v2113 = vrot.slane %v2111, 4
  %v2114 = vor.u32 %v2113, %v2109
  %v2115 = vrot.slane %v2114, 4
  %v2117 = vshll.u32 %v1790, 16
  %v2119 = vrot.slane %v2117, 5
  %v2120 = vsel %vm1856, %v2115, %v2119
  %v2122 = vshrl.u32 %v1791, 16
  %v2124 = vrot.slane %v2122, 4
  %v2125 = vshll.u32 %v1791, 16
  %v2127 = vrot.slane %v2125, 5
  %v2128 = vor.u32 %v2124, %v2127
  %v2129 = vrot.slane %v2128, 4
  %v2131 = vshll.u32 %v1792, 16
  %v2133 = vrot.slane %v2131, 5
  %v2134 = vsel %vm1856, %v2129, %v2133
  %v2135 = vshrl.u32 %v1792, 16
  %v2137 = vrot.slane %v2135, 4
  %v2138 = vor.u32 %v2137, %v2133
  %v2139 = vrot.slane %v2138, 4
  %v2141 = vshll.u32 %v1793, 16
  %v2143 = vrot.slane %v2141, 5
  %v2144 = vsel %vm1856, %v2139, %v2143
  %v2146 = vshrl.u32 %v1794, 16
  %v2148 = vrot.slane %v2146, 4
  %v2149 = vshll.u32 %v1794, 16
  %v2151 = vrot.slane %v2149, 5
  %v2152 = vor.u32 %v2148, %v2151
  %v2153 = vrot.slane %v2152, 4
  %v2155 = vshll.u32 %v1795, 16
  %v2157 = vrot.slane %v2155, 5
  %v2158 = vsel %vm1856, %v2153, %v2157
  %v2159 = vshrl.u32 %v1795, 16
  %v2161 = vrot.slane %v2159, 4
  %v2162 = vor.u32 %v2161, %v2157
  %v2163 = vrot.slane %v2162, 4
  %v2165 = vshll.u32 %v1796, 16
  %v2167 = vrot.slane %v2165, 5
  %v2168 = vsel %vm1856, %v2163, %v2167
  %v2170 = vshrl.u32 %v1797, 16
  %v2172 = vrot.slane %v2170, 4
  %v2173 = vshll.u32 %v1797, 16
  %v2175 = vrot.slane %v2173, 5
  %v2176 = vor.u32 %v2172, %v2175
  %v2177 = vrot.slane %v2176, 4
  %v2179 = vshll.u32 %v1798, 16
  %v2181 = vrot.slane %v2179, 5
  %v2182 = vsel %vm1856, %v2177, %v2181
  %v2183 = vshrl.u32 %v1798, 16
  %v2185 = vrot.slane %v2183, 4
  %v2186 = vor.u32 %v2185, %v2181
  %v2187 = vrot.slane %v2186, 4
  %v2189 = vshll.u32 %v1799, 16
  %v2191 = vrot.slane %v2189, 5
  %v2192 = vsel %vm1856, %v2187, %v2191
  %v2194 = vshrl.u32 %v1800, 16
  %v2196 = vrot.slane %v2194, 4
  %v2197 = vshll.u32 %v1800, 16
  %v2199 = vrot.slane %v2197, 5
  %v2200 = vor.u32 %v2196, %v2199
  %v2201 = vrot.slane %v2200, 4
  %v2203 = vshll.u32 %v1801, 16
  %v2205 = vrot.slane %v2203, 5
  %v2206 = vsel %vm1856, %v2201, %v2205
  %v2207 = vshrl.u32 %v1801, 16
  %v2209 = vrot.slane %v2207, 4
  %v2210 = vor.u32 %v2209, %v2205
  %v2211 = vrot.slane %v2210, 4
  %v2213 = vshll.u32 %v1802, 16
  %v2215 = vrot.slane %v2213, 5
  %v2216 = vsel %vm1856, %v2211, %v2215
  %v2218 = vshrl.u32 %v1803, 16
  %v2220 = vrot.slane %v2218, 4
  %v2221 = vshll.u32 %v1803, 16
  %v2223 = vrot.slane %v2221, 5
  %v2224 = vor.u32 %v2220, %v2223
  %v2225 = vrot.slane %v2224, 4
  %v2227 = vshll.u32 %v1804, 16
  %v2229 = vrot.slane %v2227, 5
  %v2230 = vsel %vm1856, %v2225, %v2229
  %v2231 = vshrl.u32 %v1804, 16
  %v2233 = vrot.slane %v2231, 4
  %v2234 = vor.u32 %v2233, %v2229
  %v2235 = vrot.slane %v2234, 4
  %v2237 = vshll.u32 %v1805, 16
  %v2239 = vrot.slane %v2237, 5
  %v2240 = vsel %vm1856, %v2235, %v2239
  %v2242 = vshrl.u32 %v1806, 16
  %v2244 = vrot.slane %v2242, 4
  %v2245 = vshll.u32 %v1806, 16
  %v2247 = vrot.slane %v2245, 5
  %v2248 = vor.u32 %v2244, %v2247
  %v2249 = vrot.slane %v2248, 4
  %v2251 = vshll.u32 %v1807, 16
  %v2253 = vrot.slane %v2251, 5
  %v2254 = vsel %vm1856, %v2249, %v2253
  %v2255 = vshrl.u32 %v1807, 16
  %v2257 = vrot.slane %v2255, 4
  %v2258 = vor.u32 %v2257, %v2253
  %v2259 = vrot.slane %v2258, 4
  %v2261 = vshll.u32 %v1808, 16
  %v2263 = vrot.slane %v2261, 5
  %v2264 = vsel %vm1856, %v2259, %v2263
  %v2266 = vshrl.u32 %v1809, 16
  %v2268 = vrot.slane %v2266, 4
  %v2269 = vshll.u32 %v1809, 16
  %v2271 = vrot.slane %v2269, 5
  %v2272 = vor.u32 %v2268, %v2271
  %v2273 = vrot.slane %v2272, 4
  %v2275 = vshll.u32 %v1810, 16
  %v2277 = vrot.slane %v2275, 5
  %v2278 = vsel %vm1856, %v2273, %v2277
  %v2279 = vshrl.u32 %v1810, 16
  %v2281 = vrot.slane %v2279, 4
  %v2282 = vor.u32 %v2281, %v2277
  %v2283 = vrot.slane %v2282, 4
  %v2285 = vshll.u32 %v1811, 16
  %v2287 = vrot.slane %v2285, 5
  %v2288 = vsel %vm1856, %v2283, %v2287
  %v2290 = vshrl.u32 %v1812, 16
  %v2292 = vrot.slane %v2290, 4
  %v2293 = vshll.u32 %v1812, 16
  %v2295 = vrot.slane %v2293, 5
  %v2296 = vor.u32 %v2292, %v2295
  %v2297 = vrot.slane %v2296, 4
  %v2299 = vshll.u32 %v1813, 16
  %v2301 = vrot.slane %v2299, 5
  %v2302 = vsel %vm1856, %v2297, %v2301
  %v2303 = vshrl.u32 %v1813, 16
  %v2305 = vrot.slane %v2303, 4
  %v2306 = vor.u32 %v2305, %v2301
  %v2307 = vrot.slane %v2306, 4
  %v2309 = vshll.u32 %v1814, 16
  %v2311 = vrot.slane %v2309, 5
  %v2312 = vsel %vm1856, %v2307, %v2311
  %v2314 = vshrl.u32 %v1815, 16
  %v2316 = vrot.slane %v2314, 4
  %v2317 = vshll.u32 %v1815, 16
  %v2319 = vrot.slane %v2317, 5
  %v2320 = vor.u32 %v2316, %v2319
  %v2321 = vrot.slane %v2320, 4
  %v2323 = vshll.u32 %v1816, 16
  %v2325 = vrot.slane %v2323, 5
  %v2326 = vsel %vm1856, %v2321, %v2325
  %v2327 = vshrl.u32 %v1816, 16
  %v2329 = vrot.slane %v2327, 4
  %v2330 = vor.u32 %v2329, %v2325
  %v2331 = vrot.slane %v2330, 4
  %v2333 = vshll.u32 %v1817, 16
  %v2335 = vrot.slane %v2333, 5
  %v2336 = vsel %vm1856, %v2331, %v2335
  %v2338 = vshrl.u32 %v1818, 16
  %v2340 = vrot.slane %v2338, 4
  %v2341 = vshll.u32 %v1818, 16
  %v2343 = vrot.slane %v2341, 5
  %v2344 = vor.u32 %v2340, %v2343
  %v2345 = vrot.slane %v2344, 4
  %v2347 = vshll.u32 %v1819, 16
  %v2349 = vrot.slane %v2347, 5
  %v2350 = vsel %vm1856, %v2345, %v2349
  %v2351 = vshrl.u32 %v1819, 16
  %v2353 = vrot.slane %v2351, 4
  %v2354 = vor.u32 %v2353, %v2349
  %v2355 = vrot.slane %v2354, 4
  %v2357 = vshll.u32 %v1820, 16
  %v2359 = vrot.slane %v2357, 5
  %v2360 = vsel %vm1856, %v2355, %v2359
  %v2362 = vshrl.u32 %v1821, 16
  %v2364 = vrot.slane %v2362, 4
  %v2365 = vshll.u32 %v1821, 16
  %v2367 = vrot.slane %v2365, 5
  %v2368 = vor.u32 %v2364, %v2367
  %v2369 = vrot.slane %v2368, 4
  %v2371 = vshll.u32 %v1822, 16
  %v2373 = vrot.slane %v2371, 5
  %v2374 = vsel %vm1856, %v2369, %v2373
  %v2375 = vshrl.u32 %v1822, 16
  %v2377 = vrot.slane %v2375, 4
  %v2378 = vor.u32 %v2377, %v2373
  %v2379 = vrot.slane %v2378, 4
  %v2381 = vshll.u32 %v1823, 16
  %v2383 = vrot.slane %v2381, 5
  %v2384 = vsel %vm1856, %v2379, %v2383
  %v2386 = vshrl.u32 %v1824, 16
  %v2388 = vrot.slane %v2386, 4
  %v2389 = vshll.u32 %v1824, 16
  %v2391 = vrot.slane %v2389, 5
  %v2392 = vor.u32 %v2388, %v2391
  %v2393 = vrot.slane %v2392, 4
  %v2395 = vshll.u32 %v1825, 16
  %v2397 = vrot.slane %v2395, 5
  %v2398 = vsel %vm1856, %v2393, %v2397
  %v2399 = vshrl.u32 %v1825, 16
  %v2401 = vrot.slane %v2399, 4
  %v2402 = vor.u32 %v2401, %v2397
  %v2403 = vrot.slane %v2402, 4
  %v2405 = vshll.u32 %v1826, 16
  %v2407 = vrot.slane %v2405, 5
  %v2408 = vsel %vm1856, %v2403, %v2407
  %v2410 = vshrl.u32 %v1827, 16
  %v2412 = vrot.slane %v2410, 4
  %v2413 = vshll.u32 %v1827, 16
  %v2415 = vrot.slane %v2413, 5
  %v2416 = vor.u32 %v2412, %v2415
  %v2417 = vrot.slane %v2416, 4
  %v2419 = vshll.u32 %v1828, 16
  %v2421 = vrot.slane %v2419, 5
  %v2422 = vsel %vm1856, %v2417, %v2421
  %v2423 = vshrl.u32 %v1828, 16
  %v2425 = vrot.slane %v2423, 4
  %v2426 = vor.u32 %v2425, %v2421
  %v2427 = vrot.slane %v2426, 4
  %v2429 = vshll.u32 %v1829, 16
  %v2431 = vrot.slane %v2429, 5
  %v2432 = vsel %vm1856, %v2427, %v2431
  %v2434 = vshrl.u32 %v1830, 16
  %v2436 = vrot.slane %v2434, 4
  %v2437 = vshll.u32 %v1830, 16
  %v2439 = vrot.slane %v2437, 5
  %v2440 = vor.u32 %v2436, %v2439
  %v2441 = vrot.slane %v2440, 4
  %v2443 = vshll.u32 %v1831, 16
  %v2445 = vrot.slane %v2443, 5
  %v2446 = vsel %vm1856, %v2441, %v2445
  %v2447 = vshrl.u32 %v1831, 16
  %v2449 = vrot.slane %v2447, 4
  %v2450 = vor.u32 %v2449, %v2445
  %v2451 = vrot.slane %v2450, 4
  %v2453 = vshll.u32 %v1832, 16
  %v2455 = vrot.slane %v2453, 5
  %v2456 = vsel %vm1856, %v2451, %v2455
  %v2458 = vshrl.u32 %v1833, 16
  %v2460 = vrot.slane %v2458, 4
  %v2461 = vshll.u32 %v1833, 16
  %v2463 = vrot.slane %v2461, 5
  %v2464 = vor.u32 %v2460, %v2463
  %v2465 = vrot.slane %v2464, 4
  %v2467 = vshll.u32 %v1834, 16
  %v2469 = vrot.slane %v2467, 5
  %v2470 = vsel %vm1856, %v2465, %v2469
  %v2471 = vshrl.u32 %v1834, 16
  %v2473 = vrot.slane %v2471, 4
  %v2474 = vor.u32 %v2473, %v2469
  %v2475 = vrot.slane %v2474, 4
  %v2477 = vshll.u32 %v1835, 16
  %v2479 = vrot.slane %v2477, 5
  %v2480 = vsel %vm1856, %v2475, %v2479
  %v2482 = vshrl.u32 %v1836, 16
  %v2484 = vrot.slane %v2482, 4
  %v2485 = vshll.u32 %v1836, 16
  %v2487 = vrot.slane %v2485, 5
  %v2488 = vor.u32 %v2484, %v2487
  %v2489 = vrot.slane %v2488, 4
  %v2491 = vshll.u32 %v1837, 16
  %v2493 = vrot.slane %v2491, 5
  %v2494 = vsel %vm1856, %v2489, %v2493
  %v2495 = vshrl.u32 %v1837, 16
  %v2497 = vrot.slane %v2495, 4
  %v2498 = vor.u32 %v2497, %v2493
  %v2499 = vrot.slane %v2498, 4
  %v2501 = vshll.u32 %v1838, 16
  %v2503 = vrot.slane %v2501, 5
  %v2504 = vsel %vm1856, %v2499, %v2503
  %v2506 = vshrl.u32 %v1839, 16
  %v2508 = vrot.slane %v2506, 4
  %v2509 = vshll.u32 %v1839, 16
  %v2511 = vrot.slane %v2509, 5
  %v2512 = vor.u32 %v2508, %v2511
  %v2513 = vrot.slane %v2512, 4
  %v2515 = vshll.u32 %v1840, 16
  %v2517 = vrot.slane %v2515, 5
  %v2518 = vsel %vm1856, %v2513, %v2517
  %v2519 = vshrl.u32 %v1840, 16
  %v2521 = vrot.slane %v2519, 4
  %v2522 = vor.u32 %v2521, %v2517
  %v2523 = vrot.slane %v2522, 4
  %v2525 = vshll.u32 %v1841, 16
  %v2527 = vrot.slane %v2525, 5
  %v2528 = vsel %vm1856, %v2523, %v2527
  %v2530 = vshrl.u32 %v1842, 16
  %v2532 = vrot.slane %v2530, 4
  %v2533 = vshll.u32 %v1842, 16
  %v2535 = vrot.slane %v2533, 5
  %v2536 = vor.u32 %v2532, %v2535
  %v2537 = vrot.slane %v2536, 4
  %v2539 = vshll.u32 %v1843, 16
  %v2541 = vrot.slane %v2539, 5
  %v2542 = vsel %vm1856, %v2537, %v2541
  %v2543 = vshrl.u32 %v1843, 16
  %v2545 = vrot.slane %v2543, 4
  %v2546 = vor.u32 %v2545, %v2541
  %v2547 = vrot.slane %v2546, 4
  %v2549 = vshll.u32 %v1844, 16
  %v2551 = vrot.slane %v2549, 5
  %v2552 = vsel %vm1856, %v2547, %v2551
  %v2554 = vshrl.u32 %v1845, 16
  %v2556 = vrot.slane %v2554, 4
  %v2557 = vshll.u32 %v1845, 16
  %v2559 = vrot.slane %v2557, 5
  %v2560 = vor.u32 %v2556, %v2559
  %v2561 = vrot.slane %v2560, 4
  %v2563 = vshll.u32 %v1846, 16
  %v2565 = vrot.slane %v2563, 5
  %v2566 = vsel %vm1856, %v2561, %v2565
  %v2567 = vshrl.u32 %v1846, 16
  %v2569 = vrot.slane %v2567, 4
  %v2570 = vor.u32 %v2569, %v2565
  %v2571 = vrot.slane %v2570, 4
  %v2573 = vshll.u32 %v1847, 16
  %v2575 = vrot.slane %v2573, 5
  %v2576 = vsel %vm1856, %v2571, %v2575
  %v2578 = vshrl.u32 %v1848, 16
  %v2580 = vrot.slane %v2578, 4
  %v2581 = vshll.u32 %v1848, 16
  %v2583 = vrot.slane %v2581, 5
  %v2584 = vor.u32 %v2580, %v2583
  %v2585 = vrot.slane %v2584, 4
  %v2587 = vshll.u32 %v1849, 16
  %v2589 = vrot.slane %v2587, 5
  %v2590 = vsel %vm1856, %v2585, %v2589
  %v2591 = vshrl.u32 %v1849, 16
  %v2593 = vrot.slane %v2591, 4
  %v2594 = vor.u32 %v2593, %v2589
  %v2595 = vrot.slane %v2594, 4
  %v2597 = vshll.u32 %v1850, 16
  %v2599 = vrot.slane %v2597, 5
  %v2600 = vsel %vm1856, %v2595, %v2599
  %v2602 = vshrl.u32 %v1851, 16
  %v2604 = vrot.slane %v2602, 4
  %v2605 = vshll.u32 %v1851, 16
  %v2607 = vrot.slane %v2605, 5
  %v2608 = vor.u32 %v2604, %v2607
  %v2609 = vrot.slane %v2608, 4
  %v2611 = vshll.u32 %v1852, 16
  %v2613 = vrot.slane %v2611, 5
  %v2614 = vsel %vm1856, %v2609, %v2613
  %v2615 = vshrl.u32 %v1852, 16
  %v2617 = vrot.slane %v2615, 4
  %v2618 = vor.u32 %v2617, %v2613
  %v2619 = vrot.slane %v2618, 4
  %v2621 = vshll.u32 %v1853, 16
  %v2623 = vrot.slane %v2621, 5
  %v2624 = vsel %vm1856, %v2619, %v2623
  %2625 = vrot.lane.b32.xlu0 %v1870, 4
  %v2626 = vpop.permute.xlu0 %2625
  %2627 = vrot.lane.b32.xlu0 %v1880, 4
  %v2628 = vpop.permute.xlu0 %2627
  %2629 = vrot.lane.b32.xlu0 %v1894, 4
  %v2630 = vpop.permute.xlu0 %2629
  %2631 = vrot.lane.b32.xlu0 %v1904, 4
  %v2632 = vpop.permute.xlu0 %2631
  %2633 = vrot.lane.b32.xlu0 %v1918, 4
  %v2634 = vpop.permute.xlu0 %2633
  %2635 = vrot.lane.b32.xlu0 %v1928, 4
  %v2636 = vpop.permute.xlu0 %2635
  %2637 = vrot.lane.b32.xlu0 %v1942, 4
  %v2638 = vpop.permute.xlu0 %2637
  %2639 = vrot.lane.b32.xlu0 %v1952, 4
  %v2640 = vpop.permute.xlu0 %2639
  %2641 = vrot.lane.b32.xlu0 %v1966, 4
  %v2642 = vpop.permute.xlu0 %2641
  %2643 = vrot.lane.b32.xlu0 %v1976, 4
  %v2644 = vpop.permute.xlu0 %2643
  %2645 = vrot.lane.b32.xlu0 %v1990, 4
  %v2646 = vpop.permute.xlu0 %2645
  %2647 = vrot.lane.b32.xlu0 %v2000, 4
  %v2648 = vpop.permute.xlu0 %2647
  %2649 = vrot.lane.b32.xlu0 %v2014, 4
  %v2650 = vpop.permute.xlu0 %2649
  %2651 = vrot.lane.b32.xlu0 %v2024, 4
  %v2652 = vpop.permute.xlu0 %2651
  %2653 = vrot.lane.b32.xlu0 %v2038, 4
  %v2654 = vpop.permute.xlu0 %2653
  %2655 = vrot.lane.b32.xlu0 %v2048, 4
  %v2656 = vpop.permute.xlu0 %2655
  %2657 = vrot.lane.b32.xlu0 %v2062, 4
  %v2658 = vpop.permute.xlu0 %2657
  %2659 = vrot.lane.b32.xlu0 %v2072, 4
  %v2660 = vpop.permute.xlu0 %2659
  %2661 = vrot.lane.b32.xlu0 %v2086, 4
  %v2662 = vpop.permute.xlu0 %2661
  %2663 = vrot.lane.b32.xlu0 %v2096, 4
  %v2664 = vpop.permute.xlu0 %2663
  %2665 = vrot.lane.b32.xlu0 %v2110, 4
  %v2666 = vpop.permute.xlu0 %2665
  %2667 = vrot.lane.b32.xlu0 %v2120, 4
  %v2668 = vpop.permute.xlu0 %2667
  %2669 = vrot.lane.b32.xlu0 %v2134, 4
  %v2670 = vpop.permute.xlu0 %2669
  %2671 = vrot.lane.b32.xlu0 %v2144, 4
  %v2672 = vpop.permute.xlu0 %2671
  %2673 = vrot.lane.b32.xlu0 %v2158, 4
  %v2674 = vpop.permute.xlu0 %2673
  %2675 = vrot.lane.b32.xlu0 %v2168, 4
  %v2676 = vpop.permute.xlu0 %2675
  %2677 = vrot.lane.b32.xlu0 %v2182, 4
  %v2678 = vpop.permute.xlu0 %2677
  %2679 = vrot.lane.b32.xlu0 %v2192, 4
  %v2680 = vpop.permute.xlu0 %2679
  %2681 = vrot.lane.b32.xlu0 %v2206, 4
  %v2682 = vpop.permute.xlu0 %2681
  %2683 = vrot.lane.b32.xlu0 %v2216, 4
  %v2684 = vpop.permute.xlu0 %2683
  %2685 = vrot.lane.b32.xlu0 %v2230, 4
  %v2686 = vpop.permute.xlu0 %2685
  %2687 = vrot.lane.b32.xlu0 %v2240, 4
  %v2688 = vpop.permute.xlu0 %2687
  %2689 = vrot.lane.b32.xlu0 %v2254, 4
  %v2690 = vpop.permute.xlu0 %2689
  %2691 = vrot.lane.b32.xlu0 %v2264, 4
  %v2692 = vpop.permute.xlu0 %2691
  %2693 = vrot.lane.b32.xlu0 %v2278, 4
  %v2694 = vpop.permute.xlu0 %2693
  %2695 = vrot.lane.b32.xlu0 %v2288, 4
  %v2696 = vpop.permute.xlu0 %2695
  %2697 = vrot.lane.b32.xlu0 %v2302, 4
  %v2698 = vpop.permute.xlu0 %2697
  %2699 = vrot.lane.b32.xlu0 %v2312, 4
  %v2700 = vpop.permute.xlu0 %2699
  %2701 = vrot.lane.b32.xlu0 %v2326, 4
  %v2702 = vpop.permute.xlu0 %2701
  %2703 = vrot.lane.b32.xlu0 %v2336, 4
  %v2704 = vpop.permute.xlu0 %2703
  %2705 = vrot.lane.b32.xlu0 %v2350, 4
  %v2706 = vpop.permute.xlu0 %2705
  %2707 = vrot.lane.b32.xlu0 %v2360, 4
  %v2708 = vpop.permute.xlu0 %2707
  %2709 = vrot.lane.b32.xlu0 %v2374, 4
  %v2710 = vpop.permute.xlu0 %2709
  %2711 = vrot.lane.b32.xlu0 %v2384, 4
  %v2712 = vpop.permute.xlu0 %2711
  %2713 = vrot.lane.b32.xlu0 %v2398, 4
  %v2714 = vpop.permute.xlu0 %2713
  %2715 = vrot.lane.b32.xlu0 %v2408, 4
  %v2716 = vpop.permute.xlu0 %2715
  %2717 = vrot.lane.b32.xlu0 %v2422, 4
  %v2718 = vpop.permute.xlu0 %2717
  %2719 = vrot.lane.b32.xlu0 %v2432, 4
  %v2720 = vpop.permute.xlu0 %2719
  %2721 = vrot.lane.b32.xlu0 %v2446, 4
  %v2722 = vpop.permute.xlu0 %2721
  %2723 = vrot.lane.b32.xlu0 %v2456, 4
  %v2724 = vpop.permute.xlu0 %2723
  %2725 = vrot.lane.b32.xlu0 %v2470, 4
  %v2726 = vpop.permute.xlu0 %2725
  %2727 = vrot.lane.b32.xlu0 %v2480, 4
  %v2728 = vpop.permute.xlu0 %2727
  %2729 = vrot.lane.b32.xlu0 %v2494, 4
  %v2730 = vpop.permute.xlu0 %2729
  %2731 = vrot.lane.b32.xlu0 %v2504, 4
  %v2732 = vpop.permute.xlu0 %2731
  %2733 = vrot.lane.b32.xlu0 %v2518, 4
  %v2734 = vpop.permute.xlu0 %2733
  %2735 = vrot.lane.b32.xlu0 %v2528, 4
  %v2736 = vpop.permute.xlu0 %2735
  %2737 = vrot.lane.b32.xlu0 %v2542, 4
  %v2738 = vpop.permute.xlu0 %2737
  %2739 = vrot.lane.b32.xlu0 %v2552, 4
  %v2740 = vpop.permute.xlu0 %2739
  %2741 = vrot.lane.b32.xlu0 %v2566, 4
  %v2742 = vpop.permute.xlu0 %2741
  %2743 = vrot.lane.b32.xlu0 %v2576, 4
  %v2744 = vpop.permute.xlu0 %2743
  %2745 = vrot.lane.b32.xlu0 %v2590, 4
  %v2746 = vpop.permute.xlu0 %2745
  %2747 = vrot.lane.b32.xlu0 %v2600, 4
  %v2748 = vpop.permute.xlu0 %2747
  %2749 = vrot.lane.b32.xlu0 %v2614, 4
  %v2750 = vpop.permute.xlu0 %2749
  %2751 = vrot.lane.b32.xlu0 %v2624, 4
  %v2752 = vpop.permute.xlu0 %2751
  %vm2817 = vcmask 60448
  %2818 = vst.msk [vmem:[#allocation4] sm:$0xf] %vm2817, %v2626
  %2819 = vst.msk [vmem:[#allocation4 + $0x4] sm:$0xf] %vm2817, %v2628
  %2820 = vst.msk [vmem:[#allocation4 + $0x8] sm:$0xf] %vm2817, %v2630
  %2821 = vst.msk [vmem:[#allocation4 + $0xc] sm:$0xf] %vm2817, %v2632
  %2822 = vst.msk [vmem:[#allocation4 + $0x10] sm:$0xf] %vm2817, %v2634
  %2823 = vst.msk [vmem:[#allocation4 + $0x14] sm:$0xf] %vm2817, %v2636
  %2824 = vst.msk [vmem:[#allocation4 + $0x18] sm:$0xf] %vm2817, %v2638
  %2825 = vst.msk [vmem:[#allocation4 + $0x1c] sm:$0xf] %vm2817, %v2640
  %2826 = vst.msk [vmem:[#allocation4 + $0x20] sm:$0xf] %vm2817, %v2642
  %2827 = vst.msk [vmem:[#allocation4 + $0x24] sm:$0xf] %vm2817, %v2644
  %2828 = vst.msk [vmem:[#allocation4 + $0x28] sm:$0xf] %vm2817, %v2646
  %2829 = vst.msk [vmem:[#allocation4 + $0x2c] sm:$0xf] %vm2817, %v2648
  %2830 = vst.msk [vmem:[#allocation4 + $0x30] sm:$0xf] %vm2817, %v2650
  %2831 = vst.msk [vmem:[#allocation4 + $0x34] sm:$0xf] %vm2817, %v2652
  %2832 = vst.msk [vmem:[#allocation4 + $0x38] sm:$0xf] %vm2817, %v2654
  %2833 = vst.msk [vmem:[#allocation4 + $0x3c] sm:$0xf] %vm2817, %v2656
  %2834 = vst.msk [vmem:[#allocation4 + $0x40] sm:$0xf] %vm2817, %v2658
  %2835 = vst.msk [vmem:[#allocation4 + $0x44] sm:$0xf] %vm2817, %v2660
  %2836 = vst.msk [vmem:[#allocation4 + $0x48] sm:$0xf] %vm2817, %v2662
  %2837 = vst.msk [vmem:[#allocation4 + $0x4c] sm:$0xf] %vm2817, %v2664
  %2838 = vst.msk [vmem:[#allocation4 + $0x50] sm:$0xf] %vm2817, %v2666
  %2839 = vst.msk [vmem:[#allocation4 + $0x54] sm:$0xf] %vm2817, %v2668
  %2840 = vst.msk [vmem:[#allocation4 + $0x58] sm:$0xf] %vm2817, %v2670
  %2841 = vst.msk [vmem:[#allocation4 + $0x5c] sm:$0xf] %vm2817, %v2672
  %2842 = vst.msk [vmem:[#allocation4 + $0x60] sm:$0xf] %vm2817, %v2674
  %2843 = vst.msk [vmem:[#allocation4 + $0x64] sm:$0xf] %vm2817, %v2676
  %2844 = vst.msk [vmem:[#allocation4 + $0x68] sm:$0xf] %vm2817, %v2678
  %2845 = vst.msk [vmem:[#allocation4 + $0x6c] sm:$0xf] %vm2817, %v2680
  %2846 = vst.msk [vmem:[#allocation4 + $0x70] sm:$0xf] %vm2817, %v2682
  %2847 = vst.msk [vmem:[#allocation4 + $0x74] sm:$0xf] %vm2817, %v2684
  %2848 = vst.msk [vmem:[#allocation4 + $0x78] sm:$0xf] %vm2817, %v2686
  %2849 = vst.msk [vmem:[#allocation4 + $0x7c] sm:$0xf] %vm2817, %v2688
  %2850 = vst.msk [vmem:[#allocation4 + $0x80] sm:$0xf] %vm2817, %v2690
  %2851 = vst.msk [vmem:[#allocation4 + $0x84] sm:$0xf] %vm2817, %v2692
  %2852 = vst.msk [vmem:[#allocation4 + $0x88] sm:$0xf] %vm2817, %v2694
  %2853 = vst.msk [vmem:[#allocation4 + $0x8c] sm:$0xf] %vm2817, %v2696
  %2854 = vst.msk [vmem:[#allocation4 + $0x90] sm:$0xf] %vm2817, %v2698
  %2855 = vst.msk [vmem:[#allocation4 + $0x94] sm:$0xf] %vm2817, %v2700
  %2856 = vst.msk [vmem:[#allocation4 + $0x98] sm:$0xf] %vm2817, %v2702
  %2857 = vst.msk [vmem:[#allocation4 + $0x9c] sm:$0xf] %vm2817, %v2704
  %2858 = vst.msk [vmem:[#allocation4 + $0xa0] sm:$0xf] %vm2817, %v2706
  %2859 = vst.msk [vmem:[#allocation4 + $0xa4] sm:$0xf] %vm2817, %v2708
  %2860 = vst.msk [vmem:[#allocation4 + $0xa8] sm:$0xf] %vm2817, %v2710
  %2861 = vst.msk [vmem:[#allocation4 + $0xac] sm:$0xf] %vm2817, %v2712
  %2862 = vst.msk [vmem:[#allocation4 + $0xb0] sm:$0xf] %vm2817, %v2714
  %2863 = vst.msk [vmem:[#allocation4 + $0xb4] sm:$0xf] %vm2817, %v2716
  %2864 = vst.msk [vmem:[#allocation4 + $0xb8] sm:$0xf] %vm2817, %v2718
  %2865 = vst.msk [vmem:[#allocation4 + $0xbc] sm:$0xf] %vm2817, %v2720
  %2866 = vst.msk [vmem:[#allocation4 + $0xc0] sm:$0xf] %vm2817, %v2722
  %2867 = vst.msk [vmem:[#allocation4 + $0xc4] sm:$0xf] %vm2817, %v2724
  %2868 = vst.msk [vmem:[#allocation4 + $0xc8] sm:$0xf] %vm2817, %v2726
  %2869 = vst.msk [vmem:[#allocation4 + $0xcc] sm:$0xf] %vm2817, %v2728
  %2870 = vst.msk [vmem:[#allocation4 + $0xd0] sm:$0xf] %vm2817, %v2730
  %2871 = vst.msk [vmem:[#allocation4 + $0xd4] sm:$0xf] %vm2817, %v2732
  %2872 = vst.msk [vmem:[#allocation4 + $0xd8] sm:$0xf] %vm2817, %v2734
  %2873 = vst.msk [vmem:[#allocation4 + $0xdc] sm:$0xf] %vm2817, %v2736
  %2874 = vst.msk [vmem:[#allocation4 + $0xe0] sm:$0xf] %vm2817, %v2738
  %2875 = vst.msk [vmem:[#allocation4 + $0xe4] sm:$0xf] %vm2817, %v2740
  %2876 = vst.msk [vmem:[#allocation4 + $0xe8] sm:$0xf] %vm2817, %v2742
  %2877 = vst.msk [vmem:[#allocation4 + $0xec] sm:$0xf] %vm2817, %v2744
  %2878 = vst.msk [vmem:[#allocation4 + $0xf0] sm:$0xf] %vm2817, %v2746
  %2879 = vst.msk [vmem:[#allocation4 + $0xf4] sm:$0xf] %vm2817, %v2748
  %2880 = vst.msk [vmem:[#allocation4 + $0xf8] sm:$0xf] %vm2817, %v2750
  %2881 = vst.msk [vmem:[#allocation4 + $0xfc] sm:$0xf] %vm2817, %v2752
  %v2882 = vld [vmem:[#allocation2] sm:$0xe]
  %v2883 = vld [vmem:[#allocation2 + $0x4] sm:$0xf]
  %v2884 = vld [vmem:[#allocation2 + $0x8] sm:$0x1]
  %v2885 = vld [vmem:[#allocation2 + $0xc] sm:$0xe]
  %v2886 = vld [vmem:[#allocation2 + $0x10] sm:$0xf]
  %v2887 = vld [vmem:[#allocation2 + $0x14] sm:$0x1]
  %v2888 = vld [vmem:[#allocation2 + $0x18] sm:$0xe]
  %v2889 = vld [vmem:[#allocation2 + $0x1c] sm:$0xf]
  %v2890 = vld [vmem:[#allocation2 + $0x20] sm:$0x1]
  %v2891 = vld [vmem:[#allocation2 + $0x24] sm:$0xe]
  %v2892 = vld [vmem:[#allocation2 + $0x28] sm:$0xf]
  %v2893 = vld [vmem:[#allocation2 + $0x2c] sm:$0x1]
  %v2894 = vld [vmem:[#allocation2 + $0x30] sm:$0xe]
  %v2895 = vld [vmem:[#allocation2 + $0x34] sm:$0xf]
  %v2896 = vld [vmem:[#allocation2 + $0x38] sm:$0x1]
  %v2897 = vld [vmem:[#allocation2 + $0x3c] sm:$0xe]
  %v2898 = vld [vmem:[#allocation2 + $0x40] sm:$0xf]
  %v2899 = vld [vmem:[#allocation2 + $0x44] sm:$0x1]
  %v2900 = vld [vmem:[#allocation2 + $0x48] sm:$0xe]
  %v2901 = vld [vmem:[#allocation2 + $0x4c] sm:$0xf]
  %v2902 = vld [vmem:[#allocation2 + $0x50] sm:$0x1]
  %v2903 = vld [vmem:[#allocation2 + $0x54] sm:$0xe]
  %v2904 = vld [vmem:[#allocation2 + $0x58] sm:$0xf]
  %v2905 = vld [vmem:[#allocation2 + $0x5c] sm:$0x1]
  %v2906 = vld [vmem:[#allocation2 + $0x60] sm:$0xe]
  %v2907 = vld [vmem:[#allocation2 + $0x64] sm:$0xf]
  %v2908 = vld [vmem:[#allocation2 + $0x68] sm:$0x1]
  %v2909 = vld [vmem:[#allocation2 + $0x6c] sm:$0xe]
  %v2910 = vld [vmem:[#allocation2 + $0x70] sm:$0xf]
  %v2911 = vld [vmem:[#allocation2 + $0x74] sm:$0x1]
  %v2912 = vld [vmem:[#allocation2 + $0x78] sm:$0xe]
  %v2913 = vld [vmem:[#allocation2 + $0x7c] sm:$0xf]
  %v2914 = vld [vmem:[#allocation2 + $0x80] sm:$0x1]
  %v2915 = vld [vmem:[#allocation2 + $0x84] sm:$0xe]
  %v2916 = vld [vmem:[#allocation2 + $0x88] sm:$0xf]
  %v2917 = vld [vmem:[#allocation2 + $0x8c] sm:$0x1]
  %v2918 = vld [vmem:[#allocation2 + $0x90] sm:$0xe]
  %v2919 = vld [vmem:[#allocation2 + $0x94] sm:$0xf]
  %v2920 = vld [vmem:[#allocation2 + $0x98] sm:$0x1]
  %v2921 = vld [vmem:[#allocation2 + $0x9c] sm:$0xe]
  %v2922 = vld [vmem:[#allocation2 + $0xa0] sm:$0xf]
  %v2923 = vld [vmem:[#allocation2 + $0xa4] sm:$0x1]
  %v2924 = vld [vmem:[#allocation2 + $0xa8] sm:$0xe]
  %v2925 = vld [vmem:[#allocation2 + $0xac] sm:$0xf]
  %v2926 = vld [vmem:[#allocation2 + $0xb0] sm:$0x1]
  %v2927 = vld [vmem:[#allocation2 + $0xb4] sm:$0xe]
  %v2928 = vld [vmem:[#allocation2 + $0xb8] sm:$0xf]
  %v2929 = vld [vmem:[#allocation2 + $0xbc] sm:$0x1]
  %v2930 = vld [vmem:[#allocation2 + $0xd8] sm:$0xe]
  %v2931 = vld [vmem:[#allocation2 + $0xdc] sm:$0xf]
  %v2932 = vld [vmem:[#allocation2 + $0xe0] sm:$0x1]
  %v2933 = vld [vmem:[#allocation2 + $0xe4] sm:$0xe]
  %v2934 = vld [vmem:[#allocation2 + $0xe8] sm:$0xf]
  %v2935 = vld [vmem:[#allocation2 + $0xec] sm:$0x1]
  %v2936 = vld [vmem:[#allocation2 + $0xf0] sm:$0xe]
  %v2937 = vld [vmem:[#allocation2 + $0xf4] sm:$0xf]
  %v2938 = vld [vmem:[#allocation2 + $0xf8] sm:$0x1]
  %v2939 = vld [vmem:[#allocation2 + $0xfc] sm:$0xe]
  %v2940 = vld [vmem:[#allocation2 + $0x100] sm:$0xf]
  %v2941 = vld [vmem:[#allocation2 + $0x104] sm:$0x1]
  %v2942 = vld [vmem:[#allocation2 + $0x108] sm:$0xe]
  %v2943 = vld [vmem:[#allocation2 + $0x10c] sm:$0xf]
  %v2944 = vld [vmem:[#allocation2 + $0x110] sm:$0x1]
  %v2945 = vld [vmem:[#allocation2 + $0x114] sm:$0xe]
  %v2946 = vld [vmem:[#allocation2 + $0x118] sm:$0xf]
  %v2947 = vld [vmem:[#allocation2 + $0x11c] sm:$0x1]
  %v2948 = vld [vmem:[#allocation2 + $0x120] sm:$0xe]
  %v2949 = vld [vmem:[#allocation2 + $0x124] sm:$0xf]
  %v2950 = vld [vmem:[#allocation2 + $0x128] sm:$0x1]
  %v2951 = vld [vmem:[#allocation2 + $0x12c] sm:$0xe]
  %v2952 = vld [vmem:[#allocation2 + $0x130] sm:$0xf]
  %v2953 = vld [vmem:[#allocation2 + $0x134] sm:$0x1]
  %v2954 = vld [vmem:[#allocation2 + $0x138] sm:$0xe]
  %v2955 = vld [vmem:[#allocation2 + $0x13c] sm:$0xf]
  %v2956 = vld [vmem:[#allocation2 + $0x140] sm:$0x1]
  %v2957 = vld [vmem:[#allocation2 + $0x144] sm:$0xe]
  %v2958 = vld [vmem:[#allocation2 + $0x148] sm:$0xf]
  %v2959 = vld [vmem:[#allocation2 + $0x14c] sm:$0x1]
  %v2960 = vld [vmem:[#allocation2 + $0x150] sm:$0xe]
  %v2961 = vld [vmem:[#allocation2 + $0x154] sm:$0xf]
  %v2962 = vld [vmem:[#allocation2 + $0x158] sm:$0x1]
  %v2963 = vld [vmem:[#allocation2 + $0x15c] sm:$0xe]
  %v2964 = vld [vmem:[#allocation2 + $0x160] sm:$0xf]
  %v2965 = vld [vmem:[#allocation2 + $0x164] sm:$0x1]
  %v2966 = vld [vmem:[#allocation2 + $0x168] sm:$0xe]
  %v2967 = vld [vmem:[#allocation2 + $0x16c] sm:$0xf]
  %v2968 = vld [vmem:[#allocation2 + $0x170] sm:$0x1]
  %v2969 = vld [vmem:[#allocation2 + $0x174] sm:$0xe]
  %v2970 = vld [vmem:[#allocation2 + $0x178] sm:$0xf]
  %v2971 = vld [vmem:[#allocation2 + $0x17c] sm:$0x1]
  %v2972 = vld [vmem:[#allocation2 + $0x180] sm:$0xe]
  %v2973 = vld [vmem:[#allocation2 + $0x184] sm:$0xf]
  %v2974 = vld [vmem:[#allocation2 + $0x188] sm:$0x1]
  %v2975 = vld [vmem:[#allocation2 + $0x18c] sm:$0xe]
  %v2976 = vld [vmem:[#allocation2 + $0x190] sm:$0xf]
  %v2977 = vld [vmem:[#allocation2 + $0x194] sm:$0x1]
  %vm3074 = vcmask 1042432
  %vm3075 = vcmask 1046532
  %vm3076 = vmor %vm3074, %vm3075
  %v3077 = vrot.slane %v2882, 5
  %v3078 = vrot.slane %v3077, 4
  %v3079 = vrot.slane %v2883, 5
  %v3080 = vsel %vm3076, %v3078, %v3079
  %v3081 = vrot.slane %v3079, 4
  %v3082 = vrot.slane %v2884, 5
  %v3083 = vsel %vm3076, %v3081, %v3082
  %v3084 = vrot.slane %v2885, 5
  %v3085 = vrot.slane %v3084, 4
  %v3086 = vrot.slane %v2886, 5
  %v3087 = vsel %vm3076, %v3085, %v3086
  %v3088 = vrot.slane %v3086, 4
  %v3089 = vrot.slane %v2887, 5
  %v3090 = vsel %vm3076, %v3088, %v3089
  %v3091 = vrot.slane %v2888, 5
  %v3092 = vrot.slane %v3091, 4
  %v3093 = vrot.slane %v2889, 5
  %v3094 = vsel %vm3076, %v3092, %v3093
  %v3095 = vrot.slane %v3093, 4
  %v3096 = vrot.slane %v2890, 5
  %v3097 = vsel %vm3076, %v3095, %v3096
  %v3098 = vrot.slane %v2891, 5
  %v3099 = vrot.slane %v3098, 4
  %v3100 = vrot.slane %v2892, 5
  %v3101 = vsel %vm3076, %v3099, %v3100
  %v3102 = vrot.slane %v3100, 4
  %v3103 = vrot.slane %v2893, 5
  %v3104 = vsel %vm3076, %v3102, %v3103
  %v3105 = vrot.slane %v2894, 5
  %v3106 = vrot.slane %v3105, 4
  %v3107 = vrot.slane %v2895, 5
  %v3108 = vsel %vm3076, %v3106, %v3107
  %v3109 = vrot.slane %v3107, 4
  %v3110 = vrot.slane %v2896, 5
  %v3111 = vsel %vm3076, %v3109, %v3110
  %v3112 = vrot.slane %v2897, 5
  %v3113 = vrot.slane %v3112, 4
  %v3114 = vrot.slane %v2898, 5
  %v3115 = vsel %vm3076, %v3113, %v3114
  %v3116 = vrot.slane %v3114, 4
  %v3117 = vrot.slane %v2899, 5
  %v3118 = vsel %vm3076, %v3116, %v3117
  %v3119 = vrot.slane %v2900, 5
  %v3120 = vrot.slane %v3119, 4
  %v3121 = vrot.slane %v2901, 5
  %v3122 = vsel %vm3076, %v3120, %v3121
  %v3123 = vrot.slane %v3121, 4
  %v3124 = vrot.slane %v2902, 5
  %v3125 = vsel %vm3076, %v3123, %v3124
  %v3126 = vrot.slane %v2903, 5
  %v3127 = vrot.slane %v3126, 4
  %v3128 = vrot.slane %v2904, 5
  %v3129 = vsel %vm3076, %v3127, %v3128
  %v3130 = vrot.slane %v3128, 4
  %v3131 = vrot.slane %v2905, 5
  %v3132 = vsel %vm3076, %v3130, %v3131
  %v3133 = vrot.slane %v2906, 5
  %v3134 = vrot.slane %v3133, 4
  %v3135 = vrot.slane %v2907, 5
  %v3136 = vsel %vm3076, %v3134, %v3135
  %v3137 = vrot.slane %v3135, 4
  %v3138 = vrot.slane %v2908, 5
  %v3139 = vsel %vm3076, %v3137, %v3138
  %v3140 = vrot.slane %v2909, 5
  %v3141 = vrot.slane %v3140, 4
  %v3142 = vrot.slane %v2910, 5
  %v3143 = vsel %vm3076, %v3141, %v3142
  %v3144 = vrot.slane %v3142, 4
  %v3145 = vrot.slane %v2911, 5
  %v3146 = vsel %vm3076, %v3144, %v3145
  %v3147 = vrot.slane %v2912, 5
  %v3148 = vrot.slane %v3147, 4
  %v3149 = vrot.slane %v2913, 5
  %v3150 = vsel %vm3076, %v3148, %v3149
  %v3151 = vrot.slane %v3149, 4
  %v3152 = vrot.slane %v2914, 5
  %v3153 = vsel %vm3076, %v3151, %v3152
  %v3154 = vrot.slane %v2915, 5
  %v3155 = vrot.slane %v3154, 4
  %v3156 = vrot.slane %v2916, 5
  %v3157 = vsel %vm3076, %v3155, %v3156
  %v3158 = vrot.slane %v3156, 4
  %v3159 = vrot.slane %v2917, 5
  %v3160 = vsel %vm3076, %v3158, %v3159
  %v3161 = vrot.slane %v2918, 5
  %v3162 = vrot.slane %v3161, 4
  %v3163 = vrot.slane %v2919, 5
  %v3164 = vsel %vm3076, %v3162, %v3163
  %v3165 = vrot.slane %v3163, 4
  %v3166 = vrot.slane %v2920, 5
  %v3167 = vsel %vm3076, %v3165, %v3166
  %v3168 = vrot.slane %v2921, 5
  %v3169 = vrot.slane %v3168, 4
  %v3170 = vrot.slane %v2922, 5
  %v3171 = vsel %vm3076, %v3169, %v3170
  %v3172 = vrot.slane %v3170, 4
  %v3173 = vrot.slane %v2923, 5
  %v3174 = vsel %vm3076, %v3172, %v3173
  %v3175 = vrot.slane %v2924, 5
  %v3176 = vrot.slane %v3175, 4
  %v3177 = vrot.slane %v2925, 5
  %v3178 = vsel %vm3076, %v3176, %v3177
  %v3179 = vrot.slane %v3177, 4
  %v3180 = vrot.slane %v2926, 5
  %v3181 = vsel %vm3076, %v3179, %v3180
  %v3182 = vrot.slane %v2927, 5
  %v3183 = vrot.slane %v3182, 4
  %v3184 = vrot.slane %v2928, 5
  %v3185 = vsel %vm3076, %v3183, %v3184
  %v3186 = vrot.slane %v3184, 4
  %v3187 = vrot.slane %v2929, 5
  %v3188 = vsel %vm3076, %v3186, %v3187
  %v3189 = vrot.slane %v2930, 5
  %v3190 = vrot.slane %v3189, 4
  %v3191 = vrot.slane %v2931, 5
  %v3192 = vsel %vm3076, %v3190, %v3191
  %v3193 = vrot.slane %v3191, 4
  %v3194 = vrot.slane %v2932, 5
  %v3195 = vsel %vm3076, %v3193, %v3194
  %v3196 = vrot.slane %v2933, 5
  %v3197 = vrot.slane %v3196, 4
  %v3198 = vrot.slane %v2934, 5
  %v3199 = vsel %vm3076, %v3197, %v3198
  %v3200 = vrot.slane %v3198, 4
  %v3201 = vrot.slane %v2935, 5
  %v3202 = vsel %vm3076, %v3200, %v3201
  %v3203 = vrot.slane %v2936, 5
  %v3204 = vrot.slane %v3203, 4
  %v3205 = vrot.slane %v2937, 5
  %v3206 = vsel %vm3076, %v3204, %v3205
  %v3207 = vrot.slane %v3205, 4
  %v3208 = vrot.slane %v2938, 5
  %v3209 = vsel %vm3076, %v3207, %v3208
  %v3210 = vrot.slane %v2939, 5
  %v3211 = vrot.slane %v3210, 4
  %v3212 = vrot.slane %v2940, 5
  %v3213 = vsel %vm3076, %v3211, %v3212
  %v3214 = vrot.slane %v3212, 4
  %v3215 = vrot.slane %v2941, 5
  %v3216 = vsel %vm3076, %v3214, %v3215
  %v3217 = vrot.slane %v2942, 5
  %v3218 = vrot.slane %v3217, 4
  %v3219 = vrot.slane %v2943, 5
  %v3220 = vsel %vm3076, %v3218, %v3219
  %v3221 = vrot.slane %v3219, 4
  %v3222 = vrot.slane %v2944, 5
  %v3223 = vsel %vm3076, %v3221, %v3222
  %v3224 = vrot.slane %v2945, 5
  %v3225 = vrot.slane %v3224, 4
  %v3226 = vrot.slane %v2946, 5
  %v3227 = vsel %vm3076, %v3225, %v3226
  %v3228 = vrot.slane %v3226, 4
  %v3229 = vrot.slane %v2947, 5
  %v3230 = vsel %vm3076, %v3228, %v3229
  %v3231 = vrot.slane %v2948, 5
  %v3232 = vrot.slane %v3231, 4
  %v3233 = vrot.slane %v2949, 5
  %v3234 = vsel %vm3076, %v3232, %v3233
  %v3235 = vrot.slane %v3233, 4
  %v3236 = vrot.slane %v2950, 5
  %v3237 = vsel %vm3076, %v3235, %v3236
  %v3238 = vrot.slane %v2951, 5
  %v3239 = vrot.slane %v3238, 4
  %v3240 = vrot.slane %v2952, 5
  %v3241 = vsel %vm3076, %v3239, %v3240
  %v3242 = vrot.slane %v3240, 4
  %v3243 = vrot.slane %v2953, 5
  %v3244 = vsel %vm3076, %v3242, %v3243
  %v3245 = vrot.slane %v2954, 5
  %v3246 = vrot.slane %v3245, 4
  %v3247 = vrot.slane %v2955, 5
  %v3248 = vsel %vm3076, %v3246, %v3247
  %v3249 = vrot.slane %v3247, 4
  %v3250 = vrot.slane %v2956, 5
  %v3251 = vsel %vm3076, %v3249, %v3250
  %v3252 = vrot.slane %v2957, 5
  %v3253 = vrot.slane %v3252, 4
  %v3254 = vrot.slane %v2958, 5
  %v3255 = vsel %vm3076, %v3253, %v3254
  %v3256 = vrot.slane %v3254, 4
  %v3257 = vrot.slane %v2959, 5
  %v3258 = vsel %vm3076, %v3256, %v3257
  %v3259 = vrot.slane %v2960, 5
  %v3260 = vrot.slane %v3259, 4
  %v3261 = vrot.slane %v2961, 5
  %v3262 = vsel %vm3076, %v3260, %v3261
  %v3263 = vrot.slane %v3261, 4
  %v3264 = vrot.slane %v2962, 5
  %v3265 = vsel %vm3076, %v3263, %v3264
  %v3266 = vrot.slane %v2963, 5
  %v3267 = vrot.slane %v3266, 4
  %v3268 = vrot.slane %v2964, 5
  %v3269 = vsel %vm3076, %v3267, %v3268
  %v3270 = vrot.slane %v3268, 4
  %v3271 = vrot.slane %v2965, 5
  %v3272 = vsel %vm3076, %v3270, %v3271
  %v3273 = vrot.slane %v2966, 5
  %v3274 = vrot.slane %v3273, 4
  %v3275 = vrot.slane %v2967, 5
  %v3276 = vsel %vm3076, %v3274, %v3275
  %v3277 = vrot.slane %v3275, 4
  %v3278 = vrot.slane %v2968, 5
  %v3279 = vsel %vm3076, %v3277, %v3278
  %v3280 = vrot.slane %v2969, 5
  %v3281 = vrot.slane %v3280, 4
  %v3282 = vrot.slane %v2970, 5
  %v3283 = vsel %vm3076, %v3281, %v3282
  %v3284 = vrot.slane %v3282, 4
  %v3285 = vrot.slane %v2971, 5
  %v3286 = vsel %vm3076, %v3284, %v3285
  %v3287 = vrot.slane %v2972, 5
  %v3288 = vrot.slane %v3287, 4
  %v3289 = vrot.slane %v2973, 5
  %v3290 = vsel %vm3076, %v3288, %v3289
  %v3291 = vrot.slane %v3289, 4
  %v3292 = vrot.slane %v2974, 5
  %v3293 = vsel %vm3076, %v3291, %v3292
  %v3294 = vrot.slane %v2975, 5
  %v3295 = vrot.slane %v3294, 4
  %v3296 = vrot.slane %v2976, 5
  %v3297 = vsel %vm3076, %v3295, %v3296
  %v3298 = vrot.slane %v3296, 4
  %v3299 = vrot.slane %v2977, 5
  %v3300 = vsel %vm3076, %v3298, %v3299
  %3301 = vrot.lane.b32.xlu0 %v3080, 8
  %v3302 = vpop.permute.xlu0 %3301
  %3303 = vrot.lane.b32.xlu0 %v3083, 8
  %v3304 = vpop.permute.xlu0 %3303
  %3305 = vrot.lane.b32.xlu0 %v3087, 8
  %v3306 = vpop.permute.xlu0 %3305
  %3307 = vrot.lane.b32.xlu0 %v3090, 8
  %v3308 = vpop.permute.xlu0 %3307
  %3309 = vrot.lane.b32.xlu0 %v3094, 8
  %v3310 = vpop.permute.xlu0 %3309
  %3311 = vrot.lane.b32.xlu0 %v3097, 8
  %v3312 = vpop.permute.xlu0 %3311
  %3313 = vrot.lane.b32.xlu0 %v3101, 8
  %v3314 = vpop.permute.xlu0 %3313
  %3315 = vrot.lane.b32.xlu0 %v3104, 8
  %v3316 = vpop.permute.xlu0 %3315
  %3317 = vrot.lane.b32.xlu0 %v3108, 8
  %v3318 = vpop.permute.xlu0 %3317
  %3319 = vrot.lane.b32.xlu0 %v3111, 8
  %v3320 = vpop.permute.xlu0 %3319
  %3321 = vrot.lane.b32.xlu0 %v3115, 8
  %v3322 = vpop.permute.xlu0 %3321
  %3323 = vrot.lane.b32.xlu0 %v3118, 8
  %v3324 = vpop.permute.xlu0 %3323
  %3325 = vrot.lane.b32.xlu0 %v3122, 8
  %v3326 = vpop.permute.xlu0 %3325
  %3327 = vrot.lane.b32.xlu0 %v3125, 8
  %v3328 = vpop.permute.xlu0 %3327
  %3329 = vrot.lane.b32.xlu0 %v3129, 8
  %v3330 = vpop.permute.xlu0 %3329
  %3331 = vrot.lane.b32.xlu0 %v3132, 8
  %v3332 = vpop.permute.xlu0 %3331
  %3333 = vrot.lane.b32.xlu0 %v3136, 8
  %v3334 = vpop.permute.xlu0 %3333
  %3335 = vrot.lane.b32.xlu0 %v3139, 8
  %v3336 = vpop.permute.xlu0 %3335
  %3337 = vrot.lane.b32.xlu0 %v3143, 8
  %v3338 = vpop.permute.xlu0 %3337
  %3339 = vrot.lane.b32.xlu0 %v3146, 8
  %v3340 = vpop.permute.xlu0 %3339
  %3341 = vrot.lane.b32.xlu0 %v3150, 8
  %v3342 = vpop.permute.xlu0 %3341
  %3343 = vrot.lane.b32.xlu0 %v3153, 8
  %v3344 = vpop.permute.xlu0 %3343
  %3345 = vrot.lane.b32.xlu0 %v3157, 8
  %v3346 = vpop.permute.xlu0 %3345
  %3347 = vrot.lane.b32.xlu0 %v3160, 8
  %v3348 = vpop.permute.xlu0 %3347
  %3349 = vrot.lane.b32.xlu0 %v3164, 8
  %v3350 = vpop.permute.xlu0 %3349
  %3351 = vrot.lane.b32.xlu0 %v3167, 8
  %v3352 = vpop.permute.xlu0 %3351
  %3353 = vrot.lane.b32.xlu0 %v3171, 8
  %v3354 = vpop.permute.xlu0 %3353
  %3355 = vrot.lane.b32.xlu0 %v3174, 8
  %v3356 = vpop.permute.xlu0 %3355
  %3357 = vrot.lane.b32.xlu0 %v3178, 8
  %v3358 = vpop.permute.xlu0 %3357
  %3359 = vrot.lane.b32.xlu0 %v3181, 8
  %v3360 = vpop.permute.xlu0 %3359
  %3361 = vrot.lane.b32.xlu0 %v3185, 8
  %v3362 = vpop.permute.xlu0 %3361
  %3363 = vrot.lane.b32.xlu0 %v3188, 8
  %v3364 = vpop.permute.xlu0 %3363
  %3365 = vrot.lane.b32.xlu0 %v3192, 8
  %v3366 = vpop.permute.xlu0 %3365
  %3367 = vrot.lane.b32.xlu0 %v3195, 8
  %v3368 = vpop.permute.xlu0 %3367
  %3369 = vrot.lane.b32.xlu0 %v3199, 8
  %v3370 = vpop.permute.xlu0 %3369
  %3371 = vrot.lane.b32.xlu0 %v3202, 8
  %v3372 = vpop.permute.xlu0 %3371
  %3373 = vrot.lane.b32.xlu0 %v3206, 8
  %v3374 = vpop.permute.xlu0 %3373
  %3375 = vrot.lane.b32.xlu0 %v3209, 8
  %v3376 = vpop.permute.xlu0 %3375
  %3377 = vrot.lane.b32.xlu0 %v3213, 8
  %v3378 = vpop.permute.xlu0 %3377
  %3379 = vrot.lane.b32.xlu0 %v3216, 8
  %v3380 = vpop.permute.xlu0 %3379
  %3381 = vrot.lane.b32.xlu0 %v3220, 8
  %v3382 = vpop.permute.xlu0 %3381
  %3383 = vrot.lane.b32.xlu0 %v3223, 8
  %v3384 = vpop.permute.xlu0 %3383
  %3385 = vrot.lane.b32.xlu0 %v3227, 8
  %v3386 = vpop.permute.xlu0 %3385
  %3387 = vrot.lane.b32.xlu0 %v3230, 8
  %v3388 = vpop.permute.xlu0 %3387
  %3389 = vrot.lane.b32.xlu0 %v3234, 8
  %v3390 = vpop.permute.xlu0 %3389
  %3391 = vrot.lane.b32.xlu0 %v3237, 8
  %v3392 = vpop.permute.xlu0 %3391
  %3393 = vrot.lane.b32.xlu0 %v3241, 8
  %v3394 = vpop.permute.xlu0 %3393
  %3395 = vrot.lane.b32.xlu0 %v3244, 8
  %v3396 = vpop.permute.xlu0 %3395
  %3397 = vrot.lane.b32.xlu0 %v3248, 8
  %v3398 = vpop.permute.xlu0 %3397
  %3399 = vrot.lane.b32.xlu0 %v3251, 8
  %v3400 = vpop.permute.xlu0 %3399
  %3401 = vrot.lane.b32.xlu0 %v3255, 8
  %v3402 = vpop.permute.xlu0 %3401
  %3403 = vrot.lane.b32.xlu0 %v3258, 8
  %v3404 = vpop.permute.xlu0 %3403
  %3405 = vrot.lane.b32.xlu0 %v3262, 8
  %v3406 = vpop.permute.xlu0 %3405
  %3407 = vrot.lane.b32.xlu0 %v3265, 8
  %v3408 = vpop.permute.xlu0 %3407
  %3409 = vrot.lane.b32.xlu0 %v3269, 8
  %v3410 = vpop.permute.xlu0 %3409
  %3411 = vrot.lane.b32.xlu0 %v3272, 8
  %v3412 = vpop.permute.xlu0 %3411
  %3413 = vrot.lane.b32.xlu0 %v3276, 8
  %v3414 = vpop.permute.xlu0 %3413
  %3415 = vrot.lane.b32.xlu0 %v3279, 8
  %v3416 = vpop.permute.xlu0 %3415
  %3417 = vrot.lane.b32.xlu0 %v3283, 8
  %v3418 = vpop.permute.xlu0 %3417
  %3419 = vrot.lane.b32.xlu0 %v3286, 8
  %v3420 = vpop.permute.xlu0 %3419
  %3421 = vrot.lane.b32.xlu0 %v3290, 8
  %v3422 = vpop.permute.xlu0 %3421
  %3423 = vrot.lane.b32.xlu0 %v3293, 8
  %v3424 = vpop.permute.xlu0 %3423
  %3425 = vrot.lane.b32.xlu0 %v3297, 8
  %v3426 = vpop.permute.xlu0 %3425
  %3427 = vrot.lane.b32.xlu0 %v3300, 8
  %v3428 = vpop.permute.xlu0 %3427
  %vm3493 = vcmask 93248
  %3494 = vst.msk [vmem:[#allocation4] sm:$0xf] %vm3493, %v3302
  %3495 = vst.msk [vmem:[#allocation4 + $0x4] sm:$0xf] %vm3493, %v3304
  %3496 = vst.msk [vmem:[#allocation4 + $0x8] sm:$0xf] %vm3493, %v3306
  %3497 = vst.msk [vmem:[#allocation4 + $0xc] sm:$0xf] %vm3493, %v3308
  %3498 = vst.msk [vmem:[#allocation4 + $0x10] sm:$0xf] %vm3493, %v3310
  %3499 = vst.msk [vmem:[#allocation4 + $0x14] sm:$0xf] %vm3493, %v3312
  %3500 = vst.msk [vmem:[#allocation4 + $0x18] sm:$0xf] %vm3493, %v3314
  %3501 = vst.msk [vmem:[#allocation4 + $0x1c] sm:$0xf] %vm3493, %v3316
  %3502 = vst.msk [vmem:[#allocation4 + $0x20] sm:$0xf] %vm3493, %v3318
  %3503 = vst.msk [vmem:[#allocation4 + $0x24] sm:$0xf] %vm3493, %v3320
  %3504 = vst.msk [vmem:[#allocation4 + $0x28] sm:$0xf] %vm3493, %v3322
  %3505 = vst.msk [vmem:[#allocation4 + $0x2c] sm:$0xf] %vm3493, %v3324
  %3506 = vst.msk [vmem:[#allocation4 + $0x30] sm:$0xf] %vm3493, %v3326
  %3507 = vst.msk [vmem:[#allocation4 + $0x34] sm:$0xf] %vm3493, %v3328
  %3508 = vst.msk [vmem:[#allocation4 + $0x38] sm:$0xf] %vm3493, %v3330
  %3509 = vst.msk [vmem:[#allocation4 + $0x3c] sm:$0xf] %vm3493, %v3332
  %3510 = vst.msk [vmem:[#allocation4 + $0x40] sm:$0xf] %vm3493, %v3334
  %3511 = vst.msk [vmem:[#allocation4 + $0x44] sm:$0xf] %vm3493, %v3336
  %3512 = vst.msk [vmem:[#allocation4 + $0x48] sm:$0xf] %vm3493, %v3338
  %3513 = vst.msk [vmem:[#allocation4 + $0x4c] sm:$0xf] %vm3493, %v3340
  %3514 = vst.msk [vmem:[#allocation4 + $0x50] sm:$0xf] %vm3493, %v3342
  %3515 = vst.msk [vmem:[#allocation4 + $0x54] sm:$0xf] %vm3493, %v3344
  %3516 = vst.msk [vmem:[#allocation4 + $0x58] sm:$0xf] %vm3493, %v3346
  %3517 = vst.msk [vmem:[#allocation4 + $0x5c] sm:$0xf] %vm3493, %v3348
  %3518 = vst.msk [vmem:[#allocation4 + $0x60] sm:$0xf] %vm3493, %v3350
  %3519 = vst.msk [vmem:[#allocation4 + $0x64] sm:$0xf] %vm3493, %v3352
  %3520 = vst.msk [vmem:[#allocation4 + $0x68] sm:$0xf] %vm3493, %v3354
  %3521 = vst.msk [vmem:[#allocation4 + $0x6c] sm:$0xf] %vm3493, %v3356
  %3522 = vst.msk [vmem:[#allocation4 + $0x70] sm:$0xf] %vm3493, %v3358
  %3523 = vst.msk [vmem:[#allocation4 + $0x74] sm:$0xf] %vm3493, %v3360
  %3524 = vst.msk [vmem:[#allocation4 + $0x78] sm:$0xf] %vm3493, %v3362
  %3525 = vst.msk [vmem:[#allocation4 + $0x7c] sm:$0xf] %vm3493, %v3364
  %3526 = vst.msk [vmem:[#allocation4 + $0x80] sm:$0xf] %vm3493, %v3366
  %3527 = vst.msk [vmem:[#allocation4 + $0x84] sm:$0xf] %vm3493, %v3368
  %3528 = vst.msk [vmem:[#allocation4 + $0x88] sm:$0xf] %vm3493, %v3370
  %3529 = vst.msk [vmem:[#allocation4 + $0x8c] sm:$0xf] %vm3493, %v3372
  %3530 = vst.msk [vmem:[#allocation4 + $0x90] sm:$0xf] %vm3493, %v3374
  %3531 = vst.msk [vmem:[#allocation4 + $0x94] sm:$0xf] %vm3493, %v3376
  %3532 = vst.msk [vmem:[#allocation4 + $0x98] sm:$0xf] %vm3493, %v3378
  %3533 = vst.msk [vmem:[#allocation4 + $0x9c] sm:$0xf] %vm3493, %v3380
  %3534 = vst.msk [vmem:[#allocation4 + $0xa0] sm:$0xf] %vm3493, %v3382
  %3535 = vst.msk [vmem:[#allocation4 + $0xa4] sm:$0xf] %vm3493, %v3384
  %3536 = vst.msk [vmem:[#allocation4 + $0xa8] sm:$0xf] %vm3493, %v3386
  %3537 = vst.msk [vmem:[#allocation4 + $0xac] sm:$0xf] %vm3493, %v3388
  %3538 = vst.msk [vmem:[#allocation4 + $0xb0] sm:$0xf] %vm3493, %v3390
  %3539 = vst.msk [vmem:[#allocation4 + $0xb4] sm:$0xf] %vm3493, %v3392
  %3540 = vst.msk [vmem:[#allocation4 + $0xb8] sm:$0xf] %vm3493, %v3394
  %3541 = vst.msk [vmem:[#allocation4 + $0xbc] sm:$0xf] %vm3493, %v3396
  %3542 = vst.msk [vmem:[#allocation4 + $0xc0] sm:$0xf] %vm3493, %v3398
  %3543 = vst.msk [vmem:[#allocation4 + $0xc4] sm:$0xf] %vm3493, %v3400
  %3544 = vst.msk [vmem:[#allocation4 + $0xc8] sm:$0xf] %vm3493, %v3402
  %3545 = vst.msk [vmem:[#allocation4 + $0xcc] sm:$0xf] %vm3493, %v3404
  %3546 = vst.msk [vmem:[#allocation4 + $0xd0] sm:$0xf] %vm3493, %v3406
  %3547 = vst.msk [vmem:[#allocation4 + $0xd4] sm:$0xf] %vm3493, %v3408
  %3548 = vst.msk [vmem:[#allocation4 + $0xd8] sm:$0xf] %vm3493, %v3410
  %3549 = vst.msk [vmem:[#allocation4 + $0xdc] sm:$0xf] %vm3493, %v3412
  %3550 = vst.msk [vmem:[#allocation4 + $0xe0] sm:$0xf] %vm3493, %v3414
  %3551 = vst.msk [vmem:[#allocation4 + $0xe4] sm:$0xf] %vm3493, %v3416
  %3552 = vst.msk [vmem:[#allocation4 + $0xe8] sm:$0xf] %vm3493, %v3418
  %3553 = vst.msk [vmem:[#allocation4 + $0xec] sm:$0xf] %vm3493, %v3420
  %3554 = vst.msk [vmem:[#allocation4 + $0xf0] sm:$0xf] %vm3493, %v3422
  %3555 = vst.msk [vmem:[#allocation4 + $0xf4] sm:$0xf] %vm3493, %v3424
  %3556 = vst.msk [vmem:[#allocation4 + $0xf8] sm:$0xf] %vm3493, %v3426
  %3557 = vst.msk [vmem:[#allocation4 + $0xfc] sm:$0xf] %vm3493, %v3428
  %v3558 = vld [vmem:[#allocation4] sm:$0xf]
  %v3559 = vld [vmem:[#allocation4 + $0x4] sm:$0xf]
  %v3560 = vld [vmem:[#allocation4 + $0x8] sm:$0xf]
  %v3561 = vld [vmem:[#allocation4 + $0xc] sm:$0xf]
  %v3562 = vld [vmem:[#allocation4 + $0x10] sm:$0xf]
  %v3563 = vld [vmem:[#allocation4 + $0x14] sm:$0xf]
  %v3564 = vld [vmem:[#allocation4 + $0x18] sm:$0xf]
  %v3565 = vld [vmem:[#allocation4 + $0x1c] sm:$0xf]
  %v3566 = vld [vmem:[#allocation4 + $0x20] sm:$0xf]
  %v3567 = vld [vmem:[#allocation4 + $0x24] sm:$0xf]
  %v3568 = vld [vmem:[#allocation4 + $0x28] sm:$0xf]
  %v3569 = vld [vmem:[#allocation4 + $0x2c] sm:$0xf]
  %v3570 = vld [vmem:[#allocation4 + $0x30] sm:$0xf]
  %v3571 = vld [vmem:[#allocation4 + $0x34] sm:$0xf]
  %v3572 = vld [vmem:[#allocation4 + $0x38] sm:$0xf]
  %v3573 = vld [vmem:[#allocation4 + $0x3c] sm:$0xf]
  %v3574 = vld [vmem:[#allocation4 + $0x40] sm:$0xf]
  %v3575 = vld [vmem:[#allocation4 + $0x44] sm:$0xf]
  %v3576 = vld [vmem:[#allocation4 + $0x48] sm:$0xf]
  %v3577 = vld [vmem:[#allocation4 + $0x4c] sm:$0xf]
  %v3578 = vld [vmem:[#allocation4 + $0x50] sm:$0xf]
  %v3579 = vld [vmem:[#allocation4 + $0x54] sm:$0xf]
  %v3580 = vld [vmem:[#allocation4 + $0x58] sm:$0xf]
  %v3581 = vld [vmem:[#allocation4 + $0x5c] sm:$0xf]
  %v3582 = vld [vmem:[#allocation4 + $0x60] sm:$0xf]
  %v3583 = vld [vmem:[#allocation4 + $0x64] sm:$0xf]
  %v3584 = vld [vmem:[#allocation4 + $0x68] sm:$0xf]
  %v3585 = vld [vmem:[#allocation4 + $0x6c] sm:$0xf]
  %v3586 = vld [vmem:[#allocation4 + $0x70] sm:$0xf]
  %v3587 = vld [vmem:[#allocation4 + $0x74] sm:$0xf]
  %v3588 = vld [vmem:[#allocation4 + $0x78] sm:$0xf]
  %v3589 = vld [vmem:[#allocation4 + $0x7c] sm:$0xf]
  %v3590 = vld [vmem:[#allocation4 + $0x80] sm:$0xf]
  %v3591 = vld [vmem:[#allocation4 + $0x84] sm:$0xf]
  %v3592 = vld [vmem:[#allocation4 + $0x88] sm:$0xf]
  %v3593 = vld [vmem:[#allocation4 + $0x8c] sm:$0xf]
  %v3594 = vld [vmem:[#allocation4 + $0x90] sm:$0xf]
  %v3595 = vld [vmem:[#allocation4 + $0x94] sm:$0xf]
  %v3596 = vld [vmem:[#allocation4 + $0x98] sm:$0xf]
  %v3597 = vld [vmem:[#allocation4 + $0x9c] sm:$0xf]
  %v3598 = vld [vmem:[#allocation4 + $0xa0] sm:$0xf]
  %v3599 = vld [vmem:[#allocation4 + $0xa4] sm:$0xf]
  %v3600 = vld [vmem:[#allocation4 + $0xa8] sm:$0xf]
  %v3601 = vld [vmem:[#allocation4 + $0xac] sm:$0xf]
  %v3602 = vld [vmem:[#allocation4 + $0xb0] sm:$0xf]
  %v3603 = vld [vmem:[#allocation4 + $0xb4] sm:$0xf]
  %v3604 = vld [vmem:[#allocation4 + $0xb8] sm:$0xf]
  %v3605 = vld [vmem:[#allocation4 + $0xbc] sm:$0xf]
  %v3606 = vld [vmem:[#allocation4 + $0xc0] sm:$0xf]
  %v3607 = vld [vmem:[#allocation4 + $0xc4] sm:$0xf]
  %v3608 = vld [vmem:[#allocation4 + $0xc8] sm:$0xf]
  %v3609 = vld [vmem:[#allocation4 + $0xcc] sm:$0xf]
  %v3610 = vld [vmem:[#allocation4 + $0xd0] sm:$0xf]
  %v3611 = vld [vmem:[#allocation4 + $0xd4] sm:$0xf]
  %v3612 = vld [vmem:[#allocation4 + $0xd8] sm:$0xf]
  %v3613 = vld [vmem:[#allocation4 + $0xdc] sm:$0xf]
  %v3614 = vld [vmem:[#allocation4 + $0xe0] sm:$0xf]
  %v3615 = vld [vmem:[#allocation4 + $0xe4] sm:$0xf]
  %v3616 = vld [vmem:[#allocation4 + $0xe8] sm:$0xf]
  %v3617 = vld [vmem:[#allocation4 + $0xec] sm:$0xf]
  %v3618 = vld [vmem:[#allocation4 + $0xf0] sm:$0xf]
  %v3619 = vld [vmem:[#allocation4 + $0xf4] sm:$0xf]
  %v3620 = vld [vmem:[#allocation4 + $0xf8] sm:$0xf]
  %v3621 = vld [vmem:[#allocation4 + $0xfc] sm:$0xf]
  %v3622 = vld [vmem:[%s3] sm:$0xf]
  %v3623 = vld [vmem:[%s3 + $0x4] sm:$0x3]
  %v3624 = vld [vmem:[%s1403] sm:$0xf]
  %v3625 = vld [vmem:[%s1403 + $0x4] sm:$0xf]
  %v3626 = vld [vmem:[%s1403 + $0xc] sm:$0xf]
  %v3627 = vld [vmem:[%s1403 + $0x10] sm:$0xf]
  %v3628 = vld [vmem:[%s1403 + $0x18] sm:$0xf]
  %v3629 = vld [vmem:[%s1403 + $0x1c] sm:$0xf]
  %v3630 = vld [vmem:[%s1403 + $0x24] sm:$0xf]
  %v3631 = vld [vmem:[%s1403 + $0x28] sm:$0xf]
  %v3632 = vld [vmem:[%s1403 + $0x30] sm:$0xf]
  %v3633 = vld [vmem:[%s1403 + $0x34] sm:$0xf]
  %v3634 = vld [vmem:[%s1403 + $0x3c] sm:$0xf]
  %v3635 = vld [vmem:[%s1403 + $0x40] sm:$0xf]
  %v3636 = vld [vmem:[%s1403 + $0x48] sm:$0xf]
  %v3637 = vld [vmem:[%s1403 + $0x4c] sm:$0xf]
  %v3638 = vld [vmem:[%s1403 + $0x54] sm:$0xf]
  %v3639 = vld [vmem:[%s1403 + $0x58] sm:$0xf]
  %v3640 = vld [vmem:[%s1403 + $0x60] sm:$0xf]
  %v3641 = vld [vmem:[%s1403 + $0x64] sm:$0xf]
  %v3642 = vld [vmem:[%s1403 + $0x6c] sm:$0xf]
  %v3643 = vld [vmem:[%s1403 + $0x70] sm:$0xf]
  %v3644 = vld [vmem:[%s1403 + $0x78] sm:$0xf]
  %v3645 = vld [vmem:[%s1403 + $0x7c] sm:$0xf]
  %v3646 = vld [vmem:[%s1403 + $0x84] sm:$0xf]
  %v3647 = vld [vmem:[%s1403 + $0x88] sm:$0xf]
  %v3648 = vld [vmem:[%s1403 + $0x90] sm:$0xf]
  %v3649 = vld [vmem:[%s1403 + $0x94] sm:$0xf]
  %v3650 = vld [vmem:[%s1403 + $0x9c] sm:$0xf]
  %v3651 = vld [vmem:[%s1403 + $0xa0] sm:$0xf]
  %v3652 = vld [vmem:[%s1403 + $0xa8] sm:$0xf]
  %v3653 = vld [vmem:[%s1403 + $0xac] sm:$0xf]
  %v3654 = vld [vmem:[%s1403 + $0xb4] sm:$0xf]
  %v3655 = vld [vmem:[%s1403 + $0xb8] sm:$0xf]
  %v3656 = vld [vmem:[%s1403 + $0xd8] sm:$0xf]
  %v3657 = vld [vmem:[%s1403 + $0xdc] sm:$0xf]
  %v3658 = vld [vmem:[%s1403 + $0xe4] sm:$0xf]
  %v3659 = vld [vmem:[%s1403 + $0xe8] sm:$0xf]
  %v3660 = vld [vmem:[%s1403 + $0xf0] sm:$0xf]
  %v3661 = vld [vmem:[%s1403 + $0xf4] sm:$0xf]
  %v3662 = vld [vmem:[%s1403 + $0xfc] sm:$0xf]
  %v3663 = vld [vmem:[%s1403 + $0x100] sm:$0xf]
  %v3664 = vld [vmem:[%s1403 + $0x108] sm:$0xf]
  %v3665 = vld [vmem:[%s1403 + $0x10c] sm:$0xf]
  %v3666 = vld [vmem:[%s1403 + $0x114] sm:$0xf]
  %v3667 = vld [vmem:[%s1403 + $0x118] sm:$0xf]
  %v3668 = vld [vmem:[%s1403 + $0x120] sm:$0xf]
  %v3669 = vld [vmem:[%s1403 + $0x124] sm:$0xf]
  %v3670 = vld [vmem:[%s1403 + $0x12c] sm:$0xf]
  %v3671 = vld [vmem:[%s1403 + $0x130] sm:$0xf]
  %v3672 = vld [vmem:[%s1403 + $0x138] sm:$0xf]
  %v3673 = vld [vmem:[%s1403 + $0x13c] sm:$0xf]
  %v3674 = vld [vmem:[%s1403 + $0x144] sm:$0xf]
  %v3675 = vld [vmem:[%s1403 + $0x148] sm:$0xf]
  %v3676 = vld [vmem:[%s1403 + $0x150] sm:$0xf]
  %v3677 = vld [vmem:[%s1403 + $0x154] sm:$0xf]
  %v3678 = vld [vmem:[%s1403 + $0x15c] sm:$0xf]
  %v3679 = vld [vmem:[%s1403 + $0x160] sm:$0xf]
  %v3680 = vld [vmem:[%s1403 + $0x168] sm:$0xf]
  %v3681 = vld [vmem:[%s1403 + $0x16c] sm:$0xf]
  %v3682 = vld [vmem:[%s1403 + $0x174] sm:$0xf]
  %v3683 = vld [vmem:[%s1403 + $0x178] sm:$0xf]
  %v3684 = vld [vmem:[%s1403 + $0x180] sm:$0xf]
  %v3685 = vld [vmem:[%s1403 + $0x184] sm:$0xf]
  %v3686 = vld [vmem:[%s1403 + $0x18c] sm:$0xf]
  %v3687 = vld [vmem:[%s1403 + $0x190] sm:$0xf]
  %3688 = vst.msk [vmem:[#allocation4] sm:$0xf] %vm39, %v3624
  %3689 = vst.msk [vmem:[#allocation4 + $0x4] sm:$0xf] %vm39, %v3625
  %3690 = vst.msk [vmem:[#allocation4 + $0x8] sm:$0xf] %vm39, %v3626
  %3691 = vst.msk [vmem:[#allocation4 + $0xc] sm:$0xf] %vm39, %v3627
  %3692 = vst.msk [vmem:[#allocation4 + $0x10] sm:$0xf] %vm39, %v3628
  %3693 = vst.msk [vmem:[#allocation4 + $0x14] sm:$0xf] %vm39, %v3629
  %3694 = vst.msk [vmem:[#allocation4 + $0x18] sm:$0xf] %vm39, %v3630
  %3695 = vst.msk [vmem:[#allocation4 + $0x1c] sm:$0xf] %vm39, %v3631
  %3696 = vst.msk [vmem:[#allocation4 + $0x20] sm:$0xf] %vm39, %v3632
  %3697 = vst.msk [vmem:[#allocation4 + $0x24] sm:$0xf] %vm39, %v3633
  %3698 = vst.msk [vmem:[#allocation4 + $0x28] sm:$0xf] %vm39, %v3634
  %3699 = vst.msk [vmem:[#allocation4 + $0x2c] sm:$0xf] %vm39, %v3635
  %3700 = vst.msk [vmem:[#allocation4 + $0x30] sm:$0xf] %vm39, %v3636
  %3701 = vst.msk [vmem:[#allocation4 + $0x34] sm:$0xf] %vm39, %v3637
  %3702 = vst.msk [vmem:[#allocation4 + $0x38] sm:$0xf] %vm39, %v3638
  %3703 = vst.msk [vmem:[#allocation4 + $0x3c] sm:$0xf] %vm39, %v3639
  %3704 = vst.msk [vmem:[#allocation4 + $0x40] sm:$0xf] %vm39, %v3640
  %3705 = vst.msk [vmem:[#allocation4 + $0x44] sm:$0xf] %vm39, %v3641
  %3706 = vst.msk [vmem:[#allocation4 + $0x48] sm:$0xf] %vm39, %v3642
  %3707 = vst.msk [vmem:[#allocation4 + $0x4c] sm:$0xf] %vm39, %v3643
  %3708 = vst.msk [vmem:[#allocation4 + $0x50] sm:$0xf] %vm39, %v3644
  %3709 = vst.msk [vmem:[#allocation4 + $0x54] sm:$0xf] %vm39, %v3645
  %3710 = vst.msk [vmem:[#allocation4 + $0x58] sm:$0xf] %vm39, %v3646
  %3711 = vst.msk [vmem:[#allocation4 + $0x5c] sm:$0xf] %vm39, %v3647
  %3712 = vst.msk [vmem:[#allocation4 + $0x60] sm:$0xf] %vm39, %v3648
  %3713 = vst.msk [vmem:[#allocation4 + $0x64] sm:$0xf] %vm39, %v3649
  %3714 = vst.msk [vmem:[#allocation4 + $0x68] sm:$0xf] %vm39, %v3650
  %3715 = vst.msk [vmem:[#allocation4 + $0x6c] sm:$0xf] %vm39, %v3651
  %3716 = vst.msk [vmem:[#allocation4 + $0x70] sm:$0xf] %vm39, %v3652
  %3717 = vst.msk [vmem:[#allocation4 + $0x74] sm:$0xf] %vm39, %v3653
  %3718 = vst.msk [vmem:[#allocation4 + $0x78] sm:$0xf] %vm39, %v3654
  %3719 = vst.msk [vmem:[#allocation4 + $0x7c] sm:$0xf] %vm39, %v3655
  %3720 = vst.msk [vmem:[#allocation4 + $0x80] sm:$0xf] %vm39, %v3656
  %3721 = vst.msk [vmem:[#allocation4 + $0x84] sm:$0xf] %vm39, %v3657
  %3722 = vst.msk [vmem:[#allocation4 + $0x88] sm:$0xf] %vm39, %v3658
  %3723 = vst.msk [vmem:[#allocation4 + $0x8c] sm:$0xf] %vm39, %v3659
  %3724 = vst.msk [vmem:[#allocation4 + $0x90] sm:$0xf] %vm39, %v3660
  %3725 = vst.msk [vmem:[#allocation4 + $0x94] sm:$0xf] %vm39, %v3661
  %3726 = vst.msk [vmem:[#allocation4 + $0x98] sm:$0xf] %vm39, %v3662
  %3727 = vst.msk [vmem:[#allocation4 + $0x9c] sm:$0xf] %vm39, %v3663
  %3728 = vst.msk [vmem:[#allocation4 + $0xa0] sm:$0xf] %vm39, %v3664
  %3729 = vst.msk [vmem:[#allocation4 + $0xa4] sm:$0xf] %vm39, %v3665
  %3730 = vst.msk [vmem:[#allocation4 + $0xa8] sm:$0xf] %vm39, %v3666
  %3731 = vst.msk [vmem:[#allocation4 + $0xac] sm:$0xf] %vm39, %v3667
  %3732 = vst.msk [vmem:[#allocation4 + $0xb0] sm:$0xf] %vm39, %v3668
  %3733 = vst.msk [vmem:[#allocation4 + $0xb4] sm:$0xf] %vm39, %v3669
  %3734 = vst.msk [vmem:[#allocation4 + $0xb8] sm:$0xf] %vm39, %v3670
  %3735 = vst.msk [vmem:[#allocation4 + $0xbc] sm:$0xf] %vm39, %v3671
  %3736 = vst.msk [vmem:[#allocation4 + $0xc0] sm:$0xf] %vm39, %v3672
  %3737 = vst.msk [vmem:[#allocation4 + $0xc4] sm:$0xf] %vm39, %v3673
  %3738 = vst.msk [vmem:[#allocation4 + $0xc8] sm:$0xf] %vm39, %v3674
  %3739 = vst.msk [vmem:[#allocation4 + $0xcc] sm:$0xf] %vm39, %v3675
  %3740 = vst.msk [vmem:[#allocation4 + $0xd0] sm:$0xf] %vm39, %v3676
  %3741 = vst.msk [vmem:[#allocation4 + $0xd4] sm:$0xf] %vm39, %v3677
  %3742 = vst.msk [vmem:[#allocation4 + $0xd8] sm:$0xf] %vm39, %v3678
  %3743 = vst.msk [vmem:[#allocation4 + $0xdc] sm:$0xf] %vm39, %v3679
  %3744 = vst.msk [vmem:[#allocation4 + $0xe0] sm:$0xf] %vm39, %v3680
  %3745 = vst.msk [vmem:[#allocation4 + $0xe4] sm:$0xf] %vm39, %v3681
  %3746 = vst.msk [vmem:[#allocation4 + $0xe8] sm:$0xf] %vm39, %v3682
  %3747 = vst.msk [vmem:[#allocation4 + $0xec] sm:$0xf] %vm39, %v3683
  %3748 = vst.msk [vmem:[#allocation4 + $0xf0] sm:$0xf] %vm39, %v3684
  %3749 = vst.msk [vmem:[#allocation4 + $0xf4] sm:$0xf] %vm39, %v3685
  %3750 = vst.msk [vmem:[#allocation4 + $0xf8] sm:$0xf] %vm39, %v3686
  %3751 = vst.msk [vmem:[#allocation4 + $0xfc] sm:$0xf] %vm39, %v3687
  %v3752 = vld [vmem:[%s1403] sm:$0xf]
  %v3753 = vld [vmem:[%s1403 + $0x4] sm:$0xf]
  %v3754 = vld [vmem:[%s1403 + $0x8] sm:$0x1]
  %v3755 = vld [vmem:[%s1403 + $0xc] sm:$0xf]
  %v3756 = vld [vmem:[%s1403 + $0x10] sm:$0xf]
  %v3757 = vld [vmem:[%s1403 + $0x14] sm:$0x1]
  %v3758 = vld [vmem:[%s1403 + $0x18] sm:$0xf]
  %v3759 = vld [vmem:[%s1403 + $0x1c] sm:$0xf]
  %v3760 = vld [vmem:[%s1403 + $0x20] sm:$0x1]
  %v3761 = vld [vmem:[%s1403 + $0x24] sm:$0xf]
  %v3762 = vld [vmem:[%s1403 + $0x28] sm:$0xf]
  %v3763 = vld [vmem:[%s1403 + $0x2c] sm:$0x1]
  %v3764 = vld [vmem:[%s1403 + $0x30] sm:$0xf]
  %v3765 = vld [vmem:[%s1403 + $0x34] sm:$0xf]
  %v3766 = vld [vmem:[%s1403 + $0x38] sm:$0x1]
  %v3767 = vld [vmem:[%s1403 + $0x3c] sm:$0xf]
  %v3768 = vld [vmem:[%s1403 + $0x40] sm:$0xf]
  %v3769 = vld [vmem:[%s1403 + $0x44] sm:$0x1]
  %v3770 = vld [vmem:[%s1403 + $0x48] sm:$0xf]
  %v3771 = vld [vmem:[%s1403 + $0x4c] sm:$0xf]
  %v3772 = vld [vmem:[%s1403 + $0x50] sm:$0x1]
  %v3773 = vld [vmem:[%s1403 + $0x54] sm:$0xf]
  %v3774 = vld [vmem:[%s1403 + $0x58] sm:$0xf]
  %v3775 = vld [vmem:[%s1403 + $0x5c] sm:$0x1]
  %v3776 = vld [vmem:[%s1403 + $0x60] sm:$0xf]
  %v3777 = vld [vmem:[%s1403 + $0x64] sm:$0xf]
  %v3778 = vld [vmem:[%s1403 + $0x68] sm:$0x1]
  %v3779 = vld [vmem:[%s1403 + $0x6c] sm:$0xf]
  %v3780 = vld [vmem:[%s1403 + $0x70] sm:$0xf]
  %v3781 = vld [vmem:[%s1403 + $0x74] sm:$0x1]
  %v3782 = vld [vmem:[%s1403 + $0x78] sm:$0xf]
  %v3783 = vld [vmem:[%s1403 + $0x7c] sm:$0xf]
  %v3784 = vld [vmem:[%s1403 + $0x80] sm:$0x1]
  %v3785 = vld [vmem:[%s1403 + $0x84] sm:$0xf]
  %v3786 = vld [vmem:[%s1403 + $0x88] sm:$0xf]
  %v3787 = vld [vmem:[%s1403 + $0x8c] sm:$0x1]
  %v3788 = vld [vmem:[%s1403 + $0x90] sm:$0xf]
  %v3789 = vld [vmem:[%s1403 + $0x94] sm:$0xf]
  %v3790 = vld [vmem:[%s1403 + $0x98] sm:$0x1]
  %v3791 = vld [vmem:[%s1403 + $0x9c] sm:$0xf]
  %v3792 = vld [vmem:[%s1403 + $0xa0] sm:$0xf]
  %v3793 = vld [vmem:[%s1403 + $0xa4] sm:$0x1]
  %v3794 = vld [vmem:[%s1403 + $0xa8] sm:$0xf]
  %v3795 = vld [vmem:[%s1403 + $0xac] sm:$0xf]
  %v3796 = vld [vmem:[%s1403 + $0xb0] sm:$0x1]
  %v3797 = vld [vmem:[%s1403 + $0xb4] sm:$0xf]
  %v3798 = vld [vmem:[%s1403 + $0xb8] sm:$0xf]
  %v3799 = vld [vmem:[%s1403 + $0xbc] sm:$0x1]
  %v3800 = vld [vmem:[%s1403 + $0xd8] sm:$0xf]
  %v3801 = vld [vmem:[%s1403 + $0xdc] sm:$0xf]
  %v3802 = vld [vmem:[%s1403 + $0xe0] sm:$0x1]
  %v3803 = vld [vmem:[%s1403 + $0xe4] sm:$0xf]
  %v3804 = vld [vmem:[%s1403 + $0xe8] sm:$0xf]
  %v3805 = vld [vmem:[%s1403 + $0xec] sm:$0x1]
  %v3806 = vld [vmem:[%s1403 + $0xf0] sm:$0xf]
  %v3807 = vld [vmem:[%s1403 + $0xf4] sm:$0xf]
  %v3808 = vld [vmem:[%s1403 + $0xf8] sm:$0x1]
  %v3809 = vld [vmem:[%s1403 + $0xfc] sm:$0xf]
  %v3810 = vld [vmem:[%s1403 + $0x100] sm:$0xf]
  %v3811 = vld [vmem:[%s1403 + $0x104] sm:$0x1]
  %v3812 = vld [vmem:[%s1403 + $0x108] sm:$0xf]
  %v3813 = vld [vmem:[%s1403 + $0x10c] sm:$0xf]
  %v3814 = vld [vmem:[%s1403 + $0x110] sm:$0x1]
  %v3815 = vld [vmem:[%s1403 + $0x114] sm:$0xf]
  %v3816 = vld [vmem:[%s1403 + $0x118] sm:$0xf]
  %v3817 = vld [vmem:[%s1403 + $0x11c] sm:$0x1]
  %v3818 = vld [vmem:[%s1403 + $0x120] sm:$0xf]
  %v3819 = vld [vmem:[%s1403 + $0x124] sm:$0xf]
  %v3820 = vld [vmem:[%s1403 + $0x128] sm:$0x1]
  %v3821 = vld [vmem:[%s1403 + $0x12c] sm:$0xf]
  %v3822 = vld [vmem:[%s1403 + $0x130] sm:$0xf]
  %v3823 = vld [vmem:[%s1403 + $0x134] sm:$0x1]
  %v3824 = vld [vmem:[%s1403 + $0x138] sm:$0xf]
  %v3825 = vld [vmem:[%s1403 + $0x13c] sm:$0xf]
  %v3826 = vld [vmem:[%s1403 + $0x140] sm:$0x1]
  %v3827 = vld [vmem:[%s1403 + $0x144] sm:$0xf]
  %v3828 = vld [vmem:[%s1403 + $0x148] sm:$0xf]
  %v3829 = vld [vmem:[%s1403 + $0x14c] sm:$0x1]
  %v3830 = vld [vmem:[%s1403 + $0x150] sm:$0xf]
  %v3831 = vld [vmem:[%s1403 + $0x154] sm:$0xf]
  %v3832 = vld [vmem:[%s1403 + $0x158] sm:$0x1]
  %v3833 = vld [vmem:[%s1403 + $0x15c] sm:$0xf]
  %v3834 = vld [vmem:[%s1403 + $0x160] sm:$0xf]
  %v3835 = vld [vmem:[%s1403 + $0x164] sm:$0x1]
  %v3836 = vld [vmem:[%s1403 + $0x168] sm:$0xf]
  %v3837 = vld [vmem:[%s1403 + $0x16c] sm:$0xf]
  %v3838 = vld [vmem:[%s1403 + $0x170] sm:$0x1]
  %v3839 = vld [vmem:[%s1403 + $0x174] sm:$0xf]
  %v3840 = vld [vmem:[%s1403 + $0x178] sm:$0xf]
  %v3841 = vld [vmem:[%s1403 + $0x17c] sm:$0x1]
  %v3842 = vld [vmem:[%s1403 + $0x180] sm:$0xf]
  %v3843 = vld [vmem:[%s1403 + $0x184] sm:$0xf]
  %v3844 = vld [vmem:[%s1403 + $0x188] sm:$0x1]
  %v3845 = vld [vmem:[%s1403 + $0x18c] sm:$0xf]
  %v3846 = vld [vmem:[%s1403 + $0x190] sm:$0xf]
  %v3847 = vld [vmem:[%s1403 + $0x194] sm:$0x1]
  %v3849 = vshrl.u32 %v3752, 16
  %v3851 = vrot.slane %v3849, 4
  %v3852 = vshll.u32 %v3752, 16
  %v3854 = vrot.slane %v3852, 5
  %v3855 = vor.u32 %v3851, %v3854
  %v3856 = vrot.slane %v3855, 4
  %v3858 = vshll.u32 %v3753, 16
  %v3860 = vrot.slane %v3858, 5
  %v3861 = vsel %vm1856, %v3856, %v3860
  %v3862 = vshrl.u32 %v3753, 16
  %v3864 = vrot.slane %v3862, 4
  %v3865 = vor.u32 %v3864, %v3860
  %v3866 = vrot.slane %v3865, 4
  %v3868 = vshll.u32 %v3754, 16
  %v3870 = vrot.slane %v3868, 5
  %v3871 = vsel %vm1856, %v3866, %v3870
  %v3873 = vshrl.u32 %v3755, 16
  %v3875 = vrot.slane %v3873, 4
  %v3876 = vshll.u32 %v3755, 16
  %v3878 = vrot.slane %v3876, 5
  %v3879 = vor.u32 %v3875, %v3878
  %v3880 = vrot.slane %v3879, 4
  %v3882 = vshll.u32 %v3756, 16
  %v3884 = vrot.slane %v3882, 5
  %v3885 = vsel %vm1856, %v3880, %v3884
  %v3886 = vshrl.u32 %v3756, 16
  %v3888 = vrot.slane %v3886, 4
  %v3889 = vor.u32 %v3888, %v3884
  %v3890 = vrot.slane %v3889, 4
  %v3892 = vshll.u32 %v3757, 16
  %v3894 = vrot.slane %v3892, 5
  %v3895 = vsel %vm1856, %v3890, %v3894
  %v3897 = vshrl.u32 %v3758, 16
  %v3899 = vrot.slane %v3897, 4
  %v3900 = vshll.u32 %v3758, 16
  %v3902 = vrot.slane %v3900, 5
  %v3903 = vor.u32 %v3899, %v3902
  %v3904 = vrot.slane %v3903, 4
  %v3906 = vshll.u32 %v3759, 16
  %v3908 = vrot.slane %v3906, 5
  %v3909 = vsel %vm1856, %v3904, %v3908
  %v3910 = vshrl.u32 %v3759, 16
  %v3912 = vrot.slane %v3910, 4
  %v3913 = vor.u32 %v3912, %v3908
  %v3914 = vrot.slane %v3913, 4
  %v3916 = vshll.u32 %v3760, 16
  %v3918 = vrot.slane %v3916, 5
  %v3919 = vsel %vm1856, %v3914, %v3918
  %v3921 = vshrl.u32 %v3761, 16
  %v3923 = vrot.slane %v3921, 4
  %v3924 = vshll.u32 %v3761, 16
  %v3926 = vrot.slane %v3924, 5
  %v3927 = vor.u32 %v3923, %v3926
  %v3928 = vrot.slane %v3927, 4
  %v3930 = vshll.u32 %v3762, 16
  %v3932 = vrot.slane %v3930, 5
  %v3933 = vsel %vm1856, %v3928, %v3932
  %v3934 = vshrl.u32 %v3762, 16
  %v3936 = vrot.slane %v3934, 4
  %v3937 = vor.u32 %v3936, %v3932
  %v3938 = vrot.slane %v3937, 4
  %v3940 = vshll.u32 %v3763, 16
  %v3942 = vrot.slane %v3940, 5
  %v3943 = vsel %vm1856, %v3938, %v3942
  %v3945 = vshrl.u32 %v3764, 16
  %v3947 = vrot.slane %v3945, 4
  %v3948 = vshll.u32 %v3764, 16
  %v3950 = vrot.slane %v3948, 5
  %v3951 = vor.u32 %v3947, %v3950
  %v3952 = vrot.slane %v3951, 4
  %v3954 = vshll.u32 %v3765, 16
  %v3956 = vrot.slane %v3954, 5
  %v3957 = vsel %vm1856, %v3952, %v3956
  %v3958 = vshrl.u32 %v3765, 16
  %v3960 = vrot.slane %v3958, 4
  %v3961 = vor.u32 %v3960, %v3956
  %v3962 = vrot.slane %v3961, 4
  %v3964 = vshll.u32 %v3766, 16
  %v3966 = vrot.slane %v3964, 5
  %v3967 = vsel %vm1856, %v3962, %v3966
  %v3969 = vshrl.u32 %v3767, 16
  %v3971 = vrot.slane %v3969, 4
  %v3972 = vshll.u32 %v3767, 16
  %v3974 = vrot.slane %v3972, 5
  %v3975 = vor.u32 %v3971, %v3974
  %v3976 = vrot.slane %v3975, 4
  %v3978 = vshll.u32 %v3768, 16
  %v3980 = vrot.slane %v3978, 5
  %v3981 = vsel %vm1856, %v3976, %v3980
  %v3982 = vshrl.u32 %v3768, 16
  %v3984 = vrot.slane %v3982, 4
  %v3985 = vor.u32 %v3984, %v3980
  %v3986 = vrot.slane %v3985, 4
  %v3988 = vshll.u32 %v3769, 16
  %v3990 = vrot.slane %v3988, 5
  %v3991 = vsel %vm1856, %v3986, %v3990
  %v3993 = vshrl.u32 %v3770, 16
  %v3995 = vrot.slane %v3993, 4
  %v3996 = vshll.u32 %v3770, 16
  %v3998 = vrot.slane %v3996, 5
  %v3999 = vor.u32 %v3995, %v3998
  %v4000 = vrot.slane %v3999, 4
  %v4002 = vshll.u32 %v3771, 16
  %v4004 = vrot.slane %v4002, 5
  %v4005 = vsel %vm1856, %v4000, %v4004
  %v4006 = vshrl.u32 %v3771, 16
  %v4008 = vrot.slane %v4006, 4
  %v4009 = vor.u32 %v4008, %v4004
  %v4010 = vrot.slane %v4009, 4
  %v4012 = vshll.u32 %v3772, 16
  %v4014 = vrot.slane %v4012, 5
  %v4015 = vsel %vm1856, %v4010, %v4014
  %v4017 = vshrl.u32 %v3773, 16
  %v4019 = vrot.slane %v4017, 4
  %v4020 = vshll.u32 %v3773, 16
  %v4022 = vrot.slane %v4020, 5
  %v4023 = vor.u32 %v4019, %v4022
  %v4024 = vrot.slane %v4023, 4
  %v4026 = vshll.u32 %v3774, 16
  %v4028 = vrot.slane %v4026, 5
  %v4029 = vsel %vm1856, %v4024, %v4028
  %v4030 = vshrl.u32 %v3774, 16
  %v4032 = vrot.slane %v4030, 4
  %v4033 = vor.u32 %v4032, %v4028
  %v4034 = vrot.slane %v4033, 4
  %v4036 = vshll.u32 %v3775, 16
  %v4038 = vrot.slane %v4036, 5
  %v4039 = vsel %vm1856, %v4034, %v4038
  %v4041 = vshrl.u32 %v3776, 16
  %v4043 = vrot.slane %v4041, 4
  %v4044 = vshll.u32 %v3776, 16
  %v4046 = vrot.slane %v4044, 5
  %v4047 = vor.u32 %v4043, %v4046
  %v4048 = vrot.slane %v4047, 4
  %v4050 = vshll.u32 %v3777, 16
  %v4052 = vrot.slane %v4050, 5
  %v4053 = vsel %vm1856, %v4048, %v4052
  %v4054 = vshrl.u32 %v3777, 16
  %v4056 = vrot.slane %v4054, 4
  %v4057 = vor.u32 %v4056, %v4052
  %v4058 = vrot.slane %v4057, 4
  %v4060 = vshll.u32 %v3778, 16
  %v4062 = vrot.slane %v4060, 5
  %v4063 = vsel %vm1856, %v4058, %v4062
  %v4065 = vshrl.u32 %v3779, 16
  %v4067 = vrot.slane %v4065, 4
  %v4068 = vshll.u32 %v3779, 16
  %v4070 = vrot.slane %v4068, 5
  %v4071 = vor.u32 %v4067, %v4070
  %v4072 = vrot.slane %v4071, 4
  %v4074 = vshll.u32 %v3780, 16
  %v4076 = vrot.slane %v4074, 5
  %v4077 = vsel %vm1856, %v4072, %v4076
  %v4078 = vshrl.u32 %v3780, 16
  %v4080 = vrot.slane %v4078, 4
  %v4081 = vor.u32 %v4080, %v4076
  %v4082 = vrot.slane %v4081, 4
  %v4084 = vshll.u32 %v3781, 16
  %v4086 = vrot.slane %v4084, 5
  %v4087 = vsel %vm1856, %v4082, %v4086
  %v4089 = vshrl.u32 %v3782, 16
  %v4091 = vrot.slane %v4089, 4
  %v4092 = vshll.u32 %v3782, 16
  %v4094 = vrot.slane %v4092, 5
  %v4095 = vor.u32 %v4091, %v4094
  %v4096 = vrot.slane %v4095, 4
  %v4098 = vshll.u32 %v3783, 16
  %v4100 = vrot.slane %v4098, 5
  %v4101 = vsel %vm1856, %v4096, %v4100
  %v4102 = vshrl.u32 %v3783, 16
  %v4104 = vrot.slane %v4102, 4
  %v4105 = vor.u32 %v4104, %v4100
  %v4106 = vrot.slane %v4105, 4
  %v4108 = vshll.u32 %v3784, 16
  %v4110 = vrot.slane %v4108, 5
  %v4111 = vsel %vm1856, %v4106, %v4110
  %v4113 = vshrl.u32 %v3785, 16
  %v4115 = vrot.slane %v4113, 4
  %v4116 = vshll.u32 %v3785, 16
  %v4118 = vrot.slane %v4116, 5
  %v4119 = vor.u32 %v4115, %v4118
  %v4120 = vrot.slane %v4119, 4
  %v4122 = vshll.u32 %v3786, 16
  %v4124 = vrot.slane %v4122, 5
  %v4125 = vsel %vm1856, %v4120, %v4124
  %v4126 = vshrl.u32 %v3786, 16
  %v4128 = vrot.slane %v4126, 4
  %v4129 = vor.u32 %v4128, %v4124
  %v4130 = vrot.slane %v4129, 4
  %v4132 = vshll.u32 %v3787, 16
  %v4134 = vrot.slane %v4132, 5
  %v4135 = vsel %vm1856, %v4130, %v4134
  %v4137 = vshrl.u32 %v3788, 16
  %v4139 = vrot.slane %v4137, 4
  %v4140 = vshll.u32 %v3788, 16
  %v4142 = vrot.slane %v4140, 5
  %v4143 = vor.u32 %v4139, %v4142
  %v4144 = vrot.slane %v4143, 4
  %v4146 = vshll.u32 %v3789, 16
  %v4148 = vrot.slane %v4146, 5
  %v4149 = vsel %vm1856, %v4144, %v4148
  %v4150 = vshrl.u32 %v3789, 16
  %v4152 = vrot.slane %v4150, 4
  %v4153 = vor.u32 %v4152, %v4148
  %v4154 = vrot.slane %v4153, 4
  %v4156 = vshll.u32 %v3790, 16
  %v4158 = vrot.slane %v4156, 5
  %v4159 = vsel %vm1856, %v4154, %v4158
  %v4161 = vshrl.u32 %v3791, 16
  %v4163 = vrot.slane %v4161, 4
  %v4164 = vshll.u32 %v3791, 16
  %v4166 = vrot.slane %v4164, 5
  %v4167 = vor.u32 %v4163, %v4166
  %v4168 = vrot.slane %v4167, 4
  %v4170 = vshll.u32 %v3792, 16
  %v4172 = vrot.slane %v4170, 5
  %v4173 = vsel %vm1856, %v4168, %v4172
  %v4174 = vshrl.u32 %v3792, 16
  %v4176 = vrot.slane %v4174, 4
  %v4177 = vor.u32 %v4176, %v4172
  %v4178 = vrot.slane %v4177, 4
  %v4180 = vshll.u32 %v3793, 16
  %v4182 = vrot.slane %v4180, 5
  %v4183 = vsel %vm1856, %v4178, %v4182
  %v4185 = vshrl.u32 %v3794, 16
  %v4187 = vrot.slane %v4185, 4
  %v4188 = vshll.u32 %v3794, 16
  %v4190 = vrot.slane %v4188, 5
  %v4191 = vor.u32 %v4187, %v4190
  %v4192 = vrot.slane %v4191, 4
  %v4194 = vshll.u32 %v3795, 16
  %v4196 = vrot.slane %v4194, 5
  %v4197 = vsel %vm1856, %v4192, %v4196
  %v4198 = vshrl.u32 %v3795, 16
  %v4200 = vrot.slane %v4198, 4
  %v4201 = vor.u32 %v4200, %v4196
  %v4202 = vrot.slane %v4201, 4
  %v4204 = vshll.u32 %v3796, 16
  %v4206 = vrot.slane %v4204, 5
  %v4207 = vsel %vm1856, %v4202, %v4206
  %v4209 = vshrl.u32 %v3797, 16
  %v4211 = vrot.slane %v4209, 4
  %v4212 = vshll.u32 %v3797, 16
  %v4214 = vrot.slane %v4212, 5
  %v4215 = vor.u32 %v4211, %v4214
  %v4216 = vrot.slane %v4215, 4
  %v4218 = vshll.u32 %v3798, 16
  %v4220 = vrot.slane %v4218, 5
  %v4221 = vsel %vm1856, %v4216, %v4220
  %v4222 = vshrl.u32 %v3798, 16
  %v4224 = vrot.slane %v4222, 4
  %v4225 = vor.u32 %v4224, %v4220
  %v4226 = vrot.slane %v4225, 4
  %v4228 = vshll.u32 %v3799, 16
  %v4230 = vrot.slane %v4228, 5
  %v4231 = vsel %vm1856, %v4226, %v4230
  %v4233 = vshrl.u32 %v3800, 16
  %v4235 = vrot.slane %v4233, 4
  %v4236 = vshll.u32 %v3800, 16
  %v4238 = vrot.slane %v4236, 5
  %v4239 = vor.u32 %v4235, %v4238
  %v4240 = vrot.slane %v4239, 4
  %v4242 = vshll.u32 %v3801, 16
  %v4244 = vrot.slane %v4242, 5
  %v4245 = vsel %vm1856, %v4240, %v4244
  %v4246 = vshrl.u32 %v3801, 16
  %v4248 = vrot.slane %v4246, 4
  %v4249 = vor.u32 %v4248, %v4244
  %v4250 = vrot.slane %v4249, 4
  %v4252 = vshll.u32 %v3802, 16
  %v4254 = vrot.slane %v4252, 5
  %v4255 = vsel %vm1856, %v4250, %v4254
  %v4257 = vshrl.u32 %v3803, 16
  %v4259 = vrot.slane %v4257, 4
  %v4260 = vshll.u32 %v3803, 16
  %v4262 = vrot.slane %v4260, 5
  %v4263 = vor.u32 %v4259, %v4262
  %v4264 = vrot.slane %v4263, 4
  %v4266 = vshll.u32 %v3804, 16
  %v4268 = vrot.slane %v4266, 5
  %v4269 = vsel %vm1856, %v4264, %v4268
  %v4270 = vshrl.u32 %v3804, 16
  %v4272 = vrot.slane %v4270, 4
  %v4273 = vor.u32 %v4272, %v4268
  %v4274 = vrot.slane %v4273, 4
  %v4276 = vshll.u32 %v3805, 16
  %v4278 = vrot.slane %v4276, 5
  %v4279 = vsel %vm1856, %v4274, %v4278
  %v4281 = vshrl.u32 %v3806, 16
  %v4283 = vrot.slane %v4281, 4
  %v4284 = vshll.u32 %v3806, 16
  %v4286 = vrot.slane %v4284, 5
  %v4287 = vor.u32 %v4283, %v4286
  %v4288 = vrot.slane %v4287, 4
  %v4290 = vshll.u32 %v3807, 16
  %v4292 = vrot.slane %v4290, 5
  %v4293 = vsel %vm1856, %v4288, %v4292
  %v4294 = vshrl.u32 %v3807, 16
  %v4296 = vrot.slane %v4294, 4
  %v4297 = vor.u32 %v4296, %v4292
  %v4298 = vrot.slane %v4297, 4
  %v4300 = vshll.u32 %v3808, 16
  %v4302 = vrot.slane %v4300, 5
  %v4303 = vsel %vm1856, %v4298, %v4302
  %v4305 = vshrl.u32 %v3809, 16
  %v4307 = vrot.slane %v4305, 4
  %v4308 = vshll.u32 %v3809, 16
  %v4310 = vrot.slane %v4308, 5
  %v4311 = vor.u32 %v4307, %v4310
  %v4312 = vrot.slane %v4311, 4
  %v4314 = vshll.u32 %v3810, 16
  %v4316 = vrot.slane %v4314, 5
  %v4317 = vsel %vm1856, %v4312, %v4316
  %v4318 = vshrl.u32 %v3810, 16
  %v4320 = vrot.slane %v4318, 4
  %v4321 = vor.u32 %v4320, %v4316
  %v4322 = vrot.slane %v4321, 4
  %v4324 = vshll.u32 %v3811, 16
  %v4326 = vrot.slane %v4324, 5
  %v4327 = vsel %vm1856, %v4322, %v4326
  %v4329 = vshrl.u32 %v3812, 16
  %v4331 = vrot.slane %v4329, 4
  %v4332 = vshll.u32 %v3812, 16
  %v4334 = vrot.slane %v4332, 5
  %v4335 = vor.u32 %v4331, %v4334
  %v4336 = vrot.slane %v4335, 4
  %v4338 = vshll.u32 %v3813, 16
  %v4340 = vrot.slane %v4338, 5
  %v4341 = vsel %vm1856, %v4336, %v4340
  %v4342 = vshrl.u32 %v3813, 16
  %v4344 = vrot.slane %v4342, 4
  %v4345 = vor.u32 %v4344, %v4340
  %v4346 = vrot.slane %v4345, 4
  %v4348 = vshll.u32 %v3814, 16
  %v4350 = vrot.slane %v4348, 5
  %v4351 = vsel %vm1856, %v4346, %v4350
  %v4353 = vshrl.u32 %v3815, 16
  %v4355 = vrot.slane %v4353, 4
  %v4356 = vshll.u32 %v3815, 16
  %v4358 = vrot.slane %v4356, 5
  %v4359 = vor.u32 %v4355, %v4358
  %v4360 = vrot.slane %v4359, 4
  %v4362 = vshll.u32 %v3816, 16
  %v4364 = vrot.slane %v4362, 5
  %v4365 = vsel %vm1856, %v4360, %v4364
  %v4366 = vshrl.u32 %v3816, 16
  %v4368 = vrot.slane %v4366, 4
  %v4369 = vor.u32 %v4368, %v4364
  %v4370 = vrot.slane %v4369, 4
  %v4372 = vshll.u32 %v3817, 16
  %v4374 = vrot.slane %v4372, 5
  %v4375 = vsel %vm1856, %v4370, %v4374
  %v4377 = vshrl.u32 %v3818, 16
  %v4379 = vrot.slane %v4377, 4
  %v4380 = vshll.u32 %v3818, 16
  %v4382 = vrot.slane %v4380, 5
  %v4383 = vor.u32 %v4379, %v4382
  %v4384 = vrot.slane %v4383, 4
  %v4386 = vshll.u32 %v3819, 16
  %v4388 = vrot.slane %v4386, 5
  %v4389 = vsel %vm1856, %v4384, %v4388
  %v4390 = vshrl.u32 %v3819, 16
  %v4392 = vrot.slane %v4390, 4
  %v4393 = vor.u32 %v4392, %v4388
  %v4394 = vrot.slane %v4393, 4
  %v4396 = vshll.u32 %v3820, 16
  %v4398 = vrot.slane %v4396, 5
  %v4399 = vsel %vm1856, %v4394, %v4398
  %v4401 = vshrl.u32 %v3821, 16
  %v4403 = vrot.slane %v4401, 4
  %v4404 = vshll.u32 %v3821, 16
  %v4406 = vrot.slane %v4404, 5
  %v4407 = vor.u32 %v4403, %v4406
  %v4408 = vrot.slane %v4407, 4
  %v4410 = vshll.u32 %v3822, 16
  %v4412 = vrot.slane %v4410, 5
  %v4413 = vsel %vm1856, %v4408, %v4412
  %v4414 = vshrl.u32 %v3822, 16
  %v4416 = vrot.slane %v4414, 4
  %v4417 = vor.u32 %v4416, %v4412
  %v4418 = vrot.slane %v4417, 4
  %v4420 = vshll.u32 %v3823, 16
  %v4422 = vrot.slane %v4420, 5
  %v4423 = vsel %vm1856, %v4418, %v4422
  %v4425 = vshrl.u32 %v3824, 16
  %v4427 = vrot.slane %v4425, 4
  %v4428 = vshll.u32 %v3824, 16
  %v4430 = vrot.slane %v4428, 5
  %v4431 = vor.u32 %v4427, %v4430
  %v4432 = vrot.slane %v4431, 4
  %v4434 = vshll.u32 %v3825, 16
  %v4436 = vrot.slane %v4434, 5
  %v4437 = vsel %vm1856, %v4432, %v4436
  %v4438 = vshrl.u32 %v3825, 16
  %v4440 = vrot.slane %v4438, 4
  %v4441 = vor.u32 %v4440, %v4436
  %v4442 = vrot.slane %v4441, 4
  %v4444 = vshll.u32 %v3826, 16
  %v4446 = vrot.slane %v4444, 5
  %v4447 = vsel %vm1856, %v4442, %v4446
  %v4449 = vshrl.u32 %v3827, 16
  %v4451 = vrot.slane %v4449, 4
  %v4452 = vshll.u32 %v3827, 16
  %v4454 = vrot.slane %v4452, 5
  %v4455 = vor.u32 %v4451, %v4454
  %v4456 = vrot.slane %v4455, 4
  %v4458 = vshll.u32 %v3828, 16
  %v4460 = vrot.slane %v4458, 5
  %v4461 = vsel %vm1856, %v4456, %v4460
  %v4462 = vshrl.u32 %v3828, 16
  %v4464 = vrot.slane %v4462, 4
  %v4465 = vor.u32 %v4464, %v4460
  %v4466 = vrot.slane %v4465, 4
  %v4468 = vshll.u32 %v3829, 16
  %v4470 = vrot.slane %v4468, 5
  %v4471 = vsel %vm1856, %v4466, %v4470
  %v4473 = vshrl.u32 %v3830, 16
  %v4475 = vrot.slane %v4473, 4
  %v4476 = vshll.u32 %v3830, 16
  %v4478 = vrot.slane %v4476, 5
  %v4479 = vor.u32 %v4475, %v4478
  %v4480 = vrot.slane %v4479, 4
  %v4482 = vshll.u32 %v3831, 16
  %v4484 = vrot.slane %v4482, 5
  %v4485 = vsel %vm1856, %v4480, %v4484
  %v4486 = vshrl.u32 %v3831, 16
  %v4488 = vrot.slane %v4486, 4
  %v4489 = vor.u32 %v4488, %v4484
  %v4490 = vrot.slane %v4489, 4
  %v4492 = vshll.u32 %v3832, 16
  %v4494 = vrot.slane %v4492, 5
  %v4495 = vsel %vm1856, %v4490, %v4494
  %v4497 = vshrl.u32 %v3833, 16
  %v4499 = vrot.slane %v4497, 4
  %v4500 = vshll.u32 %v3833, 16
  %v4502 = vrot.slane %v4500, 5
  %v4503 = vor.u32 %v4499, %v4502
  %v4504 = vrot.slane %v4503, 4
  %v4506 = vshll.u32 %v3834, 16
  %v4508 = vrot.slane %v4506, 5
  %v4509 = vsel %vm1856, %v4504, %v4508
  %v4510 = vshrl.u32 %v3834, 16
  %v4512 = vrot.slane %v4510, 4
  %v4513 = vor.u32 %v4512, %v4508
  %v4514 = vrot.slane %v4513, 4
  %v4516 = vshll.u32 %v3835, 16
  %v4518 = vrot.slane %v4516, 5
  %v4519 = vsel %vm1856, %v4514, %v4518
  %v4521 = vshrl.u32 %v3836, 16
  %v4523 = vrot.slane %v4521, 4
  %v4524 = vshll.u32 %v3836, 16
  %v4526 = vrot.slane %v4524, 5
  %v4527 = vor.u32 %v4523, %v4526
  %v4528 = vrot.slane %v4527, 4
  %v4530 = vshll.u32 %v3837, 16
  %v4532 = vrot.slane %v4530, 5
  %v4533 = vsel %vm1856, %v4528, %v4532
  %v4534 = vshrl.u32 %v3837, 16
  %v4536 = vrot.slane %v4534, 4
  %v4537 = vor.u32 %v4536, %v4532
  %v4538 = vrot.slane %v4537, 4
  %v4540 = vshll.u32 %v3838, 16
  %v4542 = vrot.slane %v4540, 5
  %v4543 = vsel %vm1856, %v4538, %v4542
  %v4545 = vshrl.u32 %v3839, 16
  %v4547 = vrot.slane %v4545, 4
  %v4548 = vshll.u32 %v3839, 16
  %v4550 = vrot.slane %v4548, 5
  %v4551 = vor.u32 %v4547, %v4550
  %v4552 = vrot.slane %v4551, 4
  %v4554 = vshll.u32 %v3840, 16
  %v4556 = vrot.slane %v4554, 5
  %v4557 = vsel %vm1856, %v4552, %v4556
  %v4558 = vshrl.u32 %v3840, 16
  %v4560 = vrot.slane %v4558, 4
  %v4561 = vor.u32 %v4560, %v4556
  %v4562 = vrot.slane %v4561, 4
  %v4564 = vshll.u32 %v3841, 16
  %v4566 = vrot.slane %v4564, 5
  %v4567 = vsel %vm1856, %v4562, %v4566
  %v4569 = vshrl.u32 %v3842, 16
  %v4571 = vrot.slane %v4569, 4
  %v4572 = vshll.u32 %v3842, 16
  %v4574 = vrot.slane %v4572, 5
  %v4575 = vor.u32 %v4571, %v4574
  %v4576 = vrot.slane %v4575, 4
  %v4578 = vshll.u32 %v3843, 16
  %v4580 = vrot.slane %v4578, 5
  %v4581 = vsel %vm1856, %v4576, %v4580
  %v4582 = vshrl.u32 %v3843, 16
  %v4584 = vrot.slane %v4582, 4
  %v4585 = vor.u32 %v4584, %v4580
  %v4586 = vrot.slane %v4585, 4
  %v4588 = vshll.u32 %v3844, 16
  %v4590 = vrot.slane %v4588, 5
  %v4591 = vsel %vm1856, %v4586, %v4590
  %v4593 = vshrl.u32 %v3845, 16
  %v4595 = vrot.slane %v4593, 4
  %v4596 = vshll.u32 %v3845, 16
  %v4598 = vrot.slane %v4596, 5
  %v4599 = vor.u32 %v4595, %v4598
  %v4600 = vrot.slane %v4599, 4
  %v4602 = vshll.u32 %v3846, 16
  %v4604 = vrot.slane %v4602, 5
  %v4605 = vsel %vm1856, %v4600, %v4604
  %v4606 = vshrl.u32 %v3846, 16
  %v4608 = vrot.slane %v4606, 4
  %v4609 = vor.u32 %v4608, %v4604
  %v4610 = vrot.slane %v4609, 4
  %v4612 = vshll.u32 %v3847, 16
  %v4614 = vrot.slane %v4612, 5
  %v4615 = vsel %vm1856, %v4610, %v4614
  %4616 = vrot.lane.b32.xlu0 %v3861, 4
  %v4617 = vpop.permute.xlu0 %4616
  %4618 = vrot.lane.b32.xlu0 %v3871, 4
  %v4619 = vpop.permute.xlu0 %4618
  %4620 = vrot.lane.b32.xlu0 %v3885, 4
  %v4621 = vpop.permute.xlu0 %4620
  %4622 = vrot.lane.b32.xlu0 %v3895, 4
  %v4623 = vpop.permute.xlu0 %4622
  %4624 = vrot.lane.b32.xlu0 %v3909, 4
  %v4625 = vpop.permute.xlu0 %4624
  %4626 = vrot.lane.b32.xlu0 %v3919, 4
  %v4627 = vpop.permute.xlu0 %4626
  %4628 = vrot.lane.b32.xlu0 %v3933, 4
  %v4629 = vpop.permute.xlu0 %4628
  %4630 = vrot.lane.b32.xlu0 %v3943, 4
  %v4631 = vpop.permute.xlu0 %4630
  %4632 = vrot.lane.b32.xlu0 %v3957, 4
  %v4633 = vpop.permute.xlu0 %4632
  %4634 = vrot.lane.b32.xlu0 %v3967, 4
  %v4635 = vpop.permute.xlu0 %4634
  %4636 = vrot.lane.b32.xlu0 %v3981, 4
  %v4637 = vpop.permute.xlu0 %4636
  %4638 = vrot.lane.b32.xlu0 %v3991, 4
  %v4639 = vpop.permute.xlu0 %4638
  %4640 = vrot.lane.b32.xlu0 %v4005, 4
  %v4641 = vpop.permute.xlu0 %4640
  %4642 = vrot.lane.b32.xlu0 %v4015, 4
  %v4643 = vpop.permute.xlu0 %4642
  %4644 = vrot.lane.b32.xlu0 %v4029, 4
  %v4645 = vpop.permute.xlu0 %4644
  %4646 = vrot.lane.b32.xlu0 %v4039, 4
  %v4647 = vpop.permute.xlu0 %4646
  %4648 = vrot.lane.b32.xlu0 %v4053, 4
  %v4649 = vpop.permute.xlu0 %4648
  %4650 = vrot.lane.b32.xlu0 %v4063, 4
  %v4651 = vpop.permute.xlu0 %4650
  %4652 = vrot.lane.b32.xlu0 %v4077, 4
  %v4653 = vpop.permute.xlu0 %4652
  %4654 = vrot.lane.b32.xlu0 %v4087, 4
  %v4655 = vpop.permute.xlu0 %4654
  %4656 = vrot.lane.b32.xlu0 %v4101, 4
  %v4657 = vpop.permute.xlu0 %4656
  %4658 = vrot.lane.b32.xlu0 %v4111, 4
  %v4659 = vpop.permute.xlu0 %4658
  %4660 = vrot.lane.b32.xlu0 %v4125, 4
  %v4661 = vpop.permute.xlu0 %4660
  %4662 = vrot.lane.b32.xlu0 %v4135, 4
  %v4663 = vpop.permute.xlu0 %4662
  %4664 = vrot.lane.b32.xlu0 %v4149, 4
  %v4665 = vpop.permute.xlu0 %4664
  %4666 = vrot.lane.b32.xlu0 %v4159, 4
  %v4667 = vpop.permute.xlu0 %4666
  %4668 = vrot.lane.b32.xlu0 %v4173, 4
  %v4669 = vpop.permute.xlu0 %4668
  %4670 = vrot.lane.b32.xlu0 %v4183, 4
  %v4671 = vpop.permute.xlu0 %4670
  %4672 = vrot.lane.b32.xlu0 %v4197, 4
  %v4673 = vpop.permute.xlu0 %4672
  %4674 = vrot.lane.b32.xlu0 %v4207, 4
  %v4675 = vpop.permute.xlu0 %4674
  %4676 = vrot.lane.b32.xlu0 %v4221, 4
  %v4677 = vpop.permute.xlu0 %4676
  %4678 = vrot.lane.b32.xlu0 %v4231, 4
  %v4679 = vpop.permute.xlu0 %4678
  %4680 = vrot.lane.b32.xlu0 %v4245, 4
  %v4681 = vpop.permute.xlu0 %4680
  %4682 = vrot.lane.b32.xlu0 %v4255, 4
  %v4683 = vpop.permute.xlu0 %4682
  %4684 = vrot.lane.b32.xlu0 %v4269, 4
  %v4685 = vpop.permute.xlu0 %4684
  %4686 = vrot.lane.b32.xlu0 %v4279, 4
  %v4687 = vpop.permute.xlu0 %4686
  %4688 = vrot.lane.b32.xlu0 %v4293, 4
  %v4689 = vpop.permute.xlu0 %4688
  %4690 = vrot.lane.b32.xlu0 %v4303, 4
  %v4691 = vpop.permute.xlu0 %4690
  %4692 = vrot.lane.b32.xlu0 %v4317, 4
  %v4693 = vpop.permute.xlu0 %4692
  %4694 = vrot.lane.b32.xlu0 %v4327, 4
  %v4695 = vpop.permute.xlu0 %4694
  %4696 = vrot.lane.b32.xlu0 %v4341, 4
  %v4697 = vpop.permute.xlu0 %4696
  %4698 = vrot.lane.b32.xlu0 %v4351, 4
  %v4699 = vpop.permute.xlu0 %4698
  %4700 = vrot.lane.b32.xlu0 %v4365, 4
  %v4701 = vpop.permute.xlu0 %4700
  %4702 = vrot.lane.b32.xlu0 %v4375, 4
  %v4703 = vpop.permute.xlu0 %4702
  %4704 = vrot.lane.b32.xlu0 %v4389, 4
  %v4705 = vpop.permute.xlu0 %4704
  %4706 = vrot.lane.b32.xlu0 %v4399, 4
  %v4707 = vpop.permute.xlu0 %4706
  %4708 = vrot.lane.b32.xlu0 %v4413, 4
  %v4709 = vpop.permute.xlu0 %4708
  %4710 = vrot.lane.b32.xlu0 %v4423, 4
  %v4711 = vpop.permute.xlu0 %4710
  %4712 = vrot.lane.b32.xlu0 %v4437, 4
  %v4713 = vpop.permute.xlu0 %4712
  %4714 = vrot.lane.b32.xlu0 %v4447, 4
  %v4715 = vpop.permute.xlu0 %4714
  %4716 = vrot.lane.b32.xlu0 %v4461, 4
  %v4717 = vpop.permute.xlu0 %4716
  %4718 = vrot.lane.b32.xlu0 %v4471, 4
  %v4719 = vpop.permute.xlu0 %4718
  %4720 = vrot.lane.b32.xlu0 %v4485, 4
  %v4721 = vpop.permute.xlu0 %4720
  %4722 = vrot.lane.b32.xlu0 %v4495, 4
  %v4723 = vpop.permute.xlu0 %4722
  %4724 = vrot.lane.b32.xlu0 %v4509, 4
  %v4725 = vpop.permute.xlu0 %4724
  %4726 = vrot.lane.b32.xlu0 %v4519, 4
  %v4727 = vpop.permute.xlu0 %4726
  %4728 = vrot.lane.b32.xlu0 %v4533, 4
  %v4729 = vpop.permute.xlu0 %4728
  %4730 = vrot.lane.b32.xlu0 %v4543, 4
  %v4731 = vpop.permute.xlu0 %4730
  %4732 = vrot.lane.b32.xlu0 %v4557, 4
  %v4733 = vpop.permute.xlu0 %4732
  %4734 = vrot.lane.b32.xlu0 %v4567, 4
  %v4735 = vpop.permute.xlu0 %4734
  %4736 = vrot.lane.b32.xlu0 %v4581, 4
  %v4737 = vpop.permute.xlu0 %4736
  %4738 = vrot.lane.b32.xlu0 %v4591, 4
  %v4739 = vpop.permute.xlu0 %4738
  %4740 = vrot.lane.b32.xlu0 %v4605, 4
  %v4741 = vpop.permute.xlu0 %4740
  %4742 = vrot.lane.b32.xlu0 %v4615, 4
  %v4743 = vpop.permute.xlu0 %4742
  %4808 = vst.msk [vmem:[#allocation4] sm:$0xf] %vm2817, %v4617
  %4809 = vst.msk [vmem:[#allocation4 + $0x4] sm:$0xf] %vm2817, %v4619
  %4810 = vst.msk [vmem:[#allocation4 + $0x8] sm:$0xf] %vm2817, %v4621
  %4811 = vst.msk [vmem:[#allocation4 + $0xc] sm:$0xf] %vm2817, %v4623
  %4812 = vst.msk [vmem:[#allocation4 + $0x10] sm:$0xf] %vm2817, %v4625
  %4813 = vst.msk [vmem:[#allocation4 + $0x14] sm:$0xf] %vm2817, %v4627
  %4814 = vst.msk [vmem:[#allocation4 + $0x18] sm:$0xf] %vm2817, %v4629
  %4815 = vst.msk [vmem:[#allocation4 + $0x1c] sm:$0xf] %vm2817, %v4631
  %4816 = vst.msk [vmem:[#allocation4 + $0x20] sm:$0xf] %vm2817, %v4633
  %4817 = vst.msk [vmem:[#allocation4 + $0x24] sm:$0xf] %vm2817, %v4635
  %4818 = vst.msk [vmem:[#allocation4 + $0x28] sm:$0xf] %vm2817, %v4637
  %4819 = vst.msk [vmem:[#allocation4 + $0x2c] sm:$0xf] %vm2817, %v4639
  %4820 = vst.msk [vmem:[#allocation4 + $0x30] sm:$0xf] %vm2817, %v4641
  %4821 = vst.msk [vmem:[#allocation4 + $0x34] sm:$0xf] %vm2817, %v4643
  %4822 = vst.msk [vmem:[#allocation4 + $0x38] sm:$0xf] %vm2817, %v4645
  %4823 = vst.msk [vmem:[#allocation4 + $0x3c] sm:$0xf] %vm2817, %v4647
  %4824 = vst.msk [vmem:[#allocation4 + $0x40] sm:$0xf] %vm2817, %v4649
  %4825 = vst.msk [vmem:[#allocation4 + $0x44] sm:$0xf] %vm2817, %v4651
  %4826 = vst.msk [vmem:[#allocation4 + $0x48] sm:$0xf] %vm2817, %v4653
  %4827 = vst.msk [vmem:[#allocation4 + $0x4c] sm:$0xf] %vm2817, %v4655
  %4828 = vst.msk [vmem:[#allocation4 + $0x50] sm:$0xf] %vm2817, %v4657
  %4829 = vst.msk [vmem:[#allocation4 + $0x54] sm:$0xf] %vm2817, %v4659
  %4830 = vst.msk [vmem:[#allocation4 + $0x58] sm:$0xf] %vm2817, %v4661
  %4831 = vst.msk [vmem:[#allocation4 + $0x5c] sm:$0xf] %vm2817, %v4663
  %4832 = vst.msk [vmem:[#allocation4 + $0x60] sm:$0xf] %vm2817, %v4665
  %4833 = vst.msk [vmem:[#allocation4 + $0x64] sm:$0xf] %vm2817, %v4667
  %4834 = vst.msk [vmem:[#allocation4 + $0x68] sm:$0xf] %vm2817, %v4669
  %4835 = vst.msk [vmem:[#allocation4 + $0x6c] sm:$0xf] %vm2817, %v4671
  %4836 = vst.msk [vmem:[#allocation4 + $0x70] sm:$0xf] %vm2817, %v4673
  %4837 = vst.msk [vmem:[#allocation4 + $0x74] sm:$0xf] %vm2817, %v4675
  %4838 = vst.msk [vmem:[#allocation4 + $0x78] sm:$0xf] %vm2817, %v4677
  %4839 = vst.msk [vmem:[#allocation4 + $0x7c] sm:$0xf] %vm2817, %v4679
  %4840 = vst.msk [vmem:[#allocation4 + $0x80] sm:$0xf] %vm2817, %v4681
  %4841 = vst.msk [vmem:[#allocation4 + $0x84] sm:$0xf] %vm2817, %v4683
  %4842 = vst.msk [vmem:[#allocation4 + $0x88] sm:$0xf] %vm2817, %v4685
  %4843 = vst.msk [vmem:[#allocation4 + $0x8c] sm:$0xf] %vm2817, %v4687
  %4844 = vst.msk [vmem:[#allocation4 + $0x90] sm:$0xf] %vm2817, %v4689
  %4845 = vst.msk [vmem:[#allocation4 + $0x94] sm:$0xf] %vm2817, %v4691
  %4846 = vst.msk [vmem:[#allocation4 + $0x98] sm:$0xf] %vm2817, %v4693
  %4847 = vst.msk [vmem:[#allocation4 + $0x9c] sm:$0xf] %vm2817, %v4695
  %4848 = vst.msk [vmem:[#allocation4 + $0xa0] sm:$0xf] %vm2817, %v4697
  %4849 = vst.msk [vmem:[#allocation4 + $0xa4] sm:$0xf] %vm2817, %v4699
  %4850 = vst.msk [vmem:[#allocation4 + $0xa8] sm:$0xf] %vm2817, %v4701
  %4851 = vst.msk [vmem:[#allocation4 + $0xac] sm:$0xf] %vm2817, %v4703
  %4852 = vst.msk [vmem:[#allocation4 + $0xb0] sm:$0xf] %vm2817, %v4705
  %4853 = vst.msk [vmem:[#allocation4 + $0xb4] sm:$0xf] %vm2817, %v4707
  %4854 = vst.msk [vmem:[#allocation4 + $0xb8] sm:$0xf] %vm2817, %v4709
  %4855 = vst.msk [vmem:[#allocation4 + $0xbc] sm:$0xf] %vm2817, %v4711
  %4856 = vst.msk [vmem:[#allocation4 + $0xc0] sm:$0xf] %vm2817, %v4713
  %4857 = vst.msk [vmem:[#allocation4 + $0xc4] sm:$0xf] %vm2817, %v4715
  %4858 = vst.msk [vmem:[#allocation4 + $0xc8] sm:$0xf] %vm2817, %v4717
  %4859 = vst.msk [vmem:[#allocation4 + $0xcc] sm:$0xf] %vm2817, %v4719
  %4860 = vst.msk [vmem:[#allocation4 + $0xd0] sm:$0xf] %vm2817, %v4721
  %4861 = vst.msk [vmem:[#allocation4 + $0xd4] sm:$0xf] %vm2817, %v4723
  %4862 = vst.msk [vmem:[#allocation4 + $0xd8] sm:$0xf] %vm2817, %v4725
  %4863 = vst.msk [vmem:[#allocation4 + $0xdc] sm:$0xf] %vm2817, %v4727
  %4864 = vst.msk [vmem:[#allocation4 + $0xe0] sm:$0xf] %vm2817, %v4729
  %4865 = vst.msk [vmem:[#allocation4 + $0xe4] sm:$0xf] %vm2817, %v4731
  %4866 = vst.msk [vmem:[#allocation4 + $0xe8] sm:$0xf] %vm2817, %v4733
  %4867 = vst.msk [vmem:[#allocation4 + $0xec] sm:$0xf] %vm2817, %v4735
  %4868 = vst.msk [vmem:[#allocation4 + $0xf0] sm:$0xf] %vm2817, %v4737
  %4869 = vst.msk [vmem:[#allocation4 + $0xf4] sm:$0xf] %vm2817, %v4739
  %4870 = vst.msk [vmem:[#allocation4 + $0xf8] sm:$0xf] %vm2817, %v4741
  %4871 = vst.msk [vmem:[#allocation4 + $0xfc] sm:$0xf] %vm2817, %v4743
  %v4872 = vld [vmem:[%s1403] sm:$0xe]
  %v4873 = vld [vmem:[%s1403 + $0x4] sm:$0xf]
  %v4874 = vld [vmem:[%s1403 + $0x8] sm:$0x1]
  %v4875 = vld [vmem:[%s1403 + $0xc] sm:$0xe]
  %v4876 = vld [vmem:[%s1403 + $0x10] sm:$0xf]
  %v4877 = vld [vmem:[%s1403 + $0x14] sm:$0x1]
  %v4878 = vld [vmem:[%s1403 + $0x18] sm:$0xe]
  %v4879 = vld [vmem:[%s1403 + $0x1c] sm:$0xf]
  %v4880 = vld [vmem:[%s1403 + $0x20] sm:$0x1]
  %v4881 = vld [vmem:[%s1403 + $0x24] sm:$0xe]
  %v4882 = vld [vmem:[%s1403 + $0x28] sm:$0xf]
  %v4883 = vld [vmem:[%s1403 + $0x2c] sm:$0x1]
  %v4884 = vld [vmem:[%s1403 + $0x30] sm:$0xe]
  %v4885 = vld [vmem:[%s1403 + $0x34] sm:$0xf]
  %v4886 = vld [vmem:[%s1403 + $0x38] sm:$0x1]
  %v4887 = vld [vmem:[%s1403 + $0x3c] sm:$0xe]
  %v4888 = vld [vmem:[%s1403 + $0x40] sm:$0xf]
  %v4889 = vld [vmem:[%s1403 + $0x44] sm:$0x1]
  %v4890 = vld [vmem:[%s1403 + $0x48] sm:$0xe]
  %v4891 = vld [vmem:[%s1403 + $0x4c] sm:$0xf]
  %v4892 = vld [vmem:[%s1403 + $0x50] sm:$0x1]
  %v4893 = vld [vmem:[%s1403 + $0x54] sm:$0xe]
  %v4894 = vld [vmem:[%s1403 + $0x58] sm:$0xf]
  %v4895 = vld [vmem:[%s1403 + $0x5c] sm:$0x1]
  %v4896 = vld [vmem:[%s1403 + $0x60] sm:$0xe]
  %v4897 = vld [vmem:[%s1403 + $0x64] sm:$0xf]
  %v4898 = vld [vmem:[%s1403 + $0x68] sm:$0x1]
  %v4899 = vld [vmem:[%s1403 + $0x6c] sm:$0xe]
  %v4900 = vld [vmem:[%s1403 + $0x70] sm:$0xf]
  %v4901 = vld [vmem:[%s1403 + $0x74] sm:$0x1]
  %v4902 = vld [vmem:[%s1403 + $0x78] sm:$0xe]
  %v4903 = vld [vmem:[%s1403 + $0x7c] sm:$0xf]
  %v4904 = vld [vmem:[%s1403 + $0x80] sm:$0x1]
  %v4905 = vld [vmem:[%s1403 + $0x84] sm:$0xe]
  %v4906 = vld [vmem:[%s1403 + $0x88] sm:$0xf]
  %v4907 = vld [vmem:[%s1403 + $0x8c] sm:$0x1]
  %v4908 = vld [vmem:[%s1403 + $0x90] sm:$0xe]
  %v4909 = vld [vmem:[%s1403 + $0x94] sm:$0xf]
  %v4910 = vld [vmem:[%s1403 + $0x98] sm:$0x1]
  %v4911 = vld [vmem:[%s1403 + $0x9c] sm:$0xe]
  %v4912 = vld [vmem:[%s1403 + $0xa0] sm:$0xf]
  %v4913 = vld [vmem:[%s1403 + $0xa4] sm:$0x1]
  %v4914 = vld [vmem:[%s1403 + $0xa8] sm:$0xe]
  %v4915 = vld [vmem:[%s1403 + $0xac] sm:$0xf]
  %v4916 = vld [vmem:[%s1403 + $0xb0] sm:$0x1]
  %v4917 = vld [vmem:[%s1403 + $0xb4] sm:$0xe]
  %v4918 = vld [vmem:[%s1403 + $0xb8] sm:$0xf]
  %v4919 = vld [vmem:[%s1403 + $0xbc] sm:$0x1]
  %v4920 = vld [vmem:[%s1403 + $0xd8] sm:$0xe]
  %v4921 = vld [vmem:[%s1403 + $0xdc] sm:$0xf]
  %v4922 = vld [vmem:[%s1403 + $0xe0] sm:$0x1]
  %v4923 = vld [vmem:[%s1403 + $0xe4] sm:$0xe]
  %v4924 = vld [vmem:[%s1403 + $0xe8] sm:$0xf]
  %v4925 = vld [vmem:[%s1403 + $0xec] sm:$0x1]
  %v4926 = vld [vmem:[%s1403 + $0xf0] sm:$0xe]
  %v4927 = vld [vmem:[%s1403 + $0xf4] sm:$0xf]
  %v4928 = vld [vmem:[%s1403 + $0xf8] sm:$0x1]
  %v4929 = vld [vmem:[%s1403 + $0xfc] sm:$0xe]
  %v4930 = vld [vmem:[%s1403 + $0x100] sm:$0xf]
  %v4931 = vld [vmem:[%s1403 + $0x104] sm:$0x1]
  %v4932 = vld [vmem:[%s1403 + $0x108] sm:$0xe]
  %v4933 = vld [vmem:[%s1403 + $0x10c] sm:$0xf]
  %v4934 = vld [vmem:[%s1403 + $0x110] sm:$0x1]
  %v4935 = vld [vmem:[%s1403 + $0x114] sm:$0xe]
  %v4936 = vld [vmem:[%s1403 + $0x118] sm:$0xf]
  %v4937 = vld [vmem:[%s1403 + $0x11c] sm:$0x1]
  %v4938 = vld [vmem:[%s1403 + $0x120] sm:$0xe]
  %v4939 = vld [vmem:[%s1403 + $0x124] sm:$0xf]
  %v4940 = vld [vmem:[%s1403 + $0x128] sm:$0x1]
  %v4941 = vld [vmem:[%s1403 + $0x12c] sm:$0xe]
  %v4942 = vld [vmem:[%s1403 + $0x130] sm:$0xf]
  %v4943 = vld [vmem:[%s1403 + $0x134] sm:$0x1]
  %v4944 = vld [vmem:[%s1403 + $0x138] sm:$0xe]
  %v4945 = vld [vmem:[%s1403 + $0x13c] sm:$0xf]
  %v4946 = vld [vmem:[%s1403 + $0x140] sm:$0x1]
  %v4947 = vld [vmem:[%s1403 + $0x144] sm:$0xe]
  %v4948 = vld [vmem:[%s1403 + $0x148] sm:$0xf]
  %v4949 = vld [vmem:[%s1403 + $0x14c] sm:$0x1]
  %v4950 = vld [vmem:[%s1403 + $0x150] sm:$0xe]
  %v4951 = vld [vmem:[%s1403 + $0x154] sm:$0xf]
  %v4952 = vld [vmem:[%s1403 + $0x158] sm:$0x1]
  %v4953 = vld [vmem:[%s1403 + $0x15c] sm:$0xe]
  %v4954 = vld [vmem:[%s1403 + $0x160] sm:$0xf]
  %v4955 = vld [vmem:[%s1403 + $0x164] sm:$0x1]
  %v4956 = vld [vmem:[%s1403 + $0x168] sm:$0xe]
  %v4957 = vld [vmem:[%s1403 + $0x16c] sm:$0xf]
  %v4958 = vld [vmem:[%s1403 + $0x170] sm:$0x1]
  %v4959 = vld [vmem:[%s1403 + $0x174] sm:$0xe]
  %v4960 = vld [vmem:[%s1403 + $0x178] sm:$0xf]
  %v4961 = vld [vmem:[%s1403 + $0x17c] sm:$0x1]
  %v4962 = vld [vmem:[%s1403 + $0x180] sm:$0xe]
  %v4963 = vld [vmem:[%s1403 + $0x184] sm:$0xf]
  %v4964 = vld [vmem:[%s1403 + $0x188] sm:$0x1]
  %v4965 = vld [vmem:[%s1403 + $0x18c] sm:$0xe]
  %v4966 = vld [vmem:[%s1403 + $0x190] sm:$0xf]
  %v4967 = vld [vmem:[%s1403 + $0x194] sm:$0x1]
  %v5064 = vrot.slane %v4872, 5
  %v5065 = vrot.slane %v5064, 4
  %v5066 = vrot.slane %v4873, 5
  %v5067 = vsel %vm3076, %v5065, %v5066
  %v5068 = vrot.slane %v5066, 4
  %v5069 = vrot.slane %v4874, 5
  %v5070 = vsel %vm3076, %v5068, %v5069
  %v5071 = vrot.slane %v4875, 5
  %v5072 = vrot.slane %v5071, 4
  %v5073 = vrot.slane %v4876, 5
  %v5074 = vsel %vm3076, %v5072, %v5073
  %v5075 = vrot.slane %v5073, 4
  %v5076 = vrot.slane %v4877, 5
  %v5077 = vsel %vm3076, %v5075, %v5076
  %v5078 = vrot.slane %v4878, 5
  %v5079 = vrot.slane %v5078, 4
  %v5080 = vrot.slane %v4879, 5
  %v5081 = vsel %vm3076, %v5079, %v5080
  %v5082 = vrot.slane %v5080, 4
  %v5083 = vrot.slane %v4880, 5
  %v5084 = vsel %vm3076, %v5082, %v5083
  %v5085 = vrot.slane %v4881, 5
  %v5086 = vrot.slane %v5085, 4
  %v5087 = vrot.slane %v4882, 5
  %v5088 = vsel %vm3076, %v5086, %v5087
  %v5089 = vrot.slane %v5087, 4
  %v5090 = vrot.slane %v4883, 5
  %v5091 = vsel %vm3076, %v5089, %v5090
  %v5092 = vrot.slane %v4884, 5
  %v5093 = vrot.slane %v5092, 4
  %v5094 = vrot.slane %v4885, 5
  %v5095 = vsel %vm3076, %v5093, %v5094
  %v5096 = vrot.slane %v5094, 4
  %v5097 = vrot.slane %v4886, 5
  %v5098 = vsel %vm3076, %v5096, %v5097
  %v5099 = vrot.slane %v4887, 5
  %v5100 = vrot.slane %v5099, 4
  %v5101 = vrot.slane %v4888, 5
  %v5102 = vsel %vm3076, %v5100, %v5101
  %v5103 = vrot.slane %v5101, 4
  %v5104 = vrot.slane %v4889, 5
  %v5105 = vsel %vm3076, %v5103, %v5104
  %v5106 = vrot.slane %v4890, 5
  %v5107 = vrot.slane %v5106, 4
  %v5108 = vrot.slane %v4891, 5
  %v5109 = vsel %vm3076, %v5107, %v5108
  %v5110 = vrot.slane %v5108, 4
  %v5111 = vrot.slane %v4892, 5
  %v5112 = vsel %vm3076, %v5110, %v5111
  %v5113 = vrot.slane %v4893, 5
  %v5114 = vrot.slane %v5113, 4
  %v5115 = vrot.slane %v4894, 5
  %v5116 = vsel %vm3076, %v5114, %v5115
  %v5117 = vrot.slane %v5115, 4
  %v5118 = vrot.slane %v4895, 5
  %v5119 = vsel %vm3076, %v5117, %v5118
  %v5120 = vrot.slane %v4896, 5
  %v5121 = vrot.slane %v5120, 4
  %v5122 = vrot.slane %v4897, 5
  %v5123 = vsel %vm3076, %v5121, %v5122
  %v5124 = vrot.slane %v5122, 4
  %v5125 = vrot.slane %v4898, 5
  %v5126 = vsel %vm3076, %v5124, %v5125
  %v5127 = vrot.slane %v4899, 5
  %v5128 = vrot.slane %v5127, 4
  %v5129 = vrot.slane %v4900, 5
  %v5130 = vsel %vm3076, %v5128, %v5129
  %v5131 = vrot.slane %v5129, 4
  %v5132 = vrot.slane %v4901, 5
  %v5133 = vsel %vm3076, %v5131, %v5132
  %v5134 = vrot.slane %v4902, 5
  %v5135 = vrot.slane %v5134, 4
  %v5136 = vrot.slane %v4903, 5
  %v5137 = vsel %vm3076, %v5135, %v5136
  %v5138 = vrot.slane %v5136, 4
  %v5139 = vrot.slane %v4904, 5
  %v5140 = vsel %vm3076, %v5138, %v5139
  %v5141 = vrot.slane %v4905, 5
  %v5142 = vrot.slane %v5141, 4
  %v5143 = vrot.slane %v4906, 5
  %v5144 = vsel %vm3076, %v5142, %v5143
  %v5145 = vrot.slane %v5143, 4
  %v5146 = vrot.slane %v4907, 5
  %v5147 = vsel %vm3076, %v5145, %v5146
  %v5148 = vrot.slane %v4908, 5
  %v5149 = vrot.slane %v5148, 4
  %v5150 = vrot.slane %v4909, 5
  %v5151 = vsel %vm3076, %v5149, %v5150
  %v5152 = vrot.slane %v5150, 4
  %v5153 = vrot.slane %v4910, 5
  %v5154 = vsel %vm3076, %v5152, %v5153
  %v5155 = vrot.slane %v4911, 5
  %v5156 = vrot.slane %v5155, 4
  %v5157 = vrot.slane %v4912, 5
  %v5158 = vsel %vm3076, %v5156, %v5157
  %v5159 = vrot.slane %v5157, 4
  %v5160 = vrot.slane %v4913, 5
  %v5161 = vsel %vm3076, %v5159, %v5160
  %v5162 = vrot.slane %v4914, 5
  %v5163 = vrot.slane %v5162, 4
  %v5164 = vrot.slane %v4915, 5
  %v5165 = vsel %vm3076, %v5163, %v5164
  %v5166 = vrot.slane %v5164, 4
  %v5167 = vrot.slane %v4916, 5
  %v5168 = vsel %vm3076, %v5166, %v5167
  %v5169 = vrot.slane %v4917, 5
  %v5170 = vrot.slane %v5169, 4
  %v5171 = vrot.slane %v4918, 5
  %v5172 = vsel %vm3076, %v5170, %v5171
  %v5173 = vrot.slane %v5171, 4
  %v5174 = vrot.slane %v4919, 5
  %v5175 = vsel %vm3076, %v5173, %v5174
  %v5176 = vrot.slane %v4920, 5
  %v5177 = vrot.slane %v5176, 4
  %v5178 = vrot.slane %v4921, 5
  %v5179 = vsel %vm3076, %v5177, %v5178
  %v5180 = vrot.slane %v5178, 4
  %v5181 = vrot.slane %v4922, 5
  %v5182 = vsel %vm3076, %v5180, %v5181
  %v5183 = vrot.slane %v4923, 5
  %v5184 = vrot.slane %v5183, 4
  %v5185 = vrot.slane %v4924, 5
  %v5186 = vsel %vm3076, %v5184, %v5185
  %v5187 = vrot.slane %v5185, 4
  %v5188 = vrot.slane %v4925, 5
  %v5189 = vsel %vm3076, %v5187, %v5188
  %v5190 = vrot.slane %v4926, 5
  %v5191 = vrot.slane %v5190, 4
  %v5192 = vrot.slane %v4927, 5
  %v5193 = vsel %vm3076, %v5191, %v5192
  %v5194 = vrot.slane %v5192, 4
  %v5195 = vrot.slane %v4928, 5
  %v5196 = vsel %vm3076, %v5194, %v5195
  %v5197 = vrot.slane %v4929, 5
  %v5198 = vrot.slane %v5197, 4
  %v5199 = vrot.slane %v4930, 5
  %v5200 = vsel %vm3076, %v5198, %v5199
  %v5201 = vrot.slane %v5199, 4
  %v5202 = vrot.slane %v4931, 5
  %v5203 = vsel %vm3076, %v5201, %v5202
  %v5204 = vrot.slane %v4932, 5
  %v5205 = vrot.slane %v5204, 4
  %v5206 = vrot.slane %v4933, 5
  %v5207 = vsel %vm3076, %v5205, %v5206
  %v5208 = vrot.slane %v5206, 4
  %v5209 = vrot.slane %v4934, 5
  %v5210 = vsel %vm3076, %v5208, %v5209
  %v5211 = vrot.slane %v4935, 5
  %v5212 = vrot.slane %v5211, 4
  %v5213 = vrot.slane %v4936, 5
  %v5214 = vsel %vm3076, %v5212, %v5213
  %v5215 = vrot.slane %v5213, 4
  %v5216 = vrot.slane %v4937, 5
  %v5217 = vsel %vm3076, %v5215, %v5216
  %v5218 = vrot.slane %v4938, 5
  %v5219 = vrot.slane %v5218, 4
  %v5220 = vrot.slane %v4939, 5
  %v5221 = vsel %vm3076, %v5219, %v5220
  %v5222 = vrot.slane %v5220, 4
  %v5223 = vrot.slane %v4940, 5
  %v5224 = vsel %vm3076, %v5222, %v5223
  %v5225 = vrot.slane %v4941, 5
  %v5226 = vrot.slane %v5225, 4
  %v5227 = vrot.slane %v4942, 5
  %v5228 = vsel %vm3076, %v5226, %v5227
  %v5229 = vrot.slane %v5227, 4
  %v5230 = vrot.slane %v4943, 5
  %v5231 = vsel %vm3076, %v5229, %v5230
  %v5232 = vrot.slane %v4944, 5
  %v5233 = vrot.slane %v5232, 4
  %v5234 = vrot.slane %v4945, 5
  %v5235 = vsel %vm3076, %v5233, %v5234
  %v5236 = vrot.slane %v5234, 4
  %v5237 = vrot.slane %v4946, 5
  %v5238 = vsel %vm3076, %v5236, %v5237
  %v5239 = vrot.slane %v4947, 5
  %v5240 = vrot.slane %v5239, 4
  %v5241 = vrot.slane %v4948, 5
  %v5242 = vsel %vm3076, %v5240, %v5241
  %v5243 = vrot.slane %v5241, 4
  %v5244 = vrot.slane %v4949, 5
  %v5245 = vsel %vm3076, %v5243, %v5244
  %v5246 = vrot.slane %v4950, 5
  %v5247 = vrot.slane %v5246, 4
  %v5248 = vrot.slane %v4951, 5
  %v5249 = vsel %vm3076, %v5247, %v5248
  %v5250 = vrot.slane %v5248, 4
  %v5251 = vrot.slane %v4952, 5
  %v5252 = vsel %vm3076, %v5250, %v5251
  %v5253 = vrot.slane %v4953, 5
  %v5254 = vrot.slane %v5253, 4
  %v5255 = vrot.slane %v4954, 5
  %v5256 = vsel %vm3076, %v5254, %v5255
  %v5257 = vrot.slane %v5255, 4
  %v5258 = vrot.slane %v4955, 5
  %v5259 = vsel %vm3076, %v5257, %v5258
  %v5260 = vrot.slane %v4956, 5
  %v5261 = vrot.slane %v5260, 4
  %v5262 = vrot.slane %v4957, 5
  %v5263 = vsel %vm3076, %v5261, %v5262
  %v5264 = vrot.slane %v5262, 4
  %v5265 = vrot.slane %v4958, 5
  %v5266 = vsel %vm3076, %v5264, %v5265
  %v5267 = vrot.slane %v4959, 5
  %v5268 = vrot.slane %v5267, 4
  %v5269 = vrot.slane %v4960, 5
  %v5270 = vsel %vm3076, %v5268, %v5269
  %v5271 = vrot.slane %v5269, 4
  %v5272 = vrot.slane %v4961, 5
  %v5273 = vsel %vm3076, %v5271, %v5272
  %v5274 = vrot.slane %v4962, 5
  %v5275 = vrot.slane %v5274, 4
  %v5276 = vrot.slane %v4963, 5
  %v5277 = vsel %vm3076, %v5275, %v5276
  %v5278 = vrot.slane %v5276, 4
  %v5279 = vrot.slane %v4964, 5
  %v5280 = vsel %vm3076, %v5278, %v5279
  %v5281 = vrot.slane %v4965, 5
  %v5282 = vrot.slane %v5281, 4
  %v5283 = vrot.slane %v4966, 5
  %v5284 = vsel %vm3076, %v5282, %v5283
  %v5285 = vrot.slane %v5283, 4
  %v5286 = vrot.slane %v4967, 5
  %v5287 = vsel %vm3076, %v5285, %v5286
  %5288 = vrot.lane.b32.xlu0 %v5067, 8
  %v5289 = vpop.permute.xlu0 %5288
  %5290 = vrot.lane.b32.xlu0 %v5070, 8
  %v5291 = vpop.permute.xlu0 %5290
  %5292 = vrot.lane.b32.xlu0 %v5074, 8
  %v5293 = vpop.permute.xlu0 %5292
  %5294 = vrot.lane.b32.xlu0 %v5077, 8
  %v5295 = vpop.permute.xlu0 %5294
  %5296 = vrot.lane.b32.xlu0 %v5081, 8
  %v5297 = vpop.permute.xlu0 %5296
  %5298 = vrot.lane.b32.xlu0 %v5084, 8
  %v5299 = vpop.permute.xlu0 %5298
  %5300 = vrot.lane.b32.xlu0 %v5088, 8
  %v5301 = vpop.permute.xlu0 %5300
  %5302 = vrot.lane.b32.xlu0 %v5091, 8
  %v5303 = vpop.permute.xlu0 %5302
  %5304 = vrot.lane.b32.xlu0 %v5095, 8
  %v5305 = vpop.permute.xlu0 %5304
  %5306 = vrot.lane.b32.xlu0 %v5098, 8
  %v5307 = vpop.permute.xlu0 %5306
  %5308 = vrot.lane.b32.xlu0 %v5102, 8
  %v5309 = vpop.permute.xlu0 %5308
  %5310 = vrot.lane.b32.xlu0 %v5105, 8
  %v5311 = vpop.permute.xlu0 %5310
  %5312 = vrot.lane.b32.xlu0 %v5109, 8
  %v5313 = vpop.permute.xlu0 %5312
  %5314 = vrot.lane.b32.xlu0 %v5112, 8
  %v5315 = vpop.permute.xlu0 %5314
  %5316 = vrot.lane.b32.xlu0 %v5116, 8
  %v5317 = vpop.permute.xlu0 %5316
  %5318 = vrot.lane.b32.xlu0 %v5119, 8
  %v5319 = vpop.permute.xlu0 %5318
  %5320 = vrot.lane.b32.xlu0 %v5123, 8
  %v5321 = vpop.permute.xlu0 %5320
  %5322 = vrot.lane.b32.xlu0 %v5126, 8
  %v5323 = vpop.permute.xlu0 %5322
  %5324 = vrot.lane.b32.xlu0 %v5130, 8
  %v5325 = vpop.permute.xlu0 %5324
  %5326 = vrot.lane.b32.xlu0 %v5133, 8
  %v5327 = vpop.permute.xlu0 %5326
  %5328 = vrot.lane.b32.xlu0 %v5137, 8
  %v5329 = vpop.permute.xlu0 %5328
  %5330 = vrot.lane.b32.xlu0 %v5140, 8
  %v5331 = vpop.permute.xlu0 %5330
  %5332 = vrot.lane.b32.xlu0 %v5144, 8
  %v5333 = vpop.permute.xlu0 %5332
  %5334 = vrot.lane.b32.xlu0 %v5147, 8
  %v5335 = vpop.permute.xlu0 %5334
  %5336 = vrot.lane.b32.xlu0 %v5151, 8
  %v5337 = vpop.permute.xlu0 %5336
  %5338 = vrot.lane.b32.xlu0 %v5154, 8
  %v5339 = vpop.permute.xlu0 %5338
  %5340 = vrot.lane.b32.xlu0 %v5158, 8
  %v5341 = vpop.permute.xlu0 %5340
  %5342 = vrot.lane.b32.xlu0 %v5161, 8
  %v5343 = vpop.permute.xlu0 %5342
  %5344 = vrot.lane.b32.xlu0 %v5165, 8
  %v5345 = vpop.permute.xlu0 %5344
  %5346 = vrot.lane.b32.xlu0 %v5168, 8
  %v5347 = vpop.permute.xlu0 %5346
  %5348 = vrot.lane.b32.xlu0 %v5172, 8
  %v5349 = vpop.permute.xlu0 %5348
  %5350 = vrot.lane.b32.xlu0 %v5175, 8
  %v5351 = vpop.permute.xlu0 %5350
  %5352 = vrot.lane.b32.xlu0 %v5179, 8
  %v5353 = vpop.permute.xlu0 %5352
  %5354 = vrot.lane.b32.xlu0 %v5182, 8
  %v5355 = vpop.permute.xlu0 %5354
  %5356 = vrot.lane.b32.xlu0 %v5186, 8
  %v5357 = vpop.permute.xlu0 %5356
  %5358 = vrot.lane.b32.xlu0 %v5189, 8
  %v5359 = vpop.permute.xlu0 %5358
  %5360 = vrot.lane.b32.xlu0 %v5193, 8
  %v5361 = vpop.permute.xlu0 %5360
  %5362 = vrot.lane.b32.xlu0 %v5196, 8
  %v5363 = vpop.permute.xlu0 %5362
  %5364 = vrot.lane.b32.xlu0 %v5200, 8
  %v5365 = vpop.permute.xlu0 %5364
  %5366 = vrot.lane.b32.xlu0 %v5203, 8
  %v5367 = vpop.permute.xlu0 %5366
  %5368 = vrot.lane.b32.xlu0 %v5207, 8
  %v5369 = vpop.permute.xlu0 %5368
  %5370 = vrot.lane.b32.xlu0 %v5210, 8
  %v5371 = vpop.permute.xlu0 %5370
  %5372 = vrot.lane.b32.xlu0 %v5214, 8
  %v5373 = vpop.permute.xlu0 %5372
  %5374 = vrot.lane.b32.xlu0 %v5217, 8
  %v5375 = vpop.permute.xlu0 %5374
  %5376 = vrot.lane.b32.xlu0 %v5221, 8
  %v5377 = vpop.permute.xlu0 %5376
  %5378 = vrot.lane.b32.xlu0 %v5224, 8
  %v5379 = vpop.permute.xlu0 %5378
  %5380 = vrot.lane.b32.xlu0 %v5228, 8
  %v5381 = vpop.permute.xlu0 %5380
  %5382 = vrot.lane.b32.xlu0 %v5231, 8
  %v5383 = vpop.permute.xlu0 %5382
  %5384 = vrot.lane.b32.xlu0 %v5235, 8
  %v5385 = vpop.permute.xlu0 %5384
  %5386 = vrot.lane.b32.xlu0 %v5238, 8
  %v5387 = vpop.permute.xlu0 %5386
  %5388 = vrot.lane.b32.xlu0 %v5242, 8
  %v5389 = vpop.permute.xlu0 %5388
  %5390 = vrot.lane.b32.xlu0 %v5245, 8
  %v5391 = vpop.permute.xlu0 %5390
  %5392 = vrot.lane.b32.xlu0 %v5249, 8
  %v5393 = vpop.permute.xlu0 %5392
  %5394 = vrot.lane.b32.xlu0 %v5252, 8
  %v5395 = vpop.permute.xlu0 %5394
  %5396 = vrot.lane.b32.xlu0 %v5256, 8
  %v5397 = vpop.permute.xlu0 %5396
  %5398 = vrot.lane.b32.xlu0 %v5259, 8
  %v5399 = vpop.permute.xlu0 %5398
  %5400 = vrot.lane.b32.xlu0 %v5263, 8
  %v5401 = vpop.permute.xlu0 %5400
  %5402 = vrot.lane.b32.xlu0 %v5266, 8
  %v5403 = vpop.permute.xlu0 %5402
  %5404 = vrot.lane.b32.xlu0 %v5270, 8
  %v5405 = vpop.permute.xlu0 %5404
  %5406 = vrot.lane.b32.xlu0 %v5273, 8
  %v5407 = vpop.permute.xlu0 %5406
  %5408 = vrot.lane.b32.xlu0 %v5277, 8
  %v5409 = vpop.permute.xlu0 %5408
  %5410 = vrot.lane.b32.xlu0 %v5280, 8
  %v5411 = vpop.permute.xlu0 %5410
  %5412 = vrot.lane.b32.xlu0 %v5284, 8
  %v5413 = vpop.permute.xlu0 %5412
  %5414 = vrot.lane.b32.xlu0 %v5287, 8
  %v5415 = vpop.permute.xlu0 %5414
  %5480 = vst.msk [vmem:[#allocation4] sm:$0xf] %vm3493, %v5289
  %5481 = vst.msk [vmem:[#allocation4 + $0x4] sm:$0xf] %vm3493, %v5291
  %5482 = vst.msk [vmem:[#allocation4 + $0x8] sm:$0xf] %vm3493, %v5293
  %5483 = vst.msk [vmem:[#allocation4 + $0xc] sm:$0xf] %vm3493, %v5295
  %5484 = vst.msk [vmem:[#allocation4 + $0x10] sm:$0xf] %vm3493, %v5297
  %5485 = vst.msk [vmem:[#allocation4 + $0x14] sm:$0xf] %vm3493, %v5299
  %5486 = vst.msk [vmem:[#allocation4 + $0x18] sm:$0xf] %vm3493, %v5301
  %5487 = vst.msk [vmem:[#allocation4 + $0x1c] sm:$0xf] %vm3493, %v5303
  %5488 = vst.msk [vmem:[#allocation4 + $0x20] sm:$0xf] %vm3493, %v5305
  %5489 = vst.msk [vmem:[#allocation4 + $0x24] sm:$0xf] %vm3493, %v5307
  %5490 = vst.msk [vmem:[#allocation4 + $0x28] sm:$0xf] %vm3493, %v5309
  %5491 = vst.msk [vmem:[#allocation4 + $0x2c] sm:$0xf] %vm3493, %v5311
  %5492 = vst.msk [vmem:[#allocation4 + $0x30] sm:$0xf] %vm3493, %v5313
  %5493 = vst.msk [vmem:[#allocation4 + $0x34] sm:$0xf] %vm3493, %v5315
  %5494 = vst.msk [vmem:[#allocation4 + $0x38] sm:$0xf] %vm3493, %v5317
  %5495 = vst.msk [vmem:[#allocation4 + $0x3c] sm:$0xf] %vm3493, %v5319
  %5496 = vst.msk [vmem:[#allocation4 + $0x40] sm:$0xf] %vm3493, %v5321
  %5497 = vst.msk [vmem:[#allocation4 + $0x44] sm:$0xf] %vm3493, %v5323
  %5498 = vst.msk [vmem:[#allocation4 + $0x48] sm:$0xf] %vm3493, %v5325
  %5499 = vst.msk [vmem:[#allocation4 + $0x4c] sm:$0xf] %vm3493, %v5327
  %5500 = vst.msk [vmem:[#allocation4 + $0x50] sm:$0xf] %vm3493, %v5329
  %5501 = vst.msk [vmem:[#allocation4 + $0x54] sm:$0xf] %vm3493, %v5331
  %5502 = vst.msk [vmem:[#allocation4 + $0x58] sm:$0xf] %vm3493, %v5333
  %5503 = vst.msk [vmem:[#allocation4 + $0x5c] sm:$0xf] %vm3493, %v5335
  %5504 = vst.msk [vmem:[#allocation4 + $0x60] sm:$0xf] %vm3493, %v5337
  %5505 = vst.msk [vmem:[#allocation4 + $0x64] sm:$0xf] %vm3493, %v5339
  %5506 = vst.msk [vmem:[#allocation4 + $0x68] sm:$0xf] %vm3493, %v5341
  %5507 = vst.msk [vmem:[#allocation4 + $0x6c] sm:$0xf] %vm3493, %v5343
  %5508 = vst.msk [vmem:[#allocation4 + $0x70] sm:$0xf] %vm3493, %v5345
  %5509 = vst.msk [vmem:[#allocation4 + $0x74] sm:$0xf] %vm3493, %v5347
  %5510 = vst.msk [vmem:[#allocation4 + $0x78] sm:$0xf] %vm3493, %v5349
  %5511 = vst.msk [vmem:[#allocation4 + $0x7c] sm:$0xf] %vm3493, %v5351
  %5512 = vst.msk [vmem:[#allocation4 + $0x80] sm:$0xf] %vm3493, %v5353
  %5513 = vst.msk [vmem:[#allocation4 + $0x84] sm:$0xf] %vm3493, %v5355
  %5514 = vst.msk [vmem:[#allocation4 + $0x88] sm:$0xf] %vm3493, %v5357
  %5515 = vst.msk [vmem:[#allocation4 + $0x8c] sm:$0xf] %vm3493, %v5359
  %5516 = vst.msk [vmem:[#allocation4 + $0x90] sm:$0xf] %vm3493, %v5361
  %5517 = vst.msk [vmem:[#allocation4 + $0x94] sm:$0xf] %vm3493, %v5363
  %5518 = vst.msk [vmem:[#allocation4 + $0x98] sm:$0xf] %vm3493, %v5365
  %5519 = vst.msk [vmem:[#allocation4 + $0x9c] sm:$0xf] %vm3493, %v5367
  %5520 = vst.msk [vmem:[#allocation4 + $0xa0] sm:$0xf] %vm3493, %v5369
  %5521 = vst.msk [vmem:[#allocation4 + $0xa4] sm:$0xf] %vm3493, %v5371
  %5522 = vst.msk [vmem:[#allocation4 + $0xa8] sm:$0xf] %vm3493, %v5373
  %5523 = vst.msk [vmem:[#allocation4 + $0xac] sm:$0xf] %vm3493, %v5375
  %5524 = vst.msk [vmem:[#allocation4 + $0xb0] sm:$0xf] %vm3493, %v5377
  %5525 = vst.msk [vmem:[#allocation4 + $0xb4] sm:$0xf] %vm3493, %v5379
  %5526 = vst.msk [vmem:[#allocation4 + $0xb8] sm:$0xf] %vm3493, %v5381
  %5527 = vst.msk [vmem:[#allocation4 + $0xbc] sm:$0xf] %vm3493, %v5383
  %5528 = vst.msk [vmem:[#allocation4 + $0xc0] sm:$0xf] %vm3493, %v5385
  %5529 = vst.msk [vmem:[#allocation4 + $0xc4] sm:$0xf] %vm3493, %v5387
  %5530 = vst.msk [vmem:[#allocation4 + $0xc8] sm:$0xf] %vm3493, %v5389
  %5531 = vst.msk [vmem:[#allocation4 + $0xcc] sm:$0xf] %vm3493, %v5391
  %5532 = vst.msk [vmem:[#allocation4 + $0xd0] sm:$0xf] %vm3493, %v5393
  %5533 = vst.msk [vmem:[#allocation4 + $0xd4] sm:$0xf] %vm3493, %v5395
  %5534 = vst.msk [vmem:[#allocation4 + $0xd8] sm:$0xf] %vm3493, %v5397
  %5535 = vst.msk [vmem:[#allocation4 + $0xdc] sm:$0xf] %vm3493, %v5399
  %5536 = vst.msk [vmem:[#allocation4 + $0xe0] sm:$0xf] %vm3493, %v5401
  %5537 = vst.msk [vmem:[#allocation4 + $0xe4] sm:$0xf] %vm3493, %v5403
  %5538 = vst.msk [vmem:[#allocation4 + $0xe8] sm:$0xf] %vm3493, %v5405
  %5539 = vst.msk [vmem:[#allocation4 + $0xec] sm:$0xf] %vm3493, %v5407
  %5540 = vst.msk [vmem:[#allocation4 + $0xf0] sm:$0xf] %vm3493, %v5409
  %5541 = vst.msk [vmem:[#allocation4 + $0xf4] sm:$0xf] %vm3493, %v5411
  %5542 = vst.msk [vmem:[#allocation4 + $0xf8] sm:$0xf] %vm3493, %v5413
  %5543 = vst.msk [vmem:[#allocation4 + $0xfc] sm:$0xf] %vm3493, %v5415
  %v5544 = vld [vmem:[#allocation4] sm:$0xf]
  %v5545 = vld [vmem:[#allocation4 + $0x4] sm:$0xf]
  %v5546 = vld [vmem:[#allocation4 + $0x8] sm:$0xf]
  %v5547 = vld [vmem:[#allocation4 + $0xc] sm:$0xf]
  %v5548 = vld [vmem:[#allocation4 + $0x10] sm:$0xf]
  %v5549 = vld [vmem:[#allocation4 + $0x14] sm:$0xf]
  %v5550 = vld [vmem:[#allocation4 + $0x18] sm:$0xf]
  %v5551 = vld [vmem:[#allocation4 + $0x1c] sm:$0xf]
  %v5552 = vld [vmem:[#allocation4 + $0x20] sm:$0xf]
  %v5553 = vld [vmem:[#allocation4 + $0x24] sm:$0xf]
  %v5554 = vld [vmem:[#allocation4 + $0x28] sm:$0xf]
  %v5555 = vld [vmem:[#allocation4 + $0x2c] sm:$0xf]
  %v5556 = vld [vmem:[#allocation4 + $0x30] sm:$0xf]
  %v5557 = vld [vmem:[#allocation4 + $0x34] sm:$0xf]
  %v5558 = vld [vmem:[#allocation4 + $0x38] sm:$0xf]
  %v5559 = vld [vmem:[#allocation4 + $0x3c] sm:$0xf]
  %v5560 = vld [vmem:[#allocation4 + $0x40] sm:$0xf]
  %v5561 = vld [vmem:[#allocation4 + $0x44] sm:$0xf]
  %v5562 = vld [vmem:[#allocation4 + $0x48] sm:$0xf]
  %v5563 = vld [vmem:[#allocation4 + $0x4c] sm:$0xf]
  %v5564 = vld [vmem:[#allocation4 + $0x50] sm:$0xf]
  %v5565 = vld [vmem:[#allocation4 + $0x54] sm:$0xf]
  %v5566 = vld [vmem:[#allocation4 + $0x58] sm:$0xf]
  %v5567 = vld [vmem:[#allocation4 + $0x5c] sm:$0xf]
  %v5568 = vld [vmem:[#allocation4 + $0x60] sm:$0xf]
  %v5569 = vld [vmem:[#allocation4 + $0x64] sm:$0xf]
  %v5570 = vld [vmem:[#allocation4 + $0x68] sm:$0xf]
  %v5571 = vld [vmem:[#allocation4 + $0x6c] sm:$0xf]
  %v5572 = vld [vmem:[#allocation4 + $0x70] sm:$0xf]
  %v5573 = vld [vmem:[#allocation4 + $0x74] sm:$0xf]
  %v5574 = vld [vmem:[#allocation4 + $0x78] sm:$0xf]
  %v5575 = vld [vmem:[#allocation4 + $0x7c] sm:$0xf]
  %v5576 = vld [vmem:[#allocation4 + $0x80] sm:$0xf]
  %v5577 = vld [vmem:[#allocation4 + $0x84] sm:$0xf]
  %v5578 = vld [vmem:[#allocation4 + $0x88] sm:$0xf]
  %v5579 = vld [vmem:[#allocation4 + $0x8c] sm:$0xf]
  %v5580 = vld [vmem:[#allocation4 + $0x90] sm:$0xf]
  %v5581 = vld [vmem:[#allocation4 + $0x94] sm:$0xf]
  %v5582 = vld [vmem:[#allocation4 + $0x98] sm:$0xf]
  %v5583 = vld [vmem:[#allocation4 + $0x9c] sm:$0xf]
  %v5584 = vld [vmem:[#allocation4 + $0xa0] sm:$0xf]
  %v5585 = vld [vmem:[#allocation4 + $0xa4] sm:$0xf]
  %v5586 = vld [vmem:[#allocation4 + $0xa8] sm:$0xf]
  %v5587 = vld [vmem:[#allocation4 + $0xac] sm:$0xf]
  %v5588 = vld [vmem:[#allocation4 + $0xb0] sm:$0xf]
  %v5589 = vld [vmem:[#allocation4 + $0xb4] sm:$0xf]
  %v5590 = vld [vmem:[#allocation4 + $0xb8] sm:$0xf]
  %v5591 = vld [vmem:[#allocation4 + $0xbc] sm:$0xf]
  %v5592 = vld [vmem:[#allocation4 + $0xc0] sm:$0xf]
  %v5593 = vld [vmem:[#allocation4 + $0xc4] sm:$0xf]
  %v5594 = vld [vmem:[#allocation4 + $0xc8] sm:$0xf]
  %v5595 = vld [vmem:[#allocation4 + $0xcc] sm:$0xf]
  %v5596 = vld [vmem:[#allocation4 + $0xd0] sm:$0xf]
  %v5597 = vld [vmem:[#allocation4 + $0xd4] sm:$0xf]
  %v5598 = vld [vmem:[#allocation4 + $0xd8] sm:$0xf]
  %v5599 = vld [vmem:[#allocation4 + $0xdc] sm:$0xf]
  %v5600 = vld [vmem:[#allocation4 + $0xe0] sm:$0xf]
  %v5601 = vld [vmem:[#allocation4 + $0xe4] sm:$0xf]
  %v5602 = vld [vmem:[#allocation4 + $0xe8] sm:$0xf]
  %v5603 = vld [vmem:[#allocation4 + $0xec] sm:$0xf]
  %v5604 = vld [vmem:[#allocation4 + $0xf0] sm:$0xf]
  %v5605 = vld [vmem:[#allocation4 + $0xf4] sm:$0xf]
  %v5606 = vld [vmem:[#allocation4 + $0xf8] sm:$0xf]
  %v5607 = vld [vmem:[#allocation4 + $0xfc] sm:$0xf]
  %s5608 = scalar_lea.vmem %s3, 8
  %v5609 = vld [vmem:[%s5608] sm:$0xf]
  %v5610 = vld [vmem:[%s5608 + $0x4] sm:$0x3]
  %v5675 = vunpack.c.l.b16 %v5544
  %v5676 = vunpack.c.l.b16 %v5545
  %v5677 = vunpack.c.l.b16 %v5546
  %v5678 = vunpack.c.l.b16 %v5547
  %v5679 = vunpack.c.l.b16 %v5548
  %v5680 = vunpack.c.l.b16 %v5549
  %v5681 = vunpack.c.l.b16 %v5550
  %v5682 = vunpack.c.l.b16 %v5551
  %v5683 = vunpack.c.l.b16 %v5552
  %v5684 = vunpack.c.l.b16 %v5553
  %v5685 = vunpack.c.l.b16 %v5554
  %v5686 = vunpack.c.l.b16 %v5555
  %v5687 = vunpack.c.l.b16 %v5556
  %v5688 = vunpack.c.l.b16 %v5557
  %v5689 = vunpack.c.l.b16 %v5558
  %v5690 = vunpack.c.l.b16 %v5559
  %v5691 = vunpack.c.l.b16 %v5560
  %v5692 = vunpack.c.l.b16 %v5561
  %v5693 = vunpack.c.l.b16 %v5562
  %v5694 = vunpack.c.l.b16 %v5563
  %v5695 = vunpack.c.l.b16 %v5564
  %v5696 = vunpack.c.l.b16 %v5565
  %v5697 = vunpack.c.l.b16 %v5566
  %v5698 = vunpack.c.l.b16 %v5567
  %v5699 = vunpack.c.l.b16 %v5568
  %v5700 = vunpack.c.l.b16 %v5569
  %v5701 = vunpack.c.l.b16 %v5570
  %v5702 = vunpack.c.l.b16 %v5571
  %v5703 = vunpack.c.l.b16 %v5572
  %v5704 = vunpack.c.l.b16 %v5573
  %v5705 = vunpack.c.l.b16 %v5574
  %v5706 = vunpack.c.l.b16 %v5575
  %v5707 = vunpack.c.l.b16 %v5576
  %v5708 = vunpack.c.l.b16 %v5577
  %v5709 = vunpack.c.l.b16 %v5578
  %v5710 = vunpack.c.l.b16 %v5579
  %v5711 = vunpack.c.l.b16 %v5580
  %v5712 = vunpack.c.l.b16 %v5581
  %v5713 = vunpack.c.l.b16 %v5582
  %v5714 = vunpack.c.l.b16 %v5583
  %v5715 = vunpack.c.l.b16 %v5584
  %v5716 = vunpack.c.l.b16 %v5585
  %v5717 = vunpack.c.l.b16 %v5586
  %v5718 = vunpack.c.l.b16 %v5587
  %v5719 = vunpack.c.l.b16 %v5588
  %v5720 = vunpack.c.l.b16 %v5589
  %v5721 = vunpack.c.l.b16 %v5590
  %v5722 = vunpack.c.l.b16 %v5591
  %v5723 = vunpack.c.l.b16 %v5592
  %v5724 = vunpack.c.l.b16 %v5593
  %v5725 = vunpack.c.l.b16 %v5594
  %v5726 = vunpack.c.l.b16 %v5595
  %v5727 = vunpack.c.l.b16 %v5596
  %v5728 = vunpack.c.l.b16 %v5597
  %v5729 = vunpack.c.l.b16 %v5598
  %v5730 = vunpack.c.l.b16 %v5599
  %v5731 = vunpack.c.l.b16 %v5600
  %v5732 = vunpack.c.l.b16 %v5601
  %v5733 = vunpack.c.l.b16 %v5602
  %v5734 = vunpack.c.l.b16 %v5603
  %v5735 = vunpack.c.l.b16 %v5604
  %v5736 = vunpack.c.l.b16 %v5605
  %v5737 = vunpack.c.l.b16 %v5606
  %v5738 = vunpack.c.l.b16 %v5607
  %v5739 = vpack.c.b16 %v5676, %v5675
  %v5740 = vpack.c.b16 %v5678, %v5677
  %v5741 = vpack.c.b16 %v5680, %v5679
  %v5742 = vpack.c.b16 %v5682, %v5681
  %v5743 = vpack.c.b16 %v5684, %v5683
  %v5744 = vpack.c.b16 %v5686, %v5685
  %v5745 = vpack.c.b16 %v5688, %v5687
  %v5746 = vpack.c.b16 %v5690, %v5689
  %v5747 = vpack.c.b16 %v5692, %v5691
  %v5748 = vpack.c.b16 %v5694, %v5693
  %v5749 = vpack.c.b16 %v5696, %v5695
  %v5750 = vpack.c.b16 %v5698, %v5697
  %v5751 = vpack.c.b16 %v5700, %v5699
  %v5752 = vpack.c.b16 %v5702, %v5701
  %v5753 = vpack.c.b16 %v5704, %v5703
  %v5754 = vpack.c.b16 %v5706, %v5705
  %v5755 = vpack.c.b16 %v5708, %v5707
  %v5756 = vpack.c.b16 %v5710, %v5709
  %v5757 = vpack.c.b16 %v5712, %v5711
  %v5758 = vpack.c.b16 %v5714, %v5713
  %v5759 = vpack.c.b16 %v5716, %v5715
  %v5760 = vpack.c.b16 %v5718, %v5717
  %v5761 = vpack.c.b16 %v5720, %v5719
  %v5762 = vpack.c.b16 %v5722, %v5721
  %v5763 = vpack.c.b16 %v5724, %v5723
  %v5764 = vpack.c.b16 %v5726, %v5725
  %v5765 = vpack.c.b16 %v5728, %v5727
  %v5766 = vpack.c.b16 %v5730, %v5729
  %v5767 = vpack.c.b16 %v5732, %v5731
  %v5768 = vpack.c.b16 %v5734, %v5733
  %v5769 = vpack.c.b16 %v5736, %v5735
  %v5770 = vpack.c.b16 %v5738, %v5737
  %v5773 = vunpack.c.l.b16 %v5609
  %v5774 = vunpack.c.l.b16 %v5610
  %v5775 = vpack.c.b16 %v5774, %v5773
  %vm5776 = vcmask 97280
  %v5778 = vsel %vm5776, %v5739, 0
  %v5781 = vsel %vm5776, %v5740, 0
  %v5784 = vsel %vm5776, %v5741, 0
  %v5787 = vsel %vm5776, %v5742, 0
  %v5790 = vsel %vm5776, %v5743, 0
  %v5793 = vsel %vm5776, %v5744, 0
  %v5796 = vsel %vm5776, %v5745, 0
  %v5799 = vsel %vm5776, %v5746, 0
  %v5802 = vsel %vm5776, %v5747, 0
  %v5805 = vsel %vm5776, %v5748, 0
  %v5808 = vsel %vm5776, %v5749, 0
  %v5811 = vsel %vm5776, %v5750, 0
  %v5814 = vsel %vm5776, %v5751, 0
  %v5817 = vsel %vm5776, %v5752, 0
  %v5820 = vsel %vm5776, %v5753, 0
  %v5823 = vsel %vm5776, %v5754, 0
  %v5826 = vsel %vm5776, %v5755, 0
  %v5829 = vsel %vm5776, %v5756, 0
  %v5832 = vsel %vm5776, %v5757, 0
  %v5835 = vsel %vm5776, %v5758, 0
  %v5838 = vsel %vm5776, %v5759, 0
  %v5841 = vsel %vm5776, %v5760, 0
  %v5844 = vsel %vm5776, %v5761, 0
  %v5847 = vsel %vm5776, %v5762, 0
  %v5850 = vsel %vm5776, %v5763, 0
  %v5853 = vsel %vm5776, %v5764, 0
  %v5856 = vsel %vm5776, %v5765, 0
  %v5859 = vsel %vm5776, %v5766, 0
  %v5862 = vsel %vm5776, %v5767, 0
  %v5865 = vsel %vm5776, %v5768, 0
  %v5868 = vsel %vm5776, %v5769, 0
  %v5871 = vsel %vm5776, %v5770, 0
  %vm5873 = vcmask 1045504
  %v5875 = vsel %vm5873, %v5775, 0
  %5877 = vmatprep.subr.bf16.mxu0 0
  %5878 = vmatpush1.bf16.msra.mxu0 0
  %5879 = vmatprep.subr.bf16.mxu0 0
  %5880 = vmatpush1.bf16.msra.mxu0 0
  %5881 = vmatprep.subr.bf16.mxu0 0
  %5882 = vmatpush1.bf16.msra.mxu0 0
  %5883 = vmatprep.subr.bf16.mxu0 0
  %5884 = vmatpush1.bf16.msra.mxu0 0
  %5885 = vmatprep.subr.bf16.mxu0 0
  %5886 = vmatpush1.bf16.msra.mxu0 0
  %5887 = vmatprep.subr.bf16.mxu0 0
  %5888 = vmatpush1.bf16.msra.mxu0 0
  %5889 = vmatprep.subr.bf16.mxu0 0
  %5890 = vmatpush1.bf16.msra.mxu0 0
  %5891 = vmatprep.subr.bf16.mxu0 0
  %5892 = vmatpush1.bf16.msra.mxu0 %v5875
  %5893 = vmatprep.subr.bf16.mxu0 0
  %5894 = vmatpush2.bf16.msra.mxu0 0
  %5895 = vmatprep.subr.bf16.mxu0 0
  %5896 = vmatpush2.bf16.msra.mxu0 0
  %5897 = vmatprep.subr.bf16.mxu0 0
  %5898 = vmatpush2.bf16.msra.mxu0 0
  %5899 = vmatprep.subr.bf16.mxu0 0
  %5900 = vmatpush2.bf16.msra.mxu0 0
  %5901 = vmatprep.subr.bf16.mxu0 0
  %5902 = vmatpush2.bf16.msra.mxu0 0
  %5903 = vmatprep.subr.bf16.mxu0 0
  %5904 = vmatpush2.bf16.msra.mxu0 0
  %5905 = vmatprep.subr.bf16.mxu0 0
  %5906 = vmatpush2.bf16.msra.mxu0 0
  %5907 = vmatprep.subr.bf16.mxu0 0
  %5908 = vmatpush2.bf16.msra.mxu0 0
  %5909 = vmatprep.mubr.bf16.mxu0 0
  %5910 = vmatmul.mubr.bf16.gmra.mxu0 %v5778
  %v5911 = vpop.f32.mrf.mxu0
  %v5912 = vadd.f32 0.0, %v5911
  %v5913 = vpop.f32.mrf.mxu0
  %v5914 = vpop.f32.mrf.mxu0
  %v5915 = vadd.f32 0.0, %v5914
  %v5916 = vpop.f32.mrf.mxu0
  %5917 = vmatprep.mubr.bf16.mxu0 0
  %5918 = vmatmul.mubr.bf16.gmra.mxu0 %v5781
  %v5919 = vpop.f32.mrf.mxu0
  %v5920 = vadd.f32 0.0, %v5919
  %v5921 = vpop.f32.mrf.mxu0
  %v5922 = vpop.f32.mrf.mxu0
  %v5923 = vadd.f32 0.0, %v5922
  %v5924 = vpop.f32.mrf.mxu0
  %5925 = vmatprep.mubr.bf16.mxu0 0
  %5926 = vmatmul.mubr.bf16.gmra.mxu0 %v5784
  %v5927 = vpop.f32.mrf.mxu0
  %v5928 = vadd.f32 0.0, %v5927
  %v5929 = vpop.f32.mrf.mxu0
  %v5930 = vpop.f32.mrf.mxu0
  %v5931 = vadd.f32 0.0, %v5930
  %v5932 = vpop.f32.mrf.mxu0
  %5933 = vmatprep.mubr.bf16.mxu0 0
  %5934 = vmatmul.mubr.bf16.gmra.mxu0 %v5787
  %v5935 = vpop.f32.mrf.mxu0
  %v5936 = vadd.f32 0.0, %v5935
  %v5937 = vpop.f32.mrf.mxu0
  %v5938 = vpop.f32.mrf.mxu0
  %v5939 = vadd.f32 0.0, %v5938
  %v5940 = vpop.f32.mrf.mxu0
  %5941 = vmatprep.mubr.bf16.mxu0 0
  %5942 = vmatmul.mubr.bf16.gmra.mxu0 %v5790
  %v5943 = vpop.f32.mrf.mxu0
  %v5944 = vadd.f32 0.0, %v5943
  %v5945 = vpop.f32.mrf.mxu0
  %v5946 = vpop.f32.mrf.mxu0
  %v5947 = vadd.f32 0.0, %v5946
  %v5948 = vpop.f32.mrf.mxu0
  %5949 = vmatprep.mubr.bf16.mxu0 0
  %5950 = vmatmul.mubr.bf16.gmra.mxu0 %v5793
  %v5951 = vpop.f32.mrf.mxu0
  %v5952 = vadd.f32 0.0, %v5951
  %v5953 = vpop.f32.mrf.mxu0
  %v5954 = vpop.f32.mrf.mxu0
  %v5955 = vadd.f32 0.0, %v5954
  %v5956 = vpop.f32.mrf.mxu0
  %5957 = vmatprep.mubr.bf16.mxu0 0
  %5958 = vmatmul.mubr.bf16.gmra.mxu0 %v5796
  %v5959 = vpop.f32.mrf.mxu0
  %v5960 = vadd.f32 0.0, %v5959
  %v5961 = vpop.f32.mrf.mxu0
  %v5962 = vpop.f32.mrf.mxu0
  %v5963 = vadd.f32 0.0, %v5962
  %v5964 = vpop.f32.mrf.mxu0
  %5965 = vmatprep.mubr.bf16.mxu0 0
  %5966 = vmatmul.mubr.bf16.gmra.mxu0 %v5799
  %v5967 = vpop.f32.mrf.mxu0
  %v5968 = vadd.f32 0.0, %v5967
  %v5969 = vpop.f32.mrf.mxu0
  %v5970 = vpop.f32.mrf.mxu0
  %v5971 = vadd.f32 0.0, %v5970
  %v5972 = vpop.f32.mrf.mxu0
  %5973 = vmatprep.mubr.bf16.mxu0 0
  %5974 = vmatmul.mubr.bf16.gmra.mxu0 %v5802
  %v5975 = vpop.f32.mrf.mxu0
  %v5976 = vadd.f32 0.0, %v5975
  %v5977 = vpop.f32.mrf.mxu0
  %v5978 = vpop.f32.mrf.mxu0
  %v5979 = vadd.f32 0.0, %v5978
  %v5980 = vpop.f32.mrf.mxu0
  %5981 = vmatprep.mubr.bf16.mxu0 0
  %5982 = vmatmul.mubr.bf16.gmra.mxu0 %v5805
  %v5983 = vpop.f32.mrf.mxu0
  %v5984 = vadd.f32 0.0, %v5983
  %v5985 = vpop.f32.mrf.mxu0
  %v5986 = vpop.f32.mrf.mxu0
  %v5987 = vadd.f32 0.0, %v5986
  %v5988 = vpop.f32.mrf.mxu0
  %5989 = vmatprep.mubr.bf16.mxu0 0
  %5990 = vmatmul.mubr.bf16.gmra.mxu0 %v5808
  %v5991 = vpop.f32.mrf.mxu0
  %v5992 = vadd.f32 0.0, %v5991
  %v5993 = vpop.f32.mrf.mxu0
  %v5994 = vpop.f32.mrf.mxu0
  %v5995 = vadd.f32 0.0, %v5994
  %v5996 = vpop.f32.mrf.mxu0
  %5997 = vmatprep.mubr.bf16.mxu0 0
  %5998 = vmatmul.mubr.bf16.gmra.mxu0 %v5811
  %v5999 = vpop.f32.mrf.mxu0
  %v6000 = vadd.f32 0.0, %v5999
  %v6001 = vpop.f32.mrf.mxu0
  %v6002 = vpop.f32.mrf.mxu0
  %v6003 = vadd.f32 0.0, %v6002
  %v6004 = vpop.f32.mrf.mxu0
  %6005 = vmatprep.mubr.bf16.mxu0 0
  %6006 = vmatmul.mubr.bf16.gmra.mxu0 %v5814
  %v6007 = vpop.f32.mrf.mxu0
  %v6008 = vadd.f32 0.0, %v6007
  %v6009 = vpop.f32.mrf.mxu0
  %v6010 = vpop.f32.mrf.mxu0
  %v6011 = vadd.f32 0.0, %v6010
  %v6012 = vpop.f32.mrf.mxu0
  %6013 = vmatprep.mubr.bf16.mxu0 0
  %6014 = vmatmul.mubr.bf16.gmra.mxu0 %v5817
  %v6015 = vpop.f32.mrf.mxu0
  %v6016 = vadd.f32 0.0, %v6015
  %v6017 = vpop.f32.mrf.mxu0
  %v6018 = vpop.f32.mrf.mxu0
  %v6019 = vadd.f32 0.0, %v6018
  %v6020 = vpop.f32.mrf.mxu0
  %6021 = vmatprep.mubr.bf16.mxu0 0
  %6022 = vmatmul.mubr.bf16.gmra.mxu0 %v5820
  %v6023 = vpop.f32.mrf.mxu0
  %v6024 = vadd.f32 0.0, %v6023
  %v6025 = vpop.f32.mrf.mxu0
  %v6026 = vpop.f32.mrf.mxu0
  %v6027 = vadd.f32 0.0, %v6026
  %v6028 = vpop.f32.mrf.mxu0
  %6029 = vmatprep.mubr.bf16.mxu0 0
  %6030 = vmatmul.mubr.bf16.gmra.mxu0 %v5823
  %v6031 = vpop.f32.mrf.mxu0
  %v6032 = vadd.f32 0.0, %v6031
  %v6033 = vpop.f32.mrf.mxu0
  %v6034 = vpop.f32.mrf.mxu0
  %v6035 = vadd.f32 0.0, %v6034
  %v6036 = vpop.f32.mrf.mxu0
  %6037 = vmatprep.mubr.bf16.mxu0 0
  %6038 = vmatmul.mubr.bf16.gmra.mxu0 %v5826
  %v6039 = vpop.f32.mrf.mxu0
  %v6040 = vadd.f32 0.0, %v6039
  %v6041 = vpop.f32.mrf.mxu0
  %v6042 = vpop.f32.mrf.mxu0
  %v6043 = vadd.f32 0.0, %v6042
  %v6044 = vpop.f32.mrf.mxu0
  %6045 = vmatprep.mubr.bf16.mxu0 0
  %6046 = vmatmul.mubr.bf16.gmra.mxu0 %v5829
  %v6047 = vpop.f32.mrf.mxu0
  %v6048 = vadd.f32 0.0, %v6047
  %v6049 = vpop.f32.mrf.mxu0
  %v6050 = vpop.f32.mrf.mxu0
  %v6051 = vadd.f32 0.0, %v6050
  %v6052 = vpop.f32.mrf.mxu0
  %6053 = vmatprep.mubr.bf16.mxu0 0
  %6054 = vmatmul.mubr.bf16.gmra.mxu0 %v5832
  %v6055 = vpop.f32.mrf.mxu0
  %v6056 = vadd.f32 0.0, %v6055
  %v6057 = vpop.f32.mrf.mxu0
  %v6058 = vpop.f32.mrf.mxu0
  %v6059 = vadd.f32 0.0, %v6058
  %v6060 = vpop.f32.mrf.mxu0
  %6061 = vmatprep.mubr.bf16.mxu0 0
  %6062 = vmatmul.mubr.bf16.gmra.mxu0 %v5835
  %v6063 = vpop.f32.mrf.mxu0
  %v6064 = vadd.f32 0.0, %v6063
  %v6065 = vpop.f32.mrf.mxu0
  %v6066 = vpop.f32.mrf.mxu0
  %v6067 = vadd.f32 0.0, %v6066
  %v6068 = vpop.f32.mrf.mxu0
  %6069 = vmatprep.mubr.bf16.mxu0 0
  %6070 = vmatmul.mubr.bf16.gmra.mxu0 %v5838
  %v6071 = vpop.f32.mrf.mxu0
  %v6072 = vadd.f32 0.0, %v6071
  %v6073 = vpop.f32.mrf.mxu0
  %v6074 = vpop.f32.mrf.mxu0
  %v6075 = vadd.f32 0.0, %v6074
  %v6076 = vpop.f32.mrf.mxu0
  %6077 = vmatprep.mubr.bf16.mxu0 0
  %6078 = vmatmul.mubr.bf16.gmra.mxu0 %v5841
  %v6079 = vpop.f32.mrf.mxu0
  %v6080 = vadd.f32 0.0, %v6079
  %v6081 = vpop.f32.mrf.mxu0
  %v6082 = vpop.f32.mrf.mxu0
  %v6083 = vadd.f32 0.0, %v6082
  %v6084 = vpop.f32.mrf.mxu0
  %6085 = vmatprep.mubr.bf16.mxu0 0
  %6086 = vmatmul.mubr.bf16.gmra.mxu0 %v5844
  %v6087 = vpop.f32.mrf.mxu0
  %v6088 = vadd.f32 0.0, %v6087
  %v6089 = vpop.f32.mrf.mxu0
  %v6090 = vpop.f32.mrf.mxu0
  %v6091 = vadd.f32 0.0, %v6090
  %v6092 = vpop.f32.mrf.mxu0
  %6093 = vmatprep.mubr.bf16.mxu0 0
  %6094 = vmatmul.mubr.bf16.gmra.mxu0 %v5847
  %v6095 = vpop.f32.mrf.mxu0
  %v6096 = vadd.f32 0.0, %v6095
  %v6097 = vpop.f32.mrf.mxu0
  %v6098 = vpop.f32.mrf.mxu0
  %v6099 = vadd.f32 0.0, %v6098
  %v6100 = vpop.f32.mrf.mxu0
  %6101 = vmatprep.mubr.bf16.mxu0 0
  %6102 = vmatmul.mubr.bf16.gmra.mxu0 %v5850
  %v6103 = vpop.f32.mrf.mxu0
  %v6104 = vadd.f32 0.0, %v6103
  %v6105 = vpop.f32.mrf.mxu0
  %v6106 = vpop.f32.mrf.mxu0
  %v6107 = vadd.f32 0.0, %v6106
  %v6108 = vpop.f32.mrf.mxu0
  %6109 = vmatprep.mubr.bf16.mxu0 0
  %6110 = vmatmul.mubr.bf16.gmra.mxu0 %v5853
  %v6111 = vpop.f32.mrf.mxu0
  %v6112 = vadd.f32 0.0, %v6111
  %v6113 = vpop.f32.mrf.mxu0
  %v6114 = vpop.f32.mrf.mxu0
  %v6115 = vadd.f32 0.0, %v6114
  %v6116 = vpop.f32.mrf.mxu0
  %6117 = vmatprep.mubr.bf16.mxu0 0
  %6118 = vmatmul.mubr.bf16.gmra.mxu0 %v5856
  %v6119 = vpop.f32.mrf.mxu0
  %v6120 = vadd.f32 0.0, %v6119
  %v6121 = vpop.f32.mrf.mxu0
  %v6122 = vpop.f32.mrf.mxu0
  %v6123 = vadd.f32 0.0, %v6122
  %v6124 = vpop.f32.mrf.mxu0
  %6125 = vmatprep.mubr.bf16.mxu0 0
  %6126 = vmatmul.mubr.bf16.gmra.mxu0 %v5859
  %v6127 = vpop.f32.mrf.mxu0
  %v6128 = vadd.f32 0.0, %v6127
  %v6129 = vpop.f32.mrf.mxu0
  %v6130 = vpop.f32.mrf.mxu0
  %v6131 = vadd.f32 0.0, %v6130
  %v6132 = vpop.f32.mrf.mxu0
  %6133 = vmatprep.mubr.bf16.mxu0 0
  %6134 = vmatmul.mubr.bf16.gmra.mxu0 %v5862
  %v6135 = vpop.f32.mrf.mxu0
  %v6136 = vadd.f32 0.0, %v6135
  %v6137 = vpop.f32.mrf.mxu0
  %v6138 = vpop.f32.mrf.mxu0
  %v6139 = vadd.f32 0.0, %v6138
  %v6140 = vpop.f32.mrf.mxu0
  %6141 = vmatprep.mubr.bf16.mxu0 0
  %6142 = vmatmul.mubr.bf16.gmra.mxu0 %v5865
  %v6143 = vpop.f32.mrf.mxu0
  %v6144 = vadd.f32 0.0, %v6143
  %v6145 = vpop.f32.mrf.mxu0
  %v6146 = vpop.f32.mrf.mxu0
  %v6147 = vadd.f32 0.0, %v6146
  %v6148 = vpop.f32.mrf.mxu0
  %6149 = vmatprep.mubr.bf16.mxu0 0
  %6150 = vmatmul.mubr.bf16.gmra.mxu0 %v5868
  %v6151 = vpop.f32.mrf.mxu0
  %v6152 = vadd.f32 0.0, %v6151
  %v6153 = vpop.f32.mrf.mxu0
  %v6154 = vpop.f32.mrf.mxu0
  %v6155 = vadd.f32 0.0, %v6154
  %v6156 = vpop.f32.mrf.mxu0
  %6157 = vmatprep.mubr.bf16.mxu0 0
  %6158 = vmatmul.mubr.bf16.gmra.mxu0 %v5871
  %v6159 = vpop.f32.mrf.mxu0
  %v6160 = vadd.f32 0.0, %v6159
  %v6161 = vpop.f32.mrf.mxu0
  %v6162 = vpop.f32.mrf.mxu0
  %v6163 = vadd.f32 0.0, %v6162
  %v6164 = vpop.f32.mrf.mxu0
  %6165 = vdwg.mxu0
  %v6230 = vunpack.c.l.b16 %v3558
  %v6231 = vunpack.c.l.b16 %v3559
  %v6232 = vunpack.c.l.b16 %v3560
  %v6233 = vunpack.c.l.b16 %v3561
  %v6234 = vunpack.c.l.b16 %v3562
  %v6235 = vunpack.c.l.b16 %v3563
  %v6236 = vunpack.c.l.b16 %v3564
  %v6237 = vunpack.c.l.b16 %v3565
  %v6238 = vunpack.c.l.b16 %v3566
  %v6239 = vunpack.c.l.b16 %v3567
  %v6240 = vunpack.c.l.b16 %v3568
  %v6241 = vunpack.c.l.b16 %v3569
  %v6242 = vunpack.c.l.b16 %v3570
  %v6243 = vunpack.c.l.b16 %v3571
  %v6244 = vunpack.c.l.b16 %v3572
  %v6245 = vunpack.c.l.b16 %v3573
  %v6246 = vunpack.c.l.b16 %v3574
  %v6247 = vunpack.c.l.b16 %v3575
  %v6248 = vunpack.c.l.b16 %v3576
  %v6249 = vunpack.c.l.b16 %v3577
  %v6250 = vunpack.c.l.b16 %v3578
  %v6251 = vunpack.c.l.b16 %v3579
  %v6252 = vunpack.c.l.b16 %v3580
  %v6253 = vunpack.c.l.b16 %v3581
  %v6254 = vunpack.c.l.b16 %v3582
  %v6255 = vunpack.c.l.b16 %v3583
  %v6256 = vunpack.c.l.b16 %v3584
  %v6257 = vunpack.c.l.b16 %v3585
  %v6258 = vunpack.c.l.b16 %v3586
  %v6259 = vunpack.c.l.b16 %v3587
  %v6260 = vunpack.c.l.b16 %v3588
  %v6261 = vunpack.c.l.b16 %v3589
  %v6262 = vunpack.c.l.b16 %v3590
  %v6263 = vunpack.c.l.b16 %v3591
  %v6264 = vunpack.c.l.b16 %v3592
  %v6265 = vunpack.c.l.b16 %v3593
  %v6266 = vunpack.c.l.b16 %v3594
  %v6267 = vunpack.c.l.b16 %v3595
  %v6268 = vunpack.c.l.b16 %v3596
  %v6269 = vunpack.c.l.b16 %v3597
  %v6270 = vunpack.c.l.b16 %v3598
  %v6271 = vunpack.c.l.b16 %v3599
  %v6272 = vunpack.c.l.b16 %v3600
  %v6273 = vunpack.c.l.b16 %v3601
  %v6274 = vunpack.c.l.b16 %v3602
  %v6275 = vunpack.c.l.b16 %v3603
  %v6276 = vunpack.c.l.b16 %v3604
  %v6277 = vunpack.c.l.b16 %v3605
  %v6278 = vunpack.c.l.b16 %v3606
  %v6279 = vunpack.c.l.b16 %v3607
  %v6280 = vunpack.c.l.b16 %v3608
  %v6281 = vunpack.c.l.b16 %v3609
  %v6282 = vunpack.c.l.b16 %v3610
  %v6283 = vunpack.c.l.b16 %v3611
  %v6284 = vunpack.c.l.b16 %v3612
  %v6285 = vunpack.c.l.b16 %v3613
  %v6286 = vunpack.c.l.b16 %v3614
  %v6287 = vunpack.c.l.b16 %v3615
  %v6288 = vunpack.c.l.b16 %v3616
  %v6289 = vunpack.c.l.b16 %v3617
  %v6290 = vunpack.c.l.b16 %v3618
  %v6291 = vunpack.c.l.b16 %v3619
  %v6292 = vunpack.c.l.b16 %v3620
  %v6293 = vunpack.c.l.b16 %v3621
  %v6294 = vpack.c.b16 %v6231, %v6230
  %v6295 = vpack.c.b16 %v6233, %v6232
  %v6296 = vpack.c.b16 %v6235, %v6234
  %v6297 = vpack.c.b16 %v6237, %v6236
  %v6298 = vpack.c.b16 %v6239, %v6238
  %v6299 = vpack.c.b16 %v6241, %v6240
  %v6300 = vpack.c.b16 %v6243, %v6242
  %v6301 = vpack.c.b16 %v6245, %v6244
  %v6302 = vpack.c.b16 %v6247, %v6246
  %v6303 = vpack.c.b16 %v6249, %v6248
  %v6304 = vpack.c.b16 %v6251, %v6250
  %v6305 = vpack.c.b16 %v6253, %v6252
  %v6306 = vpack.c.b16 %v6255, %v6254
  %v6307 = vpack.c.b16 %v6257, %v6256
  %v6308 = vpack.c.b16 %v6259, %v6258
  %v6309 = vpack.c.b16 %v6261, %v6260
  %v6310 = vpack.c.b16 %v6263, %v6262
  %v6311 = vpack.c.b16 %v6265, %v6264
  %v6312 = vpack.c.b16 %v6267, %v6266
  %v6313 = vpack.c.b16 %v6269, %v6268
  %v6314 = vpack.c.b16 %v6271, %v6270
  %v6315 = vpack.c.b16 %v6273, %v6272
  %v6316 = vpack.c.b16 %v6275, %v6274
  %v6317 = vpack.c.b16 %v6277, %v6276
  %v6318 = vpack.c.b16 %v6279, %v6278
  %v6319 = vpack.c.b16 %v6281, %v6280
  %v6320 = vpack.c.b16 %v6283, %v6282
  %v6321 = vpack.c.b16 %v6285, %v6284
  %v6322 = vpack.c.b16 %v6287, %v6286
  %v6323 = vpack.c.b16 %v6289, %v6288
  %v6324 = vpack.c.b16 %v6291, %v6290
  %v6325 = vpack.c.b16 %v6293, %v6292
  %v6328 = vunpack.c.l.b16 %v3622
  %v6329 = vunpack.c.l.b16 %v3623
  %v6330 = vpack.c.b16 %v6329, %v6328
  %v6332 = vsel %vm5776, %v6294, 0
  %v6335 = vsel %vm5776, %v6295, 0
  %v6338 = vsel %vm5776, %v6296, 0
  %v6341 = vsel %vm5776, %v6297, 0
  %v6344 = vsel %vm5776, %v6298, 0
  %v6347 = vsel %vm5776, %v6299, 0
  %v6350 = vsel %vm5776, %v6300, 0
  %v6353 = vsel %vm5776, %v6301, 0
  %v6356 = vsel %vm5776, %v6302, 0
  %v6359 = vsel %vm5776, %v6303, 0
  %v6362 = vsel %vm5776, %v6304, 0
  %v6365 = vsel %vm5776, %v6305, 0
  %v6368 = vsel %vm5776, %v6306, 0
  %v6371 = vsel %vm5776, %v6307, 0
  %v6374 = vsel %vm5776, %v6308, 0
  %v6377 = vsel %vm5776, %v6309, 0
  %v6380 = vsel %vm5776, %v6310, 0
  %v6383 = vsel %vm5776, %v6311, 0
  %v6386 = vsel %vm5776, %v6312, 0
  %v6389 = vsel %vm5776, %v6313, 0
  %v6392 = vsel %vm5776, %v6314, 0
  %v6395 = vsel %vm5776, %v6315, 0
  %v6398 = vsel %vm5776, %v6316, 0
  %v6401 = vsel %vm5776, %v6317, 0
  %v6404 = vsel %vm5776, %v6318, 0
  %v6407 = vsel %vm5776, %v6319, 0
  %v6410 = vsel %vm5776, %v6320, 0
  %v6413 = vsel %vm5776, %v6321, 0
  %v6416 = vsel %vm5776, %v6322, 0
  %v6419 = vsel %vm5776, %v6323, 0
  %v6422 = vsel %vm5776, %v6324, 0
  %v6425 = vsel %vm5776, %v6325, 0
  %v6428 = vsel %vm5873, %v6330, 0
  %6430 = vmatprep.subr.bf16.mxu0 0
  %6431 = vmatpush1.bf16.msra.mxu0 0
  %6432 = vmatprep.subr.bf16.mxu0 0
  %6433 = vmatpush1.bf16.msra.mxu0 0
  %6434 = vmatprep.subr.bf16.mxu0 0
  %6435 = vmatpush1.bf16.msra.mxu0 0
  %6436 = vmatprep.subr.bf16.mxu0 0
  %6437 = vmatpush1.bf16.msra.mxu0 0
  %6438 = vmatprep.subr.bf16.mxu0 0
  %6439 = vmatpush1.bf16.msra.mxu0 0
  %6440 = vmatprep.subr.bf16.mxu0 0
  %6441 = vmatpush1.bf16.msra.mxu0 0
  %6442 = vmatprep.subr.bf16.mxu0 0
  %6443 = vmatpush1.bf16.msra.mxu0 0
  %6444 = vmatprep.subr.bf16.mxu0 0
  %6445 = vmatpush1.bf16.msra.mxu0 %v6428
  %6446 = vmatprep.subr.bf16.mxu0 0
  %6447 = vmatpush2.bf16.msra.mxu0 0
  %6448 = vmatprep.subr.bf16.mxu0 0
  %6449 = vmatpush2.bf16.msra.mxu0 0
  %6450 = vmatprep.subr.bf16.mxu0 0
  %6451 = vmatpush2.bf16.msra.mxu0 0
  %6452 = vmatprep.subr.bf16.mxu0 0
  %6453 = vmatpush2.bf16.msra.mxu0 0
  %6454 = vmatprep.subr.bf16.mxu0 0
  %6455 = vmatpush2.bf16.msra.mxu0 0
  %6456 = vmatprep.subr.bf16.mxu0 0
  %6457 = vmatpush2.bf16.msra.mxu0 0
  %6458 = vmatprep.subr.bf16.mxu0 0
  %6459 = vmatpush2.bf16.msra.mxu0 0
  %6460 = vmatprep.subr.bf16.mxu0 0
  %6461 = vmatpush2.bf16.msra.mxu0 0
  %6462 = vmatprep.mubr.bf16.mxu0 0
  %6463 = vmatmul.mubr.bf16.gmra.mxu0 %v6332
  %v6464 = vpop.f32.mrf.mxu0
  %v6465 = vadd.f32 %v5912, %v6464
  %v6466 = vpop.f32.mrf.mxu0
  %v6467 = vpop.f32.mrf.mxu0
  %v6468 = vadd.f32 %v5915, %v6467
  %v6469 = vpop.f32.mrf.mxu0
  %6470 = vmatprep.mubr.bf16.mxu0 0
  %6471 = vmatmul.mubr.bf16.gmra.mxu0 %v6335
  %v6472 = vpop.f32.mrf.mxu0
  %v6473 = vadd.f32 %v5920, %v6472
  %v6474 = vpop.f32.mrf.mxu0
  %v6475 = vpop.f32.mrf.mxu0
  %v6476 = vadd.f32 %v5923, %v6475
  %v6477 = vpop.f32.mrf.mxu0
  %6478 = vmatprep.mubr.bf16.mxu0 0
  %6479 = vmatmul.mubr.bf16.gmra.mxu0 %v6338
  %v6480 = vpop.f32.mrf.mxu0
  %v6481 = vadd.f32 %v5928, %v6480
  %v6482 = vpop.f32.mrf.mxu0
  %v6483 = vpop.f32.mrf.mxu0
  %v6484 = vadd.f32 %v5931, %v6483
  %v6485 = vpop.f32.mrf.mxu0
  %6486 = vmatprep.mubr.bf16.mxu0 0
  %6487 = vmatmul.mubr.bf16.gmra.mxu0 %v6341
  %v6488 = vpop.f32.mrf.mxu0
  %v6489 = vadd.f32 %v5936, %v6488
  %v6490 = vpop.f32.mrf.mxu0
  %v6491 = vpop.f32.mrf.mxu0
  %v6492 = vadd.f32 %v5939, %v6491
  %v6493 = vpop.f32.mrf.mxu0
  %6494 = vmatprep.mubr.bf16.mxu0 0
  %6495 = vmatmul.mubr.bf16.gmra.mxu0 %v6344
  %v6496 = vpop.f32.mrf.mxu0
  %v6497 = vadd.f32 %v5944, %v6496
  %v6498 = vpop.f32.mrf.mxu0
  %v6499 = vpop.f32.mrf.mxu0
  %v6500 = vadd.f32 %v5947, %v6499
  %v6501 = vpop.f32.mrf.mxu0
  %6502 = vmatprep.mubr.bf16.mxu0 0
  %6503 = vmatmul.mubr.bf16.gmra.mxu0 %v6347
  %v6504 = vpop.f32.mrf.mxu0
  %v6505 = vadd.f32 %v5952, %v6504
  %v6506 = vpop.f32.mrf.mxu0
  %v6507 = vpop.f32.mrf.mxu0
  %v6508 = vadd.f32 %v5955, %v6507
  %v6509 = vpop.f32.mrf.mxu0
  %6510 = vmatprep.mubr.bf16.mxu0 0
  %6511 = vmatmul.mubr.bf16.gmra.mxu0 %v6350
  %v6512 = vpop.f32.mrf.mxu0
  %v6513 = vadd.f32 %v5960, %v6512
  %v6514 = vpop.f32.mrf.mxu0
  %v6515 = vpop.f32.mrf.mxu0
  %v6516 = vadd.f32 %v5963, %v6515
  %v6517 = vpop.f32.mrf.mxu0
  %6518 = vmatprep.mubr.bf16.mxu0 0
  %6519 = vmatmul.mubr.bf16.gmra.mxu0 %v6353
  %v6520 = vpop.f32.mrf.mxu0
  %v6521 = vadd.f32 %v5968, %v6520
  %v6522 = vpop.f32.mrf.mxu0
  %v6523 = vpop.f32.mrf.mxu0
  %v6524 = vadd.f32 %v5971, %v6523
  %v6525 = vpop.f32.mrf.mxu0
  %6526 = vmatprep.mubr.bf16.mxu0 0
  %6527 = vmatmul.mubr.bf16.gmra.mxu0 %v6356
  %v6528 = vpop.f32.mrf.mxu0
  %v6529 = vadd.f32 %v5976, %v6528
  %v6530 = vpop.f32.mrf.mxu0
  %v6531 = vpop.f32.mrf.mxu0
  %v6532 = vadd.f32 %v5979, %v6531
  %v6533 = vpop.f32.mrf.mxu0
  %6534 = vmatprep.mubr.bf16.mxu0 0
  %6535 = vmatmul.mubr.bf16.gmra.mxu0 %v6359
  %v6536 = vpop.f32.mrf.mxu0
  %v6537 = vadd.f32 %v5984, %v6536
  %v6538 = vpop.f32.mrf.mxu0
  %v6539 = vpop.f32.mrf.mxu0
  %v6540 = vadd.f32 %v5987, %v6539
  %v6541 = vpop.f32.mrf.mxu0
  %6542 = vmatprep.mubr.bf16.mxu0 0
  %6543 = vmatmul.mubr.bf16.gmra.mxu0 %v6362
  %v6544 = vpop.f32.mrf.mxu0
  %v6545 = vadd.f32 %v5992, %v6544
  %v6546 = vpop.f32.mrf.mxu0
  %v6547 = vpop.f32.mrf.mxu0
  %v6548 = vadd.f32 %v5995, %v6547
  %v6549 = vpop.f32.mrf.mxu0
  %6550 = vmatprep.mubr.bf16.mxu0 0
  %6551 = vmatmul.mubr.bf16.gmra.mxu0 %v6365
  %v6552 = vpop.f32.mrf.mxu0
  %v6553 = vadd.f32 %v6000, %v6552
  %v6554 = vpop.f32.mrf.mxu0
  %v6555 = vpop.f32.mrf.mxu0
  %v6556 = vadd.f32 %v6003, %v6555
  %v6557 = vpop.f32.mrf.mxu0
  %6558 = vmatprep.mubr.bf16.mxu0 0
  %6559 = vmatmul.mubr.bf16.gmra.mxu0 %v6368
  %v6560 = vpop.f32.mrf.mxu0
  %v6561 = vadd.f32 %v6008, %v6560
  %v6562 = vpop.f32.mrf.mxu0
  %v6563 = vpop.f32.mrf.mxu0
  %v6564 = vadd.f32 %v6011, %v6563
  %v6565 = vpop.f32.mrf.mxu0
  %6566 = vmatprep.mubr.bf16.mxu0 0
  %6567 = vmatmul.mubr.bf16.gmra.mxu0 %v6371
  %v6568 = vpop.f32.mrf.mxu0
  %v6569 = vadd.f32 %v6016, %v6568
  %v6570 = vpop.f32.mrf.mxu0
  %v6571 = vpop.f32.mrf.mxu0
  %v6572 = vadd.f32 %v6019, %v6571
  %v6573 = vpop.f32.mrf.mxu0
  %6574 = vmatprep.mubr.bf16.mxu0 0
  %6575 = vmatmul.mubr.bf16.gmra.mxu0 %v6374
  %v6576 = vpop.f32.mrf.mxu0
  %v6577 = vadd.f32 %v6024, %v6576
  %v6578 = vpop.f32.mrf.mxu0
  %v6579 = vpop.f32.mrf.mxu0
  %v6580 = vadd.f32 %v6027, %v6579
  %v6581 = vpop.f32.mrf.mxu0
  %6582 = vmatprep.mubr.bf16.mxu0 0
  %6583 = vmatmul.mubr.bf16.gmra.mxu0 %v6377
  %v6584 = vpop.f32.mrf.mxu0
  %v6585 = vadd.f32 %v6032, %v6584
  %v6586 = vpop.f32.mrf.mxu0
  %v6587 = vpop.f32.mrf.mxu0
  %v6588 = vadd.f32 %v6035, %v6587
  %v6589 = vpop.f32.mrf.mxu0
  %6590 = vmatprep.mubr.bf16.mxu0 0
  %6591 = vmatmul.mubr.bf16.gmra.mxu0 %v6380
  %v6592 = vpop.f32.mrf.mxu0
  %v6593 = vadd.f32 %v6040, %v6592
  %v6594 = vpop.f32.mrf.mxu0
  %v6595 = vpop.f32.mrf.mxu0
  %v6596 = vadd.f32 %v6043, %v6595
  %v6597 = vpop.f32.mrf.mxu0
  %6598 = vmatprep.mubr.bf16.mxu0 0
  %6599 = vmatmul.mubr.bf16.gmra.mxu0 %v6383
  %v6600 = vpop.f32.mrf.mxu0
  %v6601 = vadd.f32 %v6048, %v6600
  %v6602 = vpop.f32.mrf.mxu0
  %v6603 = vpop.f32.mrf.mxu0
  %v6604 = vadd.f32 %v6051, %v6603
  %v6605 = vpop.f32.mrf.mxu0
  %6606 = vmatprep.mubr.bf16.mxu0 0
  %6607 = vmatmul.mubr.bf16.gmra.mxu0 %v6386
  %v6608 = vpop.f32.mrf.mxu0
  %v6609 = vadd.f32 %v6056, %v6608
  %v6610 = vpop.f32.mrf.mxu0
  %v6611 = vpop.f32.mrf.mxu0
  %v6612 = vadd.f32 %v6059, %v6611
  %v6613 = vpop.f32.mrf.mxu0
  %6614 = vmatprep.mubr.bf16.mxu0 0
  %6615 = vmatmul.mubr.bf16.gmra.mxu0 %v6389
  %v6616 = vpop.f32.mrf.mxu0
  %v6617 = vadd.f32 %v6064, %v6616
  %v6618 = vpop.f32.mrf.mxu0
  %v6619 = vpop.f32.mrf.mxu0
  %v6620 = vadd.f32 %v6067, %v6619
  %v6621 = vpop.f32.mrf.mxu0
  %6622 = vmatprep.mubr.bf16.mxu0 0
  %6623 = vmatmul.mubr.bf16.gmra.mxu0 %v6392
  %v6624 = vpop.f32.mrf.mxu0
  %v6625 = vadd.f32 %v6072, %v6624
  %v6626 = vpop.f32.mrf.mxu0
  %v6627 = vpop.f32.mrf.mxu0
  %v6628 = vadd.f32 %v6075, %v6627
  %v6629 = vpop.f32.mrf.mxu0
  %6630 = vmatprep.mubr.bf16.mxu0 0
  %6631 = vmatmul.mubr.bf16.gmra.mxu0 %v6395
  %v6632 = vpop.f32.mrf.mxu0
  %v6633 = vadd.f32 %v6080, %v6632
  %v6634 = vpop.f32.mrf.mxu0
  %v6635 = vpop.f32.mrf.mxu0
  %v6636 = vadd.f32 %v6083, %v6635
  %v6637 = vpop.f32.mrf.mxu0
  %6638 = vmatprep.mubr.bf16.mxu0 0
  %6639 = vmatmul.mubr.bf16.gmra.mxu0 %v6398
  %v6640 = vpop.f32.mrf.mxu0
  %v6641 = vadd.f32 %v6088, %v6640
  %v6642 = vpop.f32.mrf.mxu0
  %v6643 = vpop.f32.mrf.mxu0
  %v6644 = vadd.f32 %v6091, %v6643
  %v6645 = vpop.f32.mrf.mxu0
  %6646 = vmatprep.mubr.bf16.mxu0 0
  %6647 = vmatmul.mubr.bf16.gmra.mxu0 %v6401
  %v6648 = vpop.f32.mrf.mxu0
  %v6649 = vadd.f32 %v6096, %v6648
  %v6650 = vpop.f32.mrf.mxu0
  %v6651 = vpop.f32.mrf.mxu0
  %v6652 = vadd.f32 %v6099, %v6651
  %v6653 = vpop.f32.mrf.mxu0
  %6654 = vmatprep.mubr.bf16.mxu0 0
  %6655 = vmatmul.mubr.bf16.gmra.mxu0 %v6404
  %v6656 = vpop.f32.mrf.mxu0
  %v6657 = vadd.f32 %v6104, %v6656
  %v6658 = vpop.f32.mrf.mxu0
  %v6659 = vpop.f32.mrf.mxu0
  %v6660 = vadd.f32 %v6107, %v6659
  %v6661 = vpop.f32.mrf.mxu0
  %6662 = vmatprep.mubr.bf16.mxu0 0
  %6663 = vmatmul.mubr.bf16.gmra.mxu0 %v6407
  %v6664 = vpop.f32.mrf.mxu0
  %v6665 = vadd.f32 %v6112, %v6664
  %v6666 = vpop.f32.mrf.mxu0
  %v6667 = vpop.f32.mrf.mxu0
  %v6668 = vadd.f32 %v6115, %v6667
  %v6669 = vpop.f32.mrf.mxu0
  %6670 = vmatprep.mubr.bf16.mxu0 0
  %6671 = vmatmul.mubr.bf16.gmra.mxu0 %v6410
  %v6672 = vpop.f32.mrf.mxu0
  %v6673 = vadd.f32 %v6120, %v6672
  %v6674 = vpop.f32.mrf.mxu0
  %v6675 = vpop.f32.mrf.mxu0
  %v6676 = vadd.f32 %v6123, %v6675
  %v6677 = vpop.f32.mrf.mxu0
  %6678 = vmatprep.mubr.bf16.mxu0 0
  %6679 = vmatmul.mubr.bf16.gmra.mxu0 %v6413
  %v6680 = vpop.f32.mrf.mxu0
  %v6681 = vadd.f32 %v6128, %v6680
  %v6682 = vpop.f32.mrf.mxu0
  %v6683 = vpop.f32.mrf.mxu0
  %v6684 = vadd.f32 %v6131, %v6683
  %v6685 = vpop.f32.mrf.mxu0
  %6686 = vmatprep.mubr.bf16.mxu0 0
  %6687 = vmatmul.mubr.bf16.gmra.mxu0 %v6416
  %v6688 = vpop.f32.mrf.mxu0
  %v6689 = vadd.f32 %v6136, %v6688
  %v6690 = vpop.f32.mrf.mxu0
  %v6691 = vpop.f32.mrf.mxu0
  %v6692 = vadd.f32 %v6139, %v6691
  %v6693 = vpop.f32.mrf.mxu0
  %6694 = vmatprep.mubr.bf16.mxu0 0
  %6695 = vmatmul.mubr.bf16.gmra.mxu0 %v6419
  %v6696 = vpop.f32.mrf.mxu0
  %v6697 = vadd.f32 %v6144, %v6696
  %v6698 = vpop.f32.mrf.mxu0
  %v6699 = vpop.f32.mrf.mxu0
  %v6700 = vadd.f32 %v6147, %v6699
  %v6701 = vpop.f32.mrf.mxu0
  %6702 = vmatprep.mubr.bf16.mxu0 0
  %6703 = vmatmul.mubr.bf16.gmra.mxu0 %v6422
  %v6704 = vpop.f32.mrf.mxu0
  %v6705 = vadd.f32 %v6152, %v6704
  %v6706 = vpop.f32.mrf.mxu0
  %v6707 = vpop.f32.mrf.mxu0
  %v6708 = vadd.f32 %v6155, %v6707
  %v6709 = vpop.f32.mrf.mxu0
  %6710 = vmatprep.mubr.bf16.mxu0 0
  %6711 = vmatmul.mubr.bf16.gmra.mxu0 %v6425
  %v6712 = vpop.f32.mrf.mxu0
  %v6713 = vadd.f32 %v6160, %v6712
  %v6714 = vpop.f32.mrf.mxu0
  %v6715 = vpop.f32.mrf.mxu0
  %v6716 = vadd.f32 %v6163, %v6715
  %v6717 = vpop.f32.mrf.mxu0
  %6718 = vdwg.mxu0
  %s6719 = scalar_lea.vmem [#allocation2], 24
  %v6720 = vld [vmem:[%s6719] sm:$0xf]
  %v6721 = vld [vmem:[%s6719 + $0x4] sm:$0xf]
  %v6722 = vld [vmem:[%s6719 + $0xc] sm:$0xf]
  %v6723 = vld [vmem:[%s6719 + $0x10] sm:$0xf]
  %v6724 = vld [vmem:[%s6719 + $0x18] sm:$0xf]
  %v6725 = vld [vmem:[%s6719 + $0x1c] sm:$0xf]
  %v6726 = vld [vmem:[%s6719 + $0x24] sm:$0xf]
  %v6727 = vld [vmem:[%s6719 + $0x28] sm:$0xf]
  %v6728 = vld [vmem:[%s6719 + $0x30] sm:$0xf]
  %v6729 = vld [vmem:[%s6719 + $0x34] sm:$0xf]
  %v6730 = vld [vmem:[%s6719 + $0x3c] sm:$0xf]
  %v6731 = vld [vmem:[%s6719 + $0x40] sm:$0xf]
  %v6732 = vld [vmem:[%s6719 + $0x48] sm:$0xf]
  %v6733 = vld [vmem:[%s6719 + $0x4c] sm:$0xf]
  %v6734 = vld [vmem:[%s6719 + $0x54] sm:$0xf]
  %v6735 = vld [vmem:[%s6719 + $0x58] sm:$0xf]
  %v6736 = vld [vmem:[%s6719 + $0x60] sm:$0xf]
  %v6737 = vld [vmem:[%s6719 + $0x64] sm:$0xf]
  %v6738 = vld [vmem:[%s6719 + $0x6c] sm:$0xf]
  %v6739 = vld [vmem:[%s6719 + $0x70] sm:$0xf]
  %v6740 = vld [vmem:[%s6719 + $0x78] sm:$0xf]
  %v6741 = vld [vmem:[%s6719 + $0x7c] sm:$0xf]
  %v6742 = vld [vmem:[%s6719 + $0x84] sm:$0xf]
  %v6743 = vld [vmem:[%s6719 + $0x88] sm:$0xf]
  %v6744 = vld [vmem:[%s6719 + $0x90] sm:$0xf]
  %v6745 = vld [vmem:[%s6719 + $0x94] sm:$0xf]
  %v6746 = vld [vmem:[%s6719 + $0x9c] sm:$0xf]
  %v6747 = vld [vmem:[%s6719 + $0xa0] sm:$0xf]
  %v6748 = vld [vmem:[%s6719 + $0xa8] sm:$0xf]
  %v6749 = vld [vmem:[%s6719 + $0xac] sm:$0xf]
  %v6750 = vld [vmem:[%s6719 + $0xb4] sm:$0xf]
  %v6751 = vld [vmem:[%s6719 + $0xb8] sm:$0xf]
  %v6752 = vld [vmem:[%s6719 + $0xd8] sm:$0xf]
  %v6753 = vld [vmem:[%s6719 + $0xdc] sm:$0xf]
  %v6754 = vld [vmem:[%s6719 + $0xe4] sm:$0xf]
  %v6755 = vld [vmem:[%s6719 + $0xe8] sm:$0xf]
  %v6756 = vld [vmem:[%s6719 + $0xf0] sm:$0xf]
  %v6757 = vld [vmem:[%s6719 + $0xf4] sm:$0xf]
  %v6758 = vld [vmem:[%s6719 + $0xfc] sm:$0xf]
  %v6759 = vld [vmem:[%s6719 + $0x100] sm:$0xf]
  %v6760 = vld [vmem:[%s6719 + $0x108] sm:$0xf]
  %v6761 = vld [vmem:[%s6719 + $0x10c] sm:$0xf]
  %v6762 = vld [vmem:[%s6719 + $0x114] sm:$0xf]
  %v6763 = vld [vmem:[%s6719 + $0x118] sm:$0xf]
  %v6764 = vld [vmem:[%s6719 + $0x120] sm:$0xf]
  %v6765 = vld [vmem:[%s6719 + $0x124] sm:$0xf]
  %v6766 = vld [vmem:[%s6719 + $0x12c] sm:$0xf]
  %v6767 = vld [vmem:[%s6719 + $0x130] sm:$0xf]
  %v6768 = vld [vmem:[%s6719 + $0x138] sm:$0xf]
  %v6769 = vld [vmem:[%s6719 + $0x13c] sm:$0xf]
  %v6770 = vld [vmem:[%s6719 + $0x144] sm:$0xf]
  %v6771 = vld [vmem:[%s6719 + $0x148] sm:$0xf]
  %v6772 = vld [vmem:[%s6719 + $0x150] sm:$0xf]
  %v6773 = vld [vmem:[%s6719 + $0x154] sm:$0xf]
  %v6774 = vld [vmem:[%s6719 + $0x15c] sm:$0xf]
  %v6775 = vld [vmem:[%s6719 + $0x160] sm:$0xf]
  %v6776 = vld [vmem:[%s6719 + $0x168] sm:$0xf]
  %v6777 = vld [vmem:[%s6719 + $0x16c] sm:$0xf]
  %v6778 = vld [vmem:[%s6719 + $0x174] sm:$0xf]
  %v6779 = vld [vmem:[%s6719 + $0x178] sm:$0xf]
  %v6780 = vld [vmem:[%s6719 + $0x180] sm:$0xf]
  %v6781 = vld [vmem:[%s6719 + $0x184] sm:$0xf]
  %v6782 = vld [vmem:[%s6719 + $0x18c] sm:$0xf]
  %v6783 = vld [vmem:[%s6719 + $0x190] sm:$0xf]
  %6784 = vst.msk [vmem:[#allocation4] sm:$0xf] %vm39, %v6720
  %6785 = vst.msk [vmem:[#allocation4 + $0x4] sm:$0xf] %vm39, %v6721
  %6786 = vst.msk [vmem:[#allocation4 + $0x8] sm:$0xf] %vm39, %v6722
  %6787 = vst.msk [vmem:[#allocation4 + $0xc] sm:$0xf] %vm39, %v6723
  %6788 = vst.msk [vmem:[#allocation4 + $0x10] sm:$0xf] %vm39, %v6724
  %6789 = vst.msk [vmem:[#allocation4 + $0x14] sm:$0xf] %vm39, %v6725
  %6790 = vst.msk [vmem:[#allocation4 + $0x18] sm:$0xf] %vm39, %v6726
  %6791 = vst.msk [vmem:[#allocation4 + $0x1c] sm:$0xf] %vm39, %v6727
  %6792 = vst.msk [vmem:[#allocation4 + $0x20] sm:$0xf] %vm39, %v6728
  %6793 = vst.msk [vmem:[#allocation4 + $0x24] sm:$0xf] %vm39, %v6729
  %6794 = vst.msk [vmem:[#allocation4 + $0x28] sm:$0xf] %vm39, %v6730
  %6795 = vst.msk [vmem:[#allocation4 + $0x2c] sm:$0xf] %vm39, %v6731
  %6796 = vst.msk [vmem:[#allocation4 + $0x30] sm:$0xf] %vm39, %v6732
  %6797 = vst.msk [vmem:[#allocation4 + $0x34] sm:$0xf] %vm39, %v6733
  %6798 = vst.msk [vmem:[#allocation4 + $0x38] sm:$0xf] %vm39, %v6734
  %6799 = vst.msk [vmem:[#allocation4 + $0x3c] sm:$0xf] %vm39, %v6735
  %6800 = vst.msk [vmem:[#allocation4 + $0x40] sm:$0xf] %vm39, %v6736
  %6801 = vst.msk [vmem:[#allocation4 + $0x44] sm:$0xf] %vm39, %v6737
  %6802 = vst.msk [vmem:[#allocation4 + $0x48] sm:$0xf] %vm39, %v6738
  %6803 = vst.msk [vmem:[#allocation4 + $0x4c] sm:$0xf] %vm39, %v6739
  %6804 = vst.msk [vmem:[#allocation4 + $0x50] sm:$0xf] %vm39, %v6740
  %6805 = vst.msk [vmem:[#allocation4 + $0x54] sm:$0xf] %vm39, %v6741
  %6806 = vst.msk [vmem:[#allocation4 + $0x58] sm:$0xf] %vm39, %v6742
  %6807 = vst.msk [vmem:[#allocation4 + $0x5c] sm:$0xf] %vm39, %v6743
  %6808 = vst.msk [vmem:[#allocation4 + $0x60] sm:$0xf] %vm39, %v6744
  %6809 = vst.msk [vmem:[#allocation4 + $0x64] sm:$0xf] %vm39, %v6745
  %6810 = vst.msk [vmem:[#allocation4 + $0x68] sm:$0xf] %vm39, %v6746
  %6811 = vst.msk [vmem:[#allocation4 + $0x6c] sm:$0xf] %vm39, %v6747
  %6812 = vst.msk [vmem:[#allocation4 + $0x70] sm:$0xf] %vm39, %v6748
  %6813 = vst.msk [vmem:[#allocation4 + $0x74] sm:$0xf] %vm39, %v6749
  %6814 = vst.msk [vmem:[#allocation4 + $0x78] sm:$0xf] %vm39, %v6750
  %6815 = vst.msk [vmem:[#allocation4 + $0x7c] sm:$0xf] %vm39, %v6751
  %6816 = vst.msk [vmem:[#allocation4 + $0x80] sm:$0xf] %vm39, %v6752
  %6817 = vst.msk [vmem:[#allocation4 + $0x84] sm:$0xf] %vm39, %v6753
  %6818 = vst.msk [vmem:[#allocation4 + $0x88] sm:$0xf] %vm39, %v6754
  %6819 = vst.msk [vmem:[#allocation4 + $0x8c] sm:$0xf] %vm39, %v6755
  %6820 = vst.msk [vmem:[#allocation4 + $0x90] sm:$0xf] %vm39, %v6756
  %6821 = vst.msk [vmem:[#allocation4 + $0x94] sm:$0xf] %vm39, %v6757
  %6822 = vst.msk [vmem:[#allocation4 + $0x98] sm:$0xf] %vm39, %v6758
  %6823 = vst.msk [vmem:[#allocation4 + $0x9c] sm:$0xf] %vm39, %v6759
  %6824 = vst.msk [vmem:[#allocation4 + $0xa0] sm:$0xf] %vm39, %v6760
  %6825 = vst.msk [vmem:[#allocation4 + $0xa4] sm:$0xf] %vm39, %v6761
  %6826 = vst.msk [vmem:[#allocation4 + $0xa8] sm:$0xf] %vm39, %v6762
  %6827 = vst.msk [vmem:[#allocation4 + $0xac] sm:$0xf] %vm39, %v6763
  %6828 = vst.msk [vmem:[#allocation4 + $0xb0] sm:$0xf] %vm39, %v6764
  %6829 = vst.msk [vmem:[#allocation4 + $0xb4] sm:$0xf] %vm39, %v6765
  %6830 = vst.msk [vmem:[#allocation4 + $0xb8] sm:$0xf] %vm39, %v6766
  %6831 = vst.msk [vmem:[#allocation4 + $0xbc] sm:$0xf] %vm39, %v6767
  %6832 = vst.msk [vmem:[#allocation4 + $0xc0] sm:$0xf] %vm39, %v6768
  %6833 = vst.msk [vmem:[#allocation4 + $0xc4] sm:$0xf] %vm39, %v6769
  %6834 = vst.msk [vmem:[#allocation4 + $0xc8] sm:$0xf] %vm39, %v6770
  %6835 = vst.msk [vmem:[#allocation4 + $0xcc] sm:$0xf] %vm39, %v6771
  %6836 = vst.msk [vmem:[#allocation4 + $0xd0] sm:$0xf] %vm39, %v6772
  %6837 = vst.msk [vmem:[#allocation4 + $0xd4] sm:$0xf] %vm39, %v6773
  %6838 = vst.msk [vmem:[#allocation4 + $0xd8] sm:$0xf] %vm39, %v6774
  %6839 = vst.msk [vmem:[#allocation4 + $0xdc] sm:$0xf] %vm39, %v6775
  %6840 = vst.msk [vmem:[#allocation4 + $0xe0] sm:$0xf] %vm39, %v6776
  %6841 = vst.msk [vmem:[#allocation4 + $0xe4] sm:$0xf] %vm39, %v6777
  %6842 = vst.msk [vmem:[#allocation4 + $0xe8] sm:$0xf] %vm39, %v6778
  %6843 = vst.msk [vmem:[#allocation4 + $0xec] sm:$0xf] %vm39, %v6779
  %6844 = vst.msk [vmem:[#allocation4 + $0xf0] sm:$0xf] %vm39, %v6780
  %6845 = vst.msk [vmem:[#allocation4 + $0xf4] sm:$0xf] %vm39, %v6781
  %6846 = vst.msk [vmem:[#allocation4 + $0xf8] sm:$0xf] %vm39, %v6782
  %6847 = vst.msk [vmem:[#allocation4 + $0xfc] sm:$0xf] %vm39, %v6783
  %v6848 = vld [vmem:[%s6719] sm:$0xf]
  %v6849 = vld [vmem:[%s6719 + $0x4] sm:$0xf]
  %v6850 = vld [vmem:[%s6719 + $0x8] sm:$0x1]
  %v6851 = vld [vmem:[%s6719 + $0xc] sm:$0xf]
  %v6852 = vld [vmem:[%s6719 + $0x10] sm:$0xf]
  %v6853 = vld [vmem:[%s6719 + $0x14] sm:$0x1]
  %v6854 = vld [vmem:[%s6719 + $0x18] sm:$0xf]
  %v6855 = vld [vmem:[%s6719 + $0x1c] sm:$0xf]
  %v6856 = vld [vmem:[%s6719 + $0x20] sm:$0x1]
  %v6857 = vld [vmem:[%s6719 + $0x24] sm:$0xf]
  %v6858 = vld [vmem:[%s6719 + $0x28] sm:$0xf]
  %v6859 = vld [vmem:[%s6719 + $0x2c] sm:$0x1]
  %v6860 = vld [vmem:[%s6719 + $0x30] sm:$0xf]
  %v6861 = vld [vmem:[%s6719 + $0x34] sm:$0xf]
  %v6862 = vld [vmem:[%s6719 + $0x38] sm:$0x1]
  %v6863 = vld [vmem:[%s6719 + $0x3c] sm:$0xf]
  %v6864 = vld [vmem:[%s6719 + $0x40] sm:$0xf]
  %v6865 = vld [vmem:[%s6719 + $0x44] sm:$0x1]
  %v6866 = vld [vmem:[%s6719 + $0x48] sm:$0xf]
  %v6867 = vld [vmem:[%s6719 + $0x4c] sm:$0xf]
  %v6868 = vld [vmem:[%s6719 + $0x50] sm:$0x1]
  %v6869 = vld [vmem:[%s6719 + $0x54] sm:$0xf]
  %v6870 = vld [vmem:[%s6719 + $0x58] sm:$0xf]
  %v6871 = vld [vmem:[%s6719 + $0x5c] sm:$0x1]
  %v6872 = vld [vmem:[%s6719 + $0x60] sm:$0xf]
  %v6873 = vld [vmem:[%s6719 + $0x64] sm:$0xf]
  %v6874 = vld [vmem:[%s6719 + $0x68] sm:$0x1]
  %v6875 = vld [vmem:[%s6719 + $0x6c] sm:$0xf]
  %v6876 = vld [vmem:[%s6719 + $0x70] sm:$0xf]
  %v6877 = vld [vmem:[%s6719 + $0x74] sm:$0x1]
  %v6878 = vld [vmem:[%s6719 + $0x78] sm:$0xf]
  %v6879 = vld [vmem:[%s6719 + $0x7c] sm:$0xf]
  %v6880 = vld [vmem:[%s6719 + $0x80] sm:$0x1]
  %v6881 = vld [vmem:[%s6719 + $0x84] sm:$0xf]
  %v6882 = vld [vmem:[%s6719 + $0x88] sm:$0xf]
  %v6883 = vld [vmem:[%s6719 + $0x8c] sm:$0x1]
  %v6884 = vld [vmem:[%s6719 + $0x90] sm:$0xf]
  %v6885 = vld [vmem:[%s6719 + $0x94] sm:$0xf]
  %v6886 = vld [vmem:[%s6719 + $0x98] sm:$0x1]
  %v6887 = vld [vmem:[%s6719 + $0x9c] sm:$0xf]
  %v6888 = vld [vmem:[%s6719 + $0xa0] sm:$0xf]
  %v6889 = vld [vmem:[%s6719 + $0xa4] sm:$0x1]
  %v6890 = vld [vmem:[%s6719 + $0xa8] sm:$0xf]
  %v6891 = vld [vmem:[%s6719 + $0xac] sm:$0xf]
  %v6892 = vld [vmem:[%s6719 + $0xb0] sm:$0x1]
  %v6893 = vld [vmem:[%s6719 + $0xb4] sm:$0xf]
  %v6894 = vld [vmem:[%s6719 + $0xb8] sm:$0xf]
  %v6895 = vld [vmem:[%s6719 + $0xbc] sm:$0x1]
  %v6896 = vld [vmem:[%s6719 + $0xd8] sm:$0xf]
  %v6897 = vld [vmem:[%s6719 + $0xdc] sm:$0xf]
  %v6898 = vld [vmem:[%s6719 + $0xe0] sm:$0x1]
  %v6899 = vld [vmem:[%s6719 + $0xe4] sm:$0xf]
  %v6900 = vld [vmem:[%s6719 + $0xe8] sm:$0xf]
  %v6901 = vld [vmem:[%s6719 + $0xec] sm:$0x1]
  %v6902 = vld [vmem:[%s6719 + $0xf0] sm:$0xf]
  %v6903 = vld [vmem:[%s6719 + $0xf4] sm:$0xf]
  %v6904 = vld [vmem:[%s6719 + $0xf8] sm:$0x1]
  %v6905 = vld [vmem:[%s6719 + $0xfc] sm:$0xf]
  %v6906 = vld [vmem:[%s6719 + $0x100] sm:$0xf]
  %v6907 = vld [vmem:[%s6719 + $0x104] sm:$0x1]
  %v6908 = vld [vmem:[%s6719 + $0x108] sm:$0xf]
  %v6909 = vld [vmem:[%s6719 + $0x10c] sm:$0xf]
  %v6910 = vld [vmem:[%s6719 + $0x110] sm:$0x1]
  %v6911 = vld [vmem:[%s6719 + $0x114] sm:$0xf]
  %v6912 = vld [vmem:[%s6719 + $0x118] sm:$0xf]
  %v6913 = vld [vmem:[%s6719 + $0x11c] sm:$0x1]
  %v6914 = vld [vmem:[%s6719 + $0x120] sm:$0xf]
  %v6915 = vld [vmem:[%s6719 + $0x124] sm:$0xf]
  %v6916 = vld [vmem:[%s6719 + $0x128] sm:$0x1]
  %v6917 = vld [vmem:[%s6719 + $0x12c] sm:$0xf]
  %v6918 = vld [vmem:[%s6719 + $0x130] sm:$0xf]
  %v6919 = vld [vmem:[%s6719 + $0x134] sm:$0x1]
  %v6920 = vld [vmem:[%s6719 + $0x138] sm:$0xf]
  %v6921 = vld [vmem:[%s6719 + $0x13c] sm:$0xf]
  %v6922 = vld [vmem:[%s6719 + $0x140] sm:$0x1]
  %v6923 = vld [vmem:[%s6719 + $0x144] sm:$0xf]
  %v6924 = vld [vmem:[%s6719 + $0x148] sm:$0xf]
  %v6925 = vld [vmem:[%s6719 + $0x14c] sm:$0x1]
  %v6926 = vld [vmem:[%s6719 + $0x150] sm:$0xf]
  %v6927 = vld [vmem:[%s6719 + $0x154] sm:$0xf]
  %v6928 = vld [vmem:[%s6719 + $0x158] sm:$0x1]
  %v6929 = vld [vmem:[%s6719 + $0x15c] sm:$0xf]
  %v6930 = vld [vmem:[%s6719 + $0x160] sm:$0xf]
  %v6931 = vld [vmem:[%s6719 + $0x164] sm:$0x1]
  %v6932 = vld [vmem:[%s6719 + $0x168] sm:$0xf]
  %v6933 = vld [vmem:[%s6719 + $0x16c] sm:$0xf]
  %v6934 = vld [vmem:[%s6719 + $0x170] sm:$0x1]
  %v6935 = vld [vmem:[%s6719 + $0x174] sm:$0xf]
  %v6936 = vld [vmem:[%s6719 + $0x178] sm:$0xf]
  %v6937 = vld [vmem:[%s6719 + $0x17c] sm:$0x1]
  %v6938 = vld [vmem:[%s6719 + $0x180] sm:$0xf]
  %v6939 = vld [vmem:[%s6719 + $0x184] sm:$0xf]
  %v6940 = vld [vmem:[%s6719 + $0x188] sm:$0x1]
  %v6941 = vld [vmem:[%s6719 + $0x18c] sm:$0xf]
  %v6942 = vld [vmem:[%s6719 + $0x190] sm:$0xf]
  %v6943 = vld [vmem:[%s6719 + $0x194] sm:$0x1]
  %v6945 = vshrl.u32 %v6848, 16
  %v6947 = vrot.slane %v6945, 4
  %v6948 = vshll.u32 %v6848, 16
  %v6950 = vrot.slane %v6948, 5
  %v6951 = vor.u32 %v6947, %v6950
  %v6952 = vrot.slane %v6951, 4
  %v6954 = vshll.u32 %v6849, 16
  %v6956 = vrot.slane %v6954, 5
  %v6957 = vsel %vm1856, %v6952, %v6956
  %v6958 = vshrl.u32 %v6849, 16
  %v6960 = vrot.slane %v6958, 4
  %v6961 = vor.u32 %v6960, %v6956
  %v6962 = vrot.slane %v6961, 4
  %v6964 = vshll.u32 %v6850, 16
  %v6966 = vrot.slane %v6964, 5
  %v6967 = vsel %vm1856, %v6962, %v6966
  %v6969 = vshrl.u32 %v6851, 16
  %v6971 = vrot.slane %v6969, 4
  %v6972 = vshll.u32 %v6851, 16
  %v6974 = vrot.slane %v6972, 5
  %v6975 = vor.u32 %v6971, %v6974
  %v6976 = vrot.slane %v6975, 4
  %v6978 = vshll.u32 %v6852, 16
  %v6980 = vrot.slane %v6978, 5
  %v6981 = vsel %vm1856, %v6976, %v6980
  %v6982 = vshrl.u32 %v6852, 16
  %v6984 = vrot.slane %v6982, 4
  %v6985 = vor.u32 %v6984, %v6980
  %v6986 = vrot.slane %v6985, 4
  %v6988 = vshll.u32 %v6853, 16
  %v6990 = vrot.slane %v6988, 5
  %v6991 = vsel %vm1856, %v6986, %v6990
  %v6993 = vshrl.u32 %v6854, 16
  %v6995 = vrot.slane %v6993, 4
  %v6996 = vshll.u32 %v6854, 16
  %v6998 = vrot.slane %v6996, 5
  %v6999 = vor.u32 %v6995, %v6998
  %v7000 = vrot.slane %v6999, 4
  %v7002 = vshll.u32 %v6855, 16
  %v7004 = vrot.slane %v7002, 5
  %v7005 = vsel %vm1856, %v7000, %v7004
  %v7006 = vshrl.u32 %v6855, 16
  %v7008 = vrot.slane %v7006, 4
  %v7009 = vor.u32 %v7008, %v7004
  %v7010 = vrot.slane %v7009, 4
  %v7012 = vshll.u32 %v6856, 16
  %v7014 = vrot.slane %v7012, 5
  %v7015 = vsel %vm1856, %v7010, %v7014
  %v7017 = vshrl.u32 %v6857, 16
  %v7019 = vrot.slane %v7017, 4
  %v7020 = vshll.u32 %v6857, 16
  %v7022 = vrot.slane %v7020, 5
  %v7023 = vor.u32 %v7019, %v7022
  %v7024 = vrot.slane %v7023, 4
  %v7026 = vshll.u32 %v6858, 16
  %v7028 = vrot.slane %v7026, 5
  %v7029 = vsel %vm1856, %v7024, %v7028
  %v7030 = vshrl.u32 %v6858, 16
  %v7032 = vrot.slane %v7030, 4
  %v7033 = vor.u32 %v7032, %v7028
  %v7034 = vrot.slane %v7033, 4
  %v7036 = vshll.u32 %v6859, 16
  %v7038 = vrot.slane %v7036, 5
  %v7039 = vsel %vm1856, %v7034, %v7038
  %v7041 = vshrl.u32 %v6860, 16
  %v7043 = vrot.slane %v7041, 4
  %v7044 = vshll.u32 %v6860, 16
  %v7046 = vrot.slane %v7044, 5
  %v7047 = vor.u32 %v7043, %v7046
  %v7048 = vrot.slane %v7047, 4
  %v7050 = vshll.u32 %v6861, 16
  %v7052 = vrot.slane %v7050, 5
  %v7053 = vsel %vm1856, %v7048, %v7052
  %v7054 = vshrl.u32 %v6861, 16
  %v7056 = vrot.slane %v7054, 4
  %v7057 = vor.u32 %v7056, %v7052
  %v7058 = vrot.slane %v7057, 4
  %v7060 = vshll.u32 %v6862, 16
  %v7062 = vrot.slane %v7060, 5
  %v7063 = vsel %vm1856, %v7058, %v7062
  %v7065 = vshrl.u32 %v6863, 16
  %v7067 = vrot.slane %v7065, 4
  %v7068 = vshll.u32 %v6863, 16
  %v7070 = vrot.slane %v7068, 5
  %v7071 = vor.u32 %v7067, %v7070
  %v7072 = vrot.slane %v7071, 4
  %v7074 = vshll.u32 %v6864, 16
  %v7076 = vrot.slane %v7074, 5
  %v7077 = vsel %vm1856, %v7072, %v7076
  %v7078 = vshrl.u32 %v6864, 16
  %v7080 = vrot.slane %v7078, 4
  %v7081 = vor.u32 %v7080, %v7076
  %v7082 = vrot.slane %v7081, 4
  %v7084 = vshll.u32 %v6865, 16
  %v7086 = vrot.slane %v7084, 5
  %v7087 = vsel %vm1856, %v7082, %v7086
  %v7089 = vshrl.u32 %v6866, 16
  %v7091 = vrot.slane %v7089, 4
  %v7092 = vshll.u32 %v6866, 16
  %v7094 = vrot.slane %v7092, 5
  %v7095 = vor.u32 %v7091, %v7094
  %v7096 = vrot.slane %v7095, 4
  %v7098 = vshll.u32 %v6867, 16
  %v7100 = vrot.slane %v7098, 5
  %v7101 = vsel %vm1856, %v7096, %v7100
  %v7102 = vshrl.u32 %v6867, 16
  %v7104 = vrot.slane %v7102, 4
  %v7105 = vor.u32 %v7104, %v7100
  %v7106 = vrot.slane %v7105, 4
  %v7108 = vshll.u32 %v6868, 16
  %v7110 = vrot.slane %v7108, 5
  %v7111 = vsel %vm1856, %v7106, %v7110
  %v7113 = vshrl.u32 %v6869, 16
  %v7115 = vrot.slane %v7113, 4
  %v7116 = vshll.u32 %v6869, 16
  %v7118 = vrot.slane %v7116, 5
  %v7119 = vor.u32 %v7115, %v7118
  %v7120 = vrot.slane %v7119, 4
  %v7122 = vshll.u32 %v6870, 16
  %v7124 = vrot.slane %v7122, 5
  %v7125 = vsel %vm1856, %v7120, %v7124
  %v7126 = vshrl.u32 %v6870, 16
  %v7128 = vrot.slane %v7126, 4
  %v7129 = vor.u32 %v7128, %v7124
  %v7130 = vrot.slane %v7129, 4
  %v7132 = vshll.u32 %v6871, 16
  %v7134 = vrot.slane %v7132, 5
  %v7135 = vsel %vm1856, %v7130, %v7134
  %v7137 = vshrl.u32 %v6872, 16
  %v7139 = vrot.slane %v7137, 4
  %v7140 = vshll.u32 %v6872, 16
  %v7142 = vrot.slane %v7140, 5
  %v7143 = vor.u32 %v7139, %v7142
  %v7144 = vrot.slane %v7143, 4
  %v7146 = vshll.u32 %v6873, 16
  %v7148 = vrot.slane %v7146, 5
  %v7149 = vsel %vm1856, %v7144, %v7148
  %v7150 = vshrl.u32 %v6873, 16
  %v7152 = vrot.slane %v7150, 4
  %v7153 = vor.u32 %v7152, %v7148
  %v7154 = vrot.slane %v7153, 4
  %v7156 = vshll.u32 %v6874, 16
  %v7158 = vrot.slane %v7156, 5
  %v7159 = vsel %vm1856, %v7154, %v7158
  %v7161 = vshrl.u32 %v6875, 16
  %v7163 = vrot.slane %v7161, 4
  %v7164 = vshll.u32 %v6875, 16
  %v7166 = vrot.slane %v7164, 5
  %v7167 = vor.u32 %v7163, %v7166
  %v7168 = vrot.slane %v7167, 4
  %v7170 = vshll.u32 %v6876, 16
  %v7172 = vrot.slane %v7170, 5
  %v7173 = vsel %vm1856, %v7168, %v7172
  %v7174 = vshrl.u32 %v6876, 16
  %v7176 = vrot.slane %v7174, 4
  %v7177 = vor.u32 %v7176, %v7172
  %v7178 = vrot.slane %v7177, 4
  %v7180 = vshll.u32 %v6877, 16
  %v7182 = vrot.slane %v7180, 5
  %v7183 = vsel %vm1856, %v7178, %v7182
  %v7185 = vshrl.u32 %v6878, 16
  %v7187 = vrot.slane %v7185, 4
  %v7188 = vshll.u32 %v6878, 16
  %v7190 = vrot.slane %v7188, 5
  %v7191 = vor.u32 %v7187, %v7190
  %v7192 = vrot.slane %v7191, 4
  %v7194 = vshll.u32 %v6879, 16
  %v7196 = vrot.slane %v7194, 5
  %v7197 = vsel %vm1856, %v7192, %v7196
  %v7198 = vshrl.u32 %v6879, 16
  %v7200 = vrot.slane %v7198, 4
  %v7201 = vor.u32 %v7200, %v7196
  %v7202 = vrot.slane %v7201, 4
  %v7204 = vshll.u32 %v6880, 16
  %v7206 = vrot.slane %v7204, 5
  %v7207 = vsel %vm1856, %v7202, %v7206
  %v7209 = vshrl.u32 %v6881, 16
  %v7211 = vrot.slane %v7209, 4
  %v7212 = vshll.u32 %v6881, 16
  %v7214 = vrot.slane %v7212, 5
  %v7215 = vor.u32 %v7211, %v7214
  %v7216 = vrot.slane %v7215, 4
  %v7218 = vshll.u32 %v6882, 16
  %v7220 = vrot.slane %v7218, 5
  %v7221 = vsel %vm1856, %v7216, %v7220
  %v7222 = vshrl.u32 %v6882, 16
  %v7224 = vrot.slane %v7222, 4
  %v7225 = vor.u32 %v7224, %v7220
  %v7226 = vrot.slane %v7225, 4
  %v7228 = vshll.u32 %v6883, 16
  %v7230 = vrot.slane %v7228, 5
  %v7231 = vsel %vm1856, %v7226, %v7230
  %v7233 = vshrl.u32 %v6884, 16
  %v7235 = vrot.slane %v7233, 4
  %v7236 = vshll.u32 %v6884, 16
  %v7238 = vrot.slane %v7236, 5
  %v7239 = vor.u32 %v7235, %v7238
  %v7240 = vrot.slane %v7239, 4
  %v7242 = vshll.u32 %v6885, 16
  %v7244 = vrot.slane %v7242, 5
  %v7245 = vsel %vm1856, %v7240, %v7244
  %v7246 = vshrl.u32 %v6885, 16
  %v7248 = vrot.slane %v7246, 4
  %v7249 = vor.u32 %v7248, %v7244
  %v7250 = vrot.slane %v7249, 4
  %v7252 = vshll.u32 %v6886, 16
  %v7254 = vrot.slane %v7252, 5
  %v7255 = vsel %vm1856, %v7250, %v7254
  %v7257 = vshrl.u32 %v6887, 16
  %v7259 = vrot.slane %v7257, 4
  %v7260 = vshll.u32 %v6887, 16
  %v7262 = vrot.slane %v7260, 5
  %v7263 = vor.u32 %v7259, %v7262
  %v7264 = vrot.slane %v7263, 4
  %v7266 = vshll.u32 %v6888, 16
  %v7268 = vrot.slane %v7266, 5
  %v7269 = vsel %vm1856, %v7264, %v7268
  %v7270 = vshrl.u32 %v6888, 16
  %v7272 = vrot.slane %v7270, 4
  %v7273 = vor.u32 %v7272, %v7268
  %v7274 = vrot.slane %v7273, 4
  %v7276 = vshll.u32 %v6889, 16
  %v7278 = vrot.slane %v7276, 5
  %v7279 = vsel %vm1856, %v7274, %v7278
  %v7281 = vshrl.u32 %v6890, 16
  %v7283 = vrot.slane %v7281, 4
  %v7284 = vshll.u32 %v6890, 16
  %v7286 = vrot.slane %v7284, 5
  %v7287 = vor.u32 %v7283, %v7286
  %v7288 = vrot.slane %v7287, 4
  %v7290 = vshll.u32 %v6891, 16
  %v7292 = vrot.slane %v7290, 5
  %v7293 = vsel %vm1856, %v7288, %v7292
  %v7294 = vshrl.u32 %v6891, 16
  %v7296 = vrot.slane %v7294, 4
  %v7297 = vor.u32 %v7296, %v7292
  %v7298 = vrot.slane %v7297, 4
  %v7300 = vshll.u32 %v6892, 16
  %v7302 = vrot.slane %v7300, 5
  %v7303 = vsel %vm1856, %v7298, %v7302
  %v7305 = vshrl.u32 %v6893, 16
  %v7307 = vrot.slane %v7305, 4
  %v7308 = vshll.u32 %v6893, 16
  %v7310 = vrot.slane %v7308, 5
  %v7311 = vor.u32 %v7307, %v7310
  %v7312 = vrot.slane %v7311, 4
  %v7314 = vshll.u32 %v6894, 16
  %v7316 = vrot.slane %v7314, 5
  %v7317 = vsel %vm1856, %v7312, %v7316
  %v7318 = vshrl.u32 %v6894, 16
  %v7320 = vrot.slane %v7318, 4
  %v7321 = vor.u32 %v7320, %v7316
  %v7322 = vrot.slane %v7321, 4
  %v7324 = vshll.u32 %v6895, 16
  %v7326 = vrot.slane %v7324, 5
  %v7327 = vsel %vm1856, %v7322, %v7326
  %v7329 = vshrl.u32 %v6896, 16
  %v7331 = vrot.slane %v7329, 4
  %v7332 = vshll.u32 %v6896, 16
  %v7334 = vrot.slane %v7332, 5
  %v7335 = vor.u32 %v7331, %v7334
  %v7336 = vrot.slane %v7335, 4
  %v7338 = vshll.u32 %v6897, 16
  %v7340 = vrot.slane %v7338, 5
  %v7341 = vsel %vm1856, %v7336, %v7340
  %v7342 = vshrl.u32 %v6897, 16
  %v7344 = vrot.slane %v7342, 4
  %v7345 = vor.u32 %v7344, %v7340
  %v7346 = vrot.slane %v7345, 4
  %v7348 = vshll.u32 %v6898, 16
  %v7350 = vrot.slane %v7348, 5
  %v7351 = vsel %vm1856, %v7346, %v7350
  %v7353 = vshrl.u32 %v6899, 16
  %v7355 = vrot.slane %v7353, 4
  %v7356 = vshll.u32 %v6899, 16
  %v7358 = vrot.slane %v7356, 5
  %v7359 = vor.u32 %v7355, %v7358
  %v7360 = vrot.slane %v7359, 4
  %v7362 = vshll.u32 %v6900, 16
  %v7364 = vrot.slane %v7362, 5
  %v7365 = vsel %vm1856, %v7360, %v7364
  %v7366 = vshrl.u32 %v6900, 16
  %v7368 = vrot.slane %v7366, 4
  %v7369 = vor.u32 %v7368, %v7364
  %v7370 = vrot.slane %v7369, 4
  %v7372 = vshll.u32 %v6901, 16
  %v7374 = vrot.slane %v7372, 5
  %v7375 = vsel %vm1856, %v7370, %v7374
  %v7377 = vshrl.u32 %v6902, 16
  %v7379 = vrot.slane %v7377, 4
  %v7380 = vshll.u32 %v6902, 16
  %v7382 = vrot.slane %v7380, 5
  %v7383 = vor.u32 %v7379, %v7382
  %v7384 = vrot.slane %v7383, 4
  %v7386 = vshll.u32 %v6903, 16
  %v7388 = vrot.slane %v7386, 5
  %v7389 = vsel %vm1856, %v7384, %v7388
  %v7390 = vshrl.u32 %v6903, 16
  %v7392 = vrot.slane %v7390, 4
  %v7393 = vor.u32 %v7392, %v7388
  %v7394 = vrot.slane %v7393, 4
  %v7396 = vshll.u32 %v6904, 16
  %v7398 = vrot.slane %v7396, 5
  %v7399 = vsel %vm1856, %v7394, %v7398
  %v7401 = vshrl.u32 %v6905, 16
  %v7403 = vrot.slane %v7401, 4
  %v7404 = vshll.u32 %v6905, 16
  %v7406 = vrot.slane %v7404, 5
  %v7407 = vor.u32 %v7403, %v7406
  %v7408 = vrot.slane %v7407, 4
  %v7410 = vshll.u32 %v6906, 16
  %v7412 = vrot.slane %v7410, 5
  %v7413 = vsel %vm1856, %v7408, %v7412
  %v7414 = vshrl.u32 %v6906, 16
  %v7416 = vrot.slane %v7414, 4
  %v7417 = vor.u32 %v7416, %v7412
  %v7418 = vrot.slane %v7417, 4
  %v7420 = vshll.u32 %v6907, 16
  %v7422 = vrot.slane %v7420, 5
  %v7423 = vsel %vm1856, %v7418, %v7422
  %v7425 = vshrl.u32 %v6908, 16
  %v7427 = vrot.slane %v7425, 4
  %v7428 = vshll.u32 %v6908, 16
  %v7430 = vrot.slane %v7428, 5
  %v7431 = vor.u32 %v7427, %v7430
  %v7432 = vrot.slane %v7431, 4
  %v7434 = vshll.u32 %v6909, 16
  %v7436 = vrot.slane %v7434, 5
  %v7437 = vsel %vm1856, %v7432, %v7436
  %v7438 = vshrl.u32 %v6909, 16
  %v7440 = vrot.slane %v7438, 4
  %v7441 = vor.u32 %v7440, %v7436
  %v7442 = vrot.slane %v7441, 4
  %v7444 = vshll.u32 %v6910, 16
  %v7446 = vrot.slane %v7444, 5
  %v7447 = vsel %vm1856, %v7442, %v7446
  %v7449 = vshrl.u32 %v6911, 16
  %v7451 = vrot.slane %v7449, 4
  %v7452 = vshll.u32 %v6911, 16
  %v7454 = vrot.slane %v7452, 5
  %v7455 = vor.u32 %v7451, %v7454
  %v7456 = vrot.slane %v7455, 4
  %v7458 = vshll.u32 %v6912, 16
  %v7460 = vrot.slane %v7458, 5
  %v7461 = vsel %vm1856, %v7456, %v7460
  %v7462 = vshrl.u32 %v6912, 16
  %v7464 = vrot.slane %v7462, 4
  %v7465 = vor.u32 %v7464, %v7460
  %v7466 = vrot.slane %v7465, 4
  %v7468 = vshll.u32 %v6913, 16
  %v7470 = vrot.slane %v7468, 5
  %v7471 = vsel %vm1856, %v7466, %v7470
  %v7473 = vshrl.u32 %v6914, 16
  %v7475 = vrot.slane %v7473, 4
  %v7476 = vshll.u32 %v6914, 16
  %v7478 = vrot.slane %v7476, 5
  %v7479 = vor.u32 %v7475, %v7478
  %v7480 = vrot.slane %v7479, 4
  %v7482 = vshll.u32 %v6915, 16
  %v7484 = vrot.slane %v7482, 5
  %v7485 = vsel %vm1856, %v7480, %v7484
  %v7486 = vshrl.u32 %v6915, 16
  %v7488 = vrot.slane %v7486, 4
  %v7489 = vor.u32 %v7488, %v7484
  %v7490 = vrot.slane %v7489, 4
  %v7492 = vshll.u32 %v6916, 16
  %v7494 = vrot.slane %v7492, 5
  %v7495 = vsel %vm1856, %v7490, %v7494
  %v7497 = vshrl.u32 %v6917, 16
  %v7499 = vrot.slane %v7497, 4
  %v7500 = vshll.u32 %v6917, 16
  %v7502 = vrot.slane %v7500, 5
  %v7503 = vor.u32 %v7499, %v7502
  %v7504 = vrot.slane %v7503, 4
  %v7506 = vshll.u32 %v6918, 16
  %v7508 = vrot.slane %v7506, 5
  %v7509 = vsel %vm1856, %v7504, %v7508
  %v7510 = vshrl.u32 %v6918, 16
  %v7512 = vrot.slane %v7510, 4
  %v7513 = vor.u32 %v7512, %v7508
  %v7514 = vrot.slane %v7513, 4
  %v7516 = vshll.u32 %v6919, 16
  %v7518 = vrot.slane %v7516, 5
  %v7519 = vsel %vm1856, %v7514, %v7518
  %v7521 = vshrl.u32 %v6920, 16
  %v7523 = vrot.slane %v7521, 4
  %v7524 = vshll.u32 %v6920, 16
  %v7526 = vrot.slane %v7524, 5
  %v7527 = vor.u32 %v7523, %v7526
  %v7528 = vrot.slane %v7527, 4
  %v7530 = vshll.u32 %v6921, 16
  %v7532 = vrot.slane %v7530, 5
  %v7533 = vsel %vm1856, %v7528, %v7532
  %v7534 = vshrl.u32 %v6921, 16
  %v7536 = vrot.slane %v7534, 4
  %v7537 = vor.u32 %v7536, %v7532
  %v7538 = vrot.slane %v7537, 4
  %v7540 = vshll.u32 %v6922, 16
  %v7542 = vrot.slane %v7540, 5
  %v7543 = vsel %vm1856, %v7538, %v7542
  %v7545 = vshrl.u32 %v6923, 16
  %v7547 = vrot.slane %v7545, 4
  %v7548 = vshll.u32 %v6923, 16
  %v7550 = vrot.slane %v7548, 5
  %v7551 = vor.u32 %v7547, %v7550
  %v7552 = vrot.slane %v7551, 4
  %v7554 = vshll.u32 %v6924, 16
  %v7556 = vrot.slane %v7554, 5
  %v7557 = vsel %vm1856, %v7552, %v7556
  %v7558 = vshrl.u32 %v6924, 16
  %v7560 = vrot.slane %v7558, 4
  %v7561 = vor.u32 %v7560, %v7556
  %v7562 = vrot.slane %v7561, 4
  %v7564 = vshll.u32 %v6925, 16
  %v7566 = vrot.slane %v7564, 5
  %v7567 = vsel %vm1856, %v7562, %v7566
  %v7569 = vshrl.u32 %v6926, 16
  %v7571 = vrot.slane %v7569, 4
  %v7572 = vshll.u32 %v6926, 16
  %v7574 = vrot.slane %v7572, 5
  %v7575 = vor.u32 %v7571, %v7574
  %v7576 = vrot.slane %v7575, 4
  %v7578 = vshll.u32 %v6927, 16
  %v7580 = vrot.slane %v7578, 5
  %v7581 = vsel %vm1856, %v7576, %v7580
  %v7582 = vshrl.u32 %v6927, 16
  %v7584 = vrot.slane %v7582, 4
  %v7585 = vor.u32 %v7584, %v7580
  %v7586 = vrot.slane %v7585, 4
  %v7588 = vshll.u32 %v6928, 16
  %v7590 = vrot.slane %v7588, 5
  %v7591 = vsel %vm1856, %v7586, %v7590
  %v7593 = vshrl.u32 %v6929, 16
  %v7595 = vrot.slane %v7593, 4
  %v7596 = vshll.u32 %v6929, 16
  %v7598 = vrot.slane %v7596, 5
  %v7599 = vor.u32 %v7595, %v7598
  %v7600 = vrot.slane %v7599, 4
  %v7602 = vshll.u32 %v6930, 16
  %v7604 = vrot.slane %v7602, 5
  %v7605 = vsel %vm1856, %v7600, %v7604
  %v7606 = vshrl.u32 %v6930, 16
  %v7608 = vrot.slane %v7606, 4
  %v7609 = vor.u32 %v7608, %v7604
  %v7610 = vrot.slane %v7609, 4
  %v7612 = vshll.u32 %v6931, 16
  %v7614 = vrot.slane %v7612, 5
  %v7615 = vsel %vm1856, %v7610, %v7614
  %v7617 = vshrl.u32 %v6932, 16
  %v7619 = vrot.slane %v7617, 4
  %v7620 = vshll.u32 %v6932, 16
  %v7622 = vrot.slane %v7620, 5
  %v7623 = vor.u32 %v7619, %v7622
  %v7624 = vrot.slane %v7623, 4
  %v7626 = vshll.u32 %v6933, 16
  %v7628 = vrot.slane %v7626, 5
  %v7629 = vsel %vm1856, %v7624, %v7628
  %v7630 = vshrl.u32 %v6933, 16
  %v7632 = vrot.slane %v7630, 4
  %v7633 = vor.u32 %v7632, %v7628
  %v7634 = vrot.slane %v7633, 4
  %v7636 = vshll.u32 %v6934, 16
  %v7638 = vrot.slane %v7636, 5
  %v7639 = vsel %vm1856, %v7634, %v7638
  %v7641 = vshrl.u32 %v6935, 16
  %v7643 = vrot.slane %v7641, 4
  %v7644 = vshll.u32 %v6935, 16
  %v7646 = vrot.slane %v7644, 5
  %v7647 = vor.u32 %v7643, %v7646
  %v7648 = vrot.slane %v7647, 4
  %v7650 = vshll.u32 %v6936, 16
  %v7652 = vrot.slane %v7650, 5
  %v7653 = vsel %vm1856, %v7648, %v7652
  %v7654 = vshrl.u32 %v6936, 16
  %v7656 = vrot.slane %v7654, 4
  %v7657 = vor.u32 %v7656, %v7652
  %v7658 = vrot.slane %v7657, 4
  %v7660 = vshll.u32 %v6937, 16
  %v7662 = vrot.slane %v7660, 5
  %v7663 = vsel %vm1856, %v7658, %v7662
  %v7665 = vshrl.u32 %v6938, 16
  %v7667 = vrot.slane %v7665, 4
  %v7668 = vshll.u32 %v6938, 16
  %v7670 = vrot.slane %v7668, 5
  %v7671 = vor.u32 %v7667, %v7670
  %v7672 = vrot.slane %v7671, 4
  %v7674 = vshll.u32 %v6939, 16
  %v7676 = vrot.slane %v7674, 5
  %v7677 = vsel %vm1856, %v7672, %v7676
  %v7678 = vshrl.u32 %v6939, 16
  %v7680 = vrot.slane %v7678, 4
  %v7681 = vor.u32 %v7680, %v7676
  %v7682 = vrot.slane %v7681, 4
  %v7684 = vshll.u32 %v6940, 16
  %v7686 = vrot.slane %v7684, 5
  %v7687 = vsel %vm1856, %v7682, %v7686
  %v7689 = vshrl.u32 %v6941, 16
  %v7691 = vrot.slane %v7689, 4
  %v7692 = vshll.u32 %v6941, 16
  %v7694 = vrot.slane %v7692, 5
  %v7695 = vor.u32 %v7691, %v7694
  %v7696 = vrot.slane %v7695, 4
  %v7698 = vshll.u32 %v6942, 16
  %v7700 = vrot.slane %v7698, 5
  %v7701 = vsel %vm1856, %v7696, %v7700
  %v7702 = vshrl.u32 %v6942, 16
  %v7704 = vrot.slane %v7702, 4
  %v7705 = vor.u32 %v7704, %v7700
  %v7706 = vrot.slane %v7705, 4
  %v7708 = vshll.u32 %v6943, 16
  %v7710 = vrot.slane %v7708, 5
  %v7711 = vsel %vm1856, %v7706, %v7710
  %7712 = vrot.lane.b32.xlu0 %v6957, 4
  %v7713 = vpop.permute.xlu0 %7712
  %7714 = vrot.lane.b32.xlu0 %v6967, 4
  %v7715 = vpop.permute.xlu0 %7714
  %7716 = vrot.lane.b32.xlu0 %v6981, 4
  %v7717 = vpop.permute.xlu0 %7716
  %7718 = vrot.lane.b32.xlu0 %v6991, 4
  %v7719 = vpop.permute.xlu0 %7718
  %7720 = vrot.lane.b32.xlu0 %v7005, 4
  %v7721 = vpop.permute.xlu0 %7720
  %7722 = vrot.lane.b32.xlu0 %v7015, 4
  %v7723 = vpop.permute.xlu0 %7722
  %7724 = vrot.lane.b32.xlu0 %v7029, 4
  %v7725 = vpop.permute.xlu0 %7724
  %7726 = vrot.lane.b32.xlu0 %v7039, 4
  %v7727 = vpop.permute.xlu0 %7726
  %7728 = vrot.lane.b32.xlu0 %v7053, 4
  %v7729 = vpop.permute.xlu0 %7728
  %7730 = vrot.lane.b32.xlu0 %v7063, 4
  %v7731 = vpop.permute.xlu0 %7730
  %7732 = vrot.lane.b32.xlu0 %v7077, 4
  %v7733 = vpop.permute.xlu0 %7732
  %7734 = vrot.lane.b32.xlu0 %v7087, 4
  %v7735 = vpop.permute.xlu0 %7734
  %7736 = vrot.lane.b32.xlu0 %v7101, 4
  %v7737 = vpop.permute.xlu0 %7736
  %7738 = vrot.lane.b32.xlu0 %v7111, 4
  %v7739 = vpop.permute.xlu0 %7738
  %7740 = vrot.lane.b32.xlu0 %v7125, 4
  %v7741 = vpop.permute.xlu0 %7740
  %7742 = vrot.lane.b32.xlu0 %v7135, 4
  %v7743 = vpop.permute.xlu0 %7742
  %7744 = vrot.lane.b32.xlu0 %v7149, 4
  %v7745 = vpop.permute.xlu0 %7744
  %7746 = vrot.lane.b32.xlu0 %v7159, 4
  %v7747 = vpop.permute.xlu0 %7746
  %7748 = vrot.lane.b32.xlu0 %v7173, 4
  %v7749 = vpop.permute.xlu0 %7748
  %7750 = vrot.lane.b32.xlu0 %v7183, 4
  %v7751 = vpop.permute.xlu0 %7750
  %7752 = vrot.lane.b32.xlu0 %v7197, 4
  %v7753 = vpop.permute.xlu0 %7752
  %7754 = vrot.lane.b32.xlu0 %v7207, 4
  %v7755 = vpop.permute.xlu0 %7754
  %7756 = vrot.lane.b32.xlu0 %v7221, 4
  %v7757 = vpop.permute.xlu0 %7756
  %7758 = vrot.lane.b32.xlu0 %v7231, 4
  %v7759 = vpop.permute.xlu0 %7758
  %7760 = vrot.lane.b32.xlu0 %v7245, 4
  %v7761 = vpop.permute.xlu0 %7760
  %7762 = vrot.lane.b32.xlu0 %v7255, 4
  %v7763 = vpop.permute.xlu0 %7762
  %7764 = vrot.lane.b32.xlu0 %v7269, 4
  %v7765 = vpop.permute.xlu0 %7764
  %7766 = vrot.lane.b32.xlu0 %v7279, 4
  %v7767 = vpop.permute.xlu0 %7766
  %7768 = vrot.lane.b32.xlu0 %v7293, 4
  %v7769 = vpop.permute.xlu0 %7768
  %7770 = vrot.lane.b32.xlu0 %v7303, 4
  %v7771 = vpop.permute.xlu0 %7770
  %7772 = vrot.lane.b32.xlu0 %v7317, 4
  %v7773 = vpop.permute.xlu0 %7772
  %7774 = vrot.lane.b32.xlu0 %v7327, 4
  %v7775 = vpop.permute.xlu0 %7774
  %7776 = vrot.lane.b32.xlu0 %v7341, 4
  %v7777 = vpop.permute.xlu0 %7776
  %7778 = vrot.lane.b32.xlu0 %v7351, 4
  %v7779 = vpop.permute.xlu0 %7778
  %7780 = vrot.lane.b32.xlu0 %v7365, 4
  %v7781 = vpop.permute.xlu0 %7780
  %7782 = vrot.lane.b32.xlu0 %v7375, 4
  %v7783 = vpop.permute.xlu0 %7782
  %7784 = vrot.lane.b32.xlu0 %v7389, 4
  %v7785 = vpop.permute.xlu0 %7784
  %7786 = vrot.lane.b32.xlu0 %v7399, 4
  %v7787 = vpop.permute.xlu0 %7786
  %7788 = vrot.lane.b32.xlu0 %v7413, 4
  %v7789 = vpop.permute.xlu0 %7788
  %7790 = vrot.lane.b32.xlu0 %v7423, 4
  %v7791 = vpop.permute.xlu0 %7790
  %7792 = vrot.lane.b32.xlu0 %v7437, 4
  %v7793 = vpop.permute.xlu0 %7792
  %7794 = vrot.lane.b32.xlu0 %v7447, 4
  %v7795 = vpop.permute.xlu0 %7794
  %7796 = vrot.lane.b32.xlu0 %v7461, 4
  %v7797 = vpop.permute.xlu0 %7796
  %7798 = vrot.lane.b32.xlu0 %v7471, 4
  %v7799 = vpop.permute.xlu0 %7798
  %7800 = vrot.lane.b32.xlu0 %v7485, 4
  %v7801 = vpop.permute.xlu0 %7800
  %7802 = vrot.lane.b32.xlu0 %v7495, 4
  %v7803 = vpop.permute.xlu0 %7802
  %7804 = vrot.lane.b32.xlu0 %v7509, 4
  %v7805 = vpop.permute.xlu0 %7804
  %7806 = vrot.lane.b32.xlu0 %v7519, 4
  %v7807 = vpop.permute.xlu0 %7806
  %7808 = vrot.lane.b32.xlu0 %v7533, 4
  %v7809 = vpop.permute.xlu0 %7808
  %7810 = vrot.lane.b32.xlu0 %v7543, 4
  %v7811 = vpop.permute.xlu0 %7810
  %7812 = vrot.lane.b32.xlu0 %v7557, 4
  %v7813 = vpop.permute.xlu0 %7812
  %7814 = vrot.lane.b32.xlu0 %v7567, 4
  %v7815 = vpop.permute.xlu0 %7814
  %7816 = vrot.lane.b32.xlu0 %v7581, 4
  %v7817 = vpop.permute.xlu0 %7816
  %7818 = vrot.lane.b32.xlu0 %v7591, 4
  %v7819 = vpop.permute.xlu0 %7818
  %7820 = vrot.lane.b32.xlu0 %v7605, 4
  %v7821 = vpop.permute.xlu0 %7820
  %7822 = vrot.lane.b32.xlu0 %v7615, 4
  %v7823 = vpop.permute.xlu0 %7822
  %7824 = vrot.lane.b32.xlu0 %v7629, 4
  %v7825 = vpop.permute.xlu0 %7824
  %7826 = vrot.lane.b32.xlu0 %v7639, 4
  %v7827 = vpop.permute.xlu0 %7826
  %7828 = vrot.lane.b32.xlu0 %v7653, 4
  %v7829 = vpop.permute.xlu0 %7828
  %7830 = vrot.lane.b32.xlu0 %v7663, 4
  %v7831 = vpop.permute.xlu0 %7830
  %7832 = vrot.lane.b32.xlu0 %v7677, 4
  %v7833 = vpop.permute.xlu0 %7832
  %7834 = vrot.lane.b32.xlu0 %v7687, 4
  %v7835 = vpop.permute.xlu0 %7834
  %7836 = vrot.lane.b32.xlu0 %v7701, 4
  %v7837 = vpop.permute.xlu0 %7836
  %7838 = vrot.lane.b32.xlu0 %v7711, 4
  %v7839 = vpop.permute.xlu0 %7838
  %7904 = vst.msk [vmem:[#allocation4] sm:$0xf] %vm2817, %v7713
  %7905 = vst.msk [vmem:[#allocation4 + $0x4] sm:$0xf] %vm2817, %v7715
  %7906 = vst.msk [vmem:[#allocation4 + $0x8] sm:$0xf] %vm2817, %v7717
  %7907 = vst.msk [vmem:[#allocation4 + $0xc] sm:$0xf] %vm2817, %v7719
  %7908 = vst.msk [vmem:[#allocation4 + $0x10] sm:$0xf] %vm2817, %v7721
  %7909 = vst.msk [vmem:[#allocation4 + $0x14] sm:$0xf] %vm2817, %v7723
  %7910 = vst.msk [vmem:[#allocation4 + $0x18] sm:$0xf] %vm2817, %v7725
  %7911 = vst.msk [vmem:[#allocation4 + $0x1c] sm:$0xf] %vm2817, %v7727
  %7912 = vst.msk [vmem:[#allocation4 + $0x20] sm:$0xf] %vm2817, %v7729
  %7913 = vst.msk [vmem:[#allocation4 + $0x24] sm:$0xf] %vm2817, %v7731
  %7914 = vst.msk [vmem:[#allocation4 + $0x28] sm:$0xf] %vm2817, %v7733
  %7915 = vst.msk [vmem:[#allocation4 + $0x2c] sm:$0xf] %vm2817, %v7735
  %7916 = vst.msk [vmem:[#allocation4 + $0x30] sm:$0xf] %vm2817, %v7737
  %7917 = vst.msk [vmem:[#allocation4 + $0x34] sm:$0xf] %vm2817, %v7739
  %7918 = vst.msk [vmem:[#allocation4 + $0x38] sm:$0xf] %vm2817, %v7741
  %7919 = vst.msk [vmem:[#allocation4 + $0x3c] sm:$0xf] %vm2817, %v7743
  %7920 = vst.msk [vmem:[#allocation4 + $0x40] sm:$0xf] %vm2817, %v7745
  %7921 = vst.msk [vmem:[#allocation4 + $0x44] sm:$0xf] %vm2817, %v7747
  %7922 = vst.msk [vmem:[#allocation4 + $0x48] sm:$0xf] %vm2817, %v7749
  %7923 = vst.msk [vmem:[#allocation4 + $0x4c] sm:$0xf] %vm2817, %v7751
  %7924 = vst.msk [vmem:[#allocation4 + $0x50] sm:$0xf] %vm2817, %v7753
  %7925 = vst.msk [vmem:[#allocation4 + $0x54] sm:$0xf] %vm2817, %v7755
  %7926 = vst.msk [vmem:[#allocation4 + $0x58] sm:$0xf] %vm2817, %v7757
  %7927 = vst.msk [vmem:[#allocation4 + $0x5c] sm:$0xf] %vm2817, %v7759
  %7928 = vst.msk [vmem:[#allocation4 + $0x60] sm:$0xf] %vm2817, %v7761
  %7929 = vst.msk [vmem:[#allocation4 + $0x64] sm:$0xf] %vm2817, %v7763
  %7930 = vst.msk [vmem:[#allocation4 + $0x68] sm:$0xf] %vm2817, %v7765
  %7931 = vst.msk [vmem:[#allocation4 + $0x6c] sm:$0xf] %vm2817, %v7767
  %7932 = vst.msk [vmem:[#allocation4 + $0x70] sm:$0xf] %vm2817, %v7769
  %7933 = vst.msk [vmem:[#allocation4 + $0x74] sm:$0xf] %vm2817, %v7771
  %7934 = vst.msk [vmem:[#allocation4 + $0x78] sm:$0xf] %vm2817, %v7773
  %7935 = vst.msk [vmem:[#allocation4 + $0x7c] sm:$0xf] %vm2817, %v7775
  %7936 = vst.msk [vmem:[#allocation4 + $0x80] sm:$0xf] %vm2817, %v7777
  %7937 = vst.msk [vmem:[#allocation4 + $0x84] sm:$0xf] %vm2817, %v7779
  %7938 = vst.msk [vmem:[#allocation4 + $0x88] sm:$0xf] %vm2817, %v7781
  %7939 = vst.msk [vmem:[#allocation4 + $0x8c] sm:$0xf] %vm2817, %v7783
  %7940 = vst.msk [vmem:[#allocation4 + $0x90] sm:$0xf] %vm2817, %v7785
  %7941 = vst.msk [vmem:[#allocation4 + $0x94] sm:$0xf] %vm2817, %v7787
  %7942 = vst.msk [vmem:[#allocation4 + $0x98] sm:$0xf] %vm2817, %v7789
  %7943 = vst.msk [vmem:[#allocation4 + $0x9c] sm:$0xf] %vm2817, %v7791
  %7944 = vst.msk [vmem:[#allocation4 + $0xa0] sm:$0xf] %vm2817, %v7793
  %7945 = vst.msk [vmem:[#allocation4 + $0xa4] sm:$0xf] %vm2817, %v7795
  %7946 = vst.msk [vmem:[#allocation4 + $0xa8] sm:$0xf] %vm2817, %v7797
  %7947 = vst.msk [vmem:[#allocation4 + $0xac] sm:$0xf] %vm2817, %v7799
  %7948 = vst.msk [vmem:[#allocation4 + $0xb0] sm:$0xf] %vm2817, %v7801
  %7949 = vst.msk [vmem:[#allocation4 + $0xb4] sm:$0xf] %vm2817, %v7803
  %7950 = vst.msk [vmem:[#allocation4 + $0xb8] sm:$0xf] %vm2817, %v7805
  %7951 = vst.msk [vmem:[#allocation4 + $0xbc] sm:$0xf] %vm2817, %v7807
  %7952 = vst.msk [vmem:[#allocation4 + $0xc0] sm:$0xf] %vm2817, %v7809
  %7953 = vst.msk [vmem:[#allocation4 + $0xc4] sm:$0xf] %vm2817, %v7811
  %7954 = vst.msk [vmem:[#allocation4 + $0xc8] sm:$0xf] %vm2817, %v7813
  %7955 = vst.msk [vmem:[#allocation4 + $0xcc] sm:$0xf] %vm2817, %v7815
  %7956 = vst.msk [vmem:[#allocation4 + $0xd0] sm:$0xf] %vm2817, %v7817
  %7957 = vst.msk [vmem:[#allocation4 + $0xd4] sm:$0xf] %vm2817, %v7819
  %7958 = vst.msk [vmem:[#allocation4 + $0xd8] sm:$0xf] %vm2817, %v7821
  %7959 = vst.msk [vmem:[#allocation4 + $0xdc] sm:$0xf] %vm2817, %v7823
  %7960 = vst.msk [vmem:[#allocation4 + $0xe0] sm:$0xf] %vm2817, %v7825
  %7961 = vst.msk [vmem:[#allocation4 + $0xe4] sm:$0xf] %vm2817, %v7827
  %7962 = vst.msk [vmem:[#allocation4 + $0xe8] sm:$0xf] %vm2817, %v7829
  %7963 = vst.msk [vmem:[#allocation4 + $0xec] sm:$0xf] %vm2817, %v7831
  %7964 = vst.msk [vmem:[#allocation4 + $0xf0] sm:$0xf] %vm2817, %v7833
  %7965 = vst.msk [vmem:[#allocation4 + $0xf4] sm:$0xf] %vm2817, %v7835
  %7966 = vst.msk [vmem:[#allocation4 + $0xf8] sm:$0xf] %vm2817, %v7837
  %7967 = vst.msk [vmem:[#allocation4 + $0xfc] sm:$0xf] %vm2817, %v7839
  %v7968 = vld [vmem:[%s6719] sm:$0xe]
  %v7969 = vld [vmem:[%s6719 + $0x4] sm:$0xf]
  %v7970 = vld [vmem:[%s6719 + $0x8] sm:$0x1]
  %v7971 = vld [vmem:[%s6719 + $0xc] sm:$0xe]
  %v7972 = vld [vmem:[%s6719 + $0x10] sm:$0xf]
  %v7973 = vld [vmem:[%s6719 + $0x14] sm:$0x1]
  %v7974 = vld [vmem:[%s6719 + $0x18] sm:$0xe]
  %v7975 = vld [vmem:[%s6719 + $0x1c] sm:$0xf]
  %v7976 = vld [vmem:[%s6719 + $0x20] sm:$0x1]
  %v7977 = vld [vmem:[%s6719 + $0x24] sm:$0xe]
  %v7978 = vld [vmem:[%s6719 + $0x28] sm:$0xf]
  %v7979 = vld [vmem:[%s6719 + $0x2c] sm:$0x1]
  %v7980 = vld [vmem:[%s6719 + $0x30] sm:$0xe]
  %v7981 = vld [vmem:[%s6719 + $0x34] sm:$0xf]
  %v7982 = vld [vmem:[%s6719 + $0x38] sm:$0x1]
  %v7983 = vld [vmem:[%s6719 + $0x3c] sm:$0xe]
  %v7984 = vld [vmem:[%s6719 + $0x40] sm:$0xf]
  %v7985 = vld [vmem:[%s6719 + $0x44] sm:$0x1]
  %v7986 = vld [vmem:[%s6719 + $0x48] sm:$0xe]
  %v7987 = vld [vmem:[%s6719 + $0x4c] sm:$0xf]
  %v7988 = vld [vmem:[%s6719 + $0x50] sm:$0x1]
  %v7989 = vld [vmem:[%s6719 + $0x54] sm:$0xe]
  %v7990 = vld [vmem:[%s6719 + $0x58] sm:$0xf]
  %v7991 = vld [vmem:[%s6719 + $0x5c] sm:$0x1]
  %v7992 = vld [vmem:[%s6719 + $0x60] sm:$0xe]
  %v7993 = vld [vmem:[%s6719 + $0x64] sm:$0xf]
  %v7994 = vld [vmem:[%s6719 + $0x68] sm:$0x1]
  %v7995 = vld [vmem:[%s6719 + $0x6c] sm:$0xe]
  %v7996 = vld [vmem:[%s6719 + $0x70] sm:$0xf]
  %v7997 = vld [vmem:[%s6719 + $0x74] sm:$0x1]
  %v7998 = vld [vmem:[%s6719 + $0x78] sm:$0xe]
  %v7999 = vld [vmem:[%s6719 + $0x7c] sm:$0xf]
  %v8000 = vld [vmem:[%s6719 + $0x80] sm:$0x1]
  %v8001 = vld [vmem:[%s6719 + $0x84] sm:$0xe]
  %v8002 = vld [vmem:[%s6719 + $0x88] sm:$0xf]
  %v8003 = vld [vmem:[%s6719 + $0x8c] sm:$0x1]
  %v8004 = vld [vmem:[%s6719 + $0x90] sm:$0xe]
  %v8005 = vld [vmem:[%s6719 + $0x94] sm:$0xf]
  %v8006 = vld [vmem:[%s6719 + $0x98] sm:$0x1]
  %v8007 = vld [vmem:[%s6719 + $0x9c] sm:$0xe]
  %v8008 = vld [vmem:[%s6719 + $0xa0] sm:$0xf]
  %v8009 = vld [vmem:[%s6719 + $0xa4] sm:$0x1]
  %v8010 = vld [vmem:[%s6719 + $0xa8] sm:$0xe]
  %v8011 = vld [vmem:[%s6719 + $0xac] sm:$0xf]
  %v8012 = vld [vmem:[%s6719 + $0xb0] sm:$0x1]
  %v8013 = vld [vmem:[%s6719 + $0xb4] sm:$0xe]
  %v8014 = vld [vmem:[%s6719 + $0xb8] sm:$0xf]
  %v8015 = vld [vmem:[%s6719 + $0xbc] sm:$0x1]
  %v8016 = vld [vmem:[%s6719 + $0xd8] sm:$0xe]
  %v8017 = vld [vmem:[%s6719 + $0xdc] sm:$0xf]
  %v8018 = vld [vmem:[%s6719 + $0xe0] sm:$0x1]
  %v8019 = vld [vmem:[%s6719 + $0xe4] sm:$0xe]
  %v8020 = vld [vmem:[%s6719 + $0xe8] sm:$0xf]
  %v8021 = vld [vmem:[%s6719 + $0xec] sm:$0x1]
  %v8022 = vld [vmem:[%s6719 + $0xf0] sm:$0xe]
  %v8023 = vld [vmem:[%s6719 + $0xf4] sm:$0xf]
  %v8024 = vld [vmem:[%s6719 + $0xf8] sm:$0x1]
  %v8025 = vld [vmem:[%s6719 + $0xfc] sm:$0xe]
  %v8026 = vld [vmem:[%s6719 + $0x100] sm:$0xf]
  %v8027 = vld [vmem:[%s6719 + $0x104] sm:$0x1]
  %v8028 = vld [vmem:[%s6719 + $0x108] sm:$0xe]
  %v8029 = vld [vmem:[%s6719 + $0x10c] sm:$0xf]
  %v8030 = vld [vmem:[%s6719 + $0x110] sm:$0x1]
  %v8031 = vld [vmem:[%s6719 + $0x114] sm:$0xe]
  %v8032 = vld [vmem:[%s6719 + $0x118] sm:$0xf]
  %v8033 = vld [vmem:[%s6719 + $0x11c] sm:$0x1]
  %v8034 = vld [vmem:[%s6719 + $0x120] sm:$0xe]
  %v8035 = vld [vmem:[%s6719 + $0x124] sm:$0xf]
  %v8036 = vld [vmem:[%s6719 + $0x128] sm:$0x1]
  %v8037 = vld [vmem:[%s6719 + $0x12c] sm:$0xe]
  %v8038 = vld [vmem:[%s6719 + $0x130] sm:$0xf]
  %v8039 = vld [vmem:[%s6719 + $0x134] sm:$0x1]
  %v8040 = vld [vmem:[%s6719 + $0x138] sm:$0xe]
  %v8041 = vld [vmem:[%s6719 + $0x13c] sm:$0xf]
  %v8042 = vld [vmem:[%s6719 + $0x140] sm:$0x1]
  %v8043 = vld [vmem:[%s6719 + $0x144] sm:$0xe]
  %v8044 = vld [vmem:[%s6719 + $0x148] sm:$0xf]
  %v8045 = vld [vmem:[%s6719 + $0x14c] sm:$0x1]
  %v8046 = vld [vmem:[%s6719 + $0x150] sm:$0xe]
  %v8047 = vld [vmem:[%s6719 + $0x154] sm:$0xf]
  %v8048 = vld [vmem:[%s6719 + $0x158] sm:$0x1]
  %v8049 = vld [vmem:[%s6719 + $0x15c] sm:$0xe]
  %v8050 = vld [vmem:[%s6719 + $0x160] sm:$0xf]
  %v8051 = vld [vmem:[%s6719 + $0x164] sm:$0x1]
  %v8052 = vld [vmem:[%s6719 + $0x168] sm:$0xe]
  %v8053 = vld [vmem:[%s6719 + $0x16c] sm:$0xf]
  %v8054 = vld [vmem:[%s6719 + $0x170] sm:$0x1]
  %v8055 = vld [vmem:[%s6719 + $0x174] sm:$0xe]
  %v8056 = vld [vmem:[%s6719 + $0x178] sm:$0xf]
  %v8057 = vld [vmem:[%s6719 + $0x17c] sm:$0x1]
  %v8058 = vld [vmem:[%s6719 + $0x180] sm:$0xe]
  %v8059 = vld [vmem:[%s6719 + $0x184] sm:$0xf]
  %v8060 = vld [vmem:[%s6719 + $0x188] sm:$0x1]
  %v8061 = vld [vmem:[%s6719 + $0x18c] sm:$0xe]
  %v8062 = vld [vmem:[%s6719 + $0x190] sm:$0xf]
  %v8063 = vld [vmem:[%s6719 + $0x194] sm:$0x1]
  %v8160 = vrot.slane %v7968, 5
  %v8161 = vrot.slane %v8160, 4
  %v8162 = vrot.slane %v7969, 5
  %v8163 = vsel %vm3076, %v8161, %v8162
  %v8164 = vrot.slane %v8162, 4
  %v8165 = vrot.slane %v7970, 5
  %v8166 = vsel %vm3076, %v8164, %v8165
  %v8167 = vrot.slane %v7971, 5
  %v8168 = vrot.slane %v8167, 4
  %v8169 = vrot.slane %v7972, 5
  %v8170 = vsel %vm3076, %v8168, %v8169
  %v8171 = vrot.slane %v8169, 4
  %v8172 = vrot.slane %v7973, 5
  %v8173 = vsel %vm3076, %v8171, %v8172
  %v8174 = vrot.slane %v7974, 5
  %v8175 = vrot.slane %v8174, 4
  %v8176 = vrot.slane %v7975, 5
  %v8177 = vsel %vm3076, %v8175, %v8176
  %v8178 = vrot.slane %v8176, 4
  %v8179 = vrot.slane %v7976, 5
  %v8180 = vsel %vm3076, %v8178, %v8179
  %v8181 = vrot.slane %v7977, 5
  %v8182 = vrot.slane %v8181, 4
  %v8183 = vrot.slane %v7978, 5
  %v8184 = vsel %vm3076, %v8182, %v8183
  %v8185 = vrot.slane %v8183, 4
  %v8186 = vrot.slane %v7979, 5
  %v8187 = vsel %vm3076, %v8185, %v8186
  %v8188 = vrot.slane %v7980, 5
  %v8189 = vrot.slane %v8188, 4
  %v8190 = vrot.slane %v7981, 5
  %v8191 = vsel %vm3076, %v8189, %v8190
  %v8192 = vrot.slane %v8190, 4
  %v8193 = vrot.slane %v7982, 5
  %v8194 = vsel %vm3076, %v8192, %v8193
  %v8195 = vrot.slane %v7983, 5
  %v8196 = vrot.slane %v8195, 4
  %v8197 = vrot.slane %v7984, 5
  %v8198 = vsel %vm3076, %v8196, %v8197
  %v8199 = vrot.slane %v8197, 4
  %v8200 = vrot.slane %v7985, 5
  %v8201 = vsel %vm3076, %v8199, %v8200
  %v8202 = vrot.slane %v7986, 5
  %v8203 = vrot.slane %v8202, 4
  %v8204 = vrot.slane %v7987, 5
  %v8205 = vsel %vm3076, %v8203, %v8204
  %v8206 = vrot.slane %v8204, 4
  %v8207 = vrot.slane %v7988, 5
  %v8208 = vsel %vm3076, %v8206, %v8207
  %v8209 = vrot.slane %v7989, 5
  %v8210 = vrot.slane %v8209, 4
  %v8211 = vrot.slane %v7990, 5
  %v8212 = vsel %vm3076, %v8210, %v8211
  %v8213 = vrot.slane %v8211, 4
  %v8214 = vrot.slane %v7991, 5
  %v8215 = vsel %vm3076, %v8213, %v8214
  %v8216 = vrot.slane %v7992, 5
  %v8217 = vrot.slane %v8216, 4
  %v8218 = vrot.slane %v7993, 5
  %v8219 = vsel %vm3076, %v8217, %v8218
  %v8220 = vrot.slane %v8218, 4
  %v8221 = vrot.slane %v7994, 5
  %v8222 = vsel %vm3076, %v8220, %v8221
  %v8223 = vrot.slane %v7995, 5
  %v8224 = vrot.slane %v8223, 4
  %v8225 = vrot.slane %v7996, 5
  %v8226 = vsel %vm3076, %v8224, %v8225
  %v8227 = vrot.slane %v8225, 4
  %v8228 = vrot.slane %v7997, 5
  %v8229 = vsel %vm3076, %v8227, %v8228
  %v8230 = vrot.slane %v7998, 5
  %v8231 = vrot.slane %v8230, 4
  %v8232 = vrot.slane %v7999, 5
  %v8233 = vsel %vm3076, %v8231, %v8232
  %v8234 = vrot.slane %v8232, 4
  %v8235 = vrot.slane %v8000, 5
  %v8236 = vsel %vm3076, %v8234, %v8235
  %v8237 = vrot.slane %v8001, 5
  %v8238 = vrot.slane %v8237, 4
  %v8239 = vrot.slane %v8002, 5
  %v8240 = vsel %vm3076, %v8238, %v8239
  %v8241 = vrot.slane %v8239, 4
  %v8242 = vrot.slane %v8003, 5
  %v8243 = vsel %vm3076, %v8241, %v8242
  %v8244 = vrot.slane %v8004, 5
  %v8245 = vrot.slane %v8244, 4
  %v8246 = vrot.slane %v8005, 5
  %v8247 = vsel %vm3076, %v8245, %v8246
  %v8248 = vrot.slane %v8246, 4
  %v8249 = vrot.slane %v8006, 5
  %v8250 = vsel %vm3076, %v8248, %v8249
  %v8251 = vrot.slane %v8007, 5
  %v8252 = vrot.slane %v8251, 4
  %v8253 = vrot.slane %v8008, 5
  %v8254 = vsel %vm3076, %v8252, %v8253
  %v8255 = vrot.slane %v8253, 4
  %v8256 = vrot.slane %v8009, 5
  %v8257 = vsel %vm3076, %v8255, %v8256
  %v8258 = vrot.slane %v8010, 5
  %v8259 = vrot.slane %v8258, 4
  %v8260 = vrot.slane %v8011, 5
  %v8261 = vsel %vm3076, %v8259, %v8260
  %v8262 = vrot.slane %v8260, 4
  %v8263 = vrot.slane %v8012, 5
  %v8264 = vsel %vm3076, %v8262, %v8263
  %v8265 = vrot.slane %v8013, 5
  %v8266 = vrot.slane %v8265, 4
  %v8267 = vrot.slane %v8014, 5
  %v8268 = vsel %vm3076, %v8266, %v8267
  %v8269 = vrot.slane %v8267, 4
  %v8270 = vrot.slane %v8015, 5
  %v8271 = vsel %vm3076, %v8269, %v8270
  %v8272 = vrot.slane %v8016, 5
  %v8273 = vrot.slane %v8272, 4
  %v8274 = vrot.slane %v8017, 5
  %v8275 = vsel %vm3076, %v8273, %v8274
  %v8276 = vrot.slane %v8274, 4
  %v8277 = vrot.slane %v8018, 5
  %v8278 = vsel %vm3076, %v8276, %v8277
  %v8279 = vrot.slane %v8019, 5
  %v8280 = vrot.slane %v8279, 4
  %v8281 = vrot.slane %v8020, 5
  %v8282 = vsel %vm3076, %v8280, %v8281
  %v8283 = vrot.slane %v8281, 4
  %v8284 = vrot.slane %v8021, 5
  %v8285 = vsel %vm3076, %v8283, %v8284
  %v8286 = vrot.slane %v8022, 5
  %v8287 = vrot.slane %v8286, 4
  %v8288 = vrot.slane %v8023, 5
  %v8289 = vsel %vm3076, %v8287, %v8288
  %v8290 = vrot.slane %v8288, 4
  %v8291 = vrot.slane %v8024, 5
  %v8292 = vsel %vm3076, %v8290, %v8291
  %v8293 = vrot.slane %v8025, 5
  %v8294 = vrot.slane %v8293, 4
  %v8295 = vrot.slane %v8026, 5
  %v8296 = vsel %vm3076, %v8294, %v8295
  %v8297 = vrot.slane %v8295, 4
  %v8298 = vrot.slane %v8027, 5
  %v8299 = vsel %vm3076, %v8297, %v8298
  %v8300 = vrot.slane %v8028, 5
  %v8301 = vrot.slane %v8300, 4
  %v8302 = vrot.slane %v8029, 5
  %v8303 = vsel %vm3076, %v8301, %v8302
  %v8304 = vrot.slane %v8302, 4
  %v8305 = vrot.slane %v8030, 5
  %v8306 = vsel %vm3076, %v8304, %v8305
  %v8307 = vrot.slane %v8031, 5
  %v8308 = vrot.slane %v8307, 4
  %v8309 = vrot.slane %v8032, 5
  %v8310 = vsel %vm3076, %v8308, %v8309
  %v8311 = vrot.slane %v8309, 4
  %v8312 = vrot.slane %v8033, 5
  %v8313 = vsel %vm3076, %v8311, %v8312
  %v8314 = vrot.slane %v8034, 5
  %v8315 = vrot.slane %v8314, 4
  %v8316 = vrot.slane %v8035, 5
  %v8317 = vsel %vm3076, %v8315, %v8316
  %v8318 = vrot.slane %v8316, 4
  %v8319 = vrot.slane %v8036, 5
  %v8320 = vsel %vm3076, %v8318, %v8319
  %v8321 = vrot.slane %v8037, 5
  %v8322 = vrot.slane %v8321, 4
  %v8323 = vrot.slane %v8038, 5
  %v8324 = vsel %vm3076, %v8322, %v8323
  %v8325 = vrot.slane %v8323, 4
  %v8326 = vrot.slane %v8039, 5
  %v8327 = vsel %vm3076, %v8325, %v8326
  %v8328 = vrot.slane %v8040, 5
  %v8329 = vrot.slane %v8328, 4
  %v8330 = vrot.slane %v8041, 5
  %v8331 = vsel %vm3076, %v8329, %v8330
  %v8332 = vrot.slane %v8330, 4
  %v8333 = vrot.slane %v8042, 5
  %v8334 = vsel %vm3076, %v8332, %v8333
  %v8335 = vrot.slane %v8043, 5
  %v8336 = vrot.slane %v8335, 4
  %v8337 = vrot.slane %v8044, 5
  %v8338 = vsel %vm3076, %v8336, %v8337
  %v8339 = vrot.slane %v8337, 4
  %v8340 = vrot.slane %v8045, 5
  %v8341 = vsel %vm3076, %v8339, %v8340
  %v8342 = vrot.slane %v8046, 5
  %v8343 = vrot.slane %v8342, 4
  %v8344 = vrot.slane %v8047, 5
  %v8345 = vsel %vm3076, %v8343, %v8344
  %v8346 = vrot.slane %v8344, 4
  %v8347 = vrot.slane %v8048, 5
  %v8348 = vsel %vm3076, %v8346, %v8347
  %v8349 = vrot.slane %v8049, 5
  %v8350 = vrot.slane %v8349, 4
  %v8351 = vrot.slane %v8050, 5
  %v8352 = vsel %vm3076, %v8350, %v8351
  %v8353 = vrot.slane %v8351, 4
  %v8354 = vrot.slane %v8051, 5
  %v8355 = vsel %vm3076, %v8353, %v8354
  %v8356 = vrot.slane %v8052, 5
  %v8357 = vrot.slane %v8356, 4
  %v8358 = vrot.slane %v8053, 5
  %v8359 = vsel %vm3076, %v8357, %v8358
  %v8360 = vrot.slane %v8358, 4
  %v8361 = vrot.slane %v8054, 5
  %v8362 = vsel %vm3076, %v8360, %v8361
  %v8363 = vrot.slane %v8055, 5
  %v8364 = vrot.slane %v8363, 4
  %v8365 = vrot.slane %v8056, 5
  %v8366 = vsel %vm3076, %v8364, %v8365
  %v8367 = vrot.slane %v8365, 4
  %v8368 = vrot.slane %v8057, 5
  %v8369 = vsel %vm3076, %v8367, %v8368
  %v8370 = vrot.slane %v8058, 5
  %v8371 = vrot.slane %v8370, 4
  %v8372 = vrot.slane %v8059, 5
  %v8373 = vsel %vm3076, %v8371, %v8372
  %v8374 = vrot.slane %v8372, 4
  %v8375 = vrot.slane %v8060, 5
  %v8376 = vsel %vm3076, %v8374, %v8375
  %v8377 = vrot.slane %v8061, 5
  %v8378 = vrot.slane %v8377, 4
  %v8379 = vrot.slane %v8062, 5
  %v8380 = vsel %vm3076, %v8378, %v8379
  %v8381 = vrot.slane %v8379, 4
  %v8382 = vrot.slane %v8063, 5
  %v8383 = vsel %vm3076, %v8381, %v8382
  %8384 = vrot.lane.b32.xlu0 %v8163, 8
  %v8385 = vpop.permute.xlu0 %8384
  %8386 = vrot.lane.b32.xlu0 %v8166, 8
  %v8387 = vpop.permute.xlu0 %8386
  %8388 = vrot.lane.b32.xlu0 %v8170, 8
  %v8389 = vpop.permute.xlu0 %8388
  %8390 = vrot.lane.b32.xlu0 %v8173, 8
  %v8391 = vpop.permute.xlu0 %8390
  %8392 = vrot.lane.b32.xlu0 %v8177, 8
  %v8393 = vpop.permute.xlu0 %8392
  %8394 = vrot.lane.b32.xlu0 %v8180, 8
  %v8395 = vpop.permute.xlu0 %8394
  %8396 = vrot.lane.b32.xlu0 %v8184, 8
  %v8397 = vpop.permute.xlu0 %8396
  %8398 = vrot.lane.b32.xlu0 %v8187, 8
  %v8399 = vpop.permute.xlu0 %8398
  %8400 = vrot.lane.b32.xlu0 %v8191, 8
  %v8401 = vpop.permute.xlu0 %8400
  %8402 = vrot.lane.b32.xlu0 %v8194, 8
  %v8403 = vpop.permute.xlu0 %8402
  %8404 = vrot.lane.b32.xlu0 %v8198, 8
  %v8405 = vpop.permute.xlu0 %8404
  %8406 = vrot.lane.b32.xlu0 %v8201, 8
  %v8407 = vpop.permute.xlu0 %8406
  %8408 = vrot.lane.b32.xlu0 %v8205, 8
  %v8409 = vpop.permute.xlu0 %8408
  %8410 = vrot.lane.b32.xlu0 %v8208, 8
  %v8411 = vpop.permute.xlu0 %8410
  %8412 = vrot.lane.b32.xlu0 %v8212, 8
  %v8413 = vpop.permute.xlu0 %8412
  %8414 = vrot.lane.b32.xlu0 %v8215, 8
  %v8415 = vpop.permute.xlu0 %8414
  %8416 = vrot.lane.b32.xlu0 %v8219, 8
  %v8417 = vpop.permute.xlu0 %8416
  %8418 = vrot.lane.b32.xlu0 %v8222, 8
  %v8419 = vpop.permute.xlu0 %8418
  %8420 = vrot.lane.b32.xlu0 %v8226, 8
  %v8421 = vpop.permute.xlu0 %8420
  %8422 = vrot.lane.b32.xlu0 %v8229, 8
  %v8423 = vpop.permute.xlu0 %8422
  %8424 = vrot.lane.b32.xlu0 %v8233, 8
  %v8425 = vpop.permute.xlu0 %8424
  %8426 = vrot.lane.b32.xlu0 %v8236, 8
  %v8427 = vpop.permute.xlu0 %8426
  %8428 = vrot.lane.b32.xlu0 %v8240, 8
  %v8429 = vpop.permute.xlu0 %8428
  %8430 = vrot.lane.b32.xlu0 %v8243, 8
  %v8431 = vpop.permute.xlu0 %8430
  %8432 = vrot.lane.b32.xlu0 %v8247, 8
  %v8433 = vpop.permute.xlu0 %8432
  %8434 = vrot.lane.b32.xlu0 %v8250, 8
  %v8435 = vpop.permute.xlu0 %8434
  %8436 = vrot.lane.b32.xlu0 %v8254, 8
  %v8437 = vpop.permute.xlu0 %8436
  %8438 = vrot.lane.b32.xlu0 %v8257, 8
  %v8439 = vpop.permute.xlu0 %8438
  %8440 = vrot.lane.b32.xlu0 %v8261, 8
  %v8441 = vpop.permute.xlu0 %8440
  %8442 = vrot.lane.b32.xlu0 %v8264, 8
  %v8443 = vpop.permute.xlu0 %8442
  %8444 = vrot.lane.b32.xlu0 %v8268, 8
  %v8445 = vpop.permute.xlu0 %8444
  %8446 = vrot.lane.b32.xlu0 %v8271, 8
  %v8447 = vpop.permute.xlu0 %8446
  %8448 = vrot.lane.b32.xlu0 %v8275, 8
  %v8449 = vpop.permute.xlu0 %8448
  %8450 = vrot.lane.b32.xlu0 %v8278, 8
  %v8451 = vpop.permute.xlu0 %8450
  %8452 = vrot.lane.b32.xlu0 %v8282, 8
  %v8453 = vpop.permute.xlu0 %8452
  %8454 = vrot.lane.b32.xlu0 %v8285, 8
  %v8455 = vpop.permute.xlu0 %8454
  %8456 = vrot.lane.b32.xlu0 %v8289, 8
  %v8457 = vpop.permute.xlu0 %8456
  %8458 = vrot.lane.b32.xlu0 %v8292, 8
  %v8459 = vpop.permute.xlu0 %8458
  %8460 = vrot.lane.b32.xlu0 %v8296, 8
  %v8461 = vpop.permute.xlu0 %8460
  %8462 = vrot.lane.b32.xlu0 %v8299, 8
  %v8463 = vpop.permute.xlu0 %8462
  %8464 = vrot.lane.b32.xlu0 %v8303, 8
  %v8465 = vpop.permute.xlu0 %8464
  %8466 = vrot.lane.b32.xlu0 %v8306, 8
  %v8467 = vpop.permute.xlu0 %8466
  %8468 = vrot.lane.b32.xlu0 %v8310, 8
  %v8469 = vpop.permute.xlu0 %8468
  %8470 = vrot.lane.b32.xlu0 %v8313, 8
  %v8471 = vpop.permute.xlu0 %8470
  %8472 = vrot.lane.b32.xlu0 %v8317, 8
  %v8473 = vpop.permute.xlu0 %8472
  %8474 = vrot.lane.b32.xlu0 %v8320, 8
  %v8475 = vpop.permute.xlu0 %8474
  %8476 = vrot.lane.b32.xlu0 %v8324, 8
  %v8477 = vpop.permute.xlu0 %8476
  %8478 = vrot.lane.b32.xlu0 %v8327, 8
  %v8479 = vpop.permute.xlu0 %8478
  %8480 = vrot.lane.b32.xlu0 %v8331, 8
  %v8481 = vpop.permute.xlu0 %8480
  %8482 = vrot.lane.b32.xlu0 %v8334, 8
  %v8483 = vpop.permute.xlu0 %8482
  %8484 = vrot.lane.b32.xlu0 %v8338, 8
  %v8485 = vpop.permute.xlu0 %8484
  %8486 = vrot.lane.b32.xlu0 %v8341, 8
  %v8487 = vpop.permute.xlu0 %8486
  %8488 = vrot.lane.b32.xlu0 %v8345, 8
  %v8489 = vpop.permute.xlu0 %8488
  %8490 = vrot.lane.b32.xlu0 %v8348, 8
  %v8491 = vpop.permute.xlu0 %8490
  %8492 = vrot.lane.b32.xlu0 %v8352, 8
  %v8493 = vpop.permute.xlu0 %8492
  %8494 = vrot.lane.b32.xlu0 %v8355, 8
  %v8495 = vpop.permute.xlu0 %8494
  %8496 = vrot.lane.b32.xlu0 %v8359, 8
  %v8497 = vpop.permute.xlu0 %8496
  %8498 = vrot.lane.b32.xlu0 %v8362, 8
  %v8499 = vpop.permute.xlu0 %8498
  %8500 = vrot.lane.b32.xlu0 %v8366, 8
  %v8501 = vpop.permute.xlu0 %8500
  %8502 = vrot.lane.b32.xlu0 %v8369, 8
  %v8503 = vpop.permute.xlu0 %8502
  %8504 = vrot.lane.b32.xlu0 %v8373, 8
  %v8505 = vpop.permute.xlu0 %8504
  %8506 = vrot.lane.b32.xlu0 %v8376, 8
  %v8507 = vpop.permute.xlu0 %8506
  %8508 = vrot.lane.b32.xlu0 %v8380, 8
  %v8509 = vpop.permute.xlu0 %8508
  %8510 = vrot.lane.b32.xlu0 %v8383, 8
  %v8511 = vpop.permute.xlu0 %8510
  %8576 = vst.msk [vmem:[#allocation4] sm:$0xf] %vm3493, %v8385
  %8577 = vst.msk [vmem:[#allocation4 + $0x4] sm:$0xf] %vm3493, %v8387
  %8578 = vst.msk [vmem:[#allocation4 + $0x8] sm:$0xf] %vm3493, %v8389
  %8579 = vst.msk [vmem:[#allocation4 + $0xc] sm:$0xf] %vm3493, %v8391
  %8580 = vst.msk [vmem:[#allocation4 + $0x10] sm:$0xf] %vm3493, %v8393
  %8581 = vst.msk [vmem:[#allocation4 + $0x14] sm:$0xf] %vm3493, %v8395
  %8582 = vst.msk [vmem:[#allocation4 + $0x18] sm:$0xf] %vm3493, %v8397
  %8583 = vst.msk [vmem:[#allocation4 + $0x1c] sm:$0xf] %vm3493, %v8399
  %8584 = vst.msk [vmem:[#allocation4 + $0x20] sm:$0xf] %vm3493, %v8401
  %8585 = vst.msk [vmem:[#allocation4 + $0x24] sm:$0xf] %vm3493, %v8403
  %8586 = vst.msk [vmem:[#allocation4 + $0x28] sm:$0xf] %vm3493, %v8405
  %8587 = vst.msk [vmem:[#allocation4 + $0x2c] sm:$0xf] %vm3493, %v8407
  %8588 = vst.msk [vmem:[#allocation4 + $0x30] sm:$0xf] %vm3493, %v8409
  %8589 = vst.msk [vmem:[#allocation4 + $0x34] sm:$0xf] %vm3493, %v8411
  %8590 = vst.msk [vmem:[#allocation4 + $0x38] sm:$0xf] %vm3493, %v8413
  %8591 = vst.msk [vmem:[#allocation4 + $0x3c] sm:$0xf] %vm3493, %v8415
  %8592 = vst.msk [vmem:[#allocation4 + $0x40] sm:$0xf] %vm3493, %v8417
  %8593 = vst.msk [vmem:[#allocation4 + $0x44] sm:$0xf] %vm3493, %v8419
  %8594 = vst.msk [vmem:[#allocation4 + $0x48] sm:$0xf] %vm3493, %v8421
  %8595 = vst.msk [vmem:[#allocation4 + $0x4c] sm:$0xf] %vm3493, %v8423
  %8596 = vst.msk [vmem:[#allocation4 + $0x50] sm:$0xf] %vm3493, %v8425
  %8597 = vst.msk [vmem:[#allocation4 + $0x54] sm:$0xf] %vm3493, %v8427
  %8598 = vst.msk [vmem:[#allocation4 + $0x58] sm:$0xf] %vm3493, %v8429
  %8599 = vst.msk [vmem:[#allocation4 + $0x5c] sm:$0xf] %vm3493, %v8431
  %8600 = vst.msk [vmem:[#allocation4 + $0x60] sm:$0xf] %vm3493, %v8433
  %8601 = vst.msk [vmem:[#allocation4 + $0x64] sm:$0xf] %vm3493, %v8435
  %8602 = vst.msk [vmem:[#allocation4 + $0x68] sm:$0xf] %vm3493, %v8437
  %8603 = vst.msk [vmem:[#allocation4 + $0x6c] sm:$0xf] %vm3493, %v8439
  %8604 = vst.msk [vmem:[#allocation4 + $0x70] sm:$0xf] %vm3493, %v8441
  %8605 = vst.msk [vmem:[#allocation4 + $0x74] sm:$0xf] %vm3493, %v8443
  %8606 = vst.msk [vmem:[#allocation4 + $0x78] sm:$0xf] %vm3493, %v8445
  %8607 = vst.msk [vmem:[#allocation4 + $0x7c] sm:$0xf] %vm3493, %v8447
  %8608 = vst.msk [vmem:[#allocation4 + $0x80] sm:$0xf] %vm3493, %v8449
  %8609 = vst.msk [vmem:[#allocation4 + $0x84] sm:$0xf] %vm3493, %v8451
  %8610 = vst.msk [vmem:[#allocation4 + $0x88] sm:$0xf] %vm3493, %v8453
  %8611 = vst.msk [vmem:[#allocation4 + $0x8c] sm:$0xf] %vm3493, %v8455
  %8612 = vst.msk [vmem:[#allocation4 + $0x90] sm:$0xf] %vm3493, %v8457
  %8613 = vst.msk [vmem:[#allocation4 + $0x94] sm:$0xf] %vm3493, %v8459
  %8614 = vst.msk [vmem:[#allocation4 + $0x98] sm:$0xf] %vm3493, %v8461
  %8615 = vst.msk [vmem:[#allocation4 + $0x9c] sm:$0xf] %vm3493, %v8463
  %8616 = vst.msk [vmem:[#allocation4 + $0xa0] sm:$0xf] %vm3493, %v8465
  %8617 = vst.msk [vmem:[#allocation4 + $0xa4] sm:$0xf] %vm3493, %v8467
  %8618 = vst.msk [vmem:[#allocation4 + $0xa8] sm:$0xf] %vm3493, %v8469
  %8619 = vst.msk [vmem:[#allocation4 + $0xac] sm:$0xf] %vm3493, %v8471
  %8620 = vst.msk [vmem:[#allocation4 + $0xb0] sm:$0xf] %vm3493, %v8473
  %8621 = vst.msk [vmem:[#allocation4 + $0xb4] sm:$0xf] %vm3493, %v8475
  %8622 = vst.msk [vmem:[#allocation4 + $0xb8] sm:$0xf] %vm3493, %v8477
  %8623 = vst.msk [vmem:[#allocation4 + $0xbc] sm:$0xf] %vm3493, %v8479
  %8624 = vst.msk [vmem:[#allocation4 + $0xc0] sm:$0xf] %vm3493, %v8481
  %8625 = vst.msk [vmem:[#allocation4 + $0xc4] sm:$0xf] %vm3493, %v8483
  %8626 = vst.msk [vmem:[#allocation4 + $0xc8] sm:$0xf] %vm3493, %v8485
  %8627 = vst.msk [vmem:[#allocation4 + $0xcc] sm:$0xf] %vm3493, %v8487
  %8628 = vst.msk [vmem:[#allocation4 + $0xd0] sm:$0xf] %vm3493, %v8489
  %8629 = vst.msk [vmem:[#allocation4 + $0xd4] sm:$0xf] %vm3493, %v8491
  %8630 = vst.msk [vmem:[#allocation4 + $0xd8] sm:$0xf] %vm3493, %v8493
  %8631 = vst.msk [vmem:[#allocation4 + $0xdc] sm:$0xf] %vm3493, %v8495
  %8632 = vst.msk [vmem:[#allocation4 + $0xe0] sm:$0xf] %vm3493, %v8497
  %8633 = vst.msk [vmem:[#allocation4 + $0xe4] sm:$0xf] %vm3493, %v8499
  %8634 = vst.msk [vmem:[#allocation4 + $0xe8] sm:$0xf] %vm3493, %v8501
  %8635 = vst.msk [vmem:[#allocation4 + $0xec] sm:$0xf] %vm3493, %v8503
  %8636 = vst.msk [vmem:[#allocation4 + $0xf0] sm:$0xf] %vm3493, %v8505
  %8637 = vst.msk [vmem:[#allocation4 + $0xf4] sm:$0xf] %vm3493, %v8507
  %8638 = vst.msk [vmem:[#allocation4 + $0xf8] sm:$0xf] %vm3493, %v8509
  %8639 = vst.msk [vmem:[#allocation4 + $0xfc] sm:$0xf] %vm3493, %v8511
  %v8640 = vld [vmem:[#allocation4] sm:$0xf]
  %v8641 = vld [vmem:[#allocation4 + $0x4] sm:$0xf]
  %v8642 = vld [vmem:[#allocation4 + $0x8] sm:$0xf]
  %v8643 = vld [vmem:[#allocation4 + $0xc] sm:$0xf]
  %v8644 = vld [vmem:[#allocation4 + $0x10] sm:$0xf]
  %v8645 = vld [vmem:[#allocation4 + $0x14] sm:$0xf]
  %v8646 = vld [vmem:[#allocation4 + $0x18] sm:$0xf]
  %v8647 = vld [vmem:[#allocation4 + $0x1c] sm:$0xf]
  %v8648 = vld [vmem:[#allocation4 + $0x20] sm:$0xf]
  %v8649 = vld [vmem:[#allocation4 + $0x24] sm:$0xf]
  %v8650 = vld [vmem:[#allocation4 + $0x28] sm:$0xf]
  %v8651 = vld [vmem:[#allocation4 + $0x2c] sm:$0xf]
  %v8652 = vld [vmem:[#allocation4 + $0x30] sm:$0xf]
  %v8653 = vld [vmem:[#allocation4 + $0x34] sm:$0xf]
  %v8654 = vld [vmem:[#allocation4 + $0x38] sm:$0xf]
  %v8655 = vld [vmem:[#allocation4 + $0x3c] sm:$0xf]
  %v8656 = vld [vmem:[#allocation4 + $0x40] sm:$0xf]
  %v8657 = vld [vmem:[#allocation4 + $0x44] sm:$0xf]
  %v8658 = vld [vmem:[#allocation4 + $0x48] sm:$0xf]
  %v8659 = vld [vmem:[#allocation4 + $0x4c] sm:$0xf]
  %v8660 = vld [vmem:[#allocation4 + $0x50] sm:$0xf]
  %v8661 = vld [vmem:[#allocation4 + $0x54] sm:$0xf]
  %v8662 = vld [vmem:[#allocation4 + $0x58] sm:$0xf]
  %v8663 = vld [vmem:[#allocation4 + $0x5c] sm:$0xf]
  %v8664 = vld [vmem:[#allocation4 + $0x60] sm:$0xf]
  %v8665 = vld [vmem:[#allocation4 + $0x64] sm:$0xf]
  %v8666 = vld [vmem:[#allocation4 + $0x68] sm:$0xf]
  %v8667 = vld [vmem:[#allocation4 + $0x6c] sm:$0xf]
  %v8668 = vld [vmem:[#allocation4 + $0x70] sm:$0xf]
  %v8669 = vld [vmem:[#allocation4 + $0x74] sm:$0xf]
  %v8670 = vld [vmem:[#allocation4 + $0x78] sm:$0xf]
  %v8671 = vld [vmem:[#allocation4 + $0x7c] sm:$0xf]
  %v8672 = vld [vmem:[#allocation4 + $0x80] sm:$0xf]
  %v8673 = vld [vmem:[#allocation4 + $0x84] sm:$0xf]
  %v8674 = vld [vmem:[#allocation4 + $0x88] sm:$0xf]
  %v8675 = vld [vmem:[#allocation4 + $0x8c] sm:$0xf]
  %v8676 = vld [vmem:[#allocation4 + $0x90] sm:$0xf]
  %v8677 = vld [vmem:[#allocation4 + $0x94] sm:$0xf]
  %v8678 = vld [vmem:[#allocation4 + $0x98] sm:$0xf]
  %v8679 = vld [vmem:[#allocation4 + $0x9c] sm:$0xf]
  %v8680 = vld [vmem:[#allocation4 + $0xa0] sm:$0xf]
  %v8681 = vld [vmem:[#allocation4 + $0xa4] sm:$0xf]
  %v8682 = vld [vmem:[#allocation4 + $0xa8] sm:$0xf]
  %v8683 = vld [vmem:[#allocation4 + $0xac] sm:$0xf]
  %v8684 = vld [vmem:[#allocation4 + $0xb0] sm:$0xf]
  %v8685 = vld [vmem:[#allocation4 + $0xb4] sm:$0xf]
  %v8686 = vld [vmem:[#allocation4 + $0xb8] sm:$0xf]
  %v8687 = vld [vmem:[#allocation4 + $0xbc] sm:$0xf]
  %v8688 = vld [vmem:[#allocation4 + $0xc0] sm:$0xf]
  %v8689 = vld [vmem:[#allocation4 + $0xc4] sm:$0xf]
  %v8690 = vld [vmem:[#allocation4 + $0xc8] sm:$0xf]
  %v8691 = vld [vmem:[#allocation4 + $0xcc] sm:$0xf]
  %v8692 = vld [vmem:[#allocation4 + $0xd0] sm:$0xf]
  %v8693 = vld [vmem:[#allocation4 + $0xd4] sm:$0xf]
  %v8694 = vld [vmem:[#allocation4 + $0xd8] sm:$0xf]
  %v8695 = vld [vmem:[#allocation4 + $0xdc] sm:$0xf]
  %v8696 = vld [vmem:[#allocation4 + $0xe0] sm:$0xf]
  %v8697 = vld [vmem:[#allocation4 + $0xe4] sm:$0xf]
  %v8698 = vld [vmem:[#allocation4 + $0xe8] sm:$0xf]
  %v8699 = vld [vmem:[#allocation4 + $0xec] sm:$0xf]
  %v8700 = vld [vmem:[#allocation4 + $0xf0] sm:$0xf]
  %v8701 = vld [vmem:[#allocation4 + $0xf4] sm:$0xf]
  %v8702 = vld [vmem:[#allocation4 + $0xf8] sm:$0xf]
  %v8703 = vld [vmem:[#allocation4 + $0xfc] sm:$0xf]
  %s8704 = scalar_lea.vmem %s3, 16
  %v8705 = vld [vmem:[%s8704] sm:$0xf]
  %v8706 = vld [vmem:[%s8704 + $0x4] sm:$0x3]
  %v8771 = vunpack.c.l.b16 %v8640
  %v8772 = vunpack.c.l.b16 %v8641
  %v8773 = vunpack.c.l.b16 %v8642
  %v8774 = vunpack.c.l.b16 %v8643
  %v8775 = vunpack.c.l.b16 %v8644
  %v8776 = vunpack.c.l.b16 %v8645
  %v8777 = vunpack.c.l.b16 %v8646
  %v8778 = vunpack.c.l.b16 %v8647
  %v8779 = vunpack.c.l.b16 %v8648
  %v8780 = vunpack.c.l.b16 %v8649
  %v8781 = vunpack.c.l.b16 %v8650
  %v8782 = vunpack.c.l.b16 %v8651
  %v8783 = vunpack.c.l.b16 %v8652
  %v8784 = vunpack.c.l.b16 %v8653
  %v8785 = vunpack.c.l.b16 %v8654
  %v8786 = vunpack.c.l.b16 %v8655
  %v8787 = vunpack.c.l.b16 %v8656
  %v8788 = vunpack.c.l.b16 %v8657
  %v8789 = vunpack.c.l.b16 %v8658
  %v8790 = vunpack.c.l.b16 %v8659
  %v8791 = vunpack.c.l.b16 %v8660
  %v8792 = vunpack.c.l.b16 %v8661
  %v8793 = vunpack.c.l.b16 %v8662
  %v8794 = vunpack.c.l.b16 %v8663
  %v8795 = vunpack.c.l.b16 %v8664
  %v8796 = vunpack.c.l.b16 %v8665
  %v8797 = vunpack.c.l.b16 %v8666
  %v8798 = vunpack.c.l.b16 %v8667
  %v8799 = vunpack.c.l.b16 %v8668
  %v8800 = vunpack.c.l.b16 %v8669
  %v8801 = vunpack.c.l.b16 %v8670
  %v8802 = vunpack.c.l.b16 %v8671
  %v8803 = vunpack.c.l.b16 %v8672
  %v8804 = vunpack.c.l.b16 %v8673
  %v8805 = vunpack.c.l.b16 %v8674
  %v8806 = vunpack.c.l.b16 %v8675
  %v8807 = vunpack.c.l.b16 %v8676
  %v8808 = vunpack.c.l.b16 %v8677
  %v8809 = vunpack.c.l.b16 %v8678
  %v8810 = vunpack.c.l.b16 %v8679
  %v8811 = vunpack.c.l.b16 %v8680
  %v8812 = vunpack.c.l.b16 %v8681
  %v8813 = vunpack.c.l.b16 %v8682
  %v8814 = vunpack.c.l.b16 %v8683
  %v8815 = vunpack.c.l.b16 %v8684
  %v8816 = vunpack.c.l.b16 %v8685
  %v8817 = vunpack.c.l.b16 %v8686
  %v8818 = vunpack.c.l.b16 %v8687
  %v8819 = vunpack.c.l.b16 %v8688
  %v8820 = vunpack.c.l.b16 %v8689
  %v8821 = vunpack.c.l.b16 %v8690
  %v8822 = vunpack.c.l.b16 %v8691
  %v8823 = vunpack.c.l.b16 %v8692
  %v8824 = vunpack.c.l.b16 %v8693
  %v8825 = vunpack.c.l.b16 %v8694
  %v8826 = vunpack.c.l.b16 %v8695
  %v8827 = vunpack.c.l.b16 %v8696
  %v8828 = vunpack.c.l.b16 %v8697
  %v8829 = vunpack.c.l.b16 %v8698
  %v8830 = vunpack.c.l.b16 %v8699
  %v8831 = vunpack.c.l.b16 %v8700
  %v8832 = vunpack.c.l.b16 %v8701
  %v8833 = vunpack.c.l.b16 %v8702
  %v8834 = vunpack.c.l.b16 %v8703
  %v8835 = vpack.c.b16 %v8772, %v8771
  %v8836 = vpack.c.b16 %v8774, %v8773
  %v8837 = vpack.c.b16 %v8776, %v8775
  %v8838 = vpack.c.b16 %v8778, %v8777
  %v8839 = vpack.c.b16 %v8780, %v8779
  %v8840 = vpack.c.b16 %v8782, %v8781
  %v8841 = vpack.c.b16 %v8784, %v8783
  %v8842 = vpack.c.b16 %v8786, %v8785
  %v8843 = vpack.c.b16 %v8788, %v8787
  %v8844 = vpack.c.b16 %v8790, %v8789
  %v8845 = vpack.c.b16 %v8792, %v8791
  %v8846 = vpack.c.b16 %v8794, %v8793
  %v8847 = vpack.c.b16 %v8796, %v8795
  %v8848 = vpack.c.b16 %v8798, %v8797
  %v8849 = vpack.c.b16 %v8800, %v8799
  %v8850 = vpack.c.b16 %v8802, %v8801
  %v8851 = vpack.c.b16 %v8804, %v8803
  %v8852 = vpack.c.b16 %v8806, %v8805
  %v8853 = vpack.c.b16 %v8808, %v8807
  %v8854 = vpack.c.b16 %v8810, %v8809
  %v8855 = vpack.c.b16 %v8812, %v8811
  %v8856 = vpack.c.b16 %v8814, %v8813
  %v8857 = vpack.c.b16 %v8816, %v8815
  %v8858 = vpack.c.b16 %v8818, %v8817
  %v8859 = vpack.c.b16 %v8820, %v8819
  %v8860 = vpack.c.b16 %v8822, %v8821
  %v8861 = vpack.c.b16 %v8824, %v8823
  %v8862 = vpack.c.b16 %v8826, %v8825
  %v8863 = vpack.c.b16 %v8828, %v8827
  %v8864 = vpack.c.b16 %v8830, %v8829
  %v8865 = vpack.c.b16 %v8832, %v8831
  %v8866 = vpack.c.b16 %v8834, %v8833
  %v8869 = vunpack.c.l.b16 %v8705
  %v8870 = vunpack.c.l.b16 %v8706
  %v8871 = vpack.c.b16 %v8870, %v8869
  %v8873 = vsel %vm5776, %v8835, 0
  %v8876 = vsel %vm5776, %v8836, 0
  %v8879 = vsel %vm5776, %v8837, 0
  %v8882 = vsel %vm5776, %v8838, 0
  %v8885 = vsel %vm5776, %v8839, 0
  %v8888 = vsel %vm5776, %v8840, 0
  %v8891 = vsel %vm5776, %v8841, 0
  %v8894 = vsel %vm5776, %v8842, 0
  %v8897 = vsel %vm5776, %v8843, 0
  %v8900 = vsel %vm5776, %v8844, 0
  %v8903 = vsel %vm5776, %v8845, 0
  %v8906 = vsel %vm5776, %v8846, 0
  %v8909 = vsel %vm5776, %v8847, 0
  %v8912 = vsel %vm5776, %v8848, 0
  %v8915 = vsel %vm5776, %v8849, 0
  %v8918 = vsel %vm5776, %v8850, 0
  %v8921 = vsel %vm5776, %v8851, 0
  %v8924 = vsel %vm5776, %v8852, 0
  %v8927 = vsel %vm5776, %v8853, 0
  %v8930 = vsel %vm5776, %v8854, 0
  %v8933 = vsel %vm5776, %v8855, 0
  %v8936 = vsel %vm5776, %v8856, 0
  %v8939 = vsel %vm5776, %v8857, 0
  %v8942 = vsel %vm5776, %v8858, 0
  %v8945 = vsel %vm5776, %v8859, 0
  %v8948 = vsel %vm5776, %v8860, 0
  %v8951 = vsel %vm5776, %v8861, 0
  %v8954 = vsel %vm5776, %v8862, 0
  %v8957 = vsel %vm5776, %v8863, 0
  %v8960 = vsel %vm5776, %v8864, 0
  %v8963 = vsel %vm5776, %v8865, 0
  %v8966 = vsel %vm5776, %v8866, 0
  %v8969 = vsel %vm5873, %v8871, 0
  %8971 = vmatprep.subr.bf16.mxu0 0
  %8972 = vmatpush1.bf16.msra.mxu0 0
  %8973 = vmatprep.subr.bf16.mxu0 0
  %8974 = vmatpush1.bf16.msra.mxu0 0
  %8975 = vmatprep.subr.bf16.mxu0 0
  %8976 = vmatpush1.bf16.msra.mxu0 0
  %8977 = vmatprep.subr.bf16.mxu0 0
  %8978 = vmatpush1.bf16.msra.mxu0 0
  %8979 = vmatprep.subr.bf16.mxu0 0
  %8980 = vmatpush1.bf16.msra.mxu0 0
  %8981 = vmatprep.subr.bf16.mxu0 0
  %8982 = vmatpush1.bf16.msra.mxu0 0
  %8983 = vmatprep.subr.bf16.mxu0 0
  %8984 = vmatpush1.bf16.msra.mxu0 0
  %8985 = vmatprep.subr.bf16.mxu0 0
  %8986 = vmatpush1.bf16.msra.mxu0 %v8969
  %8987 = vmatprep.subr.bf16.mxu0 0
  %8988 = vmatpush2.bf16.msra.mxu0 0
  %8989 = vmatprep.subr.bf16.mxu0 0
  %8990 = vmatpush2.bf16.msra.mxu0 0
  %8991 = vmatprep.subr.bf16.mxu0 0
  %8992 = vmatpush2.bf16.msra.mxu0 0
  %8993 = vmatprep.subr.bf16.mxu0 0
  %8994 = vmatpush2.bf16.msra.mxu0 0
  %8995 = vmatprep.subr.bf16.mxu0 0
  %8996 = vmatpush2.bf16.msra.mxu0 0
  %8997 = vmatprep.subr.bf16.mxu0 0
  %8998 = vmatpush2.bf16.msra.mxu0 0
  %8999 = vmatprep.subr.bf16.mxu0 0
  %9000 = vmatpush2.bf16.msra.mxu0 0
  %9001 = vmatprep.subr.bf16.mxu0 0
  %9002 = vmatpush2.bf16.msra.mxu0 0
  %9003 = vmatprep.mubr.bf16.mxu0 0
  %9004 = vmatmul.mubr.bf16.gmra.mxu0 %v8873
  %v9005 = vpop.f32.mrf.mxu0
  %v9006 = vadd.f32 0.0, %v9005
  %v9007 = vpop.f32.mrf.mxu0
  %v9008 = vpop.f32.mrf.mxu0
  %v9009 = vadd.f32 0.0, %v9008
  %v9010 = vpop.f32.mrf.mxu0
  %9011 = vmatprep.mubr.bf16.mxu0 0
  %9012 = vmatmul.mubr.bf16.gmra.mxu0 %v8876
  %v9013 = vpop.f32.mrf.mxu0
  %v9014 = vadd.f32 0.0, %v9013
  %v9015 = vpop.f32.mrf.mxu0
  %v9016 = vpop.f32.mrf.mxu0
  %v9017 = vadd.f32 0.0, %v9016
  %v9018 = vpop.f32.mrf.mxu0
  %9019 = vmatprep.mubr.bf16.mxu0 0
  %9020 = vmatmul.mubr.bf16.gmra.mxu0 %v8879
  %v9021 = vpop.f32.mrf.mxu0
  %v9022 = vadd.f32 0.0, %v9021
  %v9023 = vpop.f32.mrf.mxu0
  %v9024 = vpop.f32.mrf.mxu0
  %v9025 = vadd.f32 0.0, %v9024
  %v9026 = vpop.f32.mrf.mxu0
  %9027 = vmatprep.mubr.bf16.mxu0 0
  %9028 = vmatmul.mubr.bf16.gmra.mxu0 %v8882
  %v9029 = vpop.f32.mrf.mxu0
  %v9030 = vadd.f32 0.0, %v9029
  %v9031 = vpop.f32.mrf.mxu0
  %v9032 = vpop.f32.mrf.mxu0
  %v9033 = vadd.f32 0.0, %v9032
  %v9034 = vpop.f32.mrf.mxu0
  %9035 = vmatprep.mubr.bf16.mxu0 0
  %9036 = vmatmul.mubr.bf16.gmra.mxu0 %v8885
  %v9037 = vpop.f32.mrf.mxu0
  %v9038 = vadd.f32 0.0, %v9037
  %v9039 = vpop.f32.mrf.mxu0
  %v9040 = vpop.f32.mrf.mxu0
  %v9041 = vadd.f32 0.0, %v9040
  %v9042 = vpop.f32.mrf.mxu0
  %9043 = vmatprep.mubr.bf16.mxu0 0
  %9044 = vmatmul.mubr.bf16.gmra.mxu0 %v8888
  %v9045 = vpop.f32.mrf.mxu0
  %v9046 = vadd.f32 0.0, %v9045
  %v9047 = vpop.f32.mrf.mxu0
  %v9048 = vpop.f32.mrf.mxu0
  %v9049 = vadd.f32 0.0, %v9048
  %v9050 = vpop.f32.mrf.mxu0
  %9051 = vmatprep.mubr.bf16.mxu0 0
  %9052 = vmatmul.mubr.bf16.gmra.mxu0 %v8891
  %v9053 = vpop.f32.mrf.mxu0
  %v9054 = vadd.f32 0.0, %v9053
  %v9055 = vpop.f32.mrf.mxu0
  %v9056 = vpop.f32.mrf.mxu0
  %v9057 = vadd.f32 0.0, %v9056
  %v9058 = vpop.f32.mrf.mxu0
  %9059 = vmatprep.mubr.bf16.mxu0 0
  %9060 = vmatmul.mubr.bf16.gmra.mxu0 %v8894
  %v9061 = vpop.f32.mrf.mxu0
  %v9062 = vadd.f32 0.0, %v9061
  %v9063 = vpop.f32.mrf.mxu0
  %v9064 = vpop.f32.mrf.mxu0
  %v9065 = vadd.f32 0.0, %v9064
  %v9066 = vpop.f32.mrf.mxu0
  %9067 = vmatprep.mubr.bf16.mxu0 0
  %9068 = vmatmul.mubr.bf16.gmra.mxu0 %v8897
  %v9069 = vpop.f32.mrf.mxu0
  %v9070 = vadd.f32 0.0, %v9069
  %v9071 = vpop.f32.mrf.mxu0
  %v9072 = vpop.f32.mrf.mxu0
  %v9073 = vadd.f32 0.0, %v9072
  %v9074 = vpop.f32.mrf.mxu0
  %9075 = vmatprep.mubr.bf16.mxu0 0
  %9076 = vmatmul.mubr.bf16.gmra.mxu0 %v8900
  %v9077 = vpop.f32.mrf.mxu0
  %v9078 = vadd.f32 0.0, %v9077
  %v9079 = vpop.f32.mrf.mxu0
  %v9080 = vpop.f32.mrf.mxu0
  %v9081 = vadd.f32 0.0, %v9080
  %v9082 = vpop.f32.mrf.mxu0
  %9083 = vmatprep.mubr.bf16.mxu0 0
  %9084 = vmatmul.mubr.bf16.gmra.mxu0 %v8903
  %v9085 = vpop.f32.mrf.mxu0
  %v9086 = vadd.f32 0.0, %v9085
  %v9087 = vpop.f32.mrf.mxu0
  %v9088 = vpop.f32.mrf.mxu0
  %v9089 = vadd.f32 0.0, %v9088
  %v9090 = vpop.f32.mrf.mxu0
  %9091 = vmatprep.mubr.bf16.mxu0 0
  %9092 = vmatmul.mubr.bf16.gmra.mxu0 %v8906
  %v9093 = vpop.f32.mrf.mxu0
  %v9094 = vadd.f32 0.0, %v9093
  %v9095 = vpop.f32.mrf.mxu0
  %v9096 = vpop.f32.mrf.mxu0
  %v9097 = vadd.f32 0.0, %v9096
  %v9098 = vpop.f32.mrf.mxu0
  %9099 = vmatprep.mubr.bf16.mxu0 0
  %9100 = vmatmul.mubr.bf16.gmra.mxu0 %v8909
  %v9101 = vpop.f32.mrf.mxu0
  %v9102 = vadd.f32 0.0, %v9101
  %v9103 = vpop.f32.mrf.mxu0
  %v9104 = vpop.f32.mrf.mxu0
  %v9105 = vadd.f32 0.0, %v9104
  %v9106 = vpop.f32.mrf.mxu0
  %9107 = vmatprep.mubr.bf16.mxu0 0
  %9108 = vmatmul.mubr.bf16.gmra.mxu0 %v8912
  %v9109 = vpop.f32.mrf.mxu0
  %v9110 = vadd.f32 0.0, %v9109
  %v9111 = vpop.f32.mrf.mxu0
  %v9112 = vpop.f32.mrf.mxu0
  %v9113 = vadd.f32 0.0, %v9112
  %v9114 = vpop.f32.mrf.mxu0
  %9115 = vmatprep.mubr.bf16.mxu0 0
  %9116 = vmatmul.mubr.bf16.gmra.mxu0 %v8915
  %v9117 = vpop.f32.mrf.mxu0
  %v9118 = vadd.f32 0.0, %v9117
  %v9119 = vpop.f32.mrf.mxu0
  %v9120 = vpop.f32.mrf.mxu0
  %v9121 = vadd.f32 0.0, %v9120
  %v9122 = vpop.f32.mrf.mxu0
  %9123 = vmatprep.mubr.bf16.mxu0 0
  %9124 = vmatmul.mubr.bf16.gmra.mxu0 %v8918
  %v9125 = vpop.f32.mrf.mxu0
  %v9126 = vadd.f32 0.0, %v9125
  %v9127 = vpop.f32.mrf.mxu0
  %v9128 = vpop.f32.mrf.mxu0
  %v9129 = vadd.f32 0.0, %v9128
  %v9130 = vpop.f32.mrf.mxu0
  %9131 = vmatprep.mubr.bf16.mxu0 0
  %9132 = vmatmul.mubr.bf16.gmra.mxu0 %v8921
  %v9133 = vpop.f32.mrf.mxu0
  %v9134 = vadd.f32 0.0, %v9133
  %v9135 = vpop.f32.mrf.mxu0
  %v9136 = vpop.f32.mrf.mxu0
  %v9137 = vadd.f32 0.0, %v9136
  %v9138 = vpop.f32.mrf.mxu0
  %9139 = vmatprep.mubr.bf16.mxu0 0
  %9140 = vmatmul.mubr.bf16.gmra.mxu0 %v8924
  %v9141 = vpop.f32.mrf.mxu0
  %v9142 = vadd.f32 0.0, %v9141
  %v9143 = vpop.f32.mrf.mxu0
  %v9144 = vpop.f32.mrf.mxu0
  %v9145 = vadd.f32 0.0, %v9144
  %v9146 = vpop.f32.mrf.mxu0
  %9147 = vmatprep.mubr.bf16.mxu0 0
  %9148 = vmatmul.mubr.bf16.gmra.mxu0 %v8927
  %v9149 = vpop.f32.mrf.mxu0
  %v9150 = vadd.f32 0.0, %v9149
  %v9151 = vpop.f32.mrf.mxu0
  %v9152 = vpop.f32.mrf.mxu0
  %v9153 = vadd.f32 0.0, %v9152
  %v9154 = vpop.f32.mrf.mxu0
  %9155 = vmatprep.mubr.bf16.mxu0 0
  %9156 = vmatmul.mubr.bf16.gmra.mxu0 %v8930
  %v9157 = vpop.f32.mrf.mxu0
  %v9158 = vadd.f32 0.0, %v9157
  %v9159 = vpop.f32.mrf.mxu0
  %v9160 = vpop.f32.mrf.mxu0
  %v9161 = vadd.f32 0.0, %v9160
  %v9162 = vpop.f32.mrf.mxu0
  %9163 = vmatprep.mubr.bf16.mxu0 0
  %9164 = vmatmul.mubr.bf16.gmra.mxu0 %v8933
  %v9165 = vpop.f32.mrf.mxu0
  %v9166 = vadd.f32 0.0, %v9165
  %v9167 = vpop.f32.mrf.mxu0
  %v9168 = vpop.f32.mrf.mxu0
  %v9169 = vadd.f32 0.0, %v9168
  %v9170 = vpop.f32.mrf.mxu0
  %9171 = vmatprep.mubr.bf16.mxu0 0
  %9172 = vmatmul.mubr.bf16.gmra.mxu0 %v8936
  %v9173 = vpop.f32.mrf.mxu0
  %v9174 = vadd.f32 0.0, %v9173
  %v9175 = vpop.f32.mrf.mxu0
  %v9176 = vpop.f32.mrf.mxu0
  %v9177 = vadd.f32 0.0, %v9176
  %v9178 = vpop.f32.mrf.mxu0
  %9179 = vmatprep.mubr.bf16.mxu0 0
  %9180 = vmatmul.mubr.bf16.gmra.mxu0 %v8939
  %v9181 = vpop.f32.mrf.mxu0
  %v9182 = vadd.f32 0.0, %v9181
  %v9183 = vpop.f32.mrf.mxu0
  %v9184 = vpop.f32.mrf.mxu0
  %v9185 = vadd.f32 0.0, %v9184
  %v9186 = vpop.f32.mrf.mxu0
  %9187 = vmatprep.mubr.bf16.mxu0 0
  %9188 = vmatmul.mubr.bf16.gmra.mxu0 %v8942
  %v9189 = vpop.f32.mrf.mxu0
  %v9190 = vadd.f32 0.0, %v9189
  %v9191 = vpop.f32.mrf.mxu0
  %v9192 = vpop.f32.mrf.mxu0
  %v9193 = vadd.f32 0.0, %v9192
  %v9194 = vpop.f32.mrf.mxu0
  %9195 = vmatprep.mubr.bf16.mxu0 0
  %9196 = vmatmul.mubr.bf16.gmra.mxu0 %v8945
  %v9197 = vpop.f32.mrf.mxu0
  %v9198 = vadd.f32 0.0, %v9197
  %v9199 = vpop.f32.mrf.mxu0
  %v9200 = vpop.f32.mrf.mxu0
  %v9201 = vadd.f32 0.0, %v9200
  %v9202 = vpop.f32.mrf.mxu0
  %9203 = vmatprep.mubr.bf16.mxu0 0
  %9204 = vmatmul.mubr.bf16.gmra.mxu0 %v8948
  %v9205 = vpop.f32.mrf.mxu0
  %v9206 = vadd.f32 0.0, %v9205
  %v9207 = vpop.f32.mrf.mxu0
  %v9208 = vpop.f32.mrf.mxu0
  %v9209 = vadd.f32 0.0, %v9208
  %v9210 = vpop.f32.mrf.mxu0
  %9211 = vmatprep.mubr.bf16.mxu0 0
  %9212 = vmatmul.mubr.bf16.gmra.mxu0 %v8951
  %v9213 = vpop.f32.mrf.mxu0
  %v9214 = vadd.f32 0.0, %v9213
  %v9215 = vpop.f32.mrf.mxu0
  %v9216 = vpop.f32.mrf.mxu0
  %v9217 = vadd.f32 0.0, %v9216
  %v9218 = vpop.f32.mrf.mxu0
  %9219 = vmatprep.mubr.bf16.mxu0 0
  %9220 = vmatmul.mubr.bf16.gmra.mxu0 %v8954
  %v9221 = vpop.f32.mrf.mxu0
  %v9222 = vadd.f32 0.0, %v9221
  %v9223 = vpop.f32.mrf.mxu0
  %v9224 = vpop.f32.mrf.mxu0
  %v9225 = vadd.f32 0.0, %v9224
  %v9226 = vpop.f32.mrf.mxu0
  %9227 = vmatprep.mubr.bf16.mxu0 0
  %9228 = vmatmul.mubr.bf16.gmra.mxu0 %v8957
  %v9229 = vpop.f32.mrf.mxu0
  %v9230 = vadd.f32 0.0, %v9229
  %v9231 = vpop.f32.mrf.mxu0
  %v9232 = vpop.f32.mrf.mxu0
  %v9233 = vadd.f32 0.0, %v9232
  %v9234 = vpop.f32.mrf.mxu0
  %9235 = vmatprep.mubr.bf16.mxu0 0
  %9236 = vmatmul.mubr.bf16.gmra.mxu0 %v8960
  %v9237 = vpop.f32.mrf.mxu0
  %v9238 = vadd.f32 0.0, %v9237
  %v9239 = vpop.f32.mrf.mxu0
  %v9240 = vpop.f32.mrf.mxu0
  %v9241 = vadd.f32 0.0, %v9240
  %v9242 = vpop.f32.mrf.mxu0
  %9243 = vmatprep.mubr.bf16.mxu0 0
  %9244 = vmatmul.mubr.bf16.gmra.mxu0 %v8963
  %v9245 = vpop.f32.mrf.mxu0
  %v9246 = vadd.f32 0.0, %v9245
  %v9247 = vpop.f32.mrf.mxu0
  %v9248 = vpop.f32.mrf.mxu0
  %v9249 = vadd.f32 0.0, %v9248
  %v9250 = vpop.f32.mrf.mxu0
  %9251 = vmatprep.mubr.bf16.mxu0 0
  %9252 = vmatmul.mubr.bf16.gmra.mxu0 %v8966
  %v9253 = vpop.f32.mrf.mxu0
  %v9254 = vadd.f32 0.0, %v9253
  %v9255 = vpop.f32.mrf.mxu0
  %v9256 = vpop.f32.mrf.mxu0
  %v9257 = vadd.f32 0.0, %v9256
  %v9258 = vpop.f32.mrf.mxu0
  %9259 = vdwg.mxu0
  %v9260 = vadd.f32 %v6465, %v9006
  %v9261 = vadd.f32 %v6468, %v9009
  %v9262 = vadd.f32 %v6473, %v9014
  %v9263 = vadd.f32 %v6476, %v9017
  %v9264 = vadd.f32 %v6481, %v9022
  %v9265 = vadd.f32 %v6484, %v9025
  %v9266 = vadd.f32 %v6489, %v9030
  %v9267 = vadd.f32 %v6492, %v9033
  %v9268 = vadd.f32 %v6497, %v9038
  %v9269 = vadd.f32 %v6500, %v9041
  %v9270 = vadd.f32 %v6505, %v9046
  %v9271 = vadd.f32 %v6508, %v9049
  %v9272 = vadd.f32 %v6513, %v9054
  %v9273 = vadd.f32 %v6516, %v9057
  %v9274 = vadd.f32 %v6521, %v9062
  %v9275 = vadd.f32 %v6524, %v9065
  %v9276 = vadd.f32 %v6529, %v9070
  %v9277 = vadd.f32 %v6532, %v9073
  %v9278 = vadd.f32 %v6537, %v9078
  %v9279 = vadd.f32 %v6540, %v9081
  %v9280 = vadd.f32 %v6545, %v9086
  %v9281 = vadd.f32 %v6548, %v9089
  %v9282 = vadd.f32 %v6553, %v9094
  %v9283 = vadd.f32 %v6556, %v9097
  %v9284 = vadd.f32 %v6561, %v9102
  %v9285 = vadd.f32 %v6564, %v9105
  %v9286 = vadd.f32 %v6569, %v9110
  %v9287 = vadd.f32 %v6572, %v9113
  %v9288 = vadd.f32 %v6577, %v9118
  %v9289 = vadd.f32 %v6580, %v9121
  %v9290 = vadd.f32 %v6585, %v9126
  %v9291 = vadd.f32 %v6588, %v9129
  %v9292 = vadd.f32 %v6593, %v9134
  %v9293 = vadd.f32 %v6596, %v9137
  %v9294 = vadd.f32 %v6601, %v9142
  %v9295 = vadd.f32 %v6604, %v9145
  %v9296 = vadd.f32 %v6609, %v9150
  %v9297 = vadd.f32 %v6612, %v9153
  %v9298 = vadd.f32 %v6617, %v9158
  %v9299 = vadd.f32 %v6620, %v9161
  %v9300 = vadd.f32 %v6625, %v9166
  %v9301 = vadd.f32 %v6628, %v9169
  %v9302 = vadd.f32 %v6633, %v9174
  %v9303 = vadd.f32 %v6636, %v9177
  %v9304 = vadd.f32 %v6641, %v9182
  %v9305 = vadd.f32 %v6644, %v9185
  %v9306 = vadd.f32 %v6649, %v9190
  %v9307 = vadd.f32 %v6652, %v9193
  %v9308 = vadd.f32 %v6657, %v9198
  %v9309 = vadd.f32 %v6660, %v9201
  %v9310 = vadd.f32 %v6665, %v9206
  %v9311 = vadd.f32 %v6668, %v9209
  %v9312 = vadd.f32 %v6673, %v9214
  %v9313 = vadd.f32 %v6676, %v9217
  %v9314 = vadd.f32 %v6681, %v9222
  %v9315 = vadd.f32 %v6684, %v9225
  %v9316 = vadd.f32 %v6689, %v9230
  %v9317 = vadd.f32 %v6692, %v9233
  %v9318 = vadd.f32 %v6697, %v9238
  %v9319 = vadd.f32 %v6700, %v9241
  %v9320 = vadd.f32 %v6705, %v9246
  %v9321 = vadd.f32 %v6708, %v9249
  %v9322 = vadd.f32 %v6713, %v9254
  %v9323 = vadd.f32 %v6716, %v9257
  %vm9324 = vcmp.gt.f32.partialorder %v9260, 0.0
  %vm9325 = vcmp.gt.f32.partialorder %v9261, 0.0
  %vm9326 = vcmp.gt.f32.partialorder %v9262, 0.0
  %vm9327 = vcmp.gt.f32.partialorder %v9263, 0.0
  %vm9328 = vcmp.gt.f32.partialorder %v9264, 0.0
  %vm9329 = vcmp.gt.f32.partialorder %v9265, 0.0
  %vm9330 = vcmp.gt.f32.partialorder %v9266, 0.0
  %vm9331 = vcmp.gt.f32.partialorder %v9267, 0.0
  %vm9332 = vcmp.gt.f32.partialorder %v9268, 0.0
  %vm9333 = vcmp.gt.f32.partialorder %v9269, 0.0
  %vm9334 = vcmp.gt.f32.partialorder %v9270, 0.0
  %vm9335 = vcmp.gt.f32.partialorder %v9271, 0.0
  %vm9336 = vcmp.gt.f32.partialorder %v9272, 0.0
  %vm9337 = vcmp.gt.f32.partialorder %v9273, 0.0
  %vm9338 = vcmp.gt.f32.partialorder %v9274, 0.0
  %vm9339 = vcmp.gt.f32.partialorder %v9275, 0.0
  %vm9340 = vcmp.gt.f32.partialorder %v9276, 0.0
  %vm9341 = vcmp.gt.f32.partialorder %v9277, 0.0
  %vm9342 = vcmp.gt.f32.partialorder %v9278, 0.0
  %vm9343 = vcmp.gt.f32.partialorder %v9279, 0.0
  %vm9344 = vcmp.gt.f32.partialorder %v9280, 0.0
  %vm9345 = vcmp.gt.f32.partialorder %v9281, 0.0
  %vm9346 = vcmp.gt.f32.partialorder %v9282, 0.0
  %vm9347 = vcmp.gt.f32.partialorder %v9283, 0.0
  %vm9348 = vcmp.gt.f32.partialorder %v9284, 0.0
  %vm9349 = vcmp.gt.f32.partialorder %v9285, 0.0
  %vm9350 = vcmp.gt.f32.partialorder %v9286, 0.0
  %vm9351 = vcmp.gt.f32.partialorder %v9287, 0.0
  %vm9352 = vcmp.gt.f32.partialorder %v9288, 0.0
  %vm9353 = vcmp.gt.f32.partialorder %v9289, 0.0
  %vm9354 = vcmp.gt.f32.partialorder %v9290, 0.0
  %vm9355 = vcmp.gt.f32.partialorder %v9291, 0.0
  %vm9356 = vcmp.gt.f32.partialorder %v9292, 0.0
  %vm9357 = vcmp.gt.f32.partialorder %v9293, 0.0
  %vm9358 = vcmp.gt.f32.partialorder %v9294, 0.0
  %vm9359 = vcmp.gt.f32.partialorder %v9295, 0.0
  %vm9360 = vcmp.gt.f32.partialorder %v9296, 0.0
  %vm9361 = vcmp.gt.f32.partialorder %v9297, 0.0
  %vm9362 = vcmp.gt.f32.partialorder %v9298, 0.0
  %vm9363 = vcmp.gt.f32.partialorder %v9299, 0.0
  %vm9364 = vcmp.gt.f32.partialorder %v9300, 0.0
  %vm9365 = vcmp.gt.f32.partialorder %v9301, 0.0
  %vm9366 = vcmp.gt.f32.partialorder %v9302, 0.0
  %vm9367 = vcmp.gt.f32.partialorder %v9303, 0.0
  %vm9368 = vcmp.gt.f32.partialorder %v9304, 0.0
  %vm9369 = vcmp.gt.f32.partialorder %v9305, 0.0
  %vm9370 = vcmp.gt.f32.partialorder %v9306, 0.0
  %vm9371 = vcmp.gt.f32.partialorder %v9307, 0.0
  %vm9372 = vcmp.gt.f32.partialorder %v9308, 0.0
  %vm9373 = vcmp.gt.f32.partialorder %v9309, 0.0
  %vm9374 = vcmp.gt.f32.partialorder %v9310, 0.0
  %vm9375 = vcmp.gt.f32.partialorder %v9311, 0.0
  %vm9376 = vcmp.gt.f32.partialorder %v9312, 0.0
  %vm9377 = vcmp.gt.f32.partialorder %v9313, 0.0
  %vm9378 = vcmp.gt.f32.partialorder %v9314, 0.0
  %vm9379 = vcmp.gt.f32.partialorder %v9315, 0.0
  %vm9380 = vcmp.gt.f32.partialorder %v9316, 0.0
  %vm9381 = vcmp.gt.f32.partialorder %v9317, 0.0
  %vm9382 = vcmp.gt.f32.partialorder %v9318, 0.0
  %vm9383 = vcmp.gt.f32.partialorder %v9319, 0.0
  %vm9384 = vcmp.gt.f32.partialorder %v9320, 0.0
  %vm9385 = vcmp.gt.f32.partialorder %v9321, 0.0
  %vm9386 = vcmp.gt.f32.partialorder %v9322, 0.0
  %vm9387 = vcmp.gt.f32.partialorder %v9323, 0.0
  %v9388 = vld [vmem:[%s4] sm:$0x1]
  %v9390 = vlaneseq
  %v9391 = vshrl.u32 %v9390, 7
  %v9392 = vsub.s32 0, %v9391
  %v9393 = vrot.slane %v9388, %v9392
  %v9395 = vmul.f32 %v9260, %v9393
  %v9396 = vmul.f32 %v9261, %v9393
  %v9397 = vmul.f32 %v9262, %v9393
  %v9398 = vmul.f32 %v9263, %v9393
  %v9399 = vmul.f32 %v9264, %v9393
  %v9400 = vmul.f32 %v9265, %v9393
  %v9401 = vmul.f32 %v9266, %v9393
  %v9402 = vmul.f32 %v9267, %v9393
  %v9403 = vmul.f32 %v9268, %v9393
  %v9404 = vmul.f32 %v9269, %v9393
  %v9405 = vmul.f32 %v9270, %v9393
  %v9406 = vmul.f32 %v9271, %v9393
  %v9407 = vmul.f32 %v9272, %v9393
  %v9408 = vmul.f32 %v9273, %v9393
  %v9409 = vmul.f32 %v9274, %v9393
  %v9410 = vmul.f32 %v9275, %v9393
  %v9411 = vmul.f32 %v9276, %v9393
  %v9412 = vmul.f32 %v9277, %v9393
  %v9413 = vmul.f32 %v9278, %v9393
  %v9414 = vmul.f32 %v9279, %v9393
  %v9415 = vmul.f32 %v9280, %v9393
  %v9416 = vmul.f32 %v9281, %v9393
  %v9417 = vmul.f32 %v9282, %v9393
  %v9418 = vmul.f32 %v9283, %v9393
  %v9419 = vmul.f32 %v9284, %v9393
  %v9420 = vmul.f32 %v9285, %v9393
  %v9421 = vmul.f32 %v9286, %v9393
  %v9422 = vmul.f32 %v9287, %v9393
  %v9423 = vmul.f32 %v9288, %v9393
  %v9424 = vmul.f32 %v9289, %v9393
  %v9425 = vmul.f32 %v9290, %v9393
  %v9426 = vmul.f32 %v9291, %v9393
  %v9427 = vmul.f32 %v9292, %v9393
  %v9428 = vmul.f32 %v9293, %v9393
  %v9429 = vmul.f32 %v9294, %v9393
  %v9430 = vmul.f32 %v9295, %v9393
  %v9431 = vmul.f32 %v9296, %v9393
  %v9432 = vmul.f32 %v9297, %v9393
  %v9433 = vmul.f32 %v9298, %v9393
  %v9434 = vmul.f32 %v9299, %v9393
  %v9435 = vmul.f32 %v9300, %v9393
  %v9436 = vmul.f32 %v9301, %v9393
  %v9437 = vmul.f32 %v9302, %v9393
  %v9438 = vmul.f32 %v9303, %v9393
  %v9439 = vmul.f32 %v9304, %v9393
  %v9440 = vmul.f32 %v9305, %v9393
  %v9441 = vmul.f32 %v9306, %v9393
  %v9442 = vmul.f32 %v9307, %v9393
  %v9443 = vmul.f32 %v9308, %v9393
  %v9444 = vmul.f32 %v9309, %v9393
  %v9445 = vmul.f32 %v9310, %v9393
  %v9446 = vmul.f32 %v9311, %v9393
  %v9447 = vmul.f32 %v9312, %v9393
  %v9448 = vmul.f32 %v9313, %v9393
  %v9449 = vmul.f32 %v9314, %v9393
  %v9450 = vmul.f32 %v9315, %v9393
  %v9451 = vmul.f32 %v9316, %v9393
  %v9452 = vmul.f32 %v9317, %v9393
  %v9453 = vmul.f32 %v9318, %v9393
  %v9454 = vmul.f32 %v9319, %v9393
  %v9455 = vmul.f32 %v9320, %v9393
  %v9456 = vmul.f32 %v9321, %v9393
  %v9457 = vmul.f32 %v9322, %v9393
  %v9458 = vmul.f32 %v9323, %v9393
  %v9459 = vsel %vm9324, %v9260, %v9395
  %v9460 = vsel %vm9325, %v9261, %v9396
  %v9461 = vsel %vm9326, %v9262, %v9397
  %v9462 = vsel %vm9327, %v9263, %v9398
  %v9463 = vsel %vm9328, %v9264, %v9399
  %v9464 = vsel %vm9329, %v9265, %v9400
  %v9465 = vsel %vm9330, %v9266, %v9401
  %v9466 = vsel %vm9331, %v9267, %v9402
  %v9467 = vsel %vm9332, %v9268, %v9403
  %v9468 = vsel %vm9333, %v9269, %v9404
  %v9469 = vsel %vm9334, %v9270, %v9405
  %v9470 = vsel %vm9335, %v9271, %v9406
  %v9471 = vsel %vm9336, %v9272, %v9407
  %v9472 = vsel %vm9337, %v9273, %v9408
  %v9473 = vsel %vm9338, %v9274, %v9409
  %v9474 = vsel %vm9339, %v9275, %v9410
  %v9475 = vsel %vm9340, %v9276, %v9411
  %v9476 = vsel %vm9341, %v9277, %v9412
  %v9477 = vsel %vm9342, %v9278, %v9413
  %v9478 = vsel %vm9343, %v9279, %v9414
  %v9479 = vsel %vm9344, %v9280, %v9415
  %v9480 = vsel %vm9345, %v9281, %v9416
  %v9481 = vsel %vm9346, %v9282, %v9417
  %v9482 = vsel %vm9347, %v9283, %v9418
  %v9483 = vsel %vm9348, %v9284, %v9419
  %v9484 = vsel %vm9349, %v9285, %v9420
  %v9485 = vsel %vm9350, %v9286, %v9421
  %v9486 = vsel %vm9351, %v9287, %v9422
  %v9487 = vsel %vm9352, %v9288, %v9423
  %v9488 = vsel %vm9353, %v9289, %v9424
  %v9489 = vsel %vm9354, %v9290, %v9425
  %v9490 = vsel %vm9355, %v9291, %v9426
  %v9491 = vsel %vm9356, %v9292, %v9427
  %v9492 = vsel %vm9357, %v9293, %v9428
  %v9493 = vsel %vm9358, %v9294, %v9429
  %v9494 = vsel %vm9359, %v9295, %v9430
  %v9495 = vsel %vm9360, %v9296, %v9431
  %v9496 = vsel %vm9361, %v9297, %v9432
  %v9497 = vsel %vm9362, %v9298, %v9433
  %v9498 = vsel %vm9363, %v9299, %v9434
  %v9499 = vsel %vm9364, %v9300, %v9435
  %v9500 = vsel %vm9365, %v9301, %v9436
  %v9501 = vsel %vm9366, %v9302, %v9437
  %v9502 = vsel %vm9367, %v9303, %v9438
  %v9503 = vsel %vm9368, %v9304, %v9439
  %v9504 = vsel %vm9369, %v9305, %v9440
  %v9505 = vsel %vm9370, %v9306, %v9441
  %v9506 = vsel %vm9371, %v9307, %v9442
  %v9507 = vsel %vm9372, %v9308, %v9443
  %v9508 = vsel %vm9373, %v9309, %v9444
  %v9509 = vsel %vm9374, %v9310, %v9445
  %v9510 = vsel %vm9375, %v9311, %v9446
  %v9511 = vsel %vm9376, %v9312, %v9447
  %v9512 = vsel %vm9377, %v9313, %v9448
  %v9513 = vsel %vm9378, %v9314, %v9449
  %v9514 = vsel %vm9379, %v9315, %v9450
  %v9515 = vsel %vm9380, %v9316, %v9451
  %v9516 = vsel %vm9381, %v9317, %v9452
  %v9517 = vsel %vm9382, %v9318, %v9453
  %v9518 = vsel %vm9383, %v9319, %v9454
  %v9519 = vsel %vm9384, %v9320, %v9455
  %v9520 = vsel %vm9385, %v9321, %v9456
  %v9521 = vsel %vm9386, %v9322, %v9457
  %v9522 = vsel %vm9387, %v9323, %v9458
  %s9523 = scalar_lea.vmem [#allocation3], 24
  %9524 = vst.msk [vmem:[%s9523 + $0x1] sm:$0xff] %vm275, %v9459
  %9525 = vst.msk [vmem:[%s9523 + $0x9] sm:$0xff] %vm275, %v9460
  %9526 = vst.msk [vmem:[%s9523 + $0x19] sm:$0xff] %vm275, %v9461
  %9527 = vst.msk [vmem:[%s9523 + $0x21] sm:$0xff] %vm275, %v9462
  %9528 = vst.msk [vmem:[%s9523 + $0x31] sm:$0xff] %vm275, %v9463
  %9529 = vst.msk [vmem:[%s9523 + $0x39] sm:$0xff] %vm275, %v9464
  %9530 = vst.msk [vmem:[%s9523 + $0x49] sm:$0xff] %vm275, %v9465
  %9531 = vst.msk [vmem:[%s9523 + $0x51] sm:$0xff] %vm275, %v9466
  %9532 = vst.msk [vmem:[%s9523 + $0x61] sm:$0xff] %vm275, %v9467
  %9533 = vst.msk [vmem:[%s9523 + $0x69] sm:$0xff] %vm275, %v9468
  %9534 = vst.msk [vmem:[%s9523 + $0x79] sm:$0xff] %vm275, %v9469
  %9535 = vst.msk [vmem:[%s9523 + $0x81] sm:$0xff] %vm275, %v9470
  %9536 = vst.msk [vmem:[%s9523 + $0x91] sm:$0xff] %vm275, %v9471
  %9537 = vst.msk [vmem:[%s9523 + $0x99] sm:$0xff] %vm275, %v9472
  %9538 = vst.msk [vmem:[%s9523 + $0xa9] sm:$0xff] %vm275, %v9473
  %9539 = vst.msk [vmem:[%s9523 + $0xb1] sm:$0xff] %vm275, %v9474
  %9540 = vst.msk [vmem:[%s9523 + $0xc1] sm:$0xff] %vm275, %v9475
  %9541 = vst.msk [vmem:[%s9523 + $0xc9] sm:$0xff] %vm275, %v9476
  %9542 = vst.msk [vmem:[%s9523 + $0xd9] sm:$0xff] %vm275, %v9477
  %9543 = vst.msk [vmem:[%s9523 + $0xe1] sm:$0xff] %vm275, %v9478
  %9544 = vst.msk [vmem:[%s9523 + $0xf1] sm:$0xff] %vm275, %v9479
  %9545 = vst.msk [vmem:[%s9523 + $0xf9] sm:$0xff] %vm275, %v9480
  %9546 = vst.msk [vmem:[%s9523 + $0x109] sm:$0xff] %vm275, %v9481
  %9547 = vst.msk [vmem:[%s9523 + $0x111] sm:$0xff] %vm275, %v9482
  %9548 = vst.msk [vmem:[%s9523 + $0x121] sm:$0xff] %vm275, %v9483
  %9549 = vst.msk [vmem:[%s9523 + $0x129] sm:$0xff] %vm275, %v9484
  %9550 = vst.msk [vmem:[%s9523 + $0x139] sm:$0xff] %vm275, %v9485
  %9551 = vst.msk [vmem:[%s9523 + $0x141] sm:$0xff] %vm275, %v9486
  %9552 = vst.msk [vmem:[%s9523 + $0x151] sm:$0xff] %vm275, %v9487
  %9553 = vst.msk [vmem:[%s9523 + $0x159] sm:$0xff] %vm275, %v9488
  %9554 = vst.msk [vmem:[%s9523 + $0x169] sm:$0xff] %vm275, %v9489
  %9555 = vst.msk [vmem:[%s9523 + $0x171] sm:$0xff] %vm275, %v9490
  %9556 = vst.msk [vmem:[%s9523 + $0x1b1] sm:$0xff] %vm275, %v9491
  %9557 = vst.msk [vmem:[%s9523 + $0x1b9] sm:$0xff] %vm275, %v9492
  %9558 = vst.msk [vmem:[%s9523 + $0x1c9] sm:$0xff] %vm275, %v9493
  %9559 = vst.msk [vmem:[%s9523 + $0x1d1] sm:$0xff] %vm275, %v9494
  %9560 = vst.msk [vmem:[%s9523 + $0x1e1] sm:$0xff] %vm275, %v9495
  %9561 = vst.msk [vmem:[%s9523 + $0x1e9] sm:$0xff] %vm275, %v9496
  %9562 = vst.msk [vmem:[%s9523 + $0x1f9] sm:$0xff] %vm275, %v9497
  %9563 = vst.msk [vmem:[%s9523 + $0x201] sm:$0xff] %vm275, %v9498
  %9564 = vst.msk [vmem:[%s9523 + $0x211] sm:$0xff] %vm275, %v9499
  %9565 = vst.msk [vmem:[%s9523 + $0x219] sm:$0xff] %vm275, %v9500
  %9566 = vst.msk [vmem:[%s9523 + $0x229] sm:$0xff] %vm275, %v9501
  %9567 = vst.msk [vmem:[%s9523 + $0x231] sm:$0xff] %vm275, %v9502
  %9568 = vst.msk [vmem:[%s9523 + $0x241] sm:$0xff] %vm275, %v9503
  %9569 = vst.msk [vmem:[%s9523 + $0x249] sm:$0xff] %vm275, %v9504
  %9570 = vst.msk [vmem:[%s9523 + $0x259] sm:$0xff] %vm275, %v9505
  %9571 = vst.msk [vmem:[%s9523 + $0x261] sm:$0xff] %vm275, %v9506
  %9572 = vst.msk [vmem:[%s9523 + $0x271] sm:$0xff] %vm275, %v9507
  %9573 = vst.msk [vmem:[%s9523 + $0x279] sm:$0xff] %vm275, %v9508
  %9574 = vst.msk [vmem:[%s9523 + $0x289] sm:$0xff] %vm275, %v9509
  %9575 = vst.msk [vmem:[%s9523 + $0x291] sm:$0xff] %vm275, %v9510
  %9576 = vst.msk [vmem:[%s9523 + $0x2a1] sm:$0xff] %vm275, %v9511
  %9577 = vst.msk [vmem:[%s9523 + $0x2a9] sm:$0xff] %vm275, %v9512
  %9578 = vst.msk [vmem:[%s9523 + $0x2b9] sm:$0xff] %vm275, %v9513
  %9579 = vst.msk [vmem:[%s9523 + $0x2c1] sm:$0xff] %vm275, %v9514
  %9580 = vst.msk [vmem:[%s9523 + $0x2d1] sm:$0xff] %vm275, %v9515
  %9581 = vst.msk [vmem:[%s9523 + $0x2d9] sm:$0xff] %vm275, %v9516
  %9582 = vst.msk [vmem:[%s9523 + $0x2e9] sm:$0xff] %vm275, %v9517
  %9583 = vst.msk [vmem:[%s9523 + $0x2f1] sm:$0xff] %vm275, %v9518
  %9584 = vst.msk [vmem:[%s9523 + $0x301] sm:$0xff] %vm275, %v9519
  %9585 = vst.msk [vmem:[%s9523 + $0x309] sm:$0xff] %vm275, %v9520
  %9586 = vst.msk [vmem:[%s9523 + $0x319] sm:$0xff] %vm275, %v9521
  %9587 = vst.msk [vmem:[%s9523 + $0x321] sm:$0xff] %vm275, %v9522
  %v9588 = vld [vmem:[#allocation3] ss:$2 sm:$0xff]
  %s9589 = scalar_lea.vmem [#allocation3], 48
  %v9590 = vld [vmem:[%s9589] ss:$2 sm:$0xff]
  %s9591 = scalar_lea.vmem [#allocation3], 96
  %v9592 = vld [vmem:[%s9591] ss:$2 sm:$0xff]
  %s9593 = scalar_lea.vmem [#allocation3], 144
  %v9594 = vld [vmem:[%s9593] ss:$2 sm:$0xff]
  %s9595 = scalar_lea.vmem [#allocation3], 192
  %v9596 = vld [vmem:[%s9595] ss:$2 sm:$0xff]
  %s9597 = scalar_lea.vmem [#allocation3], 240
  %v9598 = vld [vmem:[%s9597] ss:$2 sm:$0xff]
  %s9599 = scalar_lea.vmem [#allocation3], 288
  %v9600 = vld [vmem:[%s9599] ss:$2 sm:$0xff]
  %s9601 = scalar_lea.vmem [#allocation3], 336
  %v9602 = vld [vmem:[%s9601] ss:$2 sm:$0xff]
  %s9603 = scalar_lea.vmem [#allocation3], 432
  %v9604 = vld [vmem:[%s9603] ss:$2 sm:$0xff]
  %s9605 = scalar_lea.vmem [#allocation3], 480
  %v9606 = vld [vmem:[%s9605] ss:$2 sm:$0xff]
  %s9607 = scalar_lea.vmem [#allocation3], 528
  %v9608 = vld [vmem:[%s9607] ss:$2 sm:$0xff]
  %s9609 = scalar_lea.vmem [#allocation3], 576
  %v9610 = vld [vmem:[%s9609] ss:$2 sm:$0xff]
  %s9611 = scalar_lea.vmem [#allocation3], 624
  %v9612 = vld [vmem:[%s9611] ss:$2 sm:$0xff]
  %s9613 = scalar_lea.vmem [#allocation3], 672
  %v9614 = vld [vmem:[%s9613] ss:$2 sm:$0xff]
  %s9615 = scalar_lea.vmem [#allocation3], 720
  %v9616 = vld [vmem:[%s9615] ss:$2 sm:$0xff]
  %s9617 = scalar_lea.vmem [#allocation3], 768
  %v9618 = vld [vmem:[%s9617] ss:$2 sm:$0xff]
  %v9619 = vpack.c.bf16 %v9590, %v9588
  %v9620 = vpack.c.bf16 %v9594, %v9592
  %v9621 = vpack.c.bf16 %v9598, %v9596
  %v9622 = vpack.c.bf16 %v9602, %v9600
  %v9623 = vpack.c.bf16 %v9606, %v9604
  %v9624 = vpack.c.bf16 %v9610, %v9608
  %v9625 = vpack.c.bf16 %v9614, %v9612
  %v9626 = vpack.c.bf16 %v9618, %v9616
  %v9635 = vunpack.c.l.b16 %v9619
  %v9636 = vunpack.c.h.b16 %v9619
  %v9637 = vunpack.c.l.b16 %v9620
  %v9638 = vunpack.c.h.b16 %v9620
  %v9639 = vunpack.c.l.b16 %v9621
  %v9640 = vunpack.c.h.b16 %v9621
  %v9641 = vunpack.c.l.b16 %v9622
  %v9642 = vunpack.c.h.b16 %v9622
  %v9643 = vunpack.c.l.b16 %v9623
  %v9644 = vunpack.c.h.b16 %v9623
  %v9645 = vunpack.c.l.b16 %v9624
  %v9646 = vunpack.c.h.b16 %v9624
  %v9647 = vunpack.c.l.b16 %v9625
  %v9648 = vunpack.c.h.b16 %v9625
  %v9649 = vunpack.c.l.b16 %v9626
  %v9650 = vunpack.c.h.b16 %v9626
  %v9651 = vpack.c.b16 %v9635, %v9635
  %v9652 = vpack.c.b16 %v9636, %v9636
  %v9653 = vpack.c.b16 %v9637, %v9637
  %v9654 = vpack.c.b16 %v9638, %v9638
  %v9655 = vpack.c.b16 %v9639, %v9639
  %v9656 = vpack.c.b16 %v9640, %v9640
  %v9657 = vpack.c.b16 %v9641, %v9641
  %v9658 = vpack.c.b16 %v9642, %v9642
  %v9659 = vpack.c.b16 %v9643, %v9643
  %v9660 = vpack.c.b16 %v9644, %v9644
  %v9661 = vpack.c.b16 %v9645, %v9645
  %v9662 = vpack.c.b16 %v9646, %v9646
  %v9663 = vpack.c.b16 %v9647, %v9647
  %v9664 = vpack.c.b16 %v9648, %v9648
  %v9665 = vpack.c.b16 %v9649, %v9649
  %v9666 = vpack.c.b16 %v9650, %v9650
  %vm9683 = vcmask 60416
  %9684 = vst.msk [vmem:[#allocation5] sm:$0xf] %vm9683, %v9651
  %9685 = vst.msk [vmem:[#allocation5 + $0x4] sm:$0xf] %vm9683, %v9652
  %9686 = vst.msk [vmem:[#allocation5 + $0x8] sm:$0xf] %vm9683, %v9653
  %9687 = vst.msk [vmem:[#allocation5 + $0xc] sm:$0xf] %vm9683, %v9654
  %9688 = vst.msk [vmem:[#allocation5 + $0x10] sm:$0xf] %vm9683, %v9655
  %9689 = vst.msk [vmem:[#allocation5 + $0x14] sm:$0xf] %vm9683, %v9656
  %9690 = vst.msk [vmem:[#allocation5 + $0x18] sm:$0xf] %vm9683, %v9657
  %9691 = vst.msk [vmem:[#allocation5 + $0x1c] sm:$0xf] %vm9683, %v9658
  %9692 = vst.msk [vmem:[#allocation5 + $0x20] sm:$0xf] %vm9683, %v9659
  %9693 = vst.msk [vmem:[#allocation5 + $0x24] sm:$0xf] %vm9683, %v9660
  %9694 = vst.msk [vmem:[#allocation5 + $0x28] sm:$0xf] %vm9683, %v9661
  %9695 = vst.msk [vmem:[#allocation5 + $0x2c] sm:$0xf] %vm9683, %v9662
  %9696 = vst.msk [vmem:[#allocation5 + $0x30] sm:$0xf] %vm9683, %v9663
  %9697 = vst.msk [vmem:[#allocation5 + $0x34] sm:$0xf] %vm9683, %v9664
  %9698 = vst.msk [vmem:[#allocation5 + $0x38] sm:$0xf] %vm9683, %v9665
  %9699 = vst.msk [vmem:[#allocation5 + $0x3c] sm:$0xf] %vm9683, %v9666
  %s9700 = scalar_lea.vmem [#allocation3], 1
  %v9701 = vld [vmem:[%s9700] ss:$2 sm:$0xff]
  %s9702 = scalar_lea.vmem [#allocation3], 49
  %v9703 = vld [vmem:[%s9702] ss:$2 sm:$0xff]
  %s9704 = scalar_lea.vmem [#allocation3], 97
  %v9705 = vld [vmem:[%s9704] ss:$2 sm:$0xff]
  %s9706 = scalar_lea.vmem [#allocation3], 145
  %v9707 = vld [vmem:[%s9706] ss:$2 sm:$0xff]
  %s9708 = scalar_lea.vmem [#allocation3], 193
  %v9709 = vld [vmem:[%s9708] ss:$2 sm:$0xff]
  %s9710 = scalar_lea.vmem [#allocation3], 241
  %v9711 = vld [vmem:[%s9710] ss:$2 sm:$0xff]
  %s9712 = scalar_lea.vmem [#allocation3], 289
  %v9713 = vld [vmem:[%s9712] ss:$2 sm:$0xff]
  %s9714 = scalar_lea.vmem [#allocation3], 337
  %v9715 = vld [vmem:[%s9714] ss:$2 sm:$0xff]
  %s9716 = scalar_lea.vmem [#allocation3], 433
  %v9717 = vld [vmem:[%s9716] ss:$2 sm:$0xff]
  %s9718 = scalar_lea.vmem [#allocation3], 481
  %v9719 = vld [vmem:[%s9718] ss:$2 sm:$0xff]
  %s9720 = scalar_lea.vmem [#allocation3], 529
  %v9721 = vld [vmem:[%s9720] ss:$2 sm:$0xff]
  %s9722 = scalar_lea.vmem [#allocation3], 577
  %v9723 = vld [vmem:[%s9722] ss:$2 sm:$0xff]
  %s9724 = scalar_lea.vmem [#allocation3], 625
  %v9725 = vld [vmem:[%s9724] ss:$2 sm:$0xff]
  %s9726 = scalar_lea.vmem [#allocation3], 673
  %v9727 = vld [vmem:[%s9726] ss:$2 sm:$0xff]
  %s9728 = scalar_lea.vmem [#allocation3], 721
  %v9729 = vld [vmem:[%s9728] ss:$2 sm:$0xff]
  %s9730 = scalar_lea.vmem [#allocation3], 769
  %v9731 = vld [vmem:[%s9730] ss:$2 sm:$0xff]
  %v9732 = vpack.c.bf16 %v9703, %v9701
  %v9733 = vpack.c.bf16 %v9707, %v9705
  %v9734 = vpack.c.bf16 %v9711, %v9709
  %v9735 = vpack.c.bf16 %v9715, %v9713
  %v9736 = vpack.c.bf16 %v9719, %v9717
  %v9737 = vpack.c.bf16 %v9723, %v9721
  %v9738 = vpack.c.bf16 %v9727, %v9725
  %v9739 = vpack.c.bf16 %v9731, %v9729
  %v9748 = vunpack.c.l.b16 %v9732
  %v9749 = vunpack.c.h.b16 %v9732
  %v9750 = vunpack.c.l.b16 %v9733
  %v9751 = vunpack.c.h.b16 %v9733
  %v9752 = vunpack.c.l.b16 %v9734
  %v9753 = vunpack.c.h.b16 %v9734
  %v9754 = vunpack.c.l.b16 %v9735
  %v9755 = vunpack.c.h.b16 %v9735
  %v9756 = vunpack.c.l.b16 %v9736
  %v9757 = vunpack.c.h.b16 %v9736
  %v9758 = vunpack.c.l.b16 %v9737
  %v9759 = vunpack.c.h.b16 %v9737
  %v9760 = vunpack.c.l.b16 %v9738
  %v9761 = vunpack.c.h.b16 %v9738
  %v9762 = vunpack.c.l.b16 %v9739
  %v9763 = vunpack.c.h.b16 %v9739
  %v9764 = vpack.c.b16 %v9748, %v9748
  %v9765 = vpack.c.b16 %v9749, %v9749
  %v9766 = vpack.c.b16 %v9750, %v9750
  %v9767 = vpack.c.b16 %v9751, %v9751
  %v9768 = vpack.c.b16 %v9752, %v9752
  %v9769 = vpack.c.b16 %v9753, %v9753
  %v9770 = vpack.c.b16 %v9754, %v9754
  %v9771 = vpack.c.b16 %v9755, %v9755
  %v9772 = vpack.c.b16 %v9756, %v9756
  %v9773 = vpack.c.b16 %v9757, %v9757
  %v9774 = vpack.c.b16 %v9758, %v9758
  %v9775 = vpack.c.b16 %v9759, %v9759
  %v9776 = vpack.c.b16 %v9760, %v9760
  %v9777 = vpack.c.b16 %v9761, %v9761
  %v9778 = vpack.c.b16 %v9762, %v9762
  %v9779 = vpack.c.b16 %v9763, %v9763
  %9780 = vrot.lane.b32.xlu0 %v9764, 8
  %v9781 = vpop.permute.xlu0 %9780
  %9782 = vrot.lane.b32.xlu0 %v9765, 8
  %v9783 = vpop.permute.xlu0 %9782
  %9784 = vrot.lane.b32.xlu0 %v9766, 8
  %v9785 = vpop.permute.xlu0 %9784
  %9786 = vrot.lane.b32.xlu0 %v9767, 8
  %v9787 = vpop.permute.xlu0 %9786
  %9788 = vrot.lane.b32.xlu0 %v9768, 8
  %v9789 = vpop.permute.xlu0 %9788
  %9790 = vrot.lane.b32.xlu0 %v9769, 8
  %v9791 = vpop.permute.xlu0 %9790
  %9792 = vrot.lane.b32.xlu0 %v9770, 8
  %v9793 = vpop.permute.xlu0 %9792
  %9794 = vrot.lane.b32.xlu0 %v9771, 8
  %v9795 = vpop.permute.xlu0 %9794
  %9796 = vrot.lane.b32.xlu0 %v9772, 8
  %v9797 = vpop.permute.xlu0 %9796
  %9798 = vrot.lane.b32.xlu0 %v9773, 8
  %v9799 = vpop.permute.xlu0 %9798
  %9800 = vrot.lane.b32.xlu0 %v9774, 8
  %v9801 = vpop.permute.xlu0 %9800
  %9802 = vrot.lane.b32.xlu0 %v9775, 8
  %v9803 = vpop.permute.xlu0 %9802
  %9804 = vrot.lane.b32.xlu0 %v9776, 8
  %v9805 = vpop.permute.xlu0 %9804
  %9806 = vrot.lane.b32.xlu0 %v9777, 8
  %v9807 = vpop.permute.xlu0 %9806
  %9808 = vrot.lane.b32.xlu0 %v9778, 8
  %v9809 = vpop.permute.xlu0 %9808
  %9810 = vrot.lane.b32.xlu0 %v9779, 8
  %v9811 = vpop.permute.xlu0 %9810
  %vm9828 = vcmask 126016
  %9829 = vst.msk [vmem:[#allocation5] sm:$0xf] %vm9828, %v9781
  %9830 = vst.msk [vmem:[#allocation5 + $0x4] sm:$0xf] %vm9828, %v9783
  %9831 = vst.msk [vmem:[#allocation5 + $0x8] sm:$0xf] %vm9828, %v9785
  %9832 = vst.msk [vmem:[#allocation5 + $0xc] sm:$0xf] %vm9828, %v9787
  %9833 = vst.msk [vmem:[#allocation5 + $0x10] sm:$0xf] %vm9828, %v9789
  %9834 = vst.msk [vmem:[#allocation5 + $0x14] sm:$0xf] %vm9828, %v9791
  %9835 = vst.msk [vmem:[#allocation5 + $0x18] sm:$0xf] %vm9828, %v9793
  %9836 = vst.msk [vmem:[#allocation5 + $0x1c] sm:$0xf] %vm9828, %v9795
  %9837 = vst.msk [vmem:[#allocation5 + $0x20] sm:$0xf] %vm9828, %v9797
  %9838 = vst.msk [vmem:[#allocation5 + $0x24] sm:$0xf] %vm9828, %v9799
  %9839 = vst.msk [vmem:[#allocation5 + $0x28] sm:$0xf] %vm9828, %v9801
  %9840 = vst.msk [vmem:[#allocation5 + $0x2c] sm:$0xf] %vm9828, %v9803
  %9841 = vst.msk [vmem:[#allocation5 + $0x30] sm:$0xf] %vm9828, %v9805
  %9842 = vst.msk [vmem:[#allocation5 + $0x34] sm:$0xf] %vm9828, %v9807
  %9843 = vst.msk [vmem:[#allocation5 + $0x38] sm:$0xf] %vm9828, %v9809
  %9844 = vst.msk [vmem:[#allocation5 + $0x3c] sm:$0xf] %vm9828, %v9811
  %s9845 = scalar_lea.vmem [#allocation3], 2
  %v9846 = vld [vmem:[%s9845] ss:$2 sm:$0xff]
  %s9847 = scalar_lea.vmem [#allocation3], 50
  %v9848 = vld [vmem:[%s9847] ss:$2 sm:$0xff]
  %s9849 = scalar_lea.vmem [#allocation3], 98
  %v9850 = vld [vmem:[%s9849] ss:$2 sm:$0xff]
  %s9851 = scalar_lea.vmem [#allocation3], 146
  %v9852 = vld [vmem:[%s9851] ss:$2 sm:$0xff]
  %s9853 = scalar_lea.vmem [#allocation3], 194
  %v9854 = vld [vmem:[%s9853] ss:$2 sm:$0xff]
  %s9855 = scalar_lea.vmem [#allocation3], 242
  %v9856 = vld [vmem:[%s9855] ss:$2 sm:$0xff]
  %s9857 = scalar_lea.vmem [#allocation3], 290
  %v9858 = vld [vmem:[%s9857] ss:$2 sm:$0xff]
  %s9859 = scalar_lea.vmem [#allocation3], 338
  %v9860 = vld [vmem:[%s9859] ss:$2 sm:$0xff]
  %s9861 = scalar_lea.vmem [#allocation3], 434
  %v9862 = vld [vmem:[%s9861] ss:$2 sm:$0xff]
  %s9863 = scalar_lea.vmem [#allocation3], 482
  %v9864 = vld [vmem:[%s9863] ss:$2 sm:$0xff]
  %s9865 = scalar_lea.vmem [#allocation3], 530
  %v9866 = vld [vmem:[%s9865] ss:$2 sm:$0xff]
  %s9867 = scalar_lea.vmem [#allocation3], 578
  %v9868 = vld [vmem:[%s9867] ss:$2 sm:$0xff]
  %s9869 = scalar_lea.vmem [#allocation3], 626
  %v9870 = vld [vmem:[%s9869] ss:$2 sm:$0xff]
  %s9871 = scalar_lea.vmem [#allocation3], 674
  %v9872 = vld [vmem:[%s9871] ss:$2 sm:$0xff]
  %s9873 = scalar_lea.vmem [#allocation3], 722
  %v9874 = vld [vmem:[%s9873] ss:$2 sm:$0xff]
  %s9875 = scalar_lea.vmem [#allocation3], 770
  %v9876 = vld [vmem:[%s9875] ss:$2 sm:$0xff]
  %v9877 = vpack.c.bf16 %v9848, %v9846
  %v9878 = vpack.c.bf16 %v9852, %v9850
  %v9879 = vpack.c.bf16 %v9856, %v9854
  %v9880 = vpack.c.bf16 %v9860, %v9858
  %v9881 = vpack.c.bf16 %v9864, %v9862
  %v9882 = vpack.c.bf16 %v9868, %v9866
  %v9883 = vpack.c.bf16 %v9872, %v9870
  %v9884 = vpack.c.bf16 %v9876, %v9874
  %v9893 = vunpack.c.l.b16 %v9877
  %v9894 = vunpack.c.h.b16 %v9877
  %v9895 = vunpack.c.l.b16 %v9878
  %v9896 = vunpack.c.h.b16 %v9878
  %v9897 = vunpack.c.l.b16 %v9879
  %v9898 = vunpack.c.h.b16 %v9879
  %v9899 = vunpack.c.l.b16 %v9880
  %v9900 = vunpack.c.h.b16 %v9880
  %v9901 = vunpack.c.l.b16 %v9881
  %v9902 = vunpack.c.h.b16 %v9881
  %v9903 = vunpack.c.l.b16 %v9882
  %v9904 = vunpack.c.h.b16 %v9882
  %v9905 = vunpack.c.l.b16 %v9883
  %v9906 = vunpack.c.h.b16 %v9883
  %v9907 = vunpack.c.l.b16 %v9884
  %v9908 = vunpack.c.h.b16 %v9884
  %v9909 = vpack.c.b16 %v9893, %v9893
  %v9910 = vpack.c.b16 %v9894, %v9894
  %v9911 = vpack.c.b16 %v9895, %v9895
  %v9912 = vpack.c.b16 %v9896, %v9896
  %v9913 = vpack.c.b16 %v9897, %v9897
  %v9914 = vpack.c.b16 %v9898, %v9898
  %v9915 = vpack.c.b16 %v9899, %v9899
  %v9916 = vpack.c.b16 %v9900, %v9900
  %v9917 = vpack.c.b16 %v9901, %v9901
  %v9918 = vpack.c.b16 %v9902, %v9902
  %v9919 = vpack.c.b16 %v9903, %v9903
  %v9920 = vpack.c.b16 %v9904, %v9904
  %v9921 = vpack.c.b16 %v9905, %v9905
  %v9922 = vpack.c.b16 %v9906, %v9906
  %v9923 = vpack.c.b16 %v9907, %v9907
  %v9924 = vpack.c.b16 %v9908, %v9908
  %9925 = vrot.lane.b32.xlu0 %v9909, 16
  %v9926 = vpop.permute.xlu0 %9925
  %9927 = vrot.lane.b32.xlu0 %v9910, 16
  %v9928 = vpop.permute.xlu0 %9927
  %9929 = vrot.lane.b32.xlu0 %v9911, 16
  %v9930 = vpop.permute.xlu0 %9929
  %9931 = vrot.lane.b32.xlu0 %v9912, 16
  %v9932 = vpop.permute.xlu0 %9931
  %9933 = vrot.lane.b32.xlu0 %v9913, 16
  %v9934 = vpop.permute.xlu0 %9933
  %9935 = vrot.lane.b32.xlu0 %v9914, 16
  %v9936 = vpop.permute.xlu0 %9935
  %9937 = vrot.lane.b32.xlu0 %v9915, 16
  %v9938 = vpop.permute.xlu0 %9937
  %9939 = vrot.lane.b32.xlu0 %v9916, 16
  %v9940 = vpop.permute.xlu0 %9939
  %9941 = vrot.lane.b32.xlu0 %v9917, 16
  %v9942 = vpop.permute.xlu0 %9941
  %9943 = vrot.lane.b32.xlu0 %v9918, 16
  %v9944 = vpop.permute.xlu0 %9943
  %9945 = vrot.lane.b32.xlu0 %v9919, 16
  %v9946 = vpop.permute.xlu0 %9945
  %9947 = vrot.lane.b32.xlu0 %v9920, 16
  %v9948 = vpop.permute.xlu0 %9947
  %9949 = vrot.lane.b32.xlu0 %v9921, 16
  %v9950 = vpop.permute.xlu0 %9949
  %9951 = vrot.lane.b32.xlu0 %v9922, 16
  %v9952 = vpop.permute.xlu0 %9951
  %9953 = vrot.lane.b32.xlu0 %v9923, 16
  %v9954 = vpop.permute.xlu0 %9953
  %9955 = vrot.lane.b32.xlu0 %v9924, 16
  %v9956 = vpop.permute.xlu0 %9955
  %vm9973 = vcmask 191616
  %9974 = vst.msk [vmem:[#allocation5] sm:$0xf] %vm9973, %v9926
  %9975 = vst.msk [vmem:[#allocation5 + $0x4] sm:$0xf] %vm9973, %v9928
  %9976 = vst.msk [vmem:[#allocation5 + $0x8] sm:$0xf] %vm9973, %v9930
  %9977 = vst.msk [vmem:[#allocation5 + $0xc] sm:$0xf] %vm9973, %v9932
  %9978 = vst.msk [vmem:[#allocation5 + $0x10] sm:$0xf] %vm9973, %v9934
  %9979 = vst.msk [vmem:[#allocation5 + $0x14] sm:$0xf] %vm9973, %v9936
  %9980 = vst.msk [vmem:[#allocation5 + $0x18] sm:$0xf] %vm9973, %v9938
  %9981 = vst.msk [vmem:[#allocation5 + $0x1c] sm:$0xf] %vm9973, %v9940
  %9982 = vst.msk [vmem:[#allocation5 + $0x20] sm:$0xf] %vm9973, %v9942
  %9983 = vst.msk [vmem:[#allocation5 + $0x24] sm:$0xf] %vm9973, %v9944
  %9984 = vst.msk [vmem:[#allocation5 + $0x28] sm:$0xf] %vm9973, %v9946
  %9985 = vst.msk [vmem:[#allocation5 + $0x2c] sm:$0xf] %vm9973, %v9948
  %9986 = vst.msk [vmem:[#allocation5 + $0x30] sm:$0xf] %vm9973, %v9950
  %9987 = vst.msk [vmem:[#allocation5 + $0x34] sm:$0xf] %vm9973, %v9952
  %9988 = vst.msk [vmem:[#allocation5 + $0x38] sm:$0xf] %vm9973, %v9954
  %9989 = vst.msk [vmem:[#allocation5 + $0x3c] sm:$0xf] %vm9973, %v9956
  %v9990 = vld [vmem:[#allocation5] sm:$0xf]
  %v9991 = vld [vmem:[#allocation5 + $0x4] sm:$0xf]
  %v9992 = vld [vmem:[#allocation5 + $0x8] sm:$0xf]
  %v9993 = vld [vmem:[#allocation5 + $0xc] sm:$0xf]
  %v9994 = vld [vmem:[#allocation5 + $0x10] sm:$0xf]
  %v9995 = vld [vmem:[#allocation5 + $0x14] sm:$0xf]
  %v9996 = vld [vmem:[#allocation5 + $0x18] sm:$0xf]
  %v9997 = vld [vmem:[#allocation5 + $0x1c] sm:$0xf]
  %v9998 = vld [vmem:[#allocation5 + $0x20] sm:$0xf]
  %v9999 = vld [vmem:[#allocation5 + $0x24] sm:$0xf]
  %v10000 = vld [vmem:[#allocation5 + $0x28] sm:$0xf]
  %v10001 = vld [vmem:[#allocation5 + $0x2c] sm:$0xf]
  %v10002 = vld [vmem:[#allocation5 + $0x30] sm:$0xf]
  %v10003 = vld [vmem:[#allocation5 + $0x34] sm:$0xf]
  %v10004 = vld [vmem:[#allocation5 + $0x38] sm:$0xf]
  %v10005 = vld [vmem:[#allocation5 + $0x3c] sm:$0xf]
  %v10006 = vld [vmem:[%s5] sm:$0xf]
  %v10007 = vld [vmem:[%s5 + $0x4] sm:$0xf]
  %v10008 = vld [vmem:[%s5 + $0x8] sm:$0xf]
  %v10009 = vld [vmem:[%s9523] ss:$2 sm:$0xff]
  %s10010 = scalar_lea.vmem %s9523, 48 [#allocation3]
  %v10011 = vld [vmem:[%s10010] ss:$2 sm:$0xff]
  %s10012 = scalar_lea.vmem %s9523, 96 [#allocation3]
  %v10013 = vld [vmem:[%s10012] ss:$2 sm:$0xff]
  %s10014 = scalar_lea.vmem %s9523, 144 [#allocation3]
  %v10015 = vld [vmem:[%s10014] ss:$2 sm:$0xff]
  %s10016 = scalar_lea.vmem %s9523, 192 [#allocation3]
  %v10017 = vld [vmem:[%s10016] ss:$2 sm:$0xff]
  %s10018 = scalar_lea.vmem %s9523, 240 [#allocation3]
  %v10019 = vld [vmem:[%s10018] ss:$2 sm:$0xff]
  %s10020 = scalar_lea.vmem %s9523, 288 [#allocation3]
  %v10021 = vld [vmem:[%s10020] ss:$2 sm:$0xff]
  %s10022 = scalar_lea.vmem %s9523, 336 [#allocation3]
  %v10023 = vld [vmem:[%s10022] ss:$2 sm:$0xff]
  %s10024 = scalar_lea.vmem %s9523, 432 [#allocation3]
  %v10025 = vld [vmem:[%s10024] ss:$2 sm:$0xff]
  %s10026 = scalar_lea.vmem %s9523, 480 [#allocation3]
  %v10027 = vld [vmem:[%s10026] ss:$2 sm:$0xff]
  %s10028 = scalar_lea.vmem %s9523, 528 [#allocation3]
  %v10029 = vld [vmem:[%s10028] ss:$2 sm:$0xff]
  %s10030 = scalar_lea.vmem %s9523, 576 [#allocation3]
  %v10031 = vld [vmem:[%s10030] ss:$2 sm:$0xff]
  %s10032 = scalar_lea.vmem %s9523, 624 [#allocation3]
  %v10033 = vld [vmem:[%s10032] ss:$2 sm:$0xff]
  %s10034 = scalar_lea.vmem %s9523, 672 [#allocation3]
  %v10035 = vld [vmem:[%s10034] ss:$2 sm:$0xff]
  %s10036 = scalar_lea.vmem %s9523, 720 [#allocation3]
  %v10037 = vld [vmem:[%s10036] ss:$2 sm:$0xff]
  %s10038 = scalar_lea.vmem %s9523, 768 [#allocation3]
  %v10039 = vld [vmem:[%s10038] ss:$2 sm:$0xff]
  %v10040 = vpack.c.bf16 %v10011, %v10009
  %v10041 = vpack.c.bf16 %v10015, %v10013
  %v10042 = vpack.c.bf16 %v10019, %v10017
  %v10043 = vpack.c.bf16 %v10023, %v10021
  %v10044 = vpack.c.bf16 %v10027, %v10025
  %v10045 = vpack.c.bf16 %v10031, %v10029
  %v10046 = vpack.c.bf16 %v10035, %v10033
  %v10047 = vpack.c.bf16 %v10039, %v10037
  %v10056 = vunpack.c.l.b16 %v10040
  %v10057 = vunpack.c.h.b16 %v10040
  %v10058 = vunpack.c.l.b16 %v10041
  %v10059 = vunpack.c.h.b16 %v10041
  %v10060 = vunpack.c.l.b16 %v10042
  %v10061 = vunpack.c.h.b16 %v10042
  %v10062 = vunpack.c.l.b16 %v10043
  %v10063 = vunpack.c.h.b16 %v10043
  %v10064 = vunpack.c.l.b16 %v10044
  %v10065 = vunpack.c.h.b16 %v10044
  %v10066 = vunpack.c.l.b16 %v10045
  %v10067 = vunpack.c.h.b16 %v10045
  %v10068 = vunpack.c.l.b16 %v10046
  %v10069 = vunpack.c.h.b16 %v10046
  %v10070 = vunpack.c.l.b16 %v10047
  %v10071 = vunpack.c.h.b16 %v10047
  %v10072 = vpack.c.b16 %v10056, %v10056
  %v10073 = vpack.c.b16 %v10057, %v10057
  %v10074 = vpack.c.b16 %v10058, %v10058
  %v10075 = vpack.c.b16 %v10059, %v10059
  %v10076 = vpack.c.b16 %v10060, %v10060
  %v10077 = vpack.c.b16 %v10061, %v10061
  %v10078 = vpack.c.b16 %v10062, %v10062
  %v10079 = vpack.c.b16 %v10063, %v10063
  %v10080 = vpack.c.b16 %v10064, %v10064
  %v10081 = vpack.c.b16 %v10065, %v10065
  %v10082 = vpack.c.b16 %v10066, %v10066
  %v10083 = vpack.c.b16 %v10067, %v10067
  %v10084 = vpack.c.b16 %v10068, %v10068
  %v10085 = vpack.c.b16 %v10069, %v10069
  %v10086 = vpack.c.b16 %v10070, %v10070
  %v10087 = vpack.c.b16 %v10071, %v10071
  %10104 = vst.msk [vmem:[#allocation5] sm:$0xf] %vm9683, %v10072
  %10105 = vst.msk [vmem:[#allocation5 + $0x4] sm:$0xf] %vm9683, %v10073
  %10106 = vst.msk [vmem:[#allocation5 + $0x8] sm:$0xf] %vm9683, %v10074
  %10107 = vst.msk [vmem:[#allocation5 + $0xc] sm:$0xf] %vm9683, %v10075
  %10108 = vst.msk [vmem:[#allocation5 + $0x10] sm:$0xf] %vm9683, %v10076
  %10109 = vst.msk [vmem:[#allocation5 + $0x14] sm:$0xf] %vm9683, %v10077
  %10110 = vst.msk [vmem:[#allocation5 + $0x18] sm:$0xf] %vm9683, %v10078
  %10111 = vst.msk [vmem:[#allocation5 + $0x1c] sm:$0xf] %vm9683, %v10079
  %10112 = vst.msk [vmem:[#allocation5 + $0x20] sm:$0xf] %vm9683, %v10080
  %10113 = vst.msk [vmem:[#allocation5 + $0x24] sm:$0xf] %vm9683, %v10081
  %10114 = vst.msk [vmem:[#allocation5 + $0x28] sm:$0xf] %vm9683, %v10082
  %10115 = vst.msk [vmem:[#allocation5 + $0x2c] sm:$0xf] %vm9683, %v10083
  %10116 = vst.msk [vmem:[#allocation5 + $0x30] sm:$0xf] %vm9683, %v10084
  %10117 = vst.msk [vmem:[#allocation5 + $0x34] sm:$0xf] %vm9683, %v10085
  %10118 = vst.msk [vmem:[#allocation5 + $0x38] sm:$0xf] %vm9683, %v10086
  %10119 = vst.msk [vmem:[#allocation5 + $0x3c] sm:$0xf] %vm9683, %v10087
  %s10120 = scalar_lea.vmem %s9523, 1 [#allocation3]
  %v10121 = vld [vmem:[%s10120] ss:$2 sm:$0xff]
  %s10122 = scalar_lea.vmem %s9523, 49 [#allocation3]
  %v10123 = vld [vmem:[%s10122] ss:$2 sm:$0xff]
  %s10124 = scalar_lea.vmem %s9523, 97 [#allocation3]
  %v10125 = vld [vmem:[%s10124] ss:$2 sm:$0xff]
  %s10126 = scalar_lea.vmem %s9523, 145 [#allocation3]
  %v10127 = vld [vmem:[%s10126] ss:$2 sm:$0xff]
  %s10128 = scalar_lea.vmem %s9523, 193 [#allocation3]
  %v10129 = vld [vmem:[%s10128] ss:$2 sm:$0xff]
  %s10130 = scalar_lea.vmem %s9523, 241 [#allocation3]
  %v10131 = vld [vmem:[%s10130] ss:$2 sm:$0xff]
  %s10132 = scalar_lea.vmem %s9523, 289 [#allocation3]
  %v10133 = vld [vmem:[%s10132] ss:$2 sm:$0xff]
  %s10134 = scalar_lea.vmem %s9523, 337 [#allocation3]
  %v10135 = vld [vmem:[%s10134] ss:$2 sm:$0xff]
  %s10136 = scalar_lea.vmem %s9523, 433 [#allocation3]
  %v10137 = vld [vmem:[%s10136] ss:$2 sm:$0xff]
  %s10138 = scalar_lea.vmem %s9523, 481 [#allocation3]
  %v10139 = vld [vmem:[%s10138] ss:$2 sm:$0xff]
  %s10140 = scalar_lea.vmem %s9523, 529 [#allocation3]
  %v10141 = vld [vmem:[%s10140] ss:$2 sm:$0xff]
  %s10142 = scalar_lea.vmem %s9523, 577 [#allocation3]
  %v10143 = vld [vmem:[%s10142] ss:$2 sm:$0xff]
  %s10144 = scalar_lea.vmem %s9523, 625 [#allocation3]
  %v10145 = vld [vmem:[%s10144] ss:$2 sm:$0xff]
  %s10146 = scalar_lea.vmem %s9523, 673 [#allocation3]
  %v10147 = vld [vmem:[%s10146] ss:$2 sm:$0xff]
  %s10148 = scalar_lea.vmem %s9523, 721 [#allocation3]
  %v10149 = vld [vmem:[%s10148] ss:$2 sm:$0xff]
  %s10150 = scalar_lea.vmem %s9523, 769 [#allocation3]
  %v10151 = vld [vmem:[%s10150] ss:$2 sm:$0xff]
  %v10152 = vpack.c.bf16 %v10123, %v10121
  %v10153 = vpack.c.bf16 %v10127, %v10125
  %v10154 = vpack.c.bf16 %v10131, %v10129
  %v10155 = vpack.c.bf16 %v10135, %v10133
  %v10156 = vpack.c.bf16 %v10139, %v10137
  %v10157 = vpack.c.bf16 %v10143, %v10141
  %v10158 = vpack.c.bf16 %v10147, %v10145
  %v10159 = vpack.c.bf16 %v10151, %v10149
  %v10168 = vunpack.c.l.b16 %v10152
  %v10169 = vunpack.c.h.b16 %v10152
  %v10170 = vunpack.c.l.b16 %v10153
  %v10171 = vunpack.c.h.b16 %v10153
  %v10172 = vunpack.c.l.b16 %v10154
  %v10173 = vunpack.c.h.b16 %v10154
  %v10174 = vunpack.c.l.b16 %v10155
  %v10175 = vunpack.c.h.b16 %v10155
  %v10176 = vunpack.c.l.b16 %v10156
  %v10177 = vunpack.c.h.b16 %v10156
  %v10178 = vunpack.c.l.b16 %v10157
  %v10179 = vunpack.c.h.b16 %v10157
  %v10180 = vunpack.c.l.b16 %v10158
  %v10181 = vunpack.c.h.b16 %v10158
  %v10182 = vunpack.c.l.b16 %v10159
  %v10183 = vunpack.c.h.b16 %v10159
  %v10184 = vpack.c.b16 %v10168, %v10168
  %v10185 = vpack.c.b16 %v10169, %v10169
  %v10186 = vpack.c.b16 %v10170, %v10170
  %v10187 = vpack.c.b16 %v10171, %v10171
  %v10188 = vpack.c.b16 %v10172, %v10172
  %v10189 = vpack.c.b16 %v10173, %v10173
  %v10190 = vpack.c.b16 %v10174, %v10174
  %v10191 = vpack.c.b16 %v10175, %v10175
  %v10192 = vpack.c.b16 %v10176, %v10176
  %v10193 = vpack.c.b16 %v10177, %v10177
  %v10194 = vpack.c.b16 %v10178, %v10178
  %v10195 = vpack.c.b16 %v10179, %v10179
  %v10196 = vpack.c.b16 %v10180, %v10180
  %v10197 = vpack.c.b16 %v10181, %v10181
  %v10198 = vpack.c.b16 %v10182, %v10182
  %v10199 = vpack.c.b16 %v10183, %v10183
  %10200 = vrot.lane.b32.xlu0 %v10184, 8
  %v10201 = vpop.permute.xlu0 %10200
  %10202 = vrot.lane.b32.xlu0 %v10185, 8
  %v10203 = vpop.permute.xlu0 %10202
  %10204 = vrot.lane.b32.xlu0 %v10186, 8
  %v10205 = vpop.permute.xlu0 %10204
  %10206 = vrot.lane.b32.xlu0 %v10187, 8
  %v10207 = vpop.permute.xlu0 %10206
  %10208 = vrot.lane.b32.xlu0 %v10188, 8
  %v10209 = vpop.permute.xlu0 %10208
  %10210 = vrot.lane.b32.xlu0 %v10189, 8
  %v10211 = vpop.permute.xlu0 %10210
  %10212 = vrot.lane.b32.xlu0 %v10190, 8
  %v10213 = vpop.permute.xlu0 %10212
  %10214 = vrot.lane.b32.xlu0 %v10191, 8
  %v10215 = vpop.permute.xlu0 %10214
  %10216 = vrot.lane.b32.xlu0 %v10192, 8
  %v10217 = vpop.permute.xlu0 %10216
  %10218 = vrot.lane.b32.xlu0 %v10193, 8
  %v10219 = vpop.permute.xlu0 %10218
  %10220 = vrot.lane.b32.xlu0 %v10194, 8
  %v10221 = vpop.permute.xlu0 %10220
  %10222 = vrot.lane.b32.xlu0 %v10195, 8
  %v10223 = vpop.permute.xlu0 %10222
  %10224 = vrot.lane.b32.xlu0 %v10196, 8
  %v10225 = vpop.permute.xlu0 %10224
  %10226 = vrot.lane.b32.xlu0 %v10197, 8
  %v10227 = vpop.permute.xlu0 %10226
  %10228 = vrot.lane.b32.xlu0 %v10198, 8
  %v10229 = vpop.permute.xlu0 %10228
  %10230 = vrot.lane.b32.xlu0 %v10199, 8
  %v10231 = vpop.permute.xlu0 %10230
  %10248 = vst.msk [vmem:[#allocation5] sm:$0xf] %vm9828, %v10201
  %10249 = vst.msk [vmem:[#allocation5 + $0x4] sm:$0xf] %vm9828, %v10203
  %10250 = vst.msk [vmem:[#allocation5 + $0x8] sm:$0xf] %vm9828, %v10205
  %10251 = vst.msk [vmem:[#allocation5 + $0xc] sm:$0xf] %vm9828, %v10207
  %10252 = vst.msk [vmem:[#allocation5 + $0x10] sm:$0xf] %vm9828, %v10209
  %10253 = vst.msk [vmem:[#allocation5 + $0x14] sm:$0xf] %vm9828, %v10211
  %10254 = vst.msk [vmem:[#allocation5 + $0x18] sm:$0xf] %vm9828, %v10213
  %10255 = vst.msk [vmem:[#allocation5 + $0x1c] sm:$0xf] %vm9828, %v10215
  %10256 = vst.msk [vmem:[#allocation5 + $0x20] sm:$0xf] %vm9828, %v10217
  %10257 = vst.msk [vmem:[#allocation5 + $0x24] sm:$0xf] %vm9828, %v10219
  %10258 = vst.msk [vmem:[#allocation5 + $0x28] sm:$0xf] %vm9828, %v10221
  %10259 = vst.msk [vmem:[#allocation5 + $0x2c] sm:$0xf] %vm9828, %v10223
  %10260 = vst.msk [vmem:[#allocation5 + $0x30] sm:$0xf] %vm9828, %v10225
  %10261 = vst.msk [vmem:[#allocation5 + $0x34] sm:$0xf] %vm9828, %v10227
  %10262 = vst.msk [vmem:[#allocation5 + $0x38] sm:$0xf] %vm9828, %v10229
  %10263 = vst.msk [vmem:[#allocation5 + $0x3c] sm:$0xf] %vm9828, %v10231
  %s10264 = scalar_lea.vmem %s9523, 2 [#allocation3]
  %v10265 = vld [vmem:[%s10264] ss:$2 sm:$0xff]
  %s10266 = scalar_lea.vmem %s9523, 50 [#allocation3]
  %v10267 = vld [vmem:[%s10266] ss:$2 sm:$0xff]
  %s10268 = scalar_lea.vmem %s9523, 98 [#allocation3]
  %v10269 = vld [vmem:[%s10268] ss:$2 sm:$0xff]
  %s10270 = scalar_lea.vmem %s9523, 146 [#allocation3]
  %v10271 = vld [vmem:[%s10270] ss:$2 sm:$0xff]
  %s10272 = scalar_lea.vmem %s9523, 194 [#allocation3]
  %v10273 = vld [vmem:[%s10272] ss:$2 sm:$0xff]
  %s10274 = scalar_lea.vmem %s9523, 242 [#allocation3]
  %v10275 = vld [vmem:[%s10274] ss:$2 sm:$0xff]
  %s10276 = scalar_lea.vmem %s9523, 290 [#allocation3]
  %v10277 = vld [vmem:[%s10276] ss:$2 sm:$0xff]
  %s10278 = scalar_lea.vmem %s9523, 338 [#allocation3]
  %v10279 = vld [vmem:[%s10278] ss:$2 sm:$0xff]
  %s10280 = scalar_lea.vmem %s9523, 434 [#allocation3]
  %v10281 = vld [vmem:[%s10280] ss:$2 sm:$0xff]
  %s10282 = scalar_lea.vmem %s9523, 482 [#allocation3]
  %v10283 = vld [vmem:[%s10282] ss:$2 sm:$0xff]
  %s10284 = scalar_lea.vmem %s9523, 530 [#allocation3]
  %v10285 = vld [vmem:[%s10284] ss:$2 sm:$0xff]
  %s10286 = scalar_lea.vmem %s9523, 578 [#allocation3]
  %v10287 = vld [vmem:[%s10286] ss:$2 sm:$0xff]
  %s10288 = scalar_lea.vmem %s9523, 626 [#allocation3]
  %v10289 = vld [vmem:[%s10288] ss:$2 sm:$0xff]
  %s10290 = scalar_lea.vmem %s9523, 674 [#allocation3]
  %v10291 = vld [vmem:[%s10290] ss:$2 sm:$0xff]
  %s10292 = scalar_lea.vmem %s9523, 722 [#allocation3]
  %v10293 = vld [vmem:[%s10292] ss:$2 sm:$0xff]
  %s10294 = scalar_lea.vmem %s9523, 770 [#allocation3]
  %v10295 = vld [vmem:[%s10294] ss:$2 sm:$0xff]
  %v10296 = vpack.c.bf16 %v10267, %v10265
  %v10297 = vpack.c.bf16 %v10271, %v10269
  %v10298 = vpack.c.bf16 %v10275, %v10273
  %v10299 = vpack.c.bf16 %v10279, %v10277
  %v10300 = vpack.c.bf16 %v10283, %v10281
  %v10301 = vpack.c.bf16 %v10287, %v10285
  %v10302 = vpack.c.bf16 %v10291, %v10289
  %v10303 = vpack.c.bf16 %v10295, %v10293
  %v10312 = vunpack.c.l.b16 %v10296
  %v10313 = vunpack.c.h.b16 %v10296
  %v10314 = vunpack.c.l.b16 %v10297
  %v10315 = vunpack.c.h.b16 %v10297
  %v10316 = vunpack.c.l.b16 %v10298
  %v10317 = vunpack.c.h.b16 %v10298
  %v10318 = vunpack.c.l.b16 %v10299
  %v10319 = vunpack.c.h.b16 %v10299
  %v10320 = vunpack.c.l.b16 %v10300
  %v10321 = vunpack.c.h.b16 %v10300
  %v10322 = vunpack.c.l.b16 %v10301
  %v10323 = vunpack.c.h.b16 %v10301
  %v10324 = vunpack.c.l.b16 %v10302
  %v10325 = vunpack.c.h.b16 %v10302
  %v10326 = vunpack.c.l.b16 %v10303
  %v10327 = vunpack.c.h.b16 %v10303
  %v10328 = vpack.c.b16 %v10312, %v10312
  %v10329 = vpack.c.b16 %v10313, %v10313
  %v10330 = vpack.c.b16 %v10314, %v10314
  %v10331 = vpack.c.b16 %v10315, %v10315
  %v10332 = vpack.c.b16 %v10316, %v10316
  %v10333 = vpack.c.b16 %v10317, %v10317
  %v10334 = vpack.c.b16 %v10318, %v10318
  %v10335 = vpack.c.b16 %v10319, %v10319
  %v10336 = vpack.c.b16 %v10320, %v10320
  %v10337 = vpack.c.b16 %v10321, %v10321
  %v10338 = vpack.c.b16 %v10322, %v10322
  %v10339 = vpack.c.b16 %v10323, %v10323
  %v10340 = vpack.c.b16 %v10324, %v10324
  %v10341 = vpack.c.b16 %v10325, %v10325
  %v10342 = vpack.c.b16 %v10326, %v10326
  %v10343 = vpack.c.b16 %v10327, %v10327
  %10344 = vrot.lane.b32.xlu0 %v10328, 16
  %v10345 = vpop.permute.xlu0 %10344
  %10346 = vrot.lane.b32.xlu0 %v10329, 16
  %v10347 = vpop.permute.xlu0 %10346
  %10348 = vrot.lane.b32.xlu0 %v10330, 16
  %v10349 = vpop.permute.xlu0 %10348
  %10350 = vrot.lane.b32.xlu0 %v10331, 16
  %v10351 = vpop.permute.xlu0 %10350
  %10352 = vrot.lane.b32.xlu0 %v10332, 16
  %v10353 = vpop.permute.xlu0 %10352
  %10354 = vrot.lane.b32.xlu0 %v10333, 16
  %v10355 = vpop.permute.xlu0 %10354
  %10356 = vrot.lane.b32.xlu0 %v10334, 16
  %v10357 = vpop.permute.xlu0 %10356
  %10358 = vrot.lane.b32.xlu0 %v10335, 16
  %v10359 = vpop.permute.xlu0 %10358
  %10360 = vrot.lane.b32.xlu0 %v10336, 16
  %v10361 = vpop.permute.xlu0 %10360
  %10362 = vrot.lane.b32.xlu0 %v10337, 16
  %v10363 = vpop.permute.xlu0 %10362
  %10364 = vrot.lane.b32.xlu0 %v10338, 16
  %v10365 = vpop.permute.xlu0 %10364
  %10366 = vrot.lane.b32.xlu0 %v10339, 16
  %v10367 = vpop.permute.xlu0 %10366
  %10368 = vrot.lane.b32.xlu0 %v10340, 16
  %v10369 = vpop.permute.xlu0 %10368
  %10370 = vrot.lane.b32.xlu0 %v10341, 16
  %v10371 = vpop.permute.xlu0 %10370
  %10372 = vrot.lane.b32.xlu0 %v10342, 16
  %v10373 = vpop.permute.xlu0 %10372
  %10374 = vrot.lane.b32.xlu0 %v10343, 16
  %v10375 = vpop.permute.xlu0 %10374
  %10392 = vst.msk [vmem:[#allocation5] sm:$0xf] %vm9973, %v10345
  %10393 = vst.msk [vmem:[#allocation5 + $0x4] sm:$0xf] %vm9973, %v10347
  %10394 = vst.msk [vmem:[#allocation5 + $0x8] sm:$0xf] %vm9973, %v10349
  %10395 = vst.msk [vmem:[#allocation5 + $0xc] sm:$0xf] %vm9973, %v10351
  %10396 = vst.msk [vmem:[#allocation5 + $0x10] sm:$0xf] %vm9973, %v10353
  %10397 = vst.msk [vmem:[#allocation5 + $0x14] sm:$0xf] %vm9973, %v10355
  %10398 = vst.msk [vmem:[#allocation5 + $0x18] sm:$0xf] %vm9973, %v10357
  %10399 = vst.msk [vmem:[#allocation5 + $0x1c] sm:$0xf] %vm9973, %v10359
  %10400 = vst.msk [vmem:[#allocation5 + $0x20] sm:$0xf] %vm9973, %v10361
  %10401 = vst.msk [vmem:[#allocation5 + $0x24] sm:$0xf] %vm9973, %v10363
  %10402 = vst.msk [vmem:[#allocation5 + $0x28] sm:$0xf] %vm9973, %v10365
  %10403 = vst.msk [vmem:[#allocation5 + $0x2c] sm:$0xf] %vm9973, %v10367
  %10404 = vst.msk [vmem:[#allocation5 + $0x30] sm:$0xf] %vm9973, %v10369
  %10405 = vst.msk [vmem:[#allocation5 + $0x34] sm:$0xf] %vm9973, %v10371
  %10406 = vst.msk [vmem:[#allocation5 + $0x38] sm:$0xf] %vm9973, %v10373
  %10407 = vst.msk [vmem:[#allocation5 + $0x3c] sm:$0xf] %vm9973, %v10375
  %v10408 = vld [vmem:[#allocation5] sm:$0xf]
  %v10409 = vld [vmem:[#allocation5 + $0x4] sm:$0xf]
  %v10410 = vld [vmem:[#allocation5 + $0x8] sm:$0xf]
  %v10411 = vld [vmem:[#allocation5 + $0xc] sm:$0xf]
  %v10412 = vld [vmem:[#allocation5 + $0x10] sm:$0xf]
  %v10413 = vld [vmem:[#allocation5 + $0x14] sm:$0xf]
  %v10414 = vld [vmem:[#allocation5 + $0x18] sm:$0xf]
  %v10415 = vld [vmem:[#allocation5 + $0x1c] sm:$0xf]
  %v10416 = vld [vmem:[#allocation5 + $0x20] sm:$0xf]
  %v10417 = vld [vmem:[#allocation5 + $0x24] sm:$0xf]
  %v10418 = vld [vmem:[#allocation5 + $0x28] sm:$0xf]
  %v10419 = vld [vmem:[#allocation5 + $0x2c] sm:$0xf]
  %v10420 = vld [vmem:[#allocation5 + $0x30] sm:$0xf]
  %v10421 = vld [vmem:[#allocation5 + $0x34] sm:$0xf]
  %v10422 = vld [vmem:[#allocation5 + $0x38] sm:$0xf]
  %v10423 = vld [vmem:[#allocation5 + $0x3c] sm:$0xf]
  %s10424 = scalar_lea.vmem %s5, 12
  %v10425 = vld [vmem:[%s10424] sm:$0xf]
  %v10426 = vld [vmem:[%s10424 + $0x4] sm:$0xf]
  %v10427 = vld [vmem:[%s10424 + $0x8] sm:$0xf]
  %v10444 = vunpack.c.l.b16 %v10408
  %v10445 = vunpack.c.l.b16 %v10409
  %v10446 = vunpack.c.l.b16 %v10410
  %v10447 = vunpack.c.l.b16 %v10411
  %v10448 = vunpack.c.l.b16 %v10412
  %v10449 = vunpack.c.l.b16 %v10413
  %v10450 = vunpack.c.l.b16 %v10414
  %v10451 = vunpack.c.l.b16 %v10415
  %v10452 = vunpack.c.l.b16 %v10416
  %v10453 = vunpack.c.l.b16 %v10417
  %v10454 = vunpack.c.l.b16 %v10418
  %v10455 = vunpack.c.l.b16 %v10419
  %v10456 = vunpack.c.l.b16 %v10420
  %v10457 = vunpack.c.l.b16 %v10421
  %v10458 = vunpack.c.l.b16 %v10422
  %v10459 = vunpack.c.l.b16 %v10423
  %v10460 = vpack.c.b16 %v10445, %v10444
  %v10461 = vpack.c.b16 %v10447, %v10446
  %v10462 = vpack.c.b16 %v10449, %v10448
  %v10463 = vpack.c.b16 %v10451, %v10450
  %v10464 = vpack.c.b16 %v10453, %v10452
  %v10465 = vpack.c.b16 %v10455, %v10454
  %v10466 = vpack.c.b16 %v10457, %v10456
  %v10467 = vpack.c.b16 %v10459, %v10458
  %v10471 = vunpack.c.l.b16 %v10425
  %v10472 = vunpack.c.l.b16 %v10426
  %v10473 = vunpack.c.l.b16 %v10427
  %v10474 = vpack.c.b16 %v10472, %v10471
  %v10475 = vpack.c.b16 %v10473, %v10473
  %vm10477 = vcmask 195584
  %v10479 = vsel %vm10477, %v10460, 0
  %v10482 = vsel %vm10477, %v10461, 0
  %v10485 = vsel %vm10477, %v10462, 0
  %v10488 = vsel %vm10477, %v10463, 0
  %v10491 = vsel %vm10477, %v10464, 0
  %v10494 = vsel %vm10477, %v10465, 0
  %v10497 = vsel %vm10477, %v10466, 0
  %v10500 = vsel %vm10477, %v10467, 0
  %vm10502 = vcmask 1043456
  %v10504 = vsel %vm10502, %v10475, 0
  %10506 = vmatprep.subr.bf16.mxu0 0
  %10507 = vmatpush1.bf16.msra.mxu0 0
  %10508 = vmatprep.subr.bf16.mxu0 0
  %10509 = vmatpush1.bf16.msra.mxu0 0
  %10510 = vmatprep.subr.bf16.mxu0 0
  %10511 = vmatpush1.bf16.msra.mxu0 0
  %10512 = vmatprep.subr.bf16.mxu0 0
  %10513 = vmatpush1.bf16.msra.mxu0 0
  %10514 = vmatprep.subr.bf16.mxu0 0
  %10515 = vmatpush1.bf16.msra.mxu0 0
  %10516 = vmatprep.subr.bf16.mxu0 0
  %10517 = vmatpush1.bf16.msra.mxu0 0
  %10518 = vmatprep.subr.bf16.mxu0 0
  %10519 = vmatpush1.bf16.msra.mxu0 %v10504
  %10520 = vmatprep.subr.bf16.mxu0 0
  %10521 = vmatpush1.bf16.msra.mxu0 %v10474
  %10522 = vmatprep.subr.bf16.mxu0 0
  %10523 = vmatpush2.bf16.msra.mxu0 0
  %10524 = vmatprep.subr.bf16.mxu0 0
  %10525 = vmatpush2.bf16.msra.mxu0 0
  %10526 = vmatprep.subr.bf16.mxu0 0
  %10527 = vmatpush2.bf16.msra.mxu0 0
  %10528 = vmatprep.subr.bf16.mxu0 0
  %10529 = vmatpush2.bf16.msra.mxu0 0
  %10530 = vmatprep.subr.bf16.mxu0 0
  %10531 = vmatpush2.bf16.msra.mxu0 0
  %10532 = vmatprep.subr.bf16.mxu0 0
  %10533 = vmatpush2.bf16.msra.mxu0 0
  %10534 = vmatprep.subr.bf16.mxu0 0
  %10535 = vmatpush2.bf16.msra.mxu0 0
  %10536 = vmatprep.subr.bf16.mxu0 0
  %10537 = vmatpush2.bf16.msra.mxu0 0
  %10538 = vmatprep.mubr.bf16.mxu0 0
  %10539 = vmatmul.mubr.bf16.gmra.mxu0 %v10479
  %v10540 = vpop.f32.mrf.mxu0
  %v10541 = vadd.f32 0.0, %v10540
  %v10542 = vpop.f32.mrf.mxu0
  %v10543 = vpop.f32.mrf.mxu0
  %v10544 = vadd.f32 0.0, %v10543
  %v10545 = vpop.f32.mrf.mxu0
  %10546 = vmatprep.mubr.bf16.mxu0 0
  %10547 = vmatmul.mubr.bf16.gmra.mxu0 %v10482
  %v10548 = vpop.f32.mrf.mxu0
  %v10549 = vadd.f32 0.0, %v10548
  %v10550 = vpop.f32.mrf.mxu0
  %v10551 = vpop.f32.mrf.mxu0
  %v10552 = vadd.f32 0.0, %v10551
  %v10553 = vpop.f32.mrf.mxu0
  %10554 = vmatprep.mubr.bf16.mxu0 0
  %10555 = vmatmul.mubr.bf16.gmra.mxu0 %v10485
  %v10556 = vpop.f32.mrf.mxu0
  %v10557 = vadd.f32 0.0, %v10556
  %v10558 = vpop.f32.mrf.mxu0
  %v10559 = vpop.f32.mrf.mxu0
  %v10560 = vadd.f32 0.0, %v10559
  %v10561 = vpop.f32.mrf.mxu0
  %10562 = vmatprep.mubr.bf16.mxu0 0
  %10563 = vmatmul.mubr.bf16.gmra.mxu0 %v10488
  %v10564 = vpop.f32.mrf.mxu0
  %v10565 = vadd.f32 0.0, %v10564
  %v10566 = vpop.f32.mrf.mxu0
  %v10567 = vpop.f32.mrf.mxu0
  %v10568 = vadd.f32 0.0, %v10567
  %v10569 = vpop.f32.mrf.mxu0
  %10570 = vmatprep.mubr.bf16.mxu0 0
  %10571 = vmatmul.mubr.bf16.gmra.mxu0 %v10491
  %v10572 = vpop.f32.mrf.mxu0
  %v10573 = vadd.f32 0.0, %v10572
  %v10574 = vpop.f32.mrf.mxu0
  %v10575 = vpop.f32.mrf.mxu0
  %v10576 = vadd.f32 0.0, %v10575
  %v10577 = vpop.f32.mrf.mxu0
  %10578 = vmatprep.mubr.bf16.mxu0 0
  %10579 = vmatmul.mubr.bf16.gmra.mxu0 %v10494
  %v10580 = vpop.f32.mrf.mxu0
  %v10581 = vadd.f32 0.0, %v10580
  %v10582 = vpop.f32.mrf.mxu0
  %v10583 = vpop.f32.mrf.mxu0
  %v10584 = vadd.f32 0.0, %v10583
  %v10585 = vpop.f32.mrf.mxu0
  %10586 = vmatprep.mubr.bf16.mxu0 0
  %10587 = vmatmul.mubr.bf16.gmra.mxu0 %v10497
  %v10588 = vpop.f32.mrf.mxu0
  %v10589 = vadd.f32 0.0, %v10588
  %v10590 = vpop.f32.mrf.mxu0
  %v10591 = vpop.f32.mrf.mxu0
  %v10592 = vadd.f32 0.0, %v10591
  %v10593 = vpop.f32.mrf.mxu0
  %10594 = vmatprep.mubr.bf16.mxu0 0
  %10595 = vmatmul.mubr.bf16.gmra.mxu0 %v10500
  %v10596 = vpop.f32.mrf.mxu0
  %v10597 = vadd.f32 0.0, %v10596
  %v10598 = vpop.f32.mrf.mxu0
  %v10599 = vpop.f32.mrf.mxu0
  %v10600 = vadd.f32 0.0, %v10599
  %v10601 = vpop.f32.mrf.mxu0
  %10602 = vdwg.mxu0
  %v10619 = vunpack.c.l.b16 %v9990
  %v10620 = vunpack.c.l.b16 %v9991
  %v10621 = vunpack.c.l.b16 %v9992
  %v10622 = vunpack.c.l.b16 %v9993
  %v10623 = vunpack.c.l.b16 %v9994
  %v10624 = vunpack.c.l.b16 %v9995
  %v10625 = vunpack.c.l.b16 %v9996
  %v10626 = vunpack.c.l.b16 %v9997
  %v10627 = vunpack.c.l.b16 %v9998
  %v10628 = vunpack.c.l.b16 %v9999
  %v10629 = vunpack.c.l.b16 %v10000
  %v10630 = vunpack.c.l.b16 %v10001
  %v10631 = vunpack.c.l.b16 %v10002
  %v10632 = vunpack.c.l.b16 %v10003
  %v10633 = vunpack.c.l.b16 %v10004
  %v10634 = vunpack.c.l.b16 %v10005
  %v10635 = vpack.c.b16 %v10620, %v10619
  %v10636 = vpack.c.b16 %v10622, %v10621
  %v10637 = vpack.c.b16 %v10624, %v10623
  %v10638 = vpack.c.b16 %v10626, %v10625
  %v10639 = vpack.c.b16 %v10628, %v10627
  %v10640 = vpack.c.b16 %v10630, %v10629
  %v10641 = vpack.c.b16 %v10632, %v10631
  %v10642 = vpack.c.b16 %v10634, %v10633
  %v10646 = vunpack.c.l.b16 %v10006
  %v10647 = vunpack.c.l.b16 %v10007
  %v10648 = vunpack.c.l.b16 %v10008
  %v10649 = vpack.c.b16 %v10647, %v10646
  %v10650 = vpack.c.b16 %v10648, %v10648
  %v10653 = vsel %vm10477, %v10635, 0
  %v10656 = vsel %vm10477, %v10636, 0
  %v10659 = vsel %vm10477, %v10637, 0
  %v10662 = vsel %vm10477, %v10638, 0
  %v10665 = vsel %vm10477, %v10639, 0
  %v10668 = vsel %vm10477, %v10640, 0
  %v10671 = vsel %vm10477, %v10641, 0
  %v10674 = vsel %vm10477, %v10642, 0
  %v10677 = vsel %vm10502, %v10650, 0
  %10679 = vmatprep.subr.bf16.mxu0 0
  %10680 = vmatpush1.bf16.msra.mxu0 0
  %10681 = vmatprep.subr.bf16.mxu0 0
  %10682 = vmatpush1.bf16.msra.mxu0 0
  %10683 = vmatprep.subr.bf16.mxu0 0
  %10684 = vmatpush1.bf16.msra.mxu0 0
  %10685 = vmatprep.subr.bf16.mxu0 0
  %10686 = vmatpush1.bf16.msra.mxu0 0
  %10687 = vmatprep.subr.bf16.mxu0 0
  %10688 = vmatpush1.bf16.msra.mxu0 0
  %10689 = vmatprep.subr.bf16.mxu0 0
  %10690 = vmatpush1.bf16.msra.mxu0 0
  %10691 = vmatprep.subr.bf16.mxu0 0
  %10692 = vmatpush1.bf16.msra.mxu0 %v10677
  %10693 = vmatprep.subr.bf16.mxu0 0
  %10694 = vmatpush1.bf16.msra.mxu0 %v10649
  %10695 = vmatprep.subr.bf16.mxu0 0
  %10696 = vmatpush2.bf16.msra.mxu0 0
  %10697 = vmatprep.subr.bf16.mxu0 0
  %10698 = vmatpush2.bf16.msra.mxu0 0
  %10699 = vmatprep.subr.bf16.mxu0 0
  %10700 = vmatpush2.bf16.msra.mxu0 0
  %10701 = vmatprep.subr.bf16.mxu0 0
  %10702 = vmatpush2.bf16.msra.mxu0 0
  %10703 = vmatprep.subr.bf16.mxu0 0
  %10704 = vmatpush2.bf16.msra.mxu0 0
  %10705 = vmatprep.subr.bf16.mxu0 0
  %10706 = vmatpush2.bf16.msra.mxu0 0
  %10707 = vmatprep.subr.bf16.mxu0 0
  %10708 = vmatpush2.bf16.msra.mxu0 0
  %10709 = vmatprep.subr.bf16.mxu0 0
  %10710 = vmatpush2.bf16.msra.mxu0 0
  %10711 = vmatprep.mubr.bf16.mxu0 0
  %10712 = vmatmul.mubr.bf16.gmra.mxu0 %v10653
  %v10713 = vpop.f32.mrf.mxu0
  %v10714 = vadd.f32 %v10541, %v10713
  %v10715 = vpop.f32.mrf.mxu0
  %v10716 = vpop.f32.mrf.mxu0
  %v10717 = vadd.f32 %v10544, %v10716
  %v10718 = vpop.f32.mrf.mxu0
  %10719 = vmatprep.mubr.bf16.mxu0 0
  %10720 = vmatmul.mubr.bf16.gmra.mxu0 %v10656
  %v10721 = vpop.f32.mrf.mxu0
  %v10722 = vadd.f32 %v10549, %v10721
  %v10723 = vpop.f32.mrf.mxu0
  %v10724 = vpop.f32.mrf.mxu0
  %v10725 = vadd.f32 %v10552, %v10724
  %v10726 = vpop.f32.mrf.mxu0
  %10727 = vmatprep.mubr.bf16.mxu0 0
  %10728 = vmatmul.mubr.bf16.gmra.mxu0 %v10659
  %v10729 = vpop.f32.mrf.mxu0
  %v10730 = vadd.f32 %v10557, %v10729
  %v10731 = vpop.f32.mrf.mxu0
  %v10732 = vpop.f32.mrf.mxu0
  %v10733 = vadd.f32 %v10560, %v10732
  %v10734 = vpop.f32.mrf.mxu0
  %10735 = vmatprep.mubr.bf16.mxu0 0
  %10736 = vmatmul.mubr.bf16.gmra.mxu0 %v10662
  %v10737 = vpop.f32.mrf.mxu0
  %v10738 = vadd.f32 %v10565, %v10737
  %v10739 = vpop.f32.mrf.mxu0
  %v10740 = vpop.f32.mrf.mxu0
  %v10741 = vadd.f32 %v10568, %v10740
  %v10742 = vpop.f32.mrf.mxu0
  %10743 = vmatprep.mubr.bf16.mxu0 0
  %10744 = vmatmul.mubr.bf16.gmra.mxu0 %v10665
  %v10745 = vpop.f32.mrf.mxu0
  %v10746 = vadd.f32 %v10573, %v10745
  %v10747 = vpop.f32.mrf.mxu0
  %v10748 = vpop.f32.mrf.mxu0
  %v10749 = vadd.f32 %v10576, %v10748
  %v10750 = vpop.f32.mrf.mxu0
  %10751 = vmatprep.mubr.bf16.mxu0 0
  %10752 = vmatmul.mubr.bf16.gmra.mxu0 %v10668
  %v10753 = vpop.f32.mrf.mxu0
  %v10754 = vadd.f32 %v10581, %v10753
  %v10755 = vpop.f32.mrf.mxu0
  %v10756 = vpop.f32.mrf.mxu0
  %v10757 = vadd.f32 %v10584, %v10756
  %v10758 = vpop.f32.mrf.mxu0
  %10759 = vmatprep.mubr.bf16.mxu0 0
  %10760 = vmatmul.mubr.bf16.gmra.mxu0 %v10671
  %v10761 = vpop.f32.mrf.mxu0
  %v10762 = vadd.f32 %v10589, %v10761
  %v10763 = vpop.f32.mrf.mxu0
  %v10764 = vpop.f32.mrf.mxu0
  %v10765 = vadd.f32 %v10592, %v10764
  %v10766 = vpop.f32.mrf.mxu0
  %10767 = vmatprep.mubr.bf16.mxu0 0
  %10768 = vmatmul.mubr.bf16.gmra.mxu0 %v10674
  %v10769 = vpop.f32.mrf.mxu0
  %v10770 = vadd.f32 %v10597, %v10769
  %v10771 = vpop.f32.mrf.mxu0
  %v10772 = vpop.f32.mrf.mxu0
  %v10773 = vadd.f32 %v10600, %v10772
  %v10774 = vpop.f32.mrf.mxu0
  %10775 = vdwg.mxu0
  %s10776 = scalar_lea.vmem [#allocation3], 48
  %v10777 = vld [vmem:[%s10776] ss:$2 sm:$0xff]
  %s10778 = scalar_lea.vmem %s10776, 48 [#allocation3]
  %v10779 = vld [vmem:[%s10778] ss:$2 sm:$0xff]
  %s10780 = scalar_lea.vmem %s10776, 96 [#allocation3]
  %v10781 = vld [vmem:[%s10780] ss:$2 sm:$0xff]
  %s10782 = scalar_lea.vmem %s10776, 144 [#allocation3]
  %v10783 = vld [vmem:[%s10782] ss:$2 sm:$0xff]
  %s10784 = scalar_lea.vmem %s10776, 192 [#allocation3]
  %v10785 = vld [vmem:[%s10784] ss:$2 sm:$0xff]
  %s10786 = scalar_lea.vmem %s10776, 240 [#allocation3]
  %v10787 = vld [vmem:[%s10786] ss:$2 sm:$0xff]
  %s10788 = scalar_lea.vmem %s10776, 288 [#allocation3]
  %v10789 = vld [vmem:[%s10788] ss:$2 sm:$0xff]
  %s10790 = scalar_lea.vmem %s10776, 336 [#allocation3]
  %v10791 = vld [vmem:[%s10790] ss:$2 sm:$0xff]
  %s10792 = scalar_lea.vmem %s10776, 432 [#allocation3]
  %v10793 = vld [vmem:[%s10792] ss:$2 sm:$0xff]
  %s10794 = scalar_lea.vmem %s10776, 480 [#allocation3]
  %v10795 = vld [vmem:[%s10794] ss:$2 sm:$0xff]
  %s10796 = scalar_lea.vmem %s10776, 528 [#allocation3]
  %v10797 = vld [vmem:[%s10796] ss:$2 sm:$0xff]
  %s10798 = scalar_lea.vmem %s10776, 576 [#allocation3]
  %v10799 = vld [vmem:[%s10798] ss:$2 sm:$0xff]
  %s10800 = scalar_lea.vmem %s10776, 624 [#allocation3]
  %v10801 = vld [vmem:[%s10800] ss:$2 sm:$0xff]
  %s10802 = scalar_lea.vmem %s10776, 672 [#allocation3]
  %v10803 = vld [vmem:[%s10802] ss:$2 sm:$0xff]
  %s10804 = scalar_lea.vmem %s10776, 720 [#allocation3]
  %v10805 = vld [vmem:[%s10804] ss:$2 sm:$0xff]
  %s10806 = scalar_lea.vmem %s10776, 768 [#allocation3]
  %v10807 = vld [vmem:[%s10806] ss:$2 sm:$0xff]
  %v10808 = vpack.c.bf16 %v10779, %v10777
  %v10809 = vpack.c.bf16 %v10783, %v10781
  %v10810 = vpack.c.bf16 %v10787, %v10785
  %v10811 = vpack.c.bf16 %v10791, %v10789
  %v10812 = vpack.c.bf16 %v10795, %v10793
  %v10813 = vpack.c.bf16 %v10799, %v10797
  %v10814 = vpack.c.bf16 %v10803, %v10801
  %v10815 = vpack.c.bf16 %v10807, %v10805
  %v10824 = vunpack.c.l.b16 %v10808
  %v10825 = vunpack.c.h.b16 %v10808
  %v10826 = vunpack.c.l.b16 %v10809
  %v10827 = vunpack.c.h.b16 %v10809
  %v10828 = vunpack.c.l.b16 %v10810
  %v10829 = vunpack.c.h.b16 %v10810
  %v10830 = vunpack.c.l.b16 %v10811
  %v10831 = vunpack.c.h.b16 %v10811
  %v10832 = vunpack.c.l.b16 %v10812
  %v10833 = vunpack.c.h.b16 %v10812
  %v10834 = vunpack.c.l.b16 %v10813
  %v10835 = vunpack.c.h.b16 %v10813
  %v10836 = vunpack.c.l.b16 %v10814
  %v10837 = vunpack.c.h.b16 %v10814
  %v10838 = vunpack.c.l.b16 %v10815
  %v10839 = vunpack.c.h.b16 %v10815
  %v10840 = vpack.c.b16 %v10824, %v10824
  %v10841 = vpack.c.b16 %v10825, %v10825
  %v10842 = vpack.c.b16 %v10826, %v10826
  %v10843 = vpack.c.b16 %v10827, %v10827
  %v10844 = vpack.c.b16 %v10828, %v10828
  %v10845 = vpack.c.b16 %v10829, %v10829
  %v10846 = vpack.c.b16 %v10830, %v10830
  %v10847 = vpack.c.b16 %v10831, %v10831
  %v10848 = vpack.c.b16 %v10832, %v10832
  %v10849 = vpack.c.b16 %v10833, %v10833
  %v10850 = vpack.c.b16 %v10834, %v10834
  %v10851 = vpack.c.b16 %v10835, %v10835
  %v10852 = vpack.c.b16 %v10836, %v10836
  %v10853 = vpack.c.b16 %v10837, %v10837
  %v10854 = vpack.c.b16 %v10838, %v10838
  %v10855 = vpack.c.b16 %v10839, %v10839
  %10872 = vst.msk [vmem:[#allocation5] sm:$0xf] %vm9683, %v10840
  %10873 = vst.msk [vmem:[#allocation5 + $0x4] sm:$0xf] %vm9683, %v10841
  %10874 = vst.msk [vmem:[#allocation5 + $0x8] sm:$0xf] %vm9683, %v10842
  %10875 = vst.msk [vmem:[#allocation5 + $0xc] sm:$0xf] %vm9683, %v10843
  %10876 = vst.msk [vmem:[#allocation5 + $0x10] sm:$0xf] %vm9683, %v10844
  %10877 = vst.msk [vmem:[#allocation5 + $0x14] sm:$0xf] %vm9683, %v10845
  %10878 = vst.msk [vmem:[#allocation5 + $0x18] sm:$0xf] %vm9683, %v10846
  %10879 = vst.msk [vmem:[#allocation5 + $0x1c] sm:$0xf] %vm9683, %v10847
  %10880 = vst.msk [vmem:[#allocation5 + $0x20] sm:$0xf] %vm9683, %v10848
  %10881 = vst.msk [vmem:[#allocation5 + $0x24] sm:$0xf] %vm9683, %v10849
  %10882 = vst.msk [vmem:[#allocation5 + $0x28] sm:$0xf] %vm9683, %v10850
  %10883 = vst.msk [vmem:[#allocation5 + $0x2c] sm:$0xf] %vm9683, %v10851
  %10884 = vst.msk [vmem:[#allocation5 + $0x30] sm:$0xf] %vm9683, %v10852
  %10885 = vst.msk [vmem:[#allocation5 + $0x34] sm:$0xf] %vm9683, %v10853
  %10886 = vst.msk [vmem:[#allocation5 + $0x38] sm:$0xf] %vm9683, %v10854
  %10887 = vst.msk [vmem:[#allocation5 + $0x3c] sm:$0xf] %vm9683, %v10855
  %s10888 = scalar_lea.vmem %s10776, 1 [#allocation3]
  %v10889 = vld [vmem:[%s10888] ss:$2 sm:$0xff]
  %s10890 = scalar_lea.vmem %s10776, 49 [#allocation3]
  %v10891 = vld [vmem:[%s10890] ss:$2 sm:$0xff]
  %s10892 = scalar_lea.vmem %s10776, 97 [#allocation3]
  %v10893 = vld [vmem:[%s10892] ss:$2 sm:$0xff]
  %s10894 = scalar_lea.vmem %s10776, 145 [#allocation3]
  %v10895 = vld [vmem:[%s10894] ss:$2 sm:$0xff]
  %s10896 = scalar_lea.vmem %s10776, 193 [#allocation3]
  %v10897 = vld [vmem:[%s10896] ss:$2 sm:$0xff]
  %s10898 = scalar_lea.vmem %s10776, 241 [#allocation3]
  %v10899 = vld [vmem:[%s10898] ss:$2 sm:$0xff]
  %s10900 = scalar_lea.vmem %s10776, 289 [#allocation3]
  %v10901 = vld [vmem:[%s10900] ss:$2 sm:$0xff]
  %s10902 = scalar_lea.vmem %s10776, 337 [#allocation3]
  %v10903 = vld [vmem:[%s10902] ss:$2 sm:$0xff]
  %s10904 = scalar_lea.vmem %s10776, 433 [#allocation3]
  %v10905 = vld [vmem:[%s10904] ss:$2 sm:$0xff]
  %s10906 = scalar_lea.vmem %s10776, 481 [#allocation3]
  %v10907 = vld [vmem:[%s10906] ss:$2 sm:$0xff]
  %s10908 = scalar_lea.vmem %s10776, 529 [#allocation3]
  %v10909 = vld [vmem:[%s10908] ss:$2 sm:$0xff]
  %s10910 = scalar_lea.vmem %s10776, 577 [#allocation3]
  %v10911 = vld [vmem:[%s10910] ss:$2 sm:$0xff]
  %s10912 = scalar_lea.vmem %s10776, 625 [#allocation3]
  %v10913 = vld [vmem:[%s10912] ss:$2 sm:$0xff]
  %s10914 = scalar_lea.vmem %s10776, 673 [#allocation3]
  %v10915 = vld [vmem:[%s10914] ss:$2 sm:$0xff]
  %s10916 = scalar_lea.vmem %s10776, 721 [#allocation3]
  %v10917 = vld [vmem:[%s10916] ss:$2 sm:$0xff]
  %s10918 = scalar_lea.vmem %s10776, 769 [#allocation3]
  %v10919 = vld [vmem:[%s10918] ss:$2 sm:$0xff]
  %v10920 = vpack.c.bf16 %v10891, %v10889
  %v10921 = vpack.c.bf16 %v10895, %v10893
  %v10922 = vpack.c.bf16 %v10899, %v10897
  %v10923 = vpack.c.bf16 %v10903, %v10901
  %v10924 = vpack.c.bf16 %v10907, %v10905
  %v10925 = vpack.c.bf16 %v10911, %v10909
  %v10926 = vpack.c.bf16 %v10915, %v10913
  %v10927 = vpack.c.bf16 %v10919, %v10917
  %v10936 = vunpack.c.l.b16 %v10920
  %v10937 = vunpack.c.h.b16 %v10920
  %v10938 = vunpack.c.l.b16 %v10921
  %v10939 = vunpack.c.h.b16 %v10921
  %v10940 = vunpack.c.l.b16 %v10922
  %v10941 = vunpack.c.h.b16 %v10922
  %v10942 = vunpack.c.l.b16 %v10923
  %v10943 = vunpack.c.h.b16 %v10923
  %v10944 = vunpack.c.l.b16 %v10924
  %v10945 = vunpack.c.h.b16 %v10924
  %v10946 = vunpack.c.l.b16 %v10925
  %v10947 = vunpack.c.h.b16 %v10925
  %v10948 = vunpack.c.l.b16 %v10926
  %v10949 = vunpack.c.h.b16 %v10926
  %v10950 = vunpack.c.l.b16 %v10927
  %v10951 = vunpack.c.h.b16 %v10927
  %v10952 = vpack.c.b16 %v10936, %v10936
  %v10953 = vpack.c.b16 %v10937, %v10937
  %v10954 = vpack.c.b16 %v10938, %v10938
  %v10955 = vpack.c.b16 %v10939, %v10939
  %v10956 = vpack.c.b16 %v10940, %v10940
  %v10957 = vpack.c.b16 %v10941, %v10941
  %v10958 = vpack.c.b16 %v10942, %v10942
  %v10959 = vpack.c.b16 %v10943, %v10943
  %v10960 = vpack.c.b16 %v10944, %v10944
  %v10961 = vpack.c.b16 %v10945, %v10945
  %v10962 = vpack.c.b16 %v10946, %v10946
  %v10963 = vpack.c.b16 %v10947, %v10947
  %v10964 = vpack.c.b16 %v10948, %v10948
  %v10965 = vpack.c.b16 %v10949, %v10949
  %v10966 = vpack.c.b16 %v10950, %v10950
  %v10967 = vpack.c.b16 %v10951, %v10951
  %10968 = vrot.lane.b32.xlu0 %v10952, 8
  %v10969 = vpop.permute.xlu0 %10968
  %10970 = vrot.lane.b32.xlu0 %v10953, 8
  %v10971 = vpop.permute.xlu0 %10970
  %10972 = vrot.lane.b32.xlu0 %v10954, 8
  %v10973 = vpop.permute.xlu0 %10972
  %10974 = vrot.lane.b32.xlu0 %v10955, 8
  %v10975 = vpop.permute.xlu0 %10974
  %10976 = vrot.lane.b32.xlu0 %v10956, 8
  %v10977 = vpop.permute.xlu0 %10976
  %10978 = vrot.lane.b32.xlu0 %v10957, 8
  %v10979 = vpop.permute.xlu0 %10978
  %10980 = vrot.lane.b32.xlu0 %v10958, 8
  %v10981 = vpop.permute.xlu0 %10980
  %10982 = vrot.lane.b32.xlu0 %v10959, 8
  %v10983 = vpop.permute.xlu0 %10982
  %10984 = vrot.lane.b32.xlu0 %v10960, 8
  %v10985 = vpop.permute.xlu0 %10984
  %10986 = vrot.lane.b32.xlu0 %v10961, 8
  %v10987 = vpop.permute.xlu0 %10986
  %10988 = vrot.lane.b32.xlu0 %v10962, 8
  %v10989 = vpop.permute.xlu0 %10988
  %10990 = vrot.lane.b32.xlu0 %v10963, 8
  %v10991 = vpop.permute.xlu0 %10990
  %10992 = vrot.lane.b32.xlu0 %v10964, 8
  %v10993 = vpop.permute.xlu0 %10992
  %10994 = vrot.lane.b32.xlu0 %v10965, 8
  %v10995 = vpop.permute.xlu0 %10994
  %10996 = vrot.lane.b32.xlu0 %v10966, 8
  %v10997 = vpop.permute.xlu0 %10996
  %10998 = vrot.lane.b32.xlu0 %v10967, 8
  %v10999 = vpop.permute.xlu0 %10998
  %11016 = vst.msk [vmem:[#allocation5] sm:$0xf] %vm9828, %v10969
  %11017 = vst.msk [vmem:[#allocation5 + $0x4] sm:$0xf] %vm9828, %v10971
  %11018 = vst.msk [vmem:[#allocation5 + $0x8] sm:$0xf] %vm9828, %v10973
  %11019 = vst.msk [vmem:[#allocation5 + $0xc] sm:$0xf] %vm9828, %v10975
  %11020 = vst.msk [vmem:[#allocation5 + $0x10] sm:$0xf] %vm9828, %v10977
  %11021 = vst.msk [vmem:[#allocation5 + $0x14] sm:$0xf] %vm9828, %v10979
  %11022 = vst.msk [vmem:[#allocation5 + $0x18] sm:$0xf] %vm9828, %v10981
  %11023 = vst.msk [vmem:[#allocation5 + $0x1c] sm:$0xf] %vm9828, %v10983
  %11024 = vst.msk [vmem:[#allocation5 + $0x20] sm:$0xf] %vm9828, %v10985
  %11025 = vst.msk [vmem:[#allocation5 + $0x24] sm:$0xf] %vm9828, %v10987
  %11026 = vst.msk [vmem:[#allocation5 + $0x28] sm:$0xf] %vm9828, %v10989
  %11027 = vst.msk [vmem:[#allocation5 + $0x2c] sm:$0xf] %vm9828, %v10991
  %11028 = vst.msk [vmem:[#allocation5 + $0x30] sm:$0xf] %vm9828, %v10993
  %11029 = vst.msk [vmem:[#allocation5 + $0x34] sm:$0xf] %vm9828, %v10995
  %11030 = vst.msk [vmem:[#allocation5 + $0x38] sm:$0xf] %vm9828, %v10997
  %11031 = vst.msk [vmem:[#allocation5 + $0x3c] sm:$0xf] %vm9828, %v10999
  %s11032 = scalar_lea.vmem %s10776, 2 [#allocation3]
  %v11033 = vld [vmem:[%s11032] ss:$2 sm:$0xff]
  %s11034 = scalar_lea.vmem %s10776, 50 [#allocation3]
  %v11035 = vld [vmem:[%s11034] ss:$2 sm:$0xff]
  %s11036 = scalar_lea.vmem %s10776, 98 [#allocation3]
  %v11037 = vld [vmem:[%s11036] ss:$2 sm:$0xff]
  %s11038 = scalar_lea.vmem %s10776, 146 [#allocation3]
  %v11039 = vld [vmem:[%s11038] ss:$2 sm:$0xff]
  %s11040 = scalar_lea.vmem %s10776, 194 [#allocation3]
  %v11041 = vld [vmem:[%s11040] ss:$2 sm:$0xff]
  %s11042 = scalar_lea.vmem %s10776, 242 [#allocation3]
  %v11043 = vld [vmem:[%s11042] ss:$2 sm:$0xff]
  %s11044 = scalar_lea.vmem %s10776, 290 [#allocation3]
  %v11045 = vld [vmem:[%s11044] ss:$2 sm:$0xff]
  %s11046 = scalar_lea.vmem %s10776, 338 [#allocation3]
  %v11047 = vld [vmem:[%s11046] ss:$2 sm:$0xff]
  %s11048 = scalar_lea.vmem %s10776, 434 [#allocation3]
  %v11049 = vld [vmem:[%s11048] ss:$2 sm:$0xff]
  %s11050 = scalar_lea.vmem %s10776, 482 [#allocation3]
  %v11051 = vld [vmem:[%s11050] ss:$2 sm:$0xff]
  %s11052 = scalar_lea.vmem %s10776, 530 [#allocation3]
  %v11053 = vld [vmem:[%s11052] ss:$2 sm:$0xff]
  %s11054 = scalar_lea.vmem %s10776, 578 [#allocation3]
  %v11055 = vld [vmem:[%s11054] ss:$2 sm:$0xff]
  %s11056 = scalar_lea.vmem %s10776, 626 [#allocation3]
  %v11057 = vld [vmem:[%s11056] ss:$2 sm:$0xff]
  %s11058 = scalar_lea.vmem %s10776, 674 [#allocation3]
  %v11059 = vld [vmem:[%s11058] ss:$2 sm:$0xff]
  %s11060 = scalar_lea.vmem %s10776, 722 [#allocation3]
  %v11061 = vld [vmem:[%s11060] ss:$2 sm:$0xff]
  %s11062 = scalar_lea.vmem %s10776, 770 [#allocation3]
  %v11063 = vld [vmem:[%s11062] ss:$2 sm:$0xff]
  %v11064 = vpack.c.bf16 %v11035, %v11033
  %v11065 = vpack.c.bf16 %v11039, %v11037
  %v11066 = vpack.c.bf16 %v11043, %v11041
  %v11067 = vpack.c.bf16 %v11047, %v11045
  %v11068 = vpack.c.bf16 %v11051, %v11049
  %v11069 = vpack.c.bf16 %v11055, %v11053
  %v11070 = vpack.c.bf16 %v11059, %v11057
  %v11071 = vpack.c.bf16 %v11063, %v11061
  %v11080 = vunpack.c.l.b16 %v11064
  %v11081 = vunpack.c.h.b16 %v11064
  %v11082 = vunpack.c.l.b16 %v11065
  %v11083 = vunpack.c.h.b16 %v11065
  %v11084 = vunpack.c.l.b16 %v11066
  %v11085 = vunpack.c.h.b16 %v11066
  %v11086 = vunpack.c.l.b16 %v11067
  %v11087 = vunpack.c.h.b16 %v11067
  %v11088 = vunpack.c.l.b16 %v11068
  %v11089 = vunpack.c.h.b16 %v11068
  %v11090 = vunpack.c.l.b16 %v11069
  %v11091 = vunpack.c.h.b16 %v11069
  %v11092 = vunpack.c.l.b16 %v11070
  %v11093 = vunpack.c.h.b16 %v11070
  %v11094 = vunpack.c.l.b16 %v11071
  %v11095 = vunpack.c.h.b16 %v11071
  %v11096 = vpack.c.b16 %v11080, %v11080
  %v11097 = vpack.c.b16 %v11081, %v11081
  %v11098 = vpack.c.b16 %v11082, %v11082
  %v11099 = vpack.c.b16 %v11083, %v11083
  %v11100 = vpack.c.b16 %v11084, %v11084
  %v11101 = vpack.c.b16 %v11085, %v11085
  %v11102 = vpack.c.b16 %v11086, %v11086
  %v11103 = vpack.c.b16 %v11087, %v11087
  %v11104 = vpack.c.b16 %v11088, %v11088
  %v11105 = vpack.c.b16 %v11089, %v11089
  %v11106 = vpack.c.b16 %v11090, %v11090
  %v11107 = vpack.c.b16 %v11091, %v11091
  %v11108 = vpack.c.b16 %v11092, %v11092
  %v11109 = vpack.c.b16 %v11093, %v11093
  %v11110 = vpack.c.b16 %v11094, %v11094
  %v11111 = vpack.c.b16 %v11095, %v11095
  %11112 = vrot.lane.b32.xlu0 %v11096, 16
  %v11113 = vpop.permute.xlu0 %11112
  %11114 = vrot.lane.b32.xlu0 %v11097, 16
  %v11115 = vpop.permute.xlu0 %11114
  %11116 = vrot.lane.b32.xlu0 %v11098, 16
  %v11117 = vpop.permute.xlu0 %11116
  %11118 = vrot.lane.b32.xlu0 %v11099, 16
  %v11119 = vpop.permute.xlu0 %11118
  %11120 = vrot.lane.b32.xlu0 %v11100, 16
  %v11121 = vpop.permute.xlu0 %11120
  %11122 = vrot.lane.b32.xlu0 %v11101, 16
  %v11123 = vpop.permute.xlu0 %11122
  %11124 = vrot.lane.b32.xlu0 %v11102, 16
  %v11125 = vpop.permute.xlu0 %11124
  %11126 = vrot.lane.b32.xlu0 %v11103, 16
  %v11127 = vpop.permute.xlu0 %11126
  %11128 = vrot.lane.b32.xlu0 %v11104, 16
  %v11129 = vpop.permute.xlu0 %11128
  %11130 = vrot.lane.b32.xlu0 %v11105, 16
  %v11131 = vpop.permute.xlu0 %11130
  %11132 = vrot.lane.b32.xlu0 %v11106, 16
  %v11133 = vpop.permute.xlu0 %11132
  %11134 = vrot.lane.b32.xlu0 %v11107, 16
  %v11135 = vpop.permute.xlu0 %11134
  %11136 = vrot.lane.b32.xlu0 %v11108, 16
  %v11137 = vpop.permute.xlu0 %11136
  %11138 = vrot.lane.b32.xlu0 %v11109, 16
  %v11139 = vpop.permute.xlu0 %11138
  %11140 = vrot.lane.b32.xlu0 %v11110, 16
  %v11141 = vpop.permute.xlu0 %11140
  %11142 = vrot.lane.b32.xlu0 %v11111, 16
  %v11143 = vpop.permute.xlu0 %11142
  %11160 = vst.msk [vmem:[#allocation5] sm:$0xf] %vm9973, %v11113
  %11161 = vst.msk [vmem:[#allocation5 + $0x4] sm:$0xf] %vm9973, %v11115
  %11162 = vst.msk [vmem:[#allocation5 + $0x8] sm:$0xf] %vm9973, %v11117
  %11163 = vst.msk [vmem:[#allocation5 + $0xc] sm:$0xf] %vm9973, %v11119
  %11164 = vst.msk [vmem:[#allocation5 + $0x10] sm:$0xf] %vm9973, %v11121
  %11165 = vst.msk [vmem:[#allocation5 + $0x14] sm:$0xf] %vm9973, %v11123
  %11166 = vst.msk [vmem:[#allocation5 + $0x18] sm:$0xf] %vm9973, %v11125
  %11167 = vst.msk [vmem:[#allocation5 + $0x1c] sm:$0xf] %vm9973, %v11127
  %11168 = vst.msk [vmem:[#allocation5 + $0x20] sm:$0xf] %vm9973, %v11129
  %11169 = vst.msk [vmem:[#allocation5 + $0x24] sm:$0xf] %vm9973, %v11131
  %11170 = vst.msk [vmem:[#allocation5 + $0x28] sm:$0xf] %vm9973, %v11133
  %11171 = vst.msk [vmem:[#allocation5 + $0x2c] sm:$0xf] %vm9973, %v11135
  %11172 = vst.msk [vmem:[#allocation5 + $0x30] sm:$0xf] %vm9973, %v11137
  %11173 = vst.msk [vmem:[#allocation5 + $0x34] sm:$0xf] %vm9973, %v11139
  %11174 = vst.msk [vmem:[#allocation5 + $0x38] sm:$0xf] %vm9973, %v11141
  %11175 = vst.msk [vmem:[#allocation5 + $0x3c] sm:$0xf] %vm9973, %v11143
  %v11176 = vld [vmem:[#allocation5] sm:$0xf]
  %v11177 = vld [vmem:[#allocation5 + $0x4] sm:$0xf]
  %v11178 = vld [vmem:[#allocation5 + $0x8] sm:$0xf]
  %v11179 = vld [vmem:[#allocation5 + $0xc] sm:$0xf]
  %v11180 = vld [vmem:[#allocation5 + $0x10] sm:$0xf]
  %v11181 = vld [vmem:[#allocation5 + $0x14] sm:$0xf]
  %v11182 = vld [vmem:[#allocation5 + $0x18] sm:$0xf]
  %v11183 = vld [vmem:[#allocation5 + $0x1c] sm:$0xf]
  %v11184 = vld [vmem:[#allocation5 + $0x20] sm:$0xf]
  %v11185 = vld [vmem:[#allocation5 + $0x24] sm:$0xf]
  %v11186 = vld [vmem:[#allocation5 + $0x28] sm:$0xf]
  %v11187 = vld [vmem:[#allocation5 + $0x2c] sm:$0xf]
  %v11188 = vld [vmem:[#allocation5 + $0x30] sm:$0xf]
  %v11189 = vld [vmem:[#allocation5 + $0x34] sm:$0xf]
  %v11190 = vld [vmem:[#allocation5 + $0x38] sm:$0xf]
  %v11191 = vld [vmem:[#allocation5 + $0x3c] sm:$0xf]
  %s11192 = scalar_lea.vmem %s5, 24
  %v11193 = vld [vmem:[%s11192] sm:$0xf]
  %v11194 = vld [vmem:[%s11192 + $0x4] sm:$0xf]
  %v11195 = vld [vmem:[%s11192 + $0x8] sm:$0xf]
  %v11212 = vunpack.c.l.b16 %v11176
  %v11213 = vunpack.c.l.b16 %v11177
  %v11214 = vunpack.c.l.b16 %v11178
  %v11215 = vunpack.c.l.b16 %v11179
  %v11216 = vunpack.c.l.b16 %v11180
  %v11217 = vunpack.c.l.b16 %v11181
  %v11218 = vunpack.c.l.b16 %v11182
  %v11219 = vunpack.c.l.b16 %v11183
  %v11220 = vunpack.c.l.b16 %v11184
  %v11221 = vunpack.c.l.b16 %v11185
  %v11222 = vunpack.c.l.b16 %v11186
  %v11223 = vunpack.c.l.b16 %v11187
  %v11224 = vunpack.c.l.b16 %v11188
  %v11225 = vunpack.c.l.b16 %v11189
  %v11226 = vunpack.c.l.b16 %v11190
  %v11227 = vunpack.c.l.b16 %v11191
  %v11228 = vpack.c.b16 %v11213, %v11212
  %v11229 = vpack.c.b16 %v11215, %v11214
  %v11230 = vpack.c.b16 %v11217, %v11216
  %v11231 = vpack.c.b16 %v11219, %v11218
  %v11232 = vpack.c.b16 %v11221, %v11220
  %v11233 = vpack.c.b16 %v11223, %v11222
  %v11234 = vpack.c.b16 %v11225, %v11224
  %v11235 = vpack.c.b16 %v11227, %v11226
  %v11239 = vunpack.c.l.b16 %v11193
  %v11240 = vunpack.c.l.b16 %v11194
  %v11241 = vunpack.c.l.b16 %v11195
  %v11242 = vpack.c.b16 %v11240, %v11239
  %v11243 = vpack.c.b16 %v11241, %v11241
  %v11246 = vsel %vm10477, %v11228, 0
  %v11249 = vsel %vm10477, %v11229, 0
  %v11252 = vsel %vm10477, %v11230, 0
  %v11255 = vsel %vm10477, %v11231, 0
  %v11258 = vsel %vm10477, %v11232, 0
  %v11261 = vsel %vm10477, %v11233, 0
  %v11264 = vsel %vm10477, %v11234, 0
  %v11267 = vsel %vm10477, %v11235, 0
  %v11270 = vsel %vm10502, %v11243, 0
  %11272 = vmatprep.subr.bf16.mxu0 0
  %11273 = vmatpush1.bf16.msra.mxu0 0
  %11274 = vmatprep.subr.bf16.mxu0 0
  %11275 = vmatpush1.bf16.msra.mxu0 0
  %11276 = vmatprep.subr.bf16.mxu0 0
  %11277 = vmatpush1.bf16.msra.mxu0 0
  %11278 = vmatprep.subr.bf16.mxu0 0
  %11279 = vmatpush1.bf16.msra.mxu0 0
  %11280 = vmatprep.subr.bf16.mxu0 0
  %11281 = vmatpush1.bf16.msra.mxu0 0
  %11282 = vmatprep.subr.bf16.mxu0 0
  %11283 = vmatpush1.bf16.msra.mxu0 0
  %11284 = vmatprep.subr.bf16.mxu0 0
  %11285 = vmatpush1.bf16.msra.mxu0 %v11270
  %11286 = vmatprep.subr.bf16.mxu0 0
  %11287 = vmatpush1.bf16.msra.mxu0 %v11242
  %11288 = vmatprep.subr.bf16.mxu0 0
  %11289 = vmatpush2.bf16.msra.mxu0 0
  %11290 = vmatprep.subr.bf16.mxu0 0
  %11291 = vmatpush2.bf16.msra.mxu0 0
  %11292 = vmatprep.subr.bf16.mxu0 0
  %11293 = vmatpush2.bf16.msra.mxu0 0
  %11294 = vmatprep.subr.bf16.mxu0 0
  %11295 = vmatpush2.bf16.msra.mxu0 0
  %11296 = vmatprep.subr.bf16.mxu0 0
  %11297 = vmatpush2.bf16.msra.mxu0 0
  %11298 = vmatprep.subr.bf16.mxu0 0
  %11299 = vmatpush2.bf16.msra.mxu0 0
  %11300 = vmatprep.subr.bf16.mxu0 0
  %11301 = vmatpush2.bf16.msra.mxu0 0
  %11302 = vmatprep.subr.bf16.mxu0 0
  %11303 = vmatpush2.bf16.msra.mxu0 0
  %11304 = vmatprep.mubr.bf16.mxu0 0
  %11305 = vmatmul.mubr.bf16.gmra.mxu0 %v11246
  %v11306 = vpop.f32.mrf.mxu0
  %v11307 = vadd.f32 0.0, %v11306
  %v11308 = vpop.f32.mrf.mxu0
  %v11309 = vpop.f32.mrf.mxu0
  %v11310 = vadd.f32 0.0, %v11309
  %v11311 = vpop.f32.mrf.mxu0
  %11312 = vmatprep.mubr.bf16.mxu0 0
  %11313 = vmatmul.mubr.bf16.gmra.mxu0 %v11249
  %v11314 = vpop.f32.mrf.mxu0
  %v11315 = vadd.f32 0.0, %v11314
  %v11316 = vpop.f32.mrf.mxu0
  %v11317 = vpop.f32.mrf.mxu0
  %v11318 = vadd.f32 0.0, %v11317
  %v11319 = vpop.f32.mrf.mxu0
  %11320 = vmatprep.mubr.bf16.mxu0 0
  %11321 = vmatmul.mubr.bf16.gmra.mxu0 %v11252
  %v11322 = vpop.f32.mrf.mxu0
  %v11323 = vadd.f32 0.0, %v11322
  %v11324 = vpop.f32.mrf.mxu0
  %v11325 = vpop.f32.mrf.mxu0
  %v11326 = vadd.f32 0.0, %v11325
  %v11327 = vpop.f32.mrf.mxu0
  %11328 = vmatprep.mubr.bf16.mxu0 0
  %11329 = vmatmul.mubr.bf16.gmra.mxu0 %v11255
  %v11330 = vpop.f32.mrf.mxu0
  %v11331 = vadd.f32 0.0, %v11330
  %v11332 = vpop.f32.mrf.mxu0
  %v11333 = vpop.f32.mrf.mxu0
  %v11334 = vadd.f32 0.0, %v11333
  %v11335 = vpop.f32.mrf.mxu0
  %11336 = vmatprep.mubr.bf16.mxu0 0
  %11337 = vmatmul.mubr.bf16.gmra.mxu0 %v11258
  %v11338 = vpop.f32.mrf.mxu0
  %v11339 = vadd.f32 0.0, %v11338
  %v11340 = vpop.f32.mrf.mxu0
  %v11341 = vpop.f32.mrf.mxu0
  %v11342 = vadd.f32 0.0, %v11341
  %v11343 = vpop.f32.mrf.mxu0
  %11344 = vmatprep.mubr.bf16.mxu0 0
  %11345 = vmatmul.mubr.bf16.gmra.mxu0 %v11261
  %v11346 = vpop.f32.mrf.mxu0
  %v11347 = vadd.f32 0.0, %v11346
  %v11348 = vpop.f32.mrf.mxu0
  %v11349 = vpop.f32.mrf.mxu0
  %v11350 = vadd.f32 0.0, %v11349
  %v11351 = vpop.f32.mrf.mxu0
  %11352 = vmatprep.mubr.bf16.mxu0 0
  %11353 = vmatmul.mubr.bf16.gmra.mxu0 %v11264
  %v11354 = vpop.f32.mrf.mxu0
  %v11355 = vadd.f32 0.0, %v11354
  %v11356 = vpop.f32.mrf.mxu0
  %v11357 = vpop.f32.mrf.mxu0
  %v11358 = vadd.f32 0.0, %v11357
  %v11359 = vpop.f32.mrf.mxu0
  %11360 = vmatprep.mubr.bf16.mxu0 0
  %11361 = vmatmul.mubr.bf16.gmra.mxu0 %v11267
  %v11362 = vpop.f32.mrf.mxu0
  %v11363 = vadd.f32 0.0, %v11362
  %v11364 = vpop.f32.mrf.mxu0
  %v11365 = vpop.f32.mrf.mxu0
  %v11366 = vadd.f32 0.0, %v11365
  %v11367 = vpop.f32.mrf.mxu0
  %11368 = vdwg.mxu0
  %v11369 = vadd.f32 %v10714, %v11307
  %v11370 = vadd.f32 %v10717, %v11310
  %v11371 = vadd.f32 %v10722, %v11315
  %v11372 = vadd.f32 %v10725, %v11318
  %v11373 = vadd.f32 %v10730, %v11323
  %v11374 = vadd.f32 %v10733, %v11326
  %v11375 = vadd.f32 %v10738, %v11331
  %v11376 = vadd.f32 %v10741, %v11334
  %v11377 = vadd.f32 %v10746, %v11339
  %v11378 = vadd.f32 %v10749, %v11342
  %v11379 = vadd.f32 %v10754, %v11347
  %v11380 = vadd.f32 %v10757, %v11350
  %v11381 = vadd.f32 %v10762, %v11355
  %v11382 = vadd.f32 %v10765, %v11358
  %v11383 = vadd.f32 %v10770, %v11363
  %v11384 = vadd.f32 %v10773, %v11366
  %v11385 = vld [vmem:[%s6] sm:$0x1]
  %v11387 = vlaneseq
  %v11388 = vshrl.u32 %v11387, 7
  %v11389 = vsub.s32 0, %v11388
  %v11390 = vrot.slane %v11385, %v11389
  %v11392 = vmul.f32 %v11369, %v11390
  %v11393 = vmul.f32 %v11370, %v11390
  %v11394 = vmul.f32 %v11371, %v11390
  %v11395 = vmul.f32 %v11372, %v11390
  %v11396 = vmul.f32 %v11373, %v11390
  %v11397 = vmul.f32 %v11374, %v11390
  %v11398 = vmul.f32 %v11375, %v11390
  %v11399 = vmul.f32 %v11376, %v11390
  %v11400 = vmul.f32 %v11377, %v11390
  %v11401 = vmul.f32 %v11378, %v11390
  %v11402 = vmul.f32 %v11379, %v11390
  %v11403 = vmul.f32 %v11380, %v11390
  %v11404 = vmul.f32 %v11381, %v11390
  %v11405 = vmul.f32 %v11382, %v11390
  %v11406 = vmul.f32 %v11383, %v11390
  %v11407 = vmul.f32 %v11384, %v11390
  %v11408 = vld [vmem:[%s7] sm:$0x1]
  %v11410 = vlaneseq
  %v11411 = vshrl.u32 %v11410, 7
  %v11412 = vsub.s32 0, %v11411
  %v11413 = vrot.slane %v11408, %v11412
  %v11415 = vadd.f32 %v11392, %v11413
  %v11416 = vadd.f32 %v11393, %v11413
  %v11417 = vadd.f32 %v11394, %v11413
  %v11418 = vadd.f32 %v11395, %v11413
  %v11419 = vadd.f32 %v11396, %v11413
  %v11420 = vadd.f32 %v11397, %v11413
  %v11421 = vadd.f32 %v11398, %v11413
  %v11422 = vadd.f32 %v11399, %v11413
  %v11423 = vadd.f32 %v11400, %v11413
  %v11424 = vadd.f32 %v11401, %v11413
  %v11425 = vadd.f32 %v11402, %v11413
  %v11426 = vadd.f32 %v11403, %v11413
  %v11427 = vadd.f32 %v11404, %v11413
  %v11428 = vadd.f32 %v11405, %v11413
  %v11429 = vadd.f32 %v11406, %v11413
  %v11430 = vadd.f32 %v11407, %v11413
  %v11431 = vld [vmem:[%s0] ss:$2 sm:$0xff]
  %s11432 = scalar_lea.vmem %s0, 32
  %v11433 = vld [vmem:[%s11432] ss:$2 sm:$0xff]
  %s11434 = scalar_lea.vmem %s0, 64
  %v11435 = vld [vmem:[%s11434] ss:$2 sm:$0xff]
  %s11436 = scalar_lea.vmem %s0, 96
  %v11437 = vld [vmem:[%s11436] ss:$2 sm:$0xff]
  %s11438 = scalar_lea.vmem %s0, 128
  %v11439 = vld [vmem:[%s11438] ss:$2 sm:$0xff]
  %s11440 = scalar_lea.vmem %s0, 160
  %v11441 = vld [vmem:[%s11440] ss:$2 sm:$0xff]
  %s11442 = scalar_lea.vmem %s0, 192
  %v11443 = vld [vmem:[%s11442] ss:$2 sm:$0xff]
  %s11444 = scalar_lea.vmem %s0, 224
  %v11445 = vld [vmem:[%s11444] ss:$2 sm:$0xff]
  %s11446 = scalar_lea.vmem %s0, 256
  %v11447 = vld [vmem:[%s11446] ss:$2 sm:$0xff]
  %s11448 = scalar_lea.vmem %s0, 288
  %v11449 = vld [vmem:[%s11448] ss:$2 sm:$0xff]
  %s11450 = scalar_lea.vmem %s0, 320
  %v11451 = vld [vmem:[%s11450] ss:$2 sm:$0xff]
  %s11452 = scalar_lea.vmem %s0, 352
  %v11453 = vld [vmem:[%s11452] ss:$2 sm:$0xff]
  %s11454 = scalar_lea.vmem %s0, 384
  %v11455 = vld [vmem:[%s11454] ss:$2 sm:$0xff]
  %s11456 = scalar_lea.vmem %s0, 416
  %v11457 = vld [vmem:[%s11456] ss:$2 sm:$0xff]
  %s11458 = scalar_lea.vmem %s0, 448
  %v11459 = vld [vmem:[%s11458] ss:$2 sm:$0xff]
  %s11460 = scalar_lea.vmem %s0, 480
  %v11461 = vld [vmem:[%s11460] ss:$2 sm:$0xff]
  %v11462 = vpack.c.bf16 %v11433, %v11431
  %v11463 = vpack.c.bf16 %v11437, %v11435
  %v11464 = vpack.c.bf16 %v11441, %v11439
  %v11465 = vpack.c.bf16 %v11445, %v11443
  %v11466 = vpack.c.bf16 %v11449, %v11447
  %v11467 = vpack.c.bf16 %v11453, %v11451
  %v11468 = vpack.c.bf16 %v11457, %v11455
  %v11469 = vpack.c.bf16 %v11461, %v11459
  %v11470 = vld [vmem:[%s8] sm:$0x3]
  %vm11471 = vcmask 31744
  %v11473 = vsel %vm11471, %v11462, 0
  %v11476 = vsel %vm11471, %v11463, 0
  %v11479 = vsel %vm11471, %v11464, 0
  %v11482 = vsel %vm11471, %v11465, 0
  %v11485 = vsel %vm11471, %v11466, 0
  %v11488 = vsel %vm11471, %v11467, 0
  %v11491 = vsel %vm11471, %v11468, 0
  %v11494 = vsel %vm11471, %v11469, 0
  %vm11496 = vcmask 1041408
  %v11498 = vsel %vm11496, %v11470, 0
  %11500 = vmatprep.subr.bf16.mxu0 0
  %11501 = vmatpush1.bf16.msra.mxu0 0
  %11502 = vmatprep.subr.bf16.mxu0 0
  %11503 = vmatpush1.bf16.msra.mxu0 0
  %11504 = vmatprep.subr.bf16.mxu0 0
  %11505 = vmatpush1.bf16.msra.mxu0 0
  %11506 = vmatprep.subr.bf16.mxu0 0
  %11507 = vmatpush1.bf16.msra.mxu0 0
  %11508 = vmatprep.subr.bf16.mxu0 0
  %11509 = vmatpush1.bf16.msra.mxu0 0
  %11510 = vmatprep.subr.bf16.mxu0 0
  %11511 = vmatpush1.bf16.msra.mxu0 0
  %11512 = vmatprep.subr.bf16.mxu0 0
  %11513 = vmatpush1.bf16.msra.mxu0 0
  %11514 = vmatprep.subr.bf16.mxu0 0
  %11515 = vmatpush1.bf16.msra.mxu0 %v11498
  %11516 = vmatprep.subr.bf16.mxu0 0
  %11517 = vmatpush2.bf16.msra.mxu0 0
  %11518 = vmatprep.subr.bf16.mxu0 0
  %11519 = vmatpush2.bf16.msra.mxu0 0
  %11520 = vmatprep.subr.bf16.mxu0 0
  %11521 = vmatpush2.bf16.msra.mxu0 0
  %11522 = vmatprep.subr.bf16.mxu0 0
  %11523 = vmatpush2.bf16.msra.mxu0 0
  %11524 = vmatprep.subr.bf16.mxu0 0
  %11525 = vmatpush2.bf16.msra.mxu0 0
  %11526 = vmatprep.subr.bf16.mxu0 0
  %11527 = vmatpush2.bf16.msra.mxu0 0
  %11528 = vmatprep.subr.bf16.mxu0 0
  %11529 = vmatpush2.bf16.msra.mxu0 0
  %11530 = vmatprep.subr.bf16.mxu0 0
  %11531 = vmatpush2.bf16.msra.mxu0 0
  %11532 = vmatprep.mubr.bf16.mxu0 0
  %11533 = vmatmul.mubr.bf16.gmra.mxu0 %v11473
  %v11534 = vpop.f32.mrf.mxu0
  %v11535 = vadd.f32 0.0, %v11534
  %v11536 = vpop.f32.mrf.mxu0
  %v11537 = vpop.f32.mrf.mxu0
  %v11538 = vadd.f32 0.0, %v11537
  %v11539 = vpop.f32.mrf.mxu0
  %11540 = vmatprep.mubr.bf16.mxu0 0
  %11541 = vmatmul.mubr.bf16.gmra.mxu0 %v11476
  %v11542 = vpop.f32.mrf.mxu0
  %v11543 = vadd.f32 0.0, %v11542
  %v11544 = vpop.f32.mrf.mxu0
  %v11545 = vpop.f32.mrf.mxu0
  %v11546 = vadd.f32 0.0, %v11545
  %v11547 = vpop.f32.mrf.mxu0
  %11548 = vmatprep.mubr.bf16.mxu0 0
  %11549 = vmatmul.mubr.bf16.gmra.mxu0 %v11479
  %v11550 = vpop.f32.mrf.mxu0
  %v11551 = vadd.f32 0.0, %v11550
  %v11552 = vpop.f32.mrf.mxu0
  %v11553 = vpop.f32.mrf.mxu0
  %v11554 = vadd.f32 0.0, %v11553
  %v11555 = vpop.f32.mrf.mxu0
  %11556 = vmatprep.mubr.bf16.mxu0 0
  %11557 = vmatmul.mubr.bf16.gmra.mxu0 %v11482
  %v11558 = vpop.f32.mrf.mxu0
  %v11559 = vadd.f32 0.0, %v11558
  %v11560 = vpop.f32.mrf.mxu0
  %v11561 = vpop.f32.mrf.mxu0
  %v11562 = vadd.f32 0.0, %v11561
  %v11563 = vpop.f32.mrf.mxu0
  %11564 = vmatprep.mubr.bf16.mxu0 0
  %11565 = vmatmul.mubr.bf16.gmra.mxu0 %v11485
  %v11566 = vpop.f32.mrf.mxu0
  %v11567 = vadd.f32 0.0, %v11566
  %v11568 = vpop.f32.mrf.mxu0
  %v11569 = vpop.f32.mrf.mxu0
  %v11570 = vadd.f32 0.0, %v11569
  %v11571 = vpop.f32.mrf.mxu0
  %11572 = vmatprep.mubr.bf16.mxu0 0
  %11573 = vmatmul.mubr.bf16.gmra.mxu0 %v11488
  %v11574 = vpop.f32.mrf.mxu0
  %v11575 = vadd.f32 0.0, %v11574
  %v11576 = vpop.f32.mrf.mxu0
  %v11577 = vpop.f32.mrf.mxu0
  %v11578 = vadd.f32 0.0, %v11577
  %v11579 = vpop.f32.mrf.mxu0
  %11580 = vmatprep.mubr.bf16.mxu0 0
  %11581 = vmatmul.mubr.bf16.gmra.mxu0 %v11491
  %v11582 = vpop.f32.mrf.mxu0
  %v11583 = vadd.f32 0.0, %v11582
  %v11584 = vpop.f32.mrf.mxu0
  %v11585 = vpop.f32.mrf.mxu0
  %v11586 = vadd.f32 0.0, %v11585
  %v11587 = vpop.f32.mrf.mxu0
  %11588 = vmatprep.mubr.bf16.mxu0 0
  %11589 = vmatmul.mubr.bf16.gmra.mxu0 %v11494
  %v11590 = vpop.f32.mrf.mxu0
  %v11591 = vadd.f32 0.0, %v11590
  %v11592 = vpop.f32.mrf.mxu0
  %v11593 = vpop.f32.mrf.mxu0
  %v11594 = vadd.f32 0.0, %v11593
  %v11595 = vpop.f32.mrf.mxu0
  %11596 = vdwg.mxu0
  %v11597 = vld [vmem:[%s9] sm:$0x1]
  %v11599 = vlaneseq
  %v11600 = vshrl.u32 %v11599, 7
  %v11601 = vsub.s32 0, %v11600
  %v11602 = vrot.slane %v11597, %v11601
  %v11604 = vmul.f32 %v11535, %v11602
  %v11605 = vmul.f32 %v11538, %v11602
  %v11606 = vmul.f32 %v11543, %v11602
  %v11607 = vmul.f32 %v11546, %v11602
  %v11608 = vmul.f32 %v11551, %v11602
  %v11609 = vmul.f32 %v11554, %v11602
  %v11610 = vmul.f32 %v11559, %v11602
  %v11611 = vmul.f32 %v11562, %v11602
  %v11612 = vmul.f32 %v11567, %v11602
  %v11613 = vmul.f32 %v11570, %v11602
  %v11614 = vmul.f32 %v11575, %v11602
  %v11615 = vmul.f32 %v11578, %v11602
  %v11616 = vmul.f32 %v11583, %v11602
  %v11617 = vmul.f32 %v11586, %v11602
  %v11618 = vmul.f32 %v11591, %v11602
  %v11619 = vmul.f32 %v11594, %v11602
  %v11620 = vld [vmem:[%s10] sm:$0x1]
  %v11622 = vlaneseq
  %v11623 = vshrl.u32 %v11622, 7
  %v11624 = vsub.s32 0, %v11623
  %v11625 = vrot.slane %v11620, %v11624
  %v11627 = vadd.f32 %v11604, %v11625
  %v11628 = vadd.f32 %v11605, %v11625
  %v11629 = vadd.f32 %v11606, %v11625
  %v11630 = vadd.f32 %v11607, %v11625
  %v11631 = vadd.f32 %v11608, %v11625
  %v11632 = vadd.f32 %v11609, %v11625
  %v11633 = vadd.f32 %v11610, %v11625
  %v11634 = vadd.f32 %v11611, %v11625
  %v11635 = vadd.f32 %v11612, %v11625
  %v11636 = vadd.f32 %v11613, %v11625
  %v11637 = vadd.f32 %v11614, %v11625
  %v11638 = vadd.f32 %v11615, %v11625
  %v11639 = vadd.f32 %v11616, %v11625
  %v11640 = vadd.f32 %v11617, %v11625
  %v11641 = vadd.f32 %v11618, %v11625
  %v11642 = vadd.f32 %v11619, %v11625
  %v11643 = vadd.f32 %v11415, %v11627
  %v11644 = vadd.f32 %v11416, %v11628
  %v11645 = vadd.f32 %v11417, %v11629
  %v11646 = vadd.f32 %v11418, %v11630
  %v11647 = vadd.f32 %v11419, %v11631
  %v11648 = vadd.f32 %v11420, %v11632
  %v11649 = vadd.f32 %v11421, %v11633
  %v11650 = vadd.f32 %v11422, %v11634
  %v11651 = vadd.f32 %v11423, %v11635
  %v11652 = vadd.f32 %v11424, %v11636
  %v11653 = vadd.f32 %v11425, %v11637
  %v11654 = vadd.f32 %v11426, %v11638
  %v11655 = vadd.f32 %v11427, %v11639
  %v11656 = vadd.f32 %v11428, %v11640
  %v11657 = vadd.f32 %v11429, %v11641
  %v11658 = vadd.f32 %v11430, %v11642
  %11659 = vst.msk [vmem:[%s11] sm:$0xff] %vm275, %v11643
  %11660 = vst.msk [vmem:[%s11 + $0x8] sm:$0xff] %vm275, %v11644
  %11661 = vst.msk [vmem:[%s11 + $0x10] sm:$0xff] %vm275, %v11645
  %11662 = vst.msk [vmem:[%s11 + $0x18] sm:$0xff] %vm275, %v11646
  %11663 = vst.msk [vmem:[%s11 + $0x20] sm:$0xff] %vm275, %v11647
  %11664 = vst.msk [vmem:[%s11 + $0x28] sm:$0xff] %vm275, %v11648
  %11665 = vst.msk [vmem:[%s11 + $0x30] sm:$0xff] %vm275, %v11649
  %11666 = vst.msk [vmem:[%s11 + $0x38] sm:$0xff] %vm275, %v11650
  %11667 = vst.msk [vmem:[%s11 + $0x40] sm:$0xff] %vm275, %v11651
  %11668 = vst.msk [vmem:[%s11 + $0x48] sm:$0xff] %vm275, %v11652
  %11669 = vst.msk [vmem:[%s11 + $0x50] sm:$0xff] %vm275, %v11653
  %11670 = vst.msk [vmem:[%s11 + $0x58] sm:$0xff] %vm275, %v11654
  %11671 = vst.msk [vmem:[%s11 + $0x60] sm:$0xff] %vm275, %v11655
  %11672 = vst.msk [vmem:[%s11 + $0x68] sm:$0xff] %vm275, %v11656
  %11673 = vst.msk [vmem:[%s11 + $0x70] sm:$0xff] %vm275, %v11657
  %11674 = vst.msk [vmem:[%s11 + $0x78] sm:$0xff] %vm275, %v11658
  // Predicated region
  $region46: #{tpu_custom_call.1} parent=0 // pred_check
    _
  $region47: #{tpu_custom_call.1} parent=0 // pred_check_branch
    %11676 = sbr.rel (0) target = $region49
  $region48: #{tpu_custom_call.1} parent=0 // pred_region
    _
  $region49: #{tpu_custom_call.1} parent=0 // pred_fallthru
    _
  // Predicated region
  $region50: #{tpu_custom_call.1} parent=0 // pred_check
    _
  $region51: #{tpu_custom_call.1} parent=0 // pred_check_branch
    %11678 = sbr.rel (0) target = $region53
  $region52: #{tpu_custom_call.1} parent=0 // pred_region
    _
  $region53: #{tpu_custom_call.1} parent=0 // pred_fallthru
    _

</llo_original>
